<compile_context>
chip_gen: v7x
topology: tpu7x:2x2x1
jax: 0.10.0
libtpu: 0.0.40
codegen_flags: <defaults>
</compile_context>

<pallas_src>
import jax
import jax.numpy as jnp
from jax import lax
from jax.experimental import pallas as pl
from jax.experimental.pallas import tpu as pltpu

INPUT_SIZE = 256                      # x features
HIDDEN_SIZE = 512                     # h / c features
CAT_SIZE = INPUT_SIZE + HIDDEN_SIZE   # 768


def _sigmoid_via_tanh(x):
    # sigmoid(x) == 0.5 * tanh(0.5 * x) + 0.5 : one EUP op (tanh) plus cheap
    # VPU mul/add, instead of exp + divide.
    return 0.5 * jnp.tanh(0.5 * x) + 0.5


def lstm_seq_kernel(x_ref, wx_ref, wh_ref, h0_ref, c0_ref,
                    h_seq_ref, c_fin_ref, h_sc, c_sc):
    """Fused multi-timestep LSTM; TU timesteps per grid invocation.

    x_ref:     (TU, BT, 256)   bf16  x_t tile
    wx_ref:    (256, 2048)     bf16  [Wf|Wi|Wc|Wo] rows for x (VMEM resident)
    wh_ref:    (512, 2048)     bf16  [Wf|Wi|Wc|Wo] rows for h (VMEM resident)
    h0_ref:    (BT, 512)       f32   h_0
    c0_ref:    (BT, 512)       f32   c_0
    h_seq_ref: (TU, BT, 512)   bf16  h_t outputs for this time block
    c_fin_ref: (BT, 512)       f32   c_T (written at last time block only)
    h_sc:      (BT, 512)       bf16  recurrent h carry (VMEM scratch)
    c_sc:      (BT, 512)       f32   recurrent c carry (VMEM scratch)
    """
    H = HIDDEN_SIZE
    tu = x_ref.shape[0]
    t_blk = pl.program_id(1)

    @pl.when(t_blk == 0)
    def _():
        h_sc[...] = h0_ref[...].astype(jnp.bfloat16)
        c_sc[...] = c0_ref[...]

    def step(u, carry):
        x_u = x_ref[u]                                       # (BT, 256) bf16
        # Two fused MXU matmuls (all four gates); bf16 in, f32 accumulate.
        gates = (
            jnp.dot(x_u, wx_ref[...], preferred_element_type=jnp.float32)
            + jnp.dot(h_sc[...], wh_ref[...],
                      preferred_element_type=jnp.float32)
        )                                  # (BT, 4H) f32, cols [f | i | c~ | o]

        f = _sigmoid_via_tanh(gates[:, 0 * H:1 * H])
        i = _sigmoid_via_tanh(gates[:, 1 * H:2 * H])
        c_tilde = jnp.tanh(gates[:, 2 * H:3 * H])
        o = _sigmoid_via_tanh(gates[:, 3 * H:4 * H])

        c_new = f * c_sc[...] + i * c_tilde                  # f32
        h_new = o * jnp.tanh(c_new)                          # f32

        c_sc[...] = c_new
        h_bf16 = h_new.astype(jnp.bfloat16)
        h_sc[...] = h_bf16
        h_seq_ref[u] = h_bf16
        return carry

    lax.fori_loop(0, tu, step, 0, unroll=True)

    @pl.when(t_blk == pl.num_programs(1) - 1)
    def _():
        c_fin_ref[...] = c_sc[...]


def lstm_sequence(x_seq, h0, c0, wx, wh, *, block_batch=128, time_unroll=8):
    """Run T LSTMCell steps in one pallas_call.

    x_seq: (T, B, 256) any float dtype (cast to bf16 for the MXU)
    h0,c0: (B, 512)
    wx:    (256, 2048) — gate columns ordered [f | i | c | o]
    wh:    (512, 2048)
    returns h_seq (T, B, 512) bf16, c_T (B, 512) f32
    """
    T, B, in_features = x_seq.shape
    assert in_features == INPUT_SIZE
    assert wx.shape == (INPUT_SIZE, 4 * HIDDEN_SIZE)
    assert wh.shape == (HIDDEN_SIZE, 4 * HIDDEN_SIZE)

    # Batch tile pinned to the MXU row width; pad small batches up to one tile
    # (padded rows are zero -> finite, sliced off below).
    BT = block_batch
    B_pad = max(BT, ((B + BT - 1) // BT) * BT)

    # Timestep unroll: largest power of two <= time_unroll that divides T.
    TU = max(1, time_unroll)
    while T % TU:
        TU //= 2
    TU = max(TU, 1)

    if B_pad != B:
        pad = B_pad - B
        x_seq = jnp.pad(x_seq, ((0, 0), (0, pad), (0, 0)))
        h0 = jnp.pad(h0, ((0, pad), (0, 0)))
        c0 = jnp.pad(c0, ((0, pad), (0, 0)))

    x_seq = x_seq.astype(jnp.bfloat16)
    wx = wx.astype(jnp.bfloat16)
    wh = wh.astype(jnp.bfloat16)
    h0 = h0.astype(jnp.float32)
    c0 = c0.astype(jnp.float32)

    h_seq, c_fin = pl.pallas_call(
        lstm_seq_kernel,
        out_shape=(
            jax.ShapeDtypeStruct((T, B_pad, HIDDEN_SIZE), jnp.bfloat16),
            jax.ShapeDtypeStruct((B_pad, HIDDEN_SIZE), jnp.float32),
        ),
        grid_spec=pltpu.PrefetchScalarGridSpec(
            num_scalar_prefetch=0,
            grid=(B_pad // BT, T // TU),
            in_specs=[
                # x tile: TU timesteps per grid step, advances along T.
                pl.BlockSpec((TU, BT, INPUT_SIZE), lambda b, t: (t, b, 0)),
                # Weights: constant block index -> DMA'd once, VMEM resident.
                pl.BlockSpec((INPUT_SIZE, 4 * HIDDEN_SIZE), lambda b, t: (0, 0)),
                pl.BlockSpec((HIDDEN_SIZE, 4 * HIDDEN_SIZE), lambda b, t: (0, 0)),
                # Initial states: constant across T (re-fetched per batch tile).
                pl.BlockSpec((BT, HIDDEN_SIZE), lambda b, t: (b, 0)),
                pl.BlockSpec((BT, HIDDEN_SIZE), lambda b, t: (b, 0)),
            ],
            out_specs=(
                # h_t written back each grid step (lane-dense 512 cols, bf16).
                pl.BlockSpec((TU, BT, HIDDEN_SIZE), lambda b, t: (t, b, 0)),
                # c_T: block index constant over T -> single writeback per tile.
                pl.BlockSpec((BT, HIDDEN_SIZE), lambda b, t: (b, 0)),
            ),
            scratch_shapes=[
                pltpu.VMEM((BT, HIDDEN_SIZE), jnp.bfloat16),   # h carry
                pltpu.VMEM((BT, HIDDEN_SIZE), jnp.float32),    # c carry
            ],
        ),
        compiler_params=pltpu.CompilerParams(
            dimension_semantics=("parallel", "arbitrary"),
            vmem_limit_bytes=32 << 20,
        ),
    )(x_seq, wx, wh, h0, c0)

    if B_pad != B:
        h_seq = h_seq[:, :B, :]
        c_fin = c_fin[:B, :]
    return h_seq, c_fin


def lstm_cell(x, hidden, wx, wh):
    """Single-step forward matching the PyTorch LSTMCell: returns (h_t, c_t)."""
    h_prev, c_prev = hidden
    h_seq, c_t = lstm_sequence(x[None], h_prev, c_prev, wx, wh)
    return h_seq[0], c_t


def reference_lstm_cell(x, hidden, wx, wh):
    """Pure-JAX reference mirroring the PyTorch forward (bf16 matmul inputs,
    f32 accumulate, exact sigmoid, f32 elementwise state update)."""
    h_prev, c_prev = hidden
    H = HIDDEN_SIZE
    gates = (
        jnp.dot(x.astype(jnp.bfloat16), wx.astype(jnp.bfloat16),
                preferred_element_type=jnp.float32)
        + jnp.dot(h_prev.astype(jnp.bfloat16), wh.astype(jnp.bfloat16),
                  preferred_element_type=jnp.float32)
    )
    f = jax.nn.sigmoid(gates[:, 0 * H:1 * H])
    i = jax.nn.sigmoid(gates[:, 1 * H:2 * H])
    c_tilde = jnp.tanh(gates[:, 2 * H:3 * H])
    o = jax.nn.sigmoid(gates[:, 3 * H:4 * H])
    c_new = f * c_prev.astype(jnp.float32) + i * c_tilde
    h_new = o * jnp.tanh(c_new)
    return h_new, c_new


if __name__ == "__main__":
    B = 8    # small demo batch (internally padded to the 128-row MXU tile)
    T = 8    # demo sequence length for the fused time loop

    key = jax.random.PRNGKey(0)
    kx, kxs, kh, kc, kf, ki, kcw, ko = jax.random.split(key, 8)

    # Parameters: each nn.Linear(768, 512, bias=False) weight is (512, 768);
    # PyTorch computes y = hxt @ W^T with hxt = [x | h].  We store W^T
    # (768, 512) per gate, split its rows into the x-part (first 256) and
    # h-part (last 512), and concatenate the four gates along the output axis
    # -> wx (256, 2048), wh (512, 2048), columns ordered [f | i | c | o].
    bound = 1.0 / (CAT_SIZE ** 0.5)   # torch default uniform init range
    Wf_T = jax.random.uniform(kf, (CAT_SIZE, HIDDEN_SIZE), jnp.float32, -bound, bound)
    Wi_T = jax.random.uniform(ki, (CAT_SIZE, HIDDEN_SIZE), jnp.float32, -bound, bound)
    Wc_T = jax.random.uniform(kcw, (CAT_SIZE, HIDDEN_SIZE), jnp.float32, -bound, bound)
    Wo_T = jax.random.uniform(ko, (CAT_SIZE, HIDDEN_SIZE), jnp.float32, -bound, bound)
    w_cat = jnp.concatenate([Wf_T, Wi_T, Wc_T, Wo_T], axis=1)   # (768, 2048)
    wx = w_cat[:INPUT_SIZE, :]    # (256, 2048)
    wh = w_cat[INPUT_SIZE:, :]    # (512, 2048)

    # Inputs.
    x0 = jax.random.normal(kx, (B, INPUT_SIZE), jnp.float32)
    x_seq = jax.random.normal(kxs, (T, B, INPUT_SIZE), jnp.float32)
    h0 = jax.random.normal(kh, (B, HIDDEN_SIZE), jnp.float32)
    c0 = jax.random.normal(kc, (B, HIDDEN_SIZE), jnp.float32)

    # --- Single-step check (exact LSTMCell.forward semantics) ---------------
    h1, c1 = lstm_cell(x0, (h0, c0), wx, wh)
    h1 = jax.block_until_ready(h1)
    c1 = jax.block_until_ready(c1)
    h1_ref, c1_ref = reference_lstm_cell(x0, (h0, c0), wx, wh)
    assert jnp.allclose(h1.astype(jnp.float32), h1_ref, atol=1e-2, rtol=1e-2), \
        "single-step h mismatch"
    assert jnp.allclose(c1, c1_ref, atol=1e-2, rtol=1e-2), "single-step c mismatch"

    # --- Fused T-step sequence check (weights resident, h/c carried in VMEM) -
    h_seq_out, c_T = lstm_sequence(x_seq, h0, c0, wx, wh)
    h_seq_out = jax.block_until_ready(h_seq_out)
    c_T = jax.block_until_ready(c_T)

    h_ref, c_ref = h0, c0
    for t in range(T):
        h_ref, c_ref = reference_lstm_cell(x_seq[t], (h_ref, c_ref), wx, wh)
        assert jnp.allclose(h_seq_out[t].astype(jnp.float32), h_ref,
                            atol=1e-2, rtol=1e-2), f"h[{t}] mismatch"
    assert jnp.allclose(c_T, c_ref, atol=1e-2, rtol=1e-2), "final c mismatch"

    print("KERNEL_OK")
</pallas_src>

<mosaic_0001>
module attributes {stable_mosaic.version = 11 : i64} {
  func.func @lstm_seq_kernel(%arg0: i32, %arg1: i32, %arg2: memref<1x128x256xbf16, #tpu.memory_space<vmem>>, %arg3: memref<256x2048xbf16, #tpu.memory_space<vmem>>, %arg4: memref<512x2048xbf16, #tpu.memory_space<vmem>>, %arg5: memref<128x512xf32, #tpu.memory_space<vmem>>, %arg6: memref<128x512xf32, #tpu.memory_space<vmem>>, %arg7: memref<1x128x512xbf16, #tpu.memory_space<vmem>>, %arg8: memref<128x512xf32, #tpu.memory_space<vmem>>, %arg9: memref<128x512xbf16, #tpu.memory_space<vmem>>, %arg10: memref<128x512xf32, #tpu.memory_space<vmem>>) attributes {dimension_semantics = [#tpu.dimension_semantics<parallel>, #tpu.dimension_semantics<arbitrary>], iteration_bounds = array<i64: 1, 1>, scalar_prefetch = 0 : i64, scratch_operands = 2 : i64, tpu.core_type = #tpu.core_type<tc>, window_params = [{transform_indices = @transform_0, window_bounds = array<i64: 1, 128, 256>}, {pipeline_mode = #tpu.pipeline_mode<synchronous>, transform_indices = @transform_1, window_bounds = array<i64: 256, 2048>}, {pipeline_mode = #tpu.pipeline_mode<synchronous>, transform_indices = @transform_2, window_bounds = array<i64: 512, 2048>}, {transform_indices = @transform_3, window_bounds = array<i64: 128, 512>}, {transform_indices = @transform_4, window_bounds = array<i64: 128, 512>}, {transform_indices = @transform_5, window_bounds = array<i64: 1, 128, 512>}, {transform_indices = @transform_6, window_bounds = array<i64: 128, 512>}]} {
    %c0_i32 = arith.constant 0 : i32
    %0 = arith.cmpi eq, %arg1, %c0_i32 : i32
    %1 = arith.extui %0 : i1 to i32
    %c0_i32_0 = arith.constant 0 : i32
    %2 = arith.cmpi ne, %1, %c0_i32_0 : i32
    scf.if %2 {
      %c0_29 = arith.constant 0 : index
      %c0_30 = arith.constant 0 : index
      %54 = vector.load %arg5[%c0_29, %c0_30] : memref<128x512xf32, #tpu.memory_space<vmem>>, vector<128x512xf32>
      %55 = arith.truncf %54 : vector<128x512xf32> to vector<128x512xbf16>
      %c0_31 = arith.constant 0 : index
      %c0_32 = arith.constant 0 : index
      %56 = vector.load %arg9[%c0_31, %c0_32] : memref<128x512xbf16, #tpu.memory_space<vmem>>, vector<128x512xbf16>
      tpu.vector_store %arg9[%c0_31, %c0_32], %55 {strides = array<i32>} : memref<128x512xbf16, #tpu.memory_space<vmem>>, vector<128x512xbf16>,
      %c0_33 = arith.constant 0 : index
      %c0_34 = arith.constant 0 : index
      %57 = vector.load %arg6[%c0_33, %c0_34] : memref<128x512xf32, #tpu.memory_space<vmem>>, vector<128x512xf32>
      %c0_35 = arith.constant 0 : index
      %c0_36 = arith.constant 0 : index
      %58 = vector.load %arg10[%c0_35, %c0_36] : memref<128x512xf32, #tpu.memory_space<vmem>>, vector<128x512xf32>
      tpu.vector_store %arg10[%c0_35, %c0_36], %57 {strides = array<i32>} : memref<128x512xf32, #tpu.memory_space<vmem>>, vector<128x512xf32>,
    } else {
    }
    %c0_i32_1 = arith.constant 0 : i32
    %3 = arith.index_cast %c0_i32_1 : i32 to index
    %c0 = arith.constant 0 : index
    %c0_2 = arith.constant 0 : index
    %4 = vector.load %arg2[%3, %c0, %c0_2] : memref<1x128x256xbf16, #tpu.memory_space<vmem>>, vector<1x128x256xbf16>
    %5 = vector.shape_cast %4 : vector<1x128x256xbf16> to vector<128x256xbf16>
    %c0_3 = arith.constant 0 : index
    %c0_4 = arith.constant 0 : index
    %6 = vector.load %arg3[%c0_3, %c0_4] : memref<256x2048xbf16, #tpu.memory_space<vmem>>, vector<256x2048xbf16>
    %cst = arith.constant dense<0.000000e+00> : vector<128x2048xf32>
    %7 = tpu.matmul %5, %6, %cst {dimension_numbers = #tpu.dot_dimension_numbers<[1], [0], [0], [1], [0, 0, 1, 1], [], []>} : vector<128x256xbf16>, vector<256x2048xbf16>, vector<128x2048xf32> -> vector<128x2048xf32>
    %c0_5 = arith.constant 0 : index
    %c0_6 = arith.constant 0 : index
    %8 = vector.load %arg9[%c0_5, %c0_6] : memref<128x512xbf16, #tpu.memory_space<vmem>>, vector<128x512xbf16>
    %c0_7 = arith.constant 0 : index
    %c0_8 = arith.constant 0 : index
    %9 = vector.load %arg4[%c0_7, %c0_8] : memref<512x2048xbf16, #tpu.memory_space<vmem>>, vector<512x2048xbf16>
    %cst_9 = arith.constant dense<0.000000e+00> : vector<128x2048xf32>
    %10 = tpu.matmul %8, %9, %cst_9 {dimension_numbers = #tpu.dot_dimension_numbers<[1], [0], [0], [1], [0, 0, 1, 1], [], []>} : vector<128x512xbf16>, vector<512x2048xbf16>, vector<128x2048xf32> -> vector<128x2048xf32>
    %11 = arith.addf %7, %10 : vector<128x2048xf32>
    %12 = vector.extract_strided_slice %11 {offsets = [0, 0], sizes = [128, 512], strides = [1, 1]} : vector<128x2048xf32> to vector<128x512xf32>
    %cst_10 = arith.constant 5.000000e-01 : f32
    %13 = vector.broadcast %cst_10 : f32 to vector<128x512xf32>
    %14 = arith.mulf %13, %12 : vector<128x512xf32>
    %15 = math.tanh %14 : vector<128x512xf32>
    %cst_11 = arith.constant 5.000000e-01 : f32
    %16 = vector.broadcast %cst_11 : f32 to vector<128x512xf32>
    %17 = arith.mulf %16, %15 : vector<128x512xf32>
    %cst_12 = arith.constant 5.000000e-01 : f32
    %18 = vector.broadcast %cst_12 : f32 to vector<128x512xf32>
    %19 = arith.addf %17, %18 : vector<128x512xf32>
    %20 = vector.extract_strided_slice %11 {offsets = [0, 512], sizes = [128, 512], strides = [1, 1]} : vector<128x2048xf32> to vector<128x512xf32>
    %cst_13 = arith.constant 5.000000e-01 : f32
    %21 = vector.broadcast %cst_13 : f32 to vector<128x512xf32>
    %22 = arith.mulf %21, %20 : vector<128x512xf32>
    %23 = math.tanh %22 : vector<128x512xf32>
    %cst_14 = arith.constant 5.000000e-01 : f32
    %24 = vector.broadcast %cst_14 : f32 to vector<128x512xf32>
    %25 = arith.mulf %24, %23 : vector<128x512xf32>
    %cst_15 = arith.constant 5.000000e-01 : f32
    %26 = vector.broadcast %cst_15 : f32 to vector<128x512xf32>
    %27 = arith.addf %25, %26 : vector<128x512xf32>
    %28 = vector.extract_strided_slice %11 {offsets = [0, 1024], sizes = [128, 512], strides = [1, 1]} : vector<128x2048xf32> to vector<128x512xf32>
    %29 = math.tanh %28 : vector<128x512xf32>
    %30 = vector.extract_strided_slice %11 {offsets = [0, 1536], sizes = [128, 512], strides = [1, 1]} : vector<128x2048xf32> to vector<128x512xf32>
    %cst_16 = arith.constant 5.000000e-01 : f32
    %31 = vector.broadcast %cst_16 : f32 to vector<128x512xf32>
    %32 = arith.mulf %31, %30 : vector<128x512xf32>
    %33 = math.tanh %32 : vector<128x512xf32>
    %cst_17 = arith.constant 5.000000e-01 : f32
    %34 = vector.broadcast %cst_17 : f32 to vector<128x512xf32>
    %35 = arith.mulf %34, %33 : vector<128x512xf32>
    %cst_18 = arith.constant 5.000000e-01 : f32
    %36 = vector.broadcast %cst_18 : f32 to vector<128x512xf32>
    %37 = arith.addf %35, %36 : vector<128x512xf32>
    %c0_19 = arith.constant 0 : index
    %c0_20 = arith.constant 0 : index
    %38 = vector.load %arg10[%c0_19, %c0_20] : memref<128x512xf32, #tpu.memory_space<vmem>>, vector<128x512xf32>
    %39 = arith.mulf %19, %38 : vector<128x512xf32>
    %40 = arith.mulf %27, %29 : vector<128x512xf32>
    %41 = arith.addf %39, %40 : vector<128x512xf32>
    %42 = math.tanh %41 : vector<128x512xf32>
    %43 = arith.mulf %37, %42 : vector<128x512xf32>
    %c0_21 = arith.constant 0 : index
    %c0_22 = arith.constant 0 : index
    %44 = vector.load %arg10[%c0_21, %c0_22] : memref<128x512xf32, #tpu.memory_space<vmem>>, vector<128x512xf32>
    tpu.vector_store %arg10[%c0_21, %c0_22], %41 {strides = array<i32>} : memref<128x512xf32, #tpu.memory_space<vmem>>, vector<128x512xf32>,
    %45 = arith.truncf %43 : vector<128x512xf32> to vector<128x512xbf16>
    %c0_23 = arith.constant 0 : index
    %c0_24 = arith.constant 0 : index
    %46 = vector.load %arg9[%c0_23, %c0_24] : memref<128x512xbf16, #tpu.memory_space<vmem>>, vector<128x512xbf16>
    tpu.vector_store %arg9[%c0_23, %c0_24], %45 {strides = array<i32>} : memref<128x512xbf16, #tpu.memory_space<vmem>>, vector<128x512xbf16>,
    %47 = arith.index_cast %c0_i32_1 : i32 to index
    %c0_25 = arith.constant 0 : index
    %c0_26 = arith.constant 0 : index
    %48 = vector.load %arg7[%47, %c0_25, %c0_26] : memref<1x128x512xbf16, #tpu.memory_space<vmem>>, vector<1x128x512xbf16>
    %49 = vector.shape_cast %48 : vector<1x128x512xbf16> to vector<128x512xbf16>
    %50 = vector.shape_cast %45 : vector<128x512xbf16> to vector<1x128x512xbf16>
    tpu.vector_store %arg7[%47, %c0_25, %c0_26], %50 {strides = array<i32>} : memref<1x128x512xbf16, #tpu.memory_space<vmem>>, vector<1x128x512xbf16>,
    %c1_i32 = arith.constant 1 : i32
    %c0_i32_27 = arith.constant 0 : i32
    %51 = arith.cmpi eq, %arg1, %c0_i32_27 : i32
    %52 = arith.extui %51 : i1 to i32
    %c0_i32_28 = arith.constant 0 : i32
    %53 = arith.cmpi ne, %52, %c0_i32_28 : i32
    scf.if %53 {
      %c0_29 = arith.constant 0 : index
      %c0_30 = arith.constant 0 : index
      %54 = vector.load %arg10[%c0_29, %c0_30] : memref<128x512xf32, #tpu.memory_space<vmem>>, vector<128x512xf32>
      %c0_31 = arith.constant 0 : index
      %c0_32 = arith.constant 0 : index
      %55 = vector.load %arg8[%c0_31, %c0_32] : memref<128x512xf32, #tpu.memory_space<vmem>>, vector<128x512xf32>
      tpu.vector_store %arg8[%c0_31, %c0_32], %54 {strides = array<i32>} : memref<128x512xf32, #tpu.memory_space<vmem>>, vector<128x512xf32>,
    } else {
    }
    return
  }
  func.func @transform_0(%arg0: i32, %arg1: i32) -> (i32, i32, i32) {
    %c0_i32 = arith.constant 0 : i32
    %c0_i32_0 = arith.constant 0 : i32
    return %arg1, %arg0, %c0_i32 : i32, i32, i32
  }
  func.func @transform_1(%arg0: i32, %arg1: i32) -> (i32, i32) {
    %c0_i32 = arith.constant 0 : i32
    %c0_i32_0 = arith.constant 0 : i32
    %c0_i32_1 = arith.constant 0 : i32
    return %c0_i32, %c0_i32_0 : i32, i32
  }
  func.func @transform_2(%arg0: i32, %arg1: i32) -> (i32, i32) {
    %c0_i32 = arith.constant 0 : i32
    %c0_i32_0 = arith.constant 0 : i32
    %c0_i32_1 = arith.constant 0 : i32
    return %c0_i32, %c0_i32_0 : i32, i32
  }
  func.func @transform_3(%arg0: i32, %arg1: i32) -> (i32, i32) {
    %c0_i32 = arith.constant 0 : i32
    %c0_i32_0 = arith.constant 0 : i32
    return %arg0, %c0_i32 : i32, i32
  }
  func.func @transform_4(%arg0: i32, %arg1: i32) -> (i32, i32) {
    %c0_i32 = arith.constant 0 : i32
    %c0_i32_0 = arith.constant 0 : i32
    return %arg0, %c0_i32 : i32, i32
  }
  func.func @transform_5(%arg0: i32, %arg1: i32) -> (i32, i32, i32) {
    %c0_i32 = arith.constant 0 : i32
    %c0_i32_0 = arith.constant 0 : i32
    return %arg1, %arg0, %c0_i32 : i32, i32, i32
  }
  func.func @transform_6(%arg0: i32, %arg1: i32) -> (i32, i32) {
    %c0_i32 = arith.constant 0 : i32
    %c0_i32_0 = arith.constant 0 : i32
    return %arg0, %c0_i32 : i32, i32
  }
}

</mosaic_0001>

<llo_original>
// kernel: tpu_custom_call.1
$region0: #{tpu_custom_call.1}
  #allocation0 [shape = 'u32[]', space=smem, size = 0x4, offset = 0x4, fixed_abs, tag = 'smem constant byte address 0x4 - core index']
  #allocation1 [shape = 'u32[144,128]{1,0:T(1,128)}', space=vmem, size = 0x12000, scoped, tag = 'internal scratch']
  #allocation2 [shape = 'bf16[128,512]{1,0:T(16,128)(2,1)}', space=vmem, size = 0x20000, scoped, tag = 'scratch operand']
  #allocation3 [shape = 'f32[128,512]{1,0:T(8,128)}', space=vmem, size = 0x40000, scoped, tag = 'scratch operand']
  %s0 = inlined_call_operand.hbm [shape: bf16[1,128,256], index: 0, kind: input, shape index: {}]
  %s1 = inlined_call_operand.hbm [shape: bf16[256,2048], index: 1, kind: input, shape index: {}]
  %s2 = inlined_call_operand.hbm [shape: bf16[512,2048], index: 2, kind: input, shape index: {}]
  %s3 = inlined_call_operand.hbm [shape: f32[128,512], index: 3, kind: input, shape index: {}]
  %s4 = inlined_call_operand.hbm [shape: f32[128,512], index: 4, kind: input, shape index: {}]
  %s5 = inlined_call_operand.hbm [shape: bf16[1,128,512], index: 5, kind: output, shape index: {0}]
  %s6 = inlined_call_operand.hbm [shape: f32[128,512], index: 6, kind: output, shape index: {1}]
  %7 = xla_tuple %s5, %s6
  %s8 = sld [smem:[#allocation0]]
  $region66: #{tpu_custom_call.1} parent=0
    _
  %s10 = ssub.s32 1, %s8
  %s11 = scalar_select 0, %s10, %s8
  $region1: #{tpu_custom_call.1} parent=0
    #allocation4 [shape = 'u8[65536]{0}', space=vmem, size = 0x10000, scoped, tag = 'input window, operand 0, single buffered']
    #allocation5 [shape = 's32[1]{0}', space=sflag, size = 0x4, scoped, tag = 'scoped memory for tpu_custom_call.1']
    #allocation6 [shape = 's32[1]{0}', space=sflag, size = 0x4, scoped, tag = 'scoped memory for tpu_custom_call.1']
    #allocation7 [shape = 'u8[1048576]{0}', space=vmem, size = 0x100000, scoped, tag = 'input window, operand 1, single buffered']
    #allocation8 [shape = 's32[1]{0}', space=sflag, size = 0x4, scoped, tag = 'scoped memory for tpu_custom_call.1']
    #allocation9 [shape = 'u8[2097152]{0}', space=vmem, size = 0x200000, scoped, tag = 'input window, operand 2, single buffered']
    #allocation10 [shape = 'u8[262144]{0}', space=vmem, size = 0x40000, scoped, tag = 'input window, operand 3, single buffered']
    #allocation11 [shape = 's32[1]{0}', space=sflag, size = 0x4, scoped, tag = 'scoped memory for tpu_custom_call.1']
    #allocation12 [shape = 'u8[262144]{0}', space=vmem, size = 0x40000, scoped, tag = 'input window, operand 4, single buffered']
    #allocation13 [shape = 'u8[131072]{0}', space=vmem, size = 0x20000, scoped, tag = 'output window, operand 0, single buffered']
    #allocation14 [shape = 'u8[262144]{0}', space=vmem, size = 0x40000, scoped, tag = 'output window, operand 1, single buffered']
    #allocation15 [shape = 's32[1]{0}', space=sflag, size = 0x4, scoped, tag = 'scoped memory for tpu_custom_call.1']
    %12 = vsyncpa [#allocation5], 0
    %13 = vsyncpa [#allocation8], 0
    %14 = vsyncpa [#allocation11], 0
    %15 = vsyncpa [#allocation6], 0
    %16 = vsyncpa [#allocation15], 0
    // Predicated region
    $region2: #{tpu_custom_call.1} parent=1 // pred_check
      _
    $region3: #{tpu_custom_call.1} parent=1 // pred_check_branch
      %18 = sbr.rel (0) target = $region5
    $region4: #{tpu_custom_call.1} parent=1 // pred_region
      %s20 = ssub.s32 2048, 2048
      %21 = vsyncadd [#allocation5], %s20
      %s22 = sshll.u32 [#allocation4], 4
      %s23 = int_to_ptr.vmem [resolvable:$true] %s22
      %28 = dma.hbm_to_vmem [thread:$0]  %s0, 2048, %s23, [#allocation5], 128, 128, 8
    $region5: #{tpu_custom_call.1} parent=1 // pred_fallthru
      _
    // Predicated region
    $region6: #{tpu_custom_call.1} parent=1 // pred_check
      _
    $region7: #{tpu_custom_call.1} parent=1 // pred_check_branch
      %30 = sbr.rel (0) target = $region9
    $region8: #{tpu_custom_call.1} parent=1 // pred_region
      %s32 = ssub.s32 32768, 32768
      %33 = vsyncadd [#allocation8], %s32
      %s34 = sshll.u32 [#allocation7], 4
      %s35 = int_to_ptr.vmem [resolvable:$true] %s34
      %40 = dma.hbm_to_vmem [thread:$0]  %s1, 32768, %s35, [#allocation8], 1024, 1024, 64
    $region9: #{tpu_custom_call.1} parent=1 // pred_fallthru
      _
    // Predicated region
    $region10: #{tpu_custom_call.1} parent=1 // pred_check
      _
    $region11: #{tpu_custom_call.1} parent=1 // pred_check_branch
      %42 = sbr.rel (0) target = $region13
    $region12: #{tpu_custom_call.1} parent=1 // pred_region
      %s44 = ssub.s32 65536, 65536
      %45 = vsyncadd [#allocation8], %s44
      %s46 = sshll.u32 [#allocation9], 4
      %s47 = int_to_ptr.vmem [resolvable:$true] %s46
      %52 = dma.hbm_to_vmem [thread:$0]  %s2, 65536, %s47, [#allocation8], 1024, 1024, 64
    $region13: #{tpu_custom_call.1} parent=1 // pred_fallthru
      _
    // Predicated region
    $region14: #{tpu_custom_call.1} parent=1 // pred_check
      _
    $region15: #{tpu_custom_call.1} parent=1 // pred_check_branch
      %54 = sbr.rel (0) target = $region17
    $region16: #{tpu_custom_call.1} parent=1 // pred_region
      %s56 = ssub.s32 8192, 8192
      %57 = vsyncadd [#allocation11], %s56
      %s58 = sshll.u32 [#allocation10], 4
      %s59 = int_to_ptr.vmem [resolvable:$true] %s58
      %64 = dma.hbm_to_vmem [thread:$0]  %s3, 8192, %s59, [#allocation11], 512, 512, 32
    $region17: #{tpu_custom_call.1} parent=1 // pred_fallthru
      _
    // Predicated region
    $region18: #{tpu_custom_call.1} parent=1 // pred_check
      _
    $region19: #{tpu_custom_call.1} parent=1 // pred_check_branch
      %66 = sbr.rel (0) target = $region21
    $region20: #{tpu_custom_call.1} parent=1 // pred_region
      %s68 = ssub.s32 8192, 8192
      %69 = vsyncadd [#allocation11], %s68
      %s70 = sshll.u32 [#allocation12], 4
      %s71 = int_to_ptr.vmem [resolvable:$true] %s70
      %76 = dma.hbm_to_vmem [thread:$0]  %s4, 8192, %s71, [#allocation11], 512, 512, 32
    $region21: #{tpu_custom_call.1} parent=1 // pred_fallthru
      _
    // Predicated region
    $region22: #{tpu_custom_call.1} parent=1 // pred_check
      _
    $region23: #{tpu_custom_call.1} parent=1 // pred_check_branch
      %78 = sbr.rel (0) target = $region25
    $region24: #{tpu_custom_call.1} parent=1 // pred_region
      %79 = dma.done [#allocation5], 2048
    $region25: #{tpu_custom_call.1} parent=1 // pred_fallthru
      _
    // Predicated region
    $region26: #{tpu_custom_call.1} parent=1 // pred_check
      _
    $region27: #{tpu_custom_call.1} parent=1 // pred_check_branch
      %81 = sbr.rel (0) target = $region29
    $region28: #{tpu_custom_call.1} parent=1 // pred_region
      %82 = dma.done [#allocation8], 32768
    $region29: #{tpu_custom_call.1} parent=1 // pred_fallthru
      _
    // Predicated region
    $region30: #{tpu_custom_call.1} parent=1 // pred_check
      _
    $region31: #{tpu_custom_call.1} parent=1 // pred_check_branch
      %84 = sbr.rel (0) target = $region33
    $region32: #{tpu_custom_call.1} parent=1 // pred_region
      %85 = dma.done [#allocation8], 65536
    $region33: #{tpu_custom_call.1} parent=1 // pred_fallthru
      _
    // Predicated region
    $region34: #{tpu_custom_call.1} parent=1 // pred_check
      _
    $region35: #{tpu_custom_call.1} parent=1 // pred_check_branch
      %87 = sbr.rel (0) target = $region37
    $region36: #{tpu_custom_call.1} parent=1 // pred_region
      %88 = dma.done [#allocation11], 8192
    $region37: #{tpu_custom_call.1} parent=1 // pred_fallthru
      _
    // Predicated region
    $region38: #{tpu_custom_call.1} parent=1 // pred_check
      _
    $region39: #{tpu_custom_call.1} parent=1 // pred_check_branch
      %90 = sbr.rel (0) target = $region41
    $region40: #{tpu_custom_call.1} parent=1 // pred_region
      %91 = dma.done [#allocation11], 8192
    $region41: #{tpu_custom_call.1} parent=1 // pred_fallthru
      _
    %p92 = scmp.eq.s32.totalorder 0, 0
    // Predicated region
    $region42: #{tpu_custom_call.1} parent=1 // pred_check
      %p93 = pneg %p92
    $region43: #{tpu_custom_call.1} parent=1 // pred_check_branch
      %95 = sbr.rel (%p93) target = $region45
    $region44: #{tpu_custom_call.1} parent=1 // pred_region
      %v96 = vld [vmem:[#allocation10] sm:$0xff]
      %v97 = vld [vmem:[#allocation10 + $0x8] sm:$0xff]
      %v98 = vld [vmem:[#allocation10 + $0x10] sm:$0xff]
      %v99 = vld [vmem:[#allocation10 + $0x18] sm:$0xff]
      %v100 = vld [vmem:[#allocation10 + $0x20] sm:$0xff]
      %v101 = vld [vmem:[#allocation10 + $0x28] sm:$0xff]
      %v102 = vld [vmem:[#allocation10 + $0x30] sm:$0xff]
      %v103 = vld [vmem:[#allocation10 + $0x38] sm:$0xff]
      %v104 = vld [vmem:[#allocation10 + $0x40] sm:$0xff]
      %v105 = vld [vmem:[#allocation10 + $0x48] sm:$0xff]
      %v106 = vld [vmem:[#allocation10 + $0x50] sm:$0xff]
      %v107 = vld [vmem:[#allocation10 + $0x58] sm:$0xff]
      %v108 = vld [vmem:[#allocation10 + $0x60] sm:$0xff]
      %v109 = vld [vmem:[#allocation10 + $0x68] sm:$0xff]
      %v110 = vld [vmem:[#allocation10 + $0x70] sm:$0xff]
      %v111 = vld [vmem:[#allocation10 + $0x78] sm:$0xff]
      %v112 = vld [vmem:[#allocation10 + $0x80] sm:$0xff]
      %v113 = vld [vmem:[#allocation10 + $0x88] sm:$0xff]
      %v114 = vld [vmem:[#allocation10 + $0x90] sm:$0xff]
      %v115 = vld [vmem:[#allocation10 + $0x98] sm:$0xff]
      %v116 = vld [vmem:[#allocation10 + $0xa0] sm:$0xff]
      %v117 = vld [vmem:[#allocation10 + $0xa8] sm:$0xff]
      %v118 = vld [vmem:[#allocation10 + $0xb0] sm:$0xff]
      %v119 = vld [vmem:[#allocation10 + $0xb8] sm:$0xff]
      %v120 = vld [vmem:[#allocation10 + $0xc0] sm:$0xff]
      %v121 = vld [vmem:[#allocation10 + $0xc8] sm:$0xff]
      %v122 = vld [vmem:[#allocation10 + $0xd0] sm:$0xff]
      %v123 = vld [vmem:[#allocation10 + $0xd8] sm:$0xff]
      %v124 = vld [vmem:[#allocation10 + $0xe0] sm:$0xff]
      %v125 = vld [vmem:[#allocation10 + $0xe8] sm:$0xff]
      %v126 = vld [vmem:[#allocation10 + $0xf0] sm:$0xff]
      %v127 = vld [vmem:[#allocation10 + $0xf8] sm:$0xff]
      %v128 = vld [vmem:[#allocation10 + $0x100] sm:$0xff]
      %v129 = vld [vmem:[#allocation10 + $0x108] sm:$0xff]
      %v130 = vld [vmem:[#allocation10 + $0x110] sm:$0xff]
      %v131 = vld [vmem:[#allocation10 + $0x118] sm:$0xff]
      %v132 = vld [vmem:[#allocation10 + $0x120] sm:$0xff]
      %v133 = vld [vmem:[#allocation10 + $0x128] sm:$0xff]
      %v134 = vld [vmem:[#allocation10 + $0x130] sm:$0xff]
      %v135 = vld [vmem:[#allocation10 + $0x138] sm:$0xff]
      %v136 = vld [vmem:[#allocation10 + $0x140] sm:$0xff]
      %v137 = vld [vmem:[#allocation10 + $0x148] sm:$0xff]
      %v138 = vld [vmem:[#allocation10 + $0x150] sm:$0xff]
      %v139 = vld [vmem:[#allocation10 + $0x158] sm:$0xff]
      %v140 = vld [vmem:[#allocation10 + $0x160] sm:$0xff]
      %v141 = vld [vmem:[#allocation10 + $0x168] sm:$0xff]
      %v142 = vld [vmem:[#allocation10 + $0x170] sm:$0xff]
      %v143 = vld [vmem:[#allocation10 + $0x178] sm:$0xff]
      %v144 = vld [vmem:[#allocation10 + $0x180] sm:$0xff]
      %v145 = vld [vmem:[#allocation10 + $0x188] sm:$0xff]
      %v146 = vld [vmem:[#allocation10 + $0x190] sm:$0xff]
      %v147 = vld [vmem:[#allocation10 + $0x198] sm:$0xff]
      %v148 = vld [vmem:[#allocation10 + $0x1a0] sm:$0xff]
      %v149 = vld [vmem:[#allocation10 + $0x1a8] sm:$0xff]
      %v150 = vld [vmem:[#allocation10 + $0x1b0] sm:$0xff]
      %v151 = vld [vmem:[#allocation10 + $0x1b8] sm:$0xff]
      %v152 = vld [vmem:[#allocation10 + $0x1c0] sm:$0xff]
      %v153 = vld [vmem:[#allocation10 + $0x1c8] sm:$0xff]
      %v154 = vld [vmem:[#allocation10 + $0x1d0] sm:$0xff]
      %v155 = vld [vmem:[#allocation10 + $0x1d8] sm:$0xff]
      %v156 = vld [vmem:[#allocation10 + $0x1e0] sm:$0xff]
      %v157 = vld [vmem:[#allocation10 + $0x1e8] sm:$0xff]
      %v158 = vld [vmem:[#allocation10 + $0x1f0] sm:$0xff]
      %v159 = vld [vmem:[#allocation10 + $0x1f8] sm:$0xff]
      %v160 = vpack.c.bf16 %v100, %v96
      %v161 = vpack.c.bf16 %v101, %v97
      %v162 = vpack.c.bf16 %v102, %v98
      %v163 = vpack.c.bf16 %v103, %v99
      %v164 = vpack.c.bf16 %v108, %v104
      %v165 = vpack.c.bf16 %v109, %v105
      %v166 = vpack.c.bf16 %v110, %v106
      %v167 = vpack.c.bf16 %v111, %v107
      %v168 = vpack.c.bf16 %v116, %v112
      %v169 = vpack.c.bf16 %v117, %v113
      %v170 = vpack.c.bf16 %v118, %v114
      %v171 = vpack.c.bf16 %v119, %v115
      %v172 = vpack.c.bf16 %v124, %v120
      %v173 = vpack.c.bf16 %v125, %v121
      %v174 = vpack.c.bf16 %v126, %v122
      %v175 = vpack.c.bf16 %v127, %v123
      %v176 = vpack.c.bf16 %v132, %v128
      %v177 = vpack.c.bf16 %v133, %v129
      %v178 = vpack.c.bf16 %v134, %v130
      %v179 = vpack.c.bf16 %v135, %v131
      %v180 = vpack.c.bf16 %v140, %v136
      %v181 = vpack.c.bf16 %v141, %v137
      %v182 = vpack.c.bf16 %v142, %v138
      %v183 = vpack.c.bf16 %v143, %v139
      %v184 = vpack.c.bf16 %v148, %v144
      %v185 = vpack.c.bf16 %v149, %v145
      %v186 = vpack.c.bf16 %v150, %v146
      %v187 = vpack.c.bf16 %v151, %v147
      %v188 = vpack.c.bf16 %v156, %v152
      %v189 = vpack.c.bf16 %v157, %v153
      %v190 = vpack.c.bf16 %v158, %v154
      %v191 = vpack.c.bf16 %v159, %v155
      %192 = vst [vmem:[#allocation2] sm:$0xff] %v160
      %193 = vst [vmem:[#allocation2 + $0x8] sm:$0xff] %v161
      %194 = vst [vmem:[#allocation2 + $0x10] sm:$0xff] %v162
      %195 = vst [vmem:[#allocation2 + $0x18] sm:$0xff] %v163
      %196 = vst [vmem:[#allocation2 + $0x20] sm:$0xff] %v164
      %197 = vst [vmem:[#allocation2 + $0x28] sm:$0xff] %v165
      %198 = vst [vmem:[#allocation2 + $0x30] sm:$0xff] %v166
      %199 = vst [vmem:[#allocation2 + $0x38] sm:$0xff] %v167
      %200 = vst [vmem:[#allocation2 + $0x40] sm:$0xff] %v168
      %201 = vst [vmem:[#allocation2 + $0x48] sm:$0xff] %v169
      %202 = vst [vmem:[#allocation2 + $0x50] sm:$0xff] %v170
      %203 = vst [vmem:[#allocation2 + $0x58] sm:$0xff] %v171
      %204 = vst [vmem:[#allocation2 + $0x60] sm:$0xff] %v172
      %205 = vst [vmem:[#allocation2 + $0x68] sm:$0xff] %v173
      %206 = vst [vmem:[#allocation2 + $0x70] sm:$0xff] %v174
      %207 = vst [vmem:[#allocation2 + $0x78] sm:$0xff] %v175
      %208 = vst [vmem:[#allocation2 + $0x80] sm:$0xff] %v176
      %209 = vst [vmem:[#allocation2 + $0x88] sm:$0xff] %v177
      %210 = vst [vmem:[#allocation2 + $0x90] sm:$0xff] %v178
      %211 = vst [vmem:[#allocation2 + $0x98] sm:$0xff] %v179
      %212 = vst [vmem:[#allocation2 + $0xa0] sm:$0xff] %v180
      %213 = vst [vmem:[#allocation2 + $0xa8] sm:$0xff] %v181
      %214 = vst [vmem:[#allocation2 + $0xb0] sm:$0xff] %v182
      %215 = vst [vmem:[#allocation2 + $0xb8] sm:$0xff] %v183
      %216 = vst [vmem:[#allocation2 + $0xc0] sm:$0xff] %v184
      %217 = vst [vmem:[#allocation2 + $0xc8] sm:$0xff] %v185
      %218 = vst [vmem:[#allocation2 + $0xd0] sm:$0xff] %v186
      %219 = vst [vmem:[#allocation2 + $0xd8] sm:$0xff] %v187
      %220 = vst [vmem:[#allocation2 + $0xe0] sm:$0xff] %v188
      %221 = vst [vmem:[#allocation2 + $0xe8] sm:$0xff] %v189
      %222 = vst [vmem:[#allocation2 + $0xf0] sm:$0xff] %v190
      %223 = vst [vmem:[#allocation2 + $0xf8] sm:$0xff] %v191
      %v224 = vld [vmem:[#allocation12] sm:$0xff]
      %v225 = vld [vmem:[#allocation12 + $0x8] sm:$0xff]
      %v226 = vld [vmem:[#allocation12 + $0x10] sm:$0xff]
      %v227 = vld [vmem:[#allocation12 + $0x18] sm:$0xff]
      %v228 = vld [vmem:[#allocation12 + $0x20] sm:$0xff]
      %v229 = vld [vmem:[#allocation12 + $0x28] sm:$0xff]
      %v230 = vld [vmem:[#allocation12 + $0x30] sm:$0xff]
      %v231 = vld [vmem:[#allocation12 + $0x38] sm:$0xff]
      %v232 = vld [vmem:[#allocation12 + $0x40] sm:$0xff]
      %v233 = vld [vmem:[#allocation12 + $0x48] sm:$0xff]
      %v234 = vld [vmem:[#allocation12 + $0x50] sm:$0xff]
      %v235 = vld [vmem:[#allocation12 + $0x58] sm:$0xff]
      %v236 = vld [vmem:[#allocation12 + $0x60] sm:$0xff]
      %v237 = vld [vmem:[#allocation12 + $0x68] sm:$0xff]
      %v238 = vld [vmem:[#allocation12 + $0x70] sm:$0xff]
      %v239 = vld [vmem:[#allocation12 + $0x78] sm:$0xff]
      %v240 = vld [vmem:[#allocation12 + $0x80] sm:$0xff]
      %v241 = vld [vmem:[#allocation12 + $0x88] sm:$0xff]
      %v242 = vld [vmem:[#allocation12 + $0x90] sm:$0xff]
      %v243 = vld [vmem:[#allocation12 + $0x98] sm:$0xff]
      %v244 = vld [vmem:[#allocation12 + $0xa0] sm:$0xff]
      %v245 = vld [vmem:[#allocation12 + $0xa8] sm:$0xff]
      %v246 = vld [vmem:[#allocation12 + $0xb0] sm:$0xff]
      %v247 = vld [vmem:[#allocation12 + $0xb8] sm:$0xff]
      %v248 = vld [vmem:[#allocation12 + $0xc0] sm:$0xff]
      %v249 = vld [vmem:[#allocation12 + $0xc8] sm:$0xff]
      %v250 = vld [vmem:[#allocation12 + $0xd0] sm:$0xff]
      %v251 = vld [vmem:[#allocation12 + $0xd8] sm:$0xff]
      %v252 = vld [vmem:[#allocation12 + $0xe0] sm:$0xff]
      %v253 = vld [vmem:[#allocation12 + $0xe8] sm:$0xff]
      %v254 = vld [vmem:[#allocation12 + $0xf0] sm:$0xff]
      %v255 = vld [vmem:[#allocation12 + $0xf8] sm:$0xff]
      %v256 = vld [vmem:[#allocation12 + $0x100] sm:$0xff]
      %v257 = vld [vmem:[#allocation12 + $0x108] sm:$0xff]
      %v258 = vld [vmem:[#allocation12 + $0x110] sm:$0xff]
      %v259 = vld [vmem:[#allocation12 + $0x118] sm:$0xff]
      %v260 = vld [vmem:[#allocation12 + $0x120] sm:$0xff]
      %v261 = vld [vmem:[#allocation12 + $0x128] sm:$0xff]
      %v262 = vld [vmem:[#allocation12 + $0x130] sm:$0xff]
      %v263 = vld [vmem:[#allocation12 + $0x138] sm:$0xff]
      %v264 = vld [vmem:[#allocation12 + $0x140] sm:$0xff]
      %v265 = vld [vmem:[#allocation12 + $0x148] sm:$0xff]
      %v266 = vld [vmem:[#allocation12 + $0x150] sm:$0xff]
      %v267 = vld [vmem:[#allocation12 + $0x158] sm:$0xff]
      %v268 = vld [vmem:[#allocation12 + $0x160] sm:$0xff]
      %v269 = vld [vmem:[#allocation12 + $0x168] sm:$0xff]
      %v270 = vld [vmem:[#allocation12 + $0x170] sm:$0xff]
      %v271 = vld [vmem:[#allocation12 + $0x178] sm:$0xff]
      %v272 = vld [vmem:[#allocation12 + $0x180] sm:$0xff]
      %v273 = vld [vmem:[#allocation12 + $0x188] sm:$0xff]
      %v274 = vld [vmem:[#allocation12 + $0x190] sm:$0xff]
      %v275 = vld [vmem:[#allocation12 + $0x198] sm:$0xff]
      %v276 = vld [vmem:[#allocation12 + $0x1a0] sm:$0xff]
      %v277 = vld [vmem:[#allocation12 + $0x1a8] sm:$0xff]
      %v278 = vld [vmem:[#allocation12 + $0x1b0] sm:$0xff]
      %v279 = vld [vmem:[#allocation12 + $0x1b8] sm:$0xff]
      %v280 = vld [vmem:[#allocation12 + $0x1c0] sm:$0xff]
      %v281 = vld [vmem:[#allocation12 + $0x1c8] sm:$0xff]
      %v282 = vld [vmem:[#allocation12 + $0x1d0] sm:$0xff]
      %v283 = vld [vmem:[#allocation12 + $0x1d8] sm:$0xff]
      %v284 = vld [vmem:[#allocation12 + $0x1e0] sm:$0xff]
      %v285 = vld [vmem:[#allocation12 + $0x1e8] sm:$0xff]
      %v286 = vld [vmem:[#allocation12 + $0x1f0] sm:$0xff]
      %v287 = vld [vmem:[#allocation12 + $0x1f8] sm:$0xff]
      %288 = vst [vmem:[#allocation3] sm:$0xff] %v224
      %289 = vst [vmem:[#allocation3 + $0x8] sm:$0xff] %v225
      %290 = vst [vmem:[#allocation3 + $0x10] sm:$0xff] %v226
      %291 = vst [vmem:[#allocation3 + $0x18] sm:$0xff] %v227
      %292 = vst [vmem:[#allocation3 + $0x20] sm:$0xff] %v228
      %293 = vst [vmem:[#allocation3 + $0x28] sm:$0xff] %v229
      %294 = vst [vmem:[#allocation3 + $0x30] sm:$0xff] %v230
      %295 = vst [vmem:[#allocation3 + $0x38] sm:$0xff] %v231
      %296 = vst [vmem:[#allocation3 + $0x40] sm:$0xff] %v232
      %297 = vst [vmem:[#allocation3 + $0x48] sm:$0xff] %v233
      %298 = vst [vmem:[#allocation3 + $0x50] sm:$0xff] %v234
      %299 = vst [vmem:[#allocation3 + $0x58] sm:$0xff] %v235
      %300 = vst [vmem:[#allocation3 + $0x60] sm:$0xff] %v236
      %301 = vst [vmem:[#allocation3 + $0x68] sm:$0xff] %v237
      %302 = vst [vmem:[#allocation3 + $0x70] sm:$0xff] %v238
      %303 = vst [vmem:[#allocation3 + $0x78] sm:$0xff] %v239
      %304 = vst [vmem:[#allocation3 + $0x80] sm:$0xff] %v240
      %305 = vst [vmem:[#allocation3 + $0x88] sm:$0xff] %v241
      %306 = vst [vmem:[#allocation3 + $0x90] sm:$0xff] %v242
      %307 = vst [vmem:[#allocation3 + $0x98] sm:$0xff] %v243
      %308 = vst [vmem:[#allocation3 + $0xa0] sm:$0xff] %v244
      %309 = vst [vmem:[#allocation3 + $0xa8] sm:$0xff] %v245
      %310 = vst [vmem:[#allocation3 + $0xb0] sm:$0xff] %v246
      %311 = vst [vmem:[#allocation3 + $0xb8] sm:$0xff] %v247
      %312 = vst [vmem:[#allocation3 + $0xc0] sm:$0xff] %v248
      %313 = vst [vmem:[#allocation3 + $0xc8] sm:$0xff] %v249
      %314 = vst [vmem:[#allocation3 + $0xd0] sm:$0xff] %v250
      %315 = vst [vmem:[#allocation3 + $0xd8] sm:$0xff] %v251
      %316 = vst [vmem:[#allocation3 + $0xe0] sm:$0xff] %v252
      %317 = vst [vmem:[#allocation3 + $0xe8] sm:$0xff] %v253
      %318 = vst [vmem:[#allocation3 + $0xf0] sm:$0xff] %v254
      %319 = vst [vmem:[#allocation3 + $0xf8] sm:$0xff] %v255
      %320 = vst [vmem:[#allocation3 + $0x100] sm:$0xff] %v256
      %321 = vst [vmem:[#allocation3 + $0x108] sm:$0xff] %v257
      %322 = vst [vmem:[#allocation3 + $0x110] sm:$0xff] %v258
      %323 = vst [vmem:[#allocation3 + $0x118] sm:$0xff] %v259
      %324 = vst [vmem:[#allocation3 + $0x120] sm:$0xff] %v260
      %325 = vst [vmem:[#allocation3 + $0x128] sm:$0xff] %v261
      %326 = vst [vmem:[#allocation3 + $0x130] sm:$0xff] %v262
      %327 = vst [vmem:[#allocation3 + $0x138] sm:$0xff] %v263
      %328 = vst [vmem:[#allocation3 + $0x140] sm:$0xff] %v264
      %329 = vst [vmem:[#allocation3 + $0x148] sm:$0xff] %v265
      %330 = vst [vmem:[#allocation3 + $0x150] sm:$0xff] %v266
      %331 = vst [vmem:[#allocation3 + $0x158] sm:$0xff] %v267
      %332 = vst [vmem:[#allocation3 + $0x160] sm:$0xff] %v268
      %333 = vst [vmem:[#allocation3 + $0x168] sm:$0xff] %v269
      %334 = vst [vmem:[#allocation3 + $0x170] sm:$0xff] %v270
      %335 = vst [vmem:[#allocation3 + $0x178] sm:$0xff] %v271
      %336 = vst [vmem:[#allocation3 + $0x180] sm:$0xff] %v272
      %337 = vst [vmem:[#allocation3 + $0x188] sm:$0xff] %v273
      %338 = vst [vmem:[#allocation3 + $0x190] sm:$0xff] %v274
      %339 = vst [vmem:[#allocation3 + $0x198] sm:$0xff] %v275
      %340 = vst [vmem:[#allocation3 + $0x1a0] sm:$0xff] %v276
      %341 = vst [vmem:[#allocation3 + $0x1a8] sm:$0xff] %v277
      %342 = vst [vmem:[#allocation3 + $0x1b0] sm:$0xff] %v278
      %343 = vst [vmem:[#allocation3 + $0x1b8] sm:$0xff] %v279
      %344 = vst [vmem:[#allocation3 + $0x1c0] sm:$0xff] %v280
      %345 = vst [vmem:[#allocation3 + $0x1c8] sm:$0xff] %v281
      %346 = vst [vmem:[#allocation3 + $0x1d0] sm:$0xff] %v282
      %347 = vst [vmem:[#allocation3 + $0x1d8] sm:$0xff] %v283
      %348 = vst [vmem:[#allocation3 + $0x1e0] sm:$0xff] %v284
      %349 = vst [vmem:[#allocation3 + $0x1e8] sm:$0xff] %v285
      %350 = vst [vmem:[#allocation3 + $0x1f0] sm:$0xff] %v286
      %351 = vst [vmem:[#allocation3 + $0x1f8] sm:$0xff] %v287
    $region45: #{tpu_custom_call.1} parent=1 // pred_fallthru
      _
    %v352 = vld [vmem:[#allocation4] sm:$0xff]
    %v353 = vld [vmem:[#allocation4 + $0x8] sm:$0xff]
    %v354 = vld [vmem:[#allocation4 + $0x10] sm:$0xff]
    %v355 = vld [vmem:[#allocation4 + $0x18] sm:$0xff]
    %v356 = vld [vmem:[#allocation4 + $0x20] sm:$0xff]
    %v357 = vld [vmem:[#allocation4 + $0x28] sm:$0xff]
    %v358 = vld [vmem:[#allocation4 + $0x30] sm:$0xff]
    %v359 = vld [vmem:[#allocation4 + $0x38] sm:$0xff]
    %v360 = vld [vmem:[#allocation4 + $0x40] sm:$0xff]
    %v361 = vld [vmem:[#allocation4 + $0x48] sm:$0xff]
    %v362 = vld [vmem:[#allocation4 + $0x50] sm:$0xff]
    %v363 = vld [vmem:[#allocation4 + $0x58] sm:$0xff]
    %v364 = vld [vmem:[#allocation4 + $0x60] sm:$0xff]
    %v365 = vld [vmem:[#allocation4 + $0x68] sm:$0xff]
    %v366 = vld [vmem:[#allocation4 + $0x70] sm:$0xff]
    %v367 = vld [vmem:[#allocation4 + $0x78] sm:$0xff]
    %v368 = vld [vmem:[#allocation7] sm:$0xff]
    %v369 = vld [vmem:[#allocation7 + $0x8] sm:$0xff]
    %v370 = vld [vmem:[#allocation7 + $0x10] sm:$0xff]
    %v371 = vld [vmem:[#allocation7 + $0x18] sm:$0xff]
    %v372 = vld [vmem:[#allocation7 + $0x20] sm:$0xff]
    %v373 = vld [vmem:[#allocation7 + $0x28] sm:$0xff]
    %v374 = vld [vmem:[#allocation7 + $0x30] sm:$0xff]
    %v375 = vld [vmem:[#allocation7 + $0x38] sm:$0xff]
    %v376 = vld [vmem:[#allocation7 + $0x40] sm:$0xff]
    %v377 = vld [vmem:[#allocation7 + $0x48] sm:$0xff]
    %v378 = vld [vmem:[#allocation7 + $0x50] sm:$0xff]
    %v379 = vld [vmem:[#allocation7 + $0x58] sm:$0xff]
    %v380 = vld [vmem:[#allocation7 + $0x60] sm:$0xff]
    %v381 = vld [vmem:[#allocation7 + $0x68] sm:$0xff]
    %v382 = vld [vmem:[#allocation7 + $0x70] sm:$0xff]
    %v383 = vld [vmem:[#allocation7 + $0x78] sm:$0xff]
    %v384 = vld [vmem:[#allocation7 + $0x80] sm:$0xff]
    %v385 = vld [vmem:[#allocation7 + $0x88] sm:$0xff]
    %v386 = vld [vmem:[#allocation7 + $0x90] sm:$0xff]
    %v387 = vld [vmem:[#allocation7 + $0x98] sm:$0xff]
    %v388 = vld [vmem:[#allocation7 + $0xa0] sm:$0xff]
    %v389 = vld [vmem:[#allocation7 + $0xa8] sm:$0xff]
    %v390 = vld [vmem:[#allocation7 + $0xb0] sm:$0xff]
    %v391 = vld [vmem:[#allocation7 + $0xb8] sm:$0xff]
    %v392 = vld [vmem:[#allocation7 + $0xc0] sm:$0xff]
    %v393 = vld [vmem:[#allocation7 + $0xc8] sm:$0xff]
    %v394 = vld [vmem:[#allocation7 + $0xd0] sm:$0xff]
    %v395 = vld [vmem:[#allocation7 + $0xd8] sm:$0xff]
    %v396 = vld [vmem:[#allocation7 + $0xe0] sm:$0xff]
    %v397 = vld [vmem:[#allocation7 + $0xe8] sm:$0xff]
    %v398 = vld [vmem:[#allocation7 + $0xf0] sm:$0xff]
    %v399 = vld [vmem:[#allocation7 + $0xf8] sm:$0xff]
    %v400 = vld [vmem:[#allocation7 + $0x100] sm:$0xff]
    %v401 = vld [vmem:[#allocation7 + $0x108] sm:$0xff]
    %v402 = vld [vmem:[#allocation7 + $0x110] sm:$0xff]
    %v403 = vld [vmem:[#allocation7 + $0x118] sm:$0xff]
    %v404 = vld [vmem:[#allocation7 + $0x120] sm:$0xff]
    %v405 = vld [vmem:[#allocation7 + $0x128] sm:$0xff]
    %v406 = vld [vmem:[#allocation7 + $0x130] sm:$0xff]
    %v407 = vld [vmem:[#allocation7 + $0x138] sm:$0xff]
    %v408 = vld [vmem:[#allocation7 + $0x140] sm:$0xff]
    %v409 = vld [vmem:[#allocation7 + $0x148] sm:$0xff]
    %v410 = vld [vmem:[#allocation7 + $0x150] sm:$0xff]
    %v411 = vld [vmem:[#allocation7 + $0x158] sm:$0xff]
    %v412 = vld [vmem:[#allocation7 + $0x160] sm:$0xff]
    %v413 = vld [vmem:[#allocation7 + $0x168] sm:$0xff]
    %v414 = vld [vmem:[#allocation7 + $0x170] sm:$0xff]
    %v415 = vld [vmem:[#allocation7 + $0x178] sm:$0xff]
    %v416 = vld [vmem:[#allocation7 + $0x180] sm:$0xff]
    %v417 = vld [vmem:[#allocation7 + $0x188] sm:$0xff]
    %v418 = vld [vmem:[#allocation7 + $0x190] sm:$0xff]
    %v419 = vld [vmem:[#allocation7 + $0x198] sm:$0xff]
    %v420 = vld [vmem:[#allocation7 + $0x1a0] sm:$0xff]
    %v421 = vld [vmem:[#allocation7 + $0x1a8] sm:$0xff]
    %v422 = vld [vmem:[#allocation7 + $0x1b0] sm:$0xff]
    %v423 = vld [vmem:[#allocation7 + $0x1b8] sm:$0xff]
    %v424 = vld [vmem:[#allocation7 + $0x1c0] sm:$0xff]
    %v425 = vld [vmem:[#allocation7 + $0x1c8] sm:$0xff]
    %v426 = vld [vmem:[#allocation7 + $0x1d0] sm:$0xff]
    %v427 = vld [vmem:[#allocation7 + $0x1d8] sm:$0xff]
    %v428 = vld [vmem:[#allocation7 + $0x1e0] sm:$0xff]
    %v429 = vld [vmem:[#allocation7 + $0x1e8] sm:$0xff]
    %v430 = vld [vmem:[#allocation7 + $0x1f0] sm:$0xff]
    %v431 = vld [vmem:[#allocation7 + $0x1f8] sm:$0xff]
    %v432 = vld [vmem:[#allocation7 + $0x200] sm:$0xff]
    %v433 = vld [vmem:[#allocation7 + $0x208] sm:$0xff]
    %v434 = vld [vmem:[#allocation7 + $0x210] sm:$0xff]
    %v435 = vld [vmem:[#allocation7 + $0x218] sm:$0xff]
    %v436 = vld [vmem:[#allocation7 + $0x220] sm:$0xff]
    %v437 = vld [vmem:[#allocation7 + $0x228] sm:$0xff]
    %v438 = vld [vmem:[#allocation7 + $0x230] sm:$0xff]
    %v439 = vld [vmem:[#allocation7 + $0x238] sm:$0xff]
    %v440 = vld [vmem:[#allocation7 + $0x240] sm:$0xff]
    %v441 = vld [vmem:[#allocation7 + $0x248] sm:$0xff]
    %v442 = vld [vmem:[#allocation7 + $0x250] sm:$0xff]
    %v443 = vld [vmem:[#allocation7 + $0x258] sm:$0xff]
    %v444 = vld [vmem:[#allocation7 + $0x260] sm:$0xff]
    %v445 = vld [vmem:[#allocation7 + $0x268] sm:$0xff]
    %v446 = vld [vmem:[#allocation7 + $0x270] sm:$0xff]
    %v447 = vld [vmem:[#allocation7 + $0x278] sm:$0xff]
    %v448 = vld [vmem:[#allocation7 + $0x280] sm:$0xff]
    %v449 = vld [vmem:[#allocation7 + $0x288] sm:$0xff]
    %v450 = vld [vmem:[#allocation7 + $0x290] sm:$0xff]
    %v451 = vld [vmem:[#allocation7 + $0x298] sm:$0xff]
    %v452 = vld [vmem:[#allocation7 + $0x2a0] sm:$0xff]
    %v453 = vld [vmem:[#allocation7 + $0x2a8] sm:$0xff]
    %v454 = vld [vmem:[#allocation7 + $0x2b0] sm:$0xff]
    %v455 = vld [vmem:[#allocation7 + $0x2b8] sm:$0xff]
    %v456 = vld [vmem:[#allocation7 + $0x2c0] sm:$0xff]
    %v457 = vld [vmem:[#allocation7 + $0x2c8] sm:$0xff]
    %v458 = vld [vmem:[#allocation7 + $0x2d0] sm:$0xff]
    %v459 = vld [vmem:[#allocation7 + $0x2d8] sm:$0xff]
    %v460 = vld [vmem:[#allocation7 + $0x2e0] sm:$0xff]
    %v461 = vld [vmem:[#allocation7 + $0x2e8] sm:$0xff]
    %v462 = vld [vmem:[#allocation7 + $0x2f0] sm:$0xff]
    %v463 = vld [vmem:[#allocation7 + $0x2f8] sm:$0xff]
    %v464 = vld [vmem:[#allocation7 + $0x300] sm:$0xff]
    %v465 = vld [vmem:[#allocation7 + $0x308] sm:$0xff]
    %v466 = vld [vmem:[#allocation7 + $0x310] sm:$0xff]
    %v467 = vld [vmem:[#allocation7 + $0x318] sm:$0xff]
    %v468 = vld [vmem:[#allocation7 + $0x320] sm:$0xff]
    %v469 = vld [vmem:[#allocation7 + $0x328] sm:$0xff]
    %v470 = vld [vmem:[#allocation7 + $0x330] sm:$0xff]
    %v471 = vld [vmem:[#allocation7 + $0x338] sm:$0xff]
    %v472 = vld [vmem:[#allocation7 + $0x340] sm:$0xff]
    %v473 = vld [vmem:[#allocation7 + $0x348] sm:$0xff]
    %v474 = vld [vmem:[#allocation7 + $0x350] sm:$0xff]
    %v475 = vld [vmem:[#allocation7 + $0x358] sm:$0xff]
    %v476 = vld [vmem:[#allocation7 + $0x360] sm:$0xff]
    %v477 = vld [vmem:[#allocation7 + $0x368] sm:$0xff]
    %v478 = vld [vmem:[#allocation7 + $0x370] sm:$0xff]
    %v479 = vld [vmem:[#allocation7 + $0x378] sm:$0xff]
    %v480 = vld [vmem:[#allocation7 + $0x380] sm:$0xff]
    %v481 = vld [vmem:[#allocation7 + $0x388] sm:$0xff]
    %v482 = vld [vmem:[#allocation7 + $0x390] sm:$0xff]
    %v483 = vld [vmem:[#allocation7 + $0x398] sm:$0xff]
    %v484 = vld [vmem:[#allocation7 + $0x3a0] sm:$0xff]
    %v485 = vld [vmem:[#allocation7 + $0x3a8] sm:$0xff]
    %v486 = vld [vmem:[#allocation7 + $0x3b0] sm:$0xff]
    %v487 = vld [vmem:[#allocation7 + $0x3b8] sm:$0xff]
    %v488 = vld [vmem:[#allocation7 + $0x3c0] sm:$0xff]
    %v489 = vld [vmem:[#allocation7 + $0x3c8] sm:$0xff]
    %v490 = vld [vmem:[#allocation7 + $0x3d0] sm:$0xff]
    %v491 = vld [vmem:[#allocation7 + $0x3d8] sm:$0xff]
    %v492 = vld [vmem:[#allocation7 + $0x3e0] sm:$0xff]
    %v493 = vld [vmem:[#allocation7 + $0x3e8] sm:$0xff]
    %v494 = vld [vmem:[#allocation7 + $0x3f0] sm:$0xff]
    %v495 = vld [vmem:[#allocation7 + $0x3f8] sm:$0xff]
    %v496 = vld [vmem:[#allocation7 + $0x400] sm:$0xff]
    %v497 = vld [vmem:[#allocation7 + $0x408] sm:$0xff]
    %v498 = vld [vmem:[#allocation7 + $0x410] sm:$0xff]
    %v499 = vld [vmem:[#allocation7 + $0x418] sm:$0xff]
    %v500 = vld [vmem:[#allocation7 + $0x420] sm:$0xff]
    %v501 = vld [vmem:[#allocation7 + $0x428] sm:$0xff]
    %v502 = vld [vmem:[#allocation7 + $0x430] sm:$0xff]
    %v503 = vld [vmem:[#allocation7 + $0x438] sm:$0xff]
    %v504 = vld [vmem:[#allocation7 + $0x440] sm:$0xff]
    %v505 = vld [vmem:[#allocation7 + $0x448] sm:$0xff]
    %v506 = vld [vmem:[#allocation7 + $0x450] sm:$0xff]
    %v507 = vld [vmem:[#allocation7 + $0x458] sm:$0xff]
    %v508 = vld [vmem:[#allocation7 + $0x460] sm:$0xff]
    %v509 = vld [vmem:[#allocation7 + $0x468] sm:$0xff]
    %v510 = vld [vmem:[#allocation7 + $0x470] sm:$0xff]
    %v511 = vld [vmem:[#allocation7 + $0x478] sm:$0xff]
    %v512 = vld [vmem:[#allocation7 + $0x480] sm:$0xff]
    %v513 = vld [vmem:[#allocation7 + $0x488] sm:$0xff]
    %v514 = vld [vmem:[#allocation7 + $0x490] sm:$0xff]
    %v515 = vld [vmem:[#allocation7 + $0x498] sm:$0xff]
    %v516 = vld [vmem:[#allocation7 + $0x4a0] sm:$0xff]
    %v517 = vld [vmem:[#allocation7 + $0x4a8] sm:$0xff]
    %v518 = vld [vmem:[#allocation7 + $0x4b0] sm:$0xff]
    %v519 = vld [vmem:[#allocation7 + $0x4b8] sm:$0xff]
    %v520 = vld [vmem:[#allocation7 + $0x4c0] sm:$0xff]
    %v521 = vld [vmem:[#allocation7 + $0x4c8] sm:$0xff]
    %v522 = vld [vmem:[#allocation7 + $0x4d0] sm:$0xff]
    %v523 = vld [vmem:[#allocation7 + $0x4d8] sm:$0xff]
    %v524 = vld [vmem:[#allocation7 + $0x4e0] sm:$0xff]
    %v525 = vld [vmem:[#allocation7 + $0x4e8] sm:$0xff]
    %v526 = vld [vmem:[#allocation7 + $0x4f0] sm:$0xff]
    %v527 = vld [vmem:[#allocation7 + $0x4f8] sm:$0xff]
    %v528 = vld [vmem:[#allocation7 + $0x500] sm:$0xff]
    %v529 = vld [vmem:[#allocation7 + $0x508] sm:$0xff]
    %v530 = vld [vmem:[#allocation7 + $0x510] sm:$0xff]
    %v531 = vld [vmem:[#allocation7 + $0x518] sm:$0xff]
    %v532 = vld [vmem:[#allocation7 + $0x520] sm:$0xff]
    %v533 = vld [vmem:[#allocation7 + $0x528] sm:$0xff]
    %v534 = vld [vmem:[#allocation7 + $0x530] sm:$0xff]
    %v535 = vld [vmem:[#allocation7 + $0x538] sm:$0xff]
    %v536 = vld [vmem:[#allocation7 + $0x540] sm:$0xff]
    %v537 = vld [vmem:[#allocation7 + $0x548] sm:$0xff]
    %v538 = vld [vmem:[#allocation7 + $0x550] sm:$0xff]
    %v539 = vld [vmem:[#allocation7 + $0x558] sm:$0xff]
    %v540 = vld [vmem:[#allocation7 + $0x560] sm:$0xff]
    %v541 = vld [vmem:[#allocation7 + $0x568] sm:$0xff]
    %v542 = vld [vmem:[#allocation7 + $0x570] sm:$0xff]
    %v543 = vld [vmem:[#allocation7 + $0x578] sm:$0xff]
    %v544 = vld [vmem:[#allocation7 + $0x580] sm:$0xff]
    %v545 = vld [vmem:[#allocation7 + $0x588] sm:$0xff]
    %v546 = vld [vmem:[#allocation7 + $0x590] sm:$0xff]
    %v547 = vld [vmem:[#allocation7 + $0x598] sm:$0xff]
    %v548 = vld [vmem:[#allocation7 + $0x5a0] sm:$0xff]
    %v549 = vld [vmem:[#allocation7 + $0x5a8] sm:$0xff]
    %v550 = vld [vmem:[#allocation7 + $0x5b0] sm:$0xff]
    %v551 = vld [vmem:[#allocation7 + $0x5b8] sm:$0xff]
    %v552 = vld [vmem:[#allocation7 + $0x5c0] sm:$0xff]
    %v553 = vld [vmem:[#allocation7 + $0x5c8] sm:$0xff]
    %v554 = vld [vmem:[#allocation7 + $0x5d0] sm:$0xff]
    %v555 = vld [vmem:[#allocation7 + $0x5d8] sm:$0xff]
    %v556 = vld [vmem:[#allocation7 + $0x5e0] sm:$0xff]
    %v557 = vld [vmem:[#allocation7 + $0x5e8] sm:$0xff]
    %v558 = vld [vmem:[#allocation7 + $0x5f0] sm:$0xff]
    %v559 = vld [vmem:[#allocation7 + $0x5f8] sm:$0xff]
    %v560 = vld [vmem:[#allocation7 + $0x600] sm:$0xff]
    %v561 = vld [vmem:[#allocation7 + $0x608] sm:$0xff]
    %v562 = vld [vmem:[#allocation7 + $0x610] sm:$0xff]
    %v563 = vld [vmem:[#allocation7 + $0x618] sm:$0xff]
    %v564 = vld [vmem:[#allocation7 + $0x620] sm:$0xff]
    %v565 = vld [vmem:[#allocation7 + $0x628] sm:$0xff]
    %v566 = vld [vmem:[#allocation7 + $0x630] sm:$0xff]
    %v567 = vld [vmem:[#allocation7 + $0x638] sm:$0xff]
    %v568 = vld [vmem:[#allocation7 + $0x640] sm:$0xff]
    %v569 = vld [vmem:[#allocation7 + $0x648] sm:$0xff]
    %v570 = vld [vmem:[#allocation7 + $0x650] sm:$0xff]
    %v571 = vld [vmem:[#allocation7 + $0x658] sm:$0xff]
    %v572 = vld [vmem:[#allocation7 + $0x660] sm:$0xff]
    %v573 = vld [vmem:[#allocation7 + $0x668] sm:$0xff]
    %v574 = vld [vmem:[#allocation7 + $0x670] sm:$0xff]
    %v575 = vld [vmem:[#allocation7 + $0x678] sm:$0xff]
    %v576 = vld [vmem:[#allocation7 + $0x680] sm:$0xff]
    %v577 = vld [vmem:[#allocation7 + $0x688] sm:$0xff]
    %v578 = vld [vmem:[#allocation7 + $0x690] sm:$0xff]
    %v579 = vld [vmem:[#allocation7 + $0x698] sm:$0xff]
    %v580 = vld [vmem:[#allocation7 + $0x6a0] sm:$0xff]
    %v581 = vld [vmem:[#allocation7 + $0x6a8] sm:$0xff]
    %v582 = vld [vmem:[#allocation7 + $0x6b0] sm:$0xff]
    %v583 = vld [vmem:[#allocation7 + $0x6b8] sm:$0xff]
    %v584 = vld [vmem:[#allocation7 + $0x6c0] sm:$0xff]
    %v585 = vld [vmem:[#allocation7 + $0x6c8] sm:$0xff]
    %v586 = vld [vmem:[#allocation7 + $0x6d0] sm:$0xff]
    %v587 = vld [vmem:[#allocation7 + $0x6d8] sm:$0xff]
    %v588 = vld [vmem:[#allocation7 + $0x6e0] sm:$0xff]
    %v589 = vld [vmem:[#allocation7 + $0x6e8] sm:$0xff]
    %v590 = vld [vmem:[#allocation7 + $0x6f0] sm:$0xff]
    %v591 = vld [vmem:[#allocation7 + $0x6f8] sm:$0xff]
    %v592 = vld [vmem:[#allocation7 + $0x700] sm:$0xff]
    %v593 = vld [vmem:[#allocation7 + $0x708] sm:$0xff]
    %v594 = vld [vmem:[#allocation7 + $0x710] sm:$0xff]
    %v595 = vld [vmem:[#allocation7 + $0x718] sm:$0xff]
    %v596 = vld [vmem:[#allocation7 + $0x720] sm:$0xff]
    %v597 = vld [vmem:[#allocation7 + $0x728] sm:$0xff]
    %v598 = vld [vmem:[#allocation7 + $0x730] sm:$0xff]
    %v599 = vld [vmem:[#allocation7 + $0x738] sm:$0xff]
    %v600 = vld [vmem:[#allocation7 + $0x740] sm:$0xff]
    %v601 = vld [vmem:[#allocation7 + $0x748] sm:$0xff]
    %v602 = vld [vmem:[#allocation7 + $0x750] sm:$0xff]
    %v603 = vld [vmem:[#allocation7 + $0x758] sm:$0xff]
    %v604 = vld [vmem:[#allocation7 + $0x760] sm:$0xff]
    %v605 = vld [vmem:[#allocation7 + $0x768] sm:$0xff]
    %v606 = vld [vmem:[#allocation7 + $0x770] sm:$0xff]
    %v607 = vld [vmem:[#allocation7 + $0x778] sm:$0xff]
    %v608 = vld [vmem:[#allocation7 + $0x780] sm:$0xff]
    %v609 = vld [vmem:[#allocation7 + $0x788] sm:$0xff]
    %v610 = vld [vmem:[#allocation7 + $0x790] sm:$0xff]
    %v611 = vld [vmem:[#allocation7 + $0x798] sm:$0xff]
    %v612 = vld [vmem:[#allocation7 + $0x7a0] sm:$0xff]
    %v613 = vld [vmem:[#allocation7 + $0x7a8] sm:$0xff]
    %v614 = vld [vmem:[#allocation7 + $0x7b0] sm:$0xff]
    %v615 = vld [vmem:[#allocation7 + $0x7b8] sm:$0xff]
    %v616 = vld [vmem:[#allocation7 + $0x7c0] sm:$0xff]
    %v617 = vld [vmem:[#allocation7 + $0x7c8] sm:$0xff]
    %v618 = vld [vmem:[#allocation7 + $0x7d0] sm:$0xff]
    %v619 = vld [vmem:[#allocation7 + $0x7d8] sm:$0xff]
    %v620 = vld [vmem:[#allocation7 + $0x7e0] sm:$0xff]
    %v621 = vld [vmem:[#allocation7 + $0x7e8] sm:$0xff]
    %v622 = vld [vmem:[#allocation7 + $0x7f0] sm:$0xff]
    %v623 = vld [vmem:[#allocation7 + $0x7f8] sm:$0xff]
    %v624 = vld [vmem:[#allocation2] sm:$0xff]
    %v625 = vld [vmem:[#allocation2 + $0x8] sm:$0xff]
    %v626 = vld [vmem:[#allocation2 + $0x10] sm:$0xff]
    %v627 = vld [vmem:[#allocation2 + $0x18] sm:$0xff]
    %v628 = vld [vmem:[#allocation2 + $0x20] sm:$0xff]
    %v629 = vld [vmem:[#allocation2 + $0x28] sm:$0xff]
    %v630 = vld [vmem:[#allocation2 + $0x30] sm:$0xff]
    %v631 = vld [vmem:[#allocation2 + $0x38] sm:$0xff]
    %v632 = vld [vmem:[#allocation2 + $0x40] sm:$0xff]
    %v633 = vld [vmem:[#allocation2 + $0x48] sm:$0xff]
    %v634 = vld [vmem:[#allocation2 + $0x50] sm:$0xff]
    %v635 = vld [vmem:[#allocation2 + $0x58] sm:$0xff]
    %v636 = vld [vmem:[#allocation2 + $0x60] sm:$0xff]
    %v637 = vld [vmem:[#allocation2 + $0x68] sm:$0xff]
    %v638 = vld [vmem:[#allocation2 + $0x70] sm:$0xff]
    %v639 = vld [vmem:[#allocation2 + $0x78] sm:$0xff]
    %v640 = vld [vmem:[#allocation2 + $0x80] sm:$0xff]
    %v641 = vld [vmem:[#allocation2 + $0x88] sm:$0xff]
    %v642 = vld [vmem:[#allocation2 + $0x90] sm:$0xff]
    %v643 = vld [vmem:[#allocation2 + $0x98] sm:$0xff]
    %v644 = vld [vmem:[#allocation2 + $0xa0] sm:$0xff]
    %v645 = vld [vmem:[#allocation2 + $0xa8] sm:$0xff]
    %v646 = vld [vmem:[#allocation2 + $0xb0] sm:$0xff]
    %v647 = vld [vmem:[#allocation2 + $0xb8] sm:$0xff]
    %v648 = vld [vmem:[#allocation2 + $0xc0] sm:$0xff]
    %v649 = vld [vmem:[#allocation2 + $0xc8] sm:$0xff]
    %v650 = vld [vmem:[#allocation2 + $0xd0] sm:$0xff]
    %v651 = vld [vmem:[#allocation2 + $0xd8] sm:$0xff]
    %v652 = vld [vmem:[#allocation2 + $0xe0] sm:$0xff]
    %v653 = vld [vmem:[#allocation2 + $0xe8] sm:$0xff]
    %v654 = vld [vmem:[#allocation2 + $0xf0] sm:$0xff]
    %v655 = vld [vmem:[#allocation2 + $0xf8] sm:$0xff]
    %v656 = vld [vmem:[#allocation9] sm:$0xff]
    %v657 = vld [vmem:[#allocation9 + $0x8] sm:$0xff]
    %v658 = vld [vmem:[#allocation9 + $0x10] sm:$0xff]
    %v659 = vld [vmem:[#allocation9 + $0x18] sm:$0xff]
    %v660 = vld [vmem:[#allocation9 + $0x20] sm:$0xff]
    %v661 = vld [vmem:[#allocation9 + $0x28] sm:$0xff]
    %v662 = vld [vmem:[#allocation9 + $0x30] sm:$0xff]
    %v663 = vld [vmem:[#allocation9 + $0x38] sm:$0xff]
    %v664 = vld [vmem:[#allocation9 + $0x40] sm:$0xff]
    %v665 = vld [vmem:[#allocation9 + $0x48] sm:$0xff]
    %v666 = vld [vmem:[#allocation9 + $0x50] sm:$0xff]
    %v667 = vld [vmem:[#allocation9 + $0x58] sm:$0xff]
    %v668 = vld [vmem:[#allocation9 + $0x60] sm:$0xff]
    %v669 = vld [vmem:[#allocation9 + $0x68] sm:$0xff]
    %v670 = vld [vmem:[#allocation9 + $0x70] sm:$0xff]
    %v671 = vld [vmem:[#allocation9 + $0x78] sm:$0xff]
    %v672 = vld [vmem:[#allocation9 + $0x80] sm:$0xff]
    %v673 = vld [vmem:[#allocation9 + $0x88] sm:$0xff]
    %v674 = vld [vmem:[#allocation9 + $0x90] sm:$0xff]
    %v675 = vld [vmem:[#allocation9 + $0x98] sm:$0xff]
    %v676 = vld [vmem:[#allocation9 + $0xa0] sm:$0xff]
    %v677 = vld [vmem:[#allocation9 + $0xa8] sm:$0xff]
    %v678 = vld [vmem:[#allocation9 + $0xb0] sm:$0xff]
    %v679 = vld [vmem:[#allocation9 + $0xb8] sm:$0xff]
    %v680 = vld [vmem:[#allocation9 + $0xc0] sm:$0xff]
    %v681 = vld [vmem:[#allocation9 + $0xc8] sm:$0xff]
    %v682 = vld [vmem:[#allocation9 + $0xd0] sm:$0xff]
    %v683 = vld [vmem:[#allocation9 + $0xd8] sm:$0xff]
    %v684 = vld [vmem:[#allocation9 + $0xe0] sm:$0xff]
    %v685 = vld [vmem:[#allocation9 + $0xe8] sm:$0xff]
    %v686 = vld [vmem:[#allocation9 + $0xf0] sm:$0xff]
    %v687 = vld [vmem:[#allocation9 + $0xf8] sm:$0xff]
    %v688 = vld [vmem:[#allocation9 + $0x100] sm:$0xff]
    %v689 = vld [vmem:[#allocation9 + $0x108] sm:$0xff]
    %v690 = vld [vmem:[#allocation9 + $0x110] sm:$0xff]
    %v691 = vld [vmem:[#allocation9 + $0x118] sm:$0xff]
    %v692 = vld [vmem:[#allocation9 + $0x120] sm:$0xff]
    %v693 = vld [vmem:[#allocation9 + $0x128] sm:$0xff]
    %v694 = vld [vmem:[#allocation9 + $0x130] sm:$0xff]
    %v695 = vld [vmem:[#allocation9 + $0x138] sm:$0xff]
    %v696 = vld [vmem:[#allocation9 + $0x140] sm:$0xff]
    %v697 = vld [vmem:[#allocation9 + $0x148] sm:$0xff]
    %v698 = vld [vmem:[#allocation9 + $0x150] sm:$0xff]
    %v699 = vld [vmem:[#allocation9 + $0x158] sm:$0xff]
    %v700 = vld [vmem:[#allocation9 + $0x160] sm:$0xff]
    %v701 = vld [vmem:[#allocation9 + $0x168] sm:$0xff]
    %v702 = vld [vmem:[#allocation9 + $0x170] sm:$0xff]
    %v703 = vld [vmem:[#allocation9 + $0x178] sm:$0xff]
    %v704 = vld [vmem:[#allocation9 + $0x180] sm:$0xff]
    %v705 = vld [vmem:[#allocation9 + $0x188] sm:$0xff]
    %v706 = vld [vmem:[#allocation9 + $0x190] sm:$0xff]
    %v707 = vld [vmem:[#allocation9 + $0x198] sm:$0xff]
    %v708 = vld [vmem:[#allocation9 + $0x1a0] sm:$0xff]
    %v709 = vld [vmem:[#allocation9 + $0x1a8] sm:$0xff]
    %v710 = vld [vmem:[#allocation9 + $0x1b0] sm:$0xff]
    %v711 = vld [vmem:[#allocation9 + $0x1b8] sm:$0xff]
    %v712 = vld [vmem:[#allocation9 + $0x1c0] sm:$0xff]
    %v713 = vld [vmem:[#allocation9 + $0x1c8] sm:$0xff]
    %v714 = vld [vmem:[#allocation9 + $0x1d0] sm:$0xff]
    %v715 = vld [vmem:[#allocation9 + $0x1d8] sm:$0xff]
    %v716 = vld [vmem:[#allocation9 + $0x1e0] sm:$0xff]
    %v717 = vld [vmem:[#allocation9 + $0x1e8] sm:$0xff]
    %v718 = vld [vmem:[#allocation9 + $0x1f0] sm:$0xff]
    %v719 = vld [vmem:[#allocation9 + $0x1f8] sm:$0xff]
    %v720 = vld [vmem:[#allocation9 + $0x200] sm:$0xff]
    %v721 = vld [vmem:[#allocation9 + $0x208] sm:$0xff]
    %v722 = vld [vmem:[#allocation9 + $0x210] sm:$0xff]
    %v723 = vld [vmem:[#allocation9 + $0x218] sm:$0xff]
    %v724 = vld [vmem:[#allocation9 + $0x220] sm:$0xff]
    %v725 = vld [vmem:[#allocation9 + $0x228] sm:$0xff]
    %v726 = vld [vmem:[#allocation9 + $0x230] sm:$0xff]
    %v727 = vld [vmem:[#allocation9 + $0x238] sm:$0xff]
    %v728 = vld [vmem:[#allocation9 + $0x240] sm:$0xff]
    %v729 = vld [vmem:[#allocation9 + $0x248] sm:$0xff]
    %v730 = vld [vmem:[#allocation9 + $0x250] sm:$0xff]
    %v731 = vld [vmem:[#allocation9 + $0x258] sm:$0xff]
    %v732 = vld [vmem:[#allocation9 + $0x260] sm:$0xff]
    %v733 = vld [vmem:[#allocation9 + $0x268] sm:$0xff]
    %v734 = vld [vmem:[#allocation9 + $0x270] sm:$0xff]
    %v735 = vld [vmem:[#allocation9 + $0x278] sm:$0xff]
    %v736 = vld [vmem:[#allocation9 + $0x280] sm:$0xff]
    %v737 = vld [vmem:[#allocation9 + $0x288] sm:$0xff]
    %v738 = vld [vmem:[#allocation9 + $0x290] sm:$0xff]
    %v739 = vld [vmem:[#allocation9 + $0x298] sm:$0xff]
    %v740 = vld [vmem:[#allocation9 + $0x2a0] sm:$0xff]
    %v741 = vld [vmem:[#allocation9 + $0x2a8] sm:$0xff]
    %v742 = vld [vmem:[#allocation9 + $0x2b0] sm:$0xff]
    %v743 = vld [vmem:[#allocation9 + $0x2b8] sm:$0xff]
    %v744 = vld [vmem:[#allocation9 + $0x2c0] sm:$0xff]
    %v745 = vld [vmem:[#allocation9 + $0x2c8] sm:$0xff]
    %v746 = vld [vmem:[#allocation9 + $0x2d0] sm:$0xff]
    %v747 = vld [vmem:[#allocation9 + $0x2d8] sm:$0xff]
    %v748 = vld [vmem:[#allocation9 + $0x2e0] sm:$0xff]
    %v749 = vld [vmem:[#allocation9 + $0x2e8] sm:$0xff]
    %v750 = vld [vmem:[#allocation9 + $0x2f0] sm:$0xff]
    %v751 = vld [vmem:[#allocation9 + $0x2f8] sm:$0xff]
    %v752 = vld [vmem:[#allocation9 + $0x300] sm:$0xff]
    %v753 = vld [vmem:[#allocation9 + $0x308] sm:$0xff]
    %v754 = vld [vmem:[#allocation9 + $0x310] sm:$0xff]
    %v755 = vld [vmem:[#allocation9 + $0x318] sm:$0xff]
    %v756 = vld [vmem:[#allocation9 + $0x320] sm:$0xff]
    %v757 = vld [vmem:[#allocation9 + $0x328] sm:$0xff]
    %v758 = vld [vmem:[#allocation9 + $0x330] sm:$0xff]
    %v759 = vld [vmem:[#allocation9 + $0x338] sm:$0xff]
    %v760 = vld [vmem:[#allocation9 + $0x340] sm:$0xff]
    %v761 = vld [vmem:[#allocation9 + $0x348] sm:$0xff]
    %v762 = vld [vmem:[#allocation9 + $0x350] sm:$0xff]
    %v763 = vld [vmem:[#allocation9 + $0x358] sm:$0xff]
    %v764 = vld [vmem:[#allocation9 + $0x360] sm:$0xff]
    %v765 = vld [vmem:[#allocation9 + $0x368] sm:$0xff]
    %v766 = vld [vmem:[#allocation9 + $0x370] sm:$0xff]
    %v767 = vld [vmem:[#allocation9 + $0x378] sm:$0xff]
    %v768 = vld [vmem:[#allocation9 + $0x380] sm:$0xff]
    %v769 = vld [vmem:[#allocation9 + $0x388] sm:$0xff]
    %v770 = vld [vmem:[#allocation9 + $0x390] sm:$0xff]
    %v771 = vld [vmem:[#allocation9 + $0x398] sm:$0xff]
    %v772 = vld [vmem:[#allocation9 + $0x3a0] sm:$0xff]
    %v773 = vld [vmem:[#allocation9 + $0x3a8] sm:$0xff]
    %v774 = vld [vmem:[#allocation9 + $0x3b0] sm:$0xff]
    %v775 = vld [vmem:[#allocation9 + $0x3b8] sm:$0xff]
    %v776 = vld [vmem:[#allocation9 + $0x3c0] sm:$0xff]
    %v777 = vld [vmem:[#allocation9 + $0x3c8] sm:$0xff]
    %v778 = vld [vmem:[#allocation9 + $0x3d0] sm:$0xff]
    %v779 = vld [vmem:[#allocation9 + $0x3d8] sm:$0xff]
    %v780 = vld [vmem:[#allocation9 + $0x3e0] sm:$0xff]
    %v781 = vld [vmem:[#allocation9 + $0x3e8] sm:$0xff]
    %v782 = vld [vmem:[#allocation9 + $0x3f0] sm:$0xff]
    %v783 = vld [vmem:[#allocation9 + $0x3f8] sm:$0xff]
    %v784 = vld [vmem:[#allocation9 + $0x400] sm:$0xff]
    %v785 = vld [vmem:[#allocation9 + $0x408] sm:$0xff]
    %v786 = vld [vmem:[#allocation9 + $0x410] sm:$0xff]
    %v787 = vld [vmem:[#allocation9 + $0x418] sm:$0xff]
    %v788 = vld [vmem:[#allocation9 + $0x420] sm:$0xff]
    %v789 = vld [vmem:[#allocation9 + $0x428] sm:$0xff]
    %v790 = vld [vmem:[#allocation9 + $0x430] sm:$0xff]
    %v791 = vld [vmem:[#allocation9 + $0x438] sm:$0xff]
    %v792 = vld [vmem:[#allocation9 + $0x440] sm:$0xff]
    %v793 = vld [vmem:[#allocation9 + $0x448] sm:$0xff]
    %v794 = vld [vmem:[#allocation9 + $0x450] sm:$0xff]
    %v795 = vld [vmem:[#allocation9 + $0x458] sm:$0xff]
    %v796 = vld [vmem:[#allocation9 + $0x460] sm:$0xff]
    %v797 = vld [vmem:[#allocation9 + $0x468] sm:$0xff]
    %v798 = vld [vmem:[#allocation9 + $0x470] sm:$0xff]
    %v799 = vld [vmem:[#allocation9 + $0x478] sm:$0xff]
    %v800 = vld [vmem:[#allocation9 + $0x480] sm:$0xff]
    %v801 = vld [vmem:[#allocation9 + $0x488] sm:$0xff]
    %v802 = vld [vmem:[#allocation9 + $0x490] sm:$0xff]
    %v803 = vld [vmem:[#allocation9 + $0x498] sm:$0xff]
    %v804 = vld [vmem:[#allocation9 + $0x4a0] sm:$0xff]
    %v805 = vld [vmem:[#allocation9 + $0x4a8] sm:$0xff]
    %v806 = vld [vmem:[#allocation9 + $0x4b0] sm:$0xff]
    %v807 = vld [vmem:[#allocation9 + $0x4b8] sm:$0xff]
    %v808 = vld [vmem:[#allocation9 + $0x4c0] sm:$0xff]
    %v809 = vld [vmem:[#allocation9 + $0x4c8] sm:$0xff]
    %v810 = vld [vmem:[#allocation9 + $0x4d0] sm:$0xff]
    %v811 = vld [vmem:[#allocation9 + $0x4d8] sm:$0xff]
    %v812 = vld [vmem:[#allocation9 + $0x4e0] sm:$0xff]
    %v813 = vld [vmem:[#allocation9 + $0x4e8] sm:$0xff]
    %v814 = vld [vmem:[#allocation9 + $0x4f0] sm:$0xff]
    %v815 = vld [vmem:[#allocation9 + $0x4f8] sm:$0xff]
    %v816 = vld [vmem:[#allocation9 + $0x500] sm:$0xff]
    %v817 = vld [vmem:[#allocation9 + $0x508] sm:$0xff]
    %v818 = vld [vmem:[#allocation9 + $0x510] sm:$0xff]
    %v819 = vld [vmem:[#allocation9 + $0x518] sm:$0xff]
    %v820 = vld [vmem:[#allocation9 + $0x520] sm:$0xff]
    %v821 = vld [vmem:[#allocation9 + $0x528] sm:$0xff]
    %v822 = vld [vmem:[#allocation9 + $0x530] sm:$0xff]
    %v823 = vld [vmem:[#allocation9 + $0x538] sm:$0xff]
    %v824 = vld [vmem:[#allocation9 + $0x540] sm:$0xff]
    %v825 = vld [vmem:[#allocation9 + $0x548] sm:$0xff]
    %v826 = vld [vmem:[#allocation9 + $0x550] sm:$0xff]
    %v827 = vld [vmem:[#allocation9 + $0x558] sm:$0xff]
    %v828 = vld [vmem:[#allocation9 + $0x560] sm:$0xff]
    %v829 = vld [vmem:[#allocation9 + $0x568] sm:$0xff]
    %v830 = vld [vmem:[#allocation9 + $0x570] sm:$0xff]
    %v831 = vld [vmem:[#allocation9 + $0x578] sm:$0xff]
    %v832 = vld [vmem:[#allocation9 + $0x580] sm:$0xff]
    %v833 = vld [vmem:[#allocation9 + $0x588] sm:$0xff]
    %v834 = vld [vmem:[#allocation9 + $0x590] sm:$0xff]
    %v835 = vld [vmem:[#allocation9 + $0x598] sm:$0xff]
    %v836 = vld [vmem:[#allocation9 + $0x5a0] sm:$0xff]
    %v837 = vld [vmem:[#allocation9 + $0x5a8] sm:$0xff]
    %v838 = vld [vmem:[#allocation9 + $0x5b0] sm:$0xff]
    %v839 = vld [vmem:[#allocation9 + $0x5b8] sm:$0xff]
    %v840 = vld [vmem:[#allocation9 + $0x5c0] sm:$0xff]
    %v841 = vld [vmem:[#allocation9 + $0x5c8] sm:$0xff]
    %v842 = vld [vmem:[#allocation9 + $0x5d0] sm:$0xff]
    %v843 = vld [vmem:[#allocation9 + $0x5d8] sm:$0xff]
    %v844 = vld [vmem:[#allocation9 + $0x5e0] sm:$0xff]
    %v845 = vld [vmem:[#allocation9 + $0x5e8] sm:$0xff]
    %v846 = vld [vmem:[#allocation9 + $0x5f0] sm:$0xff]
    %v847 = vld [vmem:[#allocation9 + $0x5f8] sm:$0xff]
    %v848 = vld [vmem:[#allocation9 + $0x600] sm:$0xff]
    %v849 = vld [vmem:[#allocation9 + $0x608] sm:$0xff]
    %v850 = vld [vmem:[#allocation9 + $0x610] sm:$0xff]
    %v851 = vld [vmem:[#allocation9 + $0x618] sm:$0xff]
    %v852 = vld [vmem:[#allocation9 + $0x620] sm:$0xff]
    %v853 = vld [vmem:[#allocation9 + $0x628] sm:$0xff]
    %v854 = vld [vmem:[#allocation9 + $0x630] sm:$0xff]
    %v855 = vld [vmem:[#allocation9 + $0x638] sm:$0xff]
    %v856 = vld [vmem:[#allocation9 + $0x640] sm:$0xff]
    %v857 = vld [vmem:[#allocation9 + $0x648] sm:$0xff]
    %v858 = vld [vmem:[#allocation9 + $0x650] sm:$0xff]
    %v859 = vld [vmem:[#allocation9 + $0x658] sm:$0xff]
    %v860 = vld [vmem:[#allocation9 + $0x660] sm:$0xff]
    %v861 = vld [vmem:[#allocation9 + $0x668] sm:$0xff]
    %v862 = vld [vmem:[#allocation9 + $0x670] sm:$0xff]
    %v863 = vld [vmem:[#allocation9 + $0x678] sm:$0xff]
    %v864 = vld [vmem:[#allocation9 + $0x680] sm:$0xff]
    %v865 = vld [vmem:[#allocation9 + $0x688] sm:$0xff]
    %v866 = vld [vmem:[#allocation9 + $0x690] sm:$0xff]
    %v867 = vld [vmem:[#allocation9 + $0x698] sm:$0xff]
    %v868 = vld [vmem:[#allocation9 + $0x6a0] sm:$0xff]
    %v869 = vld [vmem:[#allocation9 + $0x6a8] sm:$0xff]
    %v870 = vld [vmem:[#allocation9 + $0x6b0] sm:$0xff]
    %v871 = vld [vmem:[#allocation9 + $0x6b8] sm:$0xff]
    %v872 = vld [vmem:[#allocation9 + $0x6c0] sm:$0xff]
    %v873 = vld [vmem:[#allocation9 + $0x6c8] sm:$0xff]
    %v874 = vld [vmem:[#allocation9 + $0x6d0] sm:$0xff]
    %v875 = vld [vmem:[#allocation9 + $0x6d8] sm:$0xff]
    %v876 = vld [vmem:[#allocation9 + $0x6e0] sm:$0xff]
    %v877 = vld [vmem:[#allocation9 + $0x6e8] sm:$0xff]
    %v878 = vld [vmem:[#allocation9 + $0x6f0] sm:$0xff]
    %v879 = vld [vmem:[#allocation9 + $0x6f8] sm:$0xff]
    %v880 = vld [vmem:[#allocation9 + $0x700] sm:$0xff]
    %v881 = vld [vmem:[#allocation9 + $0x708] sm:$0xff]
    %v882 = vld [vmem:[#allocation9 + $0x710] sm:$0xff]
    %v883 = vld [vmem:[#allocation9 + $0x718] sm:$0xff]
    %v884 = vld [vmem:[#allocation9 + $0x720] sm:$0xff]
    %v885 = vld [vmem:[#allocation9 + $0x728] sm:$0xff]
    %v886 = vld [vmem:[#allocation9 + $0x730] sm:$0xff]
    %v887 = vld [vmem:[#allocation9 + $0x738] sm:$0xff]
    %v888 = vld [vmem:[#allocation9 + $0x740] sm:$0xff]
    %v889 = vld [vmem:[#allocation9 + $0x748] sm:$0xff]
    %v890 = vld [vmem:[#allocation9 + $0x750] sm:$0xff]
    %v891 = vld [vmem:[#allocation9 + $0x758] sm:$0xff]
    %v892 = vld [vmem:[#allocation9 + $0x760] sm:$0xff]
    %v893 = vld [vmem:[#allocation9 + $0x768] sm:$0xff]
    %v894 = vld [vmem:[#allocation9 + $0x770] sm:$0xff]
    %v895 = vld [vmem:[#allocation9 + $0x778] sm:$0xff]
    %v896 = vld [vmem:[#allocation9 + $0x780] sm:$0xff]
    %v897 = vld [vmem:[#allocation9 + $0x788] sm:$0xff]
    %v898 = vld [vmem:[#allocation9 + $0x790] sm:$0xff]
    %v899 = vld [vmem:[#allocation9 + $0x798] sm:$0xff]
    %v900 = vld [vmem:[#allocation9 + $0x7a0] sm:$0xff]
    %v901 = vld [vmem:[#allocation9 + $0x7a8] sm:$0xff]
    %v902 = vld [vmem:[#allocation9 + $0x7b0] sm:$0xff]
    %v903 = vld [vmem:[#allocation9 + $0x7b8] sm:$0xff]
    %v904 = vld [vmem:[#allocation9 + $0x7c0] sm:$0xff]
    %v905 = vld [vmem:[#allocation9 + $0x7c8] sm:$0xff]
    %v906 = vld [vmem:[#allocation9 + $0x7d0] sm:$0xff]
    %v907 = vld [vmem:[#allocation9 + $0x7d8] sm:$0xff]
    %v908 = vld [vmem:[#allocation9 + $0x7e0] sm:$0xff]
    %v909 = vld [vmem:[#allocation9 + $0x7e8] sm:$0xff]
    %v910 = vld [vmem:[#allocation9 + $0x7f0] sm:$0xff]
    %v911 = vld [vmem:[#allocation9 + $0x7f8] sm:$0xff]
    %v912 = vld [vmem:[#allocation9 + $0x800] sm:$0xff]
    %v913 = vld [vmem:[#allocation9 + $0x808] sm:$0xff]
    %v914 = vld [vmem:[#allocation9 + $0x810] sm:$0xff]
    %v915 = vld [vmem:[#allocation9 + $0x818] sm:$0xff]
    %v916 = vld [vmem:[#allocation9 + $0x820] sm:$0xff]
    %v917 = vld [vmem:[#allocation9 + $0x828] sm:$0xff]
    %v918 = vld [vmem:[#allocation9 + $0x830] sm:$0xff]
    %v919 = vld [vmem:[#allocation9 + $0x838] sm:$0xff]
    %v920 = vld [vmem:[#allocation9 + $0x840] sm:$0xff]
    %v921 = vld [vmem:[#allocation9 + $0x848] sm:$0xff]
    %v922 = vld [vmem:[#allocation9 + $0x850] sm:$0xff]
    %v923 = vld [vmem:[#allocation9 + $0x858] sm:$0xff]
    %v924 = vld [vmem:[#allocation9 + $0x860] sm:$0xff]
    %v925 = vld [vmem:[#allocation9 + $0x868] sm:$0xff]
    %v926 = vld [vmem:[#allocation9 + $0x870] sm:$0xff]
    %v927 = vld [vmem:[#allocation9 + $0x878] sm:$0xff]
    %v928 = vld [vmem:[#allocation9 + $0x880] sm:$0xff]
    %v929 = vld [vmem:[#allocation9 + $0x888] sm:$0xff]
    %v930 = vld [vmem:[#allocation9 + $0x890] sm:$0xff]
    %v931 = vld [vmem:[#allocation9 + $0x898] sm:$0xff]
    %v932 = vld [vmem:[#allocation9 + $0x8a0] sm:$0xff]
    %v933 = vld [vmem:[#allocation9 + $0x8a8] sm:$0xff]
    %v934 = vld [vmem:[#allocation9 + $0x8b0] sm:$0xff]
    %v935 = vld [vmem:[#allocation9 + $0x8b8] sm:$0xff]
    %v936 = vld [vmem:[#allocation9 + $0x8c0] sm:$0xff]
    %v937 = vld [vmem:[#allocation9 + $0x8c8] sm:$0xff]
    %v938 = vld [vmem:[#allocation9 + $0x8d0] sm:$0xff]
    %v939 = vld [vmem:[#allocation9 + $0x8d8] sm:$0xff]
    %v940 = vld [vmem:[#allocation9 + $0x8e0] sm:$0xff]
    %v941 = vld [vmem:[#allocation9 + $0x8e8] sm:$0xff]
    %v942 = vld [vmem:[#allocation9 + $0x8f0] sm:$0xff]
    %v943 = vld [vmem:[#allocation9 + $0x8f8] sm:$0xff]
    %v944 = vld [vmem:[#allocation9 + $0x900] sm:$0xff]
    %v945 = vld [vmem:[#allocation9 + $0x908] sm:$0xff]
    %v946 = vld [vmem:[#allocation9 + $0x910] sm:$0xff]
    %v947 = vld [vmem:[#allocation9 + $0x918] sm:$0xff]
    %v948 = vld [vmem:[#allocation9 + $0x920] sm:$0xff]
    %v949 = vld [vmem:[#allocation9 + $0x928] sm:$0xff]
    %v950 = vld [vmem:[#allocation9 + $0x930] sm:$0xff]
    %v951 = vld [vmem:[#allocation9 + $0x938] sm:$0xff]
    %v952 = vld [vmem:[#allocation9 + $0x940] sm:$0xff]
    %v953 = vld [vmem:[#allocation9 + $0x948] sm:$0xff]
    %v954 = vld [vmem:[#allocation9 + $0x950] sm:$0xff]
    %v955 = vld [vmem:[#allocation9 + $0x958] sm:$0xff]
    %v956 = vld [vmem:[#allocation9 + $0x960] sm:$0xff]
    %v957 = vld [vmem:[#allocation9 + $0x968] sm:$0xff]
    %v958 = vld [vmem:[#allocation9 + $0x970] sm:$0xff]
    %v959 = vld [vmem:[#allocation9 + $0x978] sm:$0xff]
    %v960 = vld [vmem:[#allocation9 + $0x980] sm:$0xff]
    %v961 = vld [vmem:[#allocation9 + $0x988] sm:$0xff]
    %v962 = vld [vmem:[#allocation9 + $0x990] sm:$0xff]
    %v963 = vld [vmem:[#allocation9 + $0x998] sm:$0xff]
    %v964 = vld [vmem:[#allocation9 + $0x9a0] sm:$0xff]
    %v965 = vld [vmem:[#allocation9 + $0x9a8] sm:$0xff]
    %v966 = vld [vmem:[#allocation9 + $0x9b0] sm:$0xff]
    %v967 = vld [vmem:[#allocation9 + $0x9b8] sm:$0xff]
    %v968 = vld [vmem:[#allocation9 + $0x9c0] sm:$0xff]
    %v969 = vld [vmem:[#allocation9 + $0x9c8] sm:$0xff]
    %v970 = vld [vmem:[#allocation9 + $0x9d0] sm:$0xff]
    %v971 = vld [vmem:[#allocation9 + $0x9d8] sm:$0xff]
    %v972 = vld [vmem:[#allocation9 + $0x9e0] sm:$0xff]
    %v973 = vld [vmem:[#allocation9 + $0x9e8] sm:$0xff]
    %v974 = vld [vmem:[#allocation9 + $0x9f0] sm:$0xff]
    %v975 = vld [vmem:[#allocation9 + $0x9f8] sm:$0xff]
    %v976 = vld [vmem:[#allocation9 + $0xa00] sm:$0xff]
    %v977 = vld [vmem:[#allocation9 + $0xa08] sm:$0xff]
    %v978 = vld [vmem:[#allocation9 + $0xa10] sm:$0xff]
    %v979 = vld [vmem:[#allocation9 + $0xa18] sm:$0xff]
    %v980 = vld [vmem:[#allocation9 + $0xa20] sm:$0xff]
    %v981 = vld [vmem:[#allocation9 + $0xa28] sm:$0xff]
    %v982 = vld [vmem:[#allocation9 + $0xa30] sm:$0xff]
    %v983 = vld [vmem:[#allocation9 + $0xa38] sm:$0xff]
    %v984 = vld [vmem:[#allocation9 + $0xa40] sm:$0xff]
    %v985 = vld [vmem:[#allocation9 + $0xa48] sm:$0xff]
    %v986 = vld [vmem:[#allocation9 + $0xa50] sm:$0xff]
    %v987 = vld [vmem:[#allocation9 + $0xa58] sm:$0xff]
    %v988 = vld [vmem:[#allocation9 + $0xa60] sm:$0xff]
    %v989 = vld [vmem:[#allocation9 + $0xa68] sm:$0xff]
    %v990 = vld [vmem:[#allocation9 + $0xa70] sm:$0xff]
    %v991 = vld [vmem:[#allocation9 + $0xa78] sm:$0xff]
    %v992 = vld [vmem:[#allocation9 + $0xa80] sm:$0xff]
    %v993 = vld [vmem:[#allocation9 + $0xa88] sm:$0xff]
    %v994 = vld [vmem:[#allocation9 + $0xa90] sm:$0xff]
    %v995 = vld [vmem:[#allocation9 + $0xa98] sm:$0xff]
    %v996 = vld [vmem:[#allocation9 + $0xaa0] sm:$0xff]
    %v997 = vld [vmem:[#allocation9 + $0xaa8] sm:$0xff]
    %v998 = vld [vmem:[#allocation9 + $0xab0] sm:$0xff]
    %v999 = vld [vmem:[#allocation9 + $0xab8] sm:$0xff]
    %v1000 = vld [vmem:[#allocation9 + $0xac0] sm:$0xff]
    %v1001 = vld [vmem:[#allocation9 + $0xac8] sm:$0xff]
    %v1002 = vld [vmem:[#allocation9 + $0xad0] sm:$0xff]
    %v1003 = vld [vmem:[#allocation9 + $0xad8] sm:$0xff]
    %v1004 = vld [vmem:[#allocation9 + $0xae0] sm:$0xff]
    %v1005 = vld [vmem:[#allocation9 + $0xae8] sm:$0xff]
    %v1006 = vld [vmem:[#allocation9 + $0xaf0] sm:$0xff]
    %v1007 = vld [vmem:[#allocation9 + $0xaf8] sm:$0xff]
    %v1008 = vld [vmem:[#allocation9 + $0xb00] sm:$0xff]
    %v1009 = vld [vmem:[#allocation9 + $0xb08] sm:$0xff]
    %v1010 = vld [vmem:[#allocation9 + $0xb10] sm:$0xff]
    %v1011 = vld [vmem:[#allocation9 + $0xb18] sm:$0xff]
    %v1012 = vld [vmem:[#allocation9 + $0xb20] sm:$0xff]
    %v1013 = vld [vmem:[#allocation9 + $0xb28] sm:$0xff]
    %v1014 = vld [vmem:[#allocation9 + $0xb30] sm:$0xff]
    %v1015 = vld [vmem:[#allocation9 + $0xb38] sm:$0xff]
    %v1016 = vld [vmem:[#allocation9 + $0xb40] sm:$0xff]
    %v1017 = vld [vmem:[#allocation9 + $0xb48] sm:$0xff]
    %v1018 = vld [vmem:[#allocation9 + $0xb50] sm:$0xff]
    %v1019 = vld [vmem:[#allocation9 + $0xb58] sm:$0xff]
    %v1020 = vld [vmem:[#allocation9 + $0xb60] sm:$0xff]
    %v1021 = vld [vmem:[#allocation9 + $0xb68] sm:$0xff]
    %v1022 = vld [vmem:[#allocation9 + $0xb70] sm:$0xff]
    %v1023 = vld [vmem:[#allocation9 + $0xb78] sm:$0xff]
    %v1024 = vld [vmem:[#allocation9 + $0xb80] sm:$0xff]
    %v1025 = vld [vmem:[#allocation9 + $0xb88] sm:$0xff]
    %v1026 = vld [vmem:[#allocation9 + $0xb90] sm:$0xff]
    %v1027 = vld [vmem:[#allocation9 + $0xb98] sm:$0xff]
    %v1028 = vld [vmem:[#allocation9 + $0xba0] sm:$0xff]
    %v1029 = vld [vmem:[#allocation9 + $0xba8] sm:$0xff]
    %v1030 = vld [vmem:[#allocation9 + $0xbb0] sm:$0xff]
    %v1031 = vld [vmem:[#allocation9 + $0xbb8] sm:$0xff]
    %v1032 = vld [vmem:[#allocation9 + $0xbc0] sm:$0xff]
    %v1033 = vld [vmem:[#allocation9 + $0xbc8] sm:$0xff]
    %v1034 = vld [vmem:[#allocation9 + $0xbd0] sm:$0xff]
    %v1035 = vld [vmem:[#allocation9 + $0xbd8] sm:$0xff]
    %v1036 = vld [vmem:[#allocation9 + $0xbe0] sm:$0xff]
    %v1037 = vld [vmem:[#allocation9 + $0xbe8] sm:$0xff]
    %v1038 = vld [vmem:[#allocation9 + $0xbf0] sm:$0xff]
    %v1039 = vld [vmem:[#allocation9 + $0xbf8] sm:$0xff]
    %v1040 = vld [vmem:[#allocation9 + $0xc00] sm:$0xff]
    %v1041 = vld [vmem:[#allocation9 + $0xc08] sm:$0xff]
    %v1042 = vld [vmem:[#allocation9 + $0xc10] sm:$0xff]
    %v1043 = vld [vmem:[#allocation9 + $0xc18] sm:$0xff]
    %v1044 = vld [vmem:[#allocation9 + $0xc20] sm:$0xff]
    %v1045 = vld [vmem:[#allocation9 + $0xc28] sm:$0xff]
    %v1046 = vld [vmem:[#allocation9 + $0xc30] sm:$0xff]
    %v1047 = vld [vmem:[#allocation9 + $0xc38] sm:$0xff]
    %v1048 = vld [vmem:[#allocation9 + $0xc40] sm:$0xff]
    %v1049 = vld [vmem:[#allocation9 + $0xc48] sm:$0xff]
    %v1050 = vld [vmem:[#allocation9 + $0xc50] sm:$0xff]
    %v1051 = vld [vmem:[#allocation9 + $0xc58] sm:$0xff]
    %v1052 = vld [vmem:[#allocation9 + $0xc60] sm:$0xff]
    %v1053 = vld [vmem:[#allocation9 + $0xc68] sm:$0xff]
    %v1054 = vld [vmem:[#allocation9 + $0xc70] sm:$0xff]
    %v1055 = vld [vmem:[#allocation9 + $0xc78] sm:$0xff]
    %v1056 = vld [vmem:[#allocation9 + $0xc80] sm:$0xff]
    %v1057 = vld [vmem:[#allocation9 + $0xc88] sm:$0xff]
    %v1058 = vld [vmem:[#allocation9 + $0xc90] sm:$0xff]
    %v1059 = vld [vmem:[#allocation9 + $0xc98] sm:$0xff]
    %v1060 = vld [vmem:[#allocation9 + $0xca0] sm:$0xff]
    %v1061 = vld [vmem:[#allocation9 + $0xca8] sm:$0xff]
    %v1062 = vld [vmem:[#allocation9 + $0xcb0] sm:$0xff]
    %v1063 = vld [vmem:[#allocation9 + $0xcb8] sm:$0xff]
    %v1064 = vld [vmem:[#allocation9 + $0xcc0] sm:$0xff]
    %v1065 = vld [vmem:[#allocation9 + $0xcc8] sm:$0xff]
    %v1066 = vld [vmem:[#allocation9 + $0xcd0] sm:$0xff]
    %v1067 = vld [vmem:[#allocation9 + $0xcd8] sm:$0xff]
    %v1068 = vld [vmem:[#allocation9 + $0xce0] sm:$0xff]
    %v1069 = vld [vmem:[#allocation9 + $0xce8] sm:$0xff]
    %v1070 = vld [vmem:[#allocation9 + $0xcf0] sm:$0xff]
    %v1071 = vld [vmem:[#allocation9 + $0xcf8] sm:$0xff]
    %v1072 = vld [vmem:[#allocation9 + $0xd00] sm:$0xff]
    %v1073 = vld [vmem:[#allocation9 + $0xd08] sm:$0xff]
    %v1074 = vld [vmem:[#allocation9 + $0xd10] sm:$0xff]
    %v1075 = vld [vmem:[#allocation9 + $0xd18] sm:$0xff]
    %v1076 = vld [vmem:[#allocation9 + $0xd20] sm:$0xff]
    %v1077 = vld [vmem:[#allocation9 + $0xd28] sm:$0xff]
    %v1078 = vld [vmem:[#allocation9 + $0xd30] sm:$0xff]
    %v1079 = vld [vmem:[#allocation9 + $0xd38] sm:$0xff]
    %v1080 = vld [vmem:[#allocation9 + $0xd40] sm:$0xff]
    %v1081 = vld [vmem:[#allocation9 + $0xd48] sm:$0xff]
    %v1082 = vld [vmem:[#allocation9 + $0xd50] sm:$0xff]
    %v1083 = vld [vmem:[#allocation9 + $0xd58] sm:$0xff]
    %v1084 = vld [vmem:[#allocation9 + $0xd60] sm:$0xff]
    %v1085 = vld [vmem:[#allocation9 + $0xd68] sm:$0xff]
    %v1086 = vld [vmem:[#allocation9 + $0xd70] sm:$0xff]
    %v1087 = vld [vmem:[#allocation9 + $0xd78] sm:$0xff]
    %v1088 = vld [vmem:[#allocation9 + $0xd80] sm:$0xff]
    %v1089 = vld [vmem:[#allocation9 + $0xd88] sm:$0xff]
    %v1090 = vld [vmem:[#allocation9 + $0xd90] sm:$0xff]
    %v1091 = vld [vmem:[#allocation9 + $0xd98] sm:$0xff]
    %v1092 = vld [vmem:[#allocation9 + $0xda0] sm:$0xff]
    %v1093 = vld [vmem:[#allocation9 + $0xda8] sm:$0xff]
    %v1094 = vld [vmem:[#allocation9 + $0xdb0] sm:$0xff]
    %v1095 = vld [vmem:[#allocation9 + $0xdb8] sm:$0xff]
    %v1096 = vld [vmem:[#allocation9 + $0xdc0] sm:$0xff]
    %v1097 = vld [vmem:[#allocation9 + $0xdc8] sm:$0xff]
    %v1098 = vld [vmem:[#allocation9 + $0xdd0] sm:$0xff]
    %v1099 = vld [vmem:[#allocation9 + $0xdd8] sm:$0xff]
    %v1100 = vld [vmem:[#allocation9 + $0xde0] sm:$0xff]
    %v1101 = vld [vmem:[#allocation9 + $0xde8] sm:$0xff]
    %v1102 = vld [vmem:[#allocation9 + $0xdf0] sm:$0xff]
    %v1103 = vld [vmem:[#allocation9 + $0xdf8] sm:$0xff]
    %v1104 = vld [vmem:[#allocation9 + $0xe00] sm:$0xff]
    %v1105 = vld [vmem:[#allocation9 + $0xe08] sm:$0xff]
    %v1106 = vld [vmem:[#allocation9 + $0xe10] sm:$0xff]
    %v1107 = vld [vmem:[#allocation9 + $0xe18] sm:$0xff]
    %v1108 = vld [vmem:[#allocation9 + $0xe20] sm:$0xff]
    %v1109 = vld [vmem:[#allocation9 + $0xe28] sm:$0xff]
    %v1110 = vld [vmem:[#allocation9 + $0xe30] sm:$0xff]
    %v1111 = vld [vmem:[#allocation9 + $0xe38] sm:$0xff]
    %v1112 = vld [vmem:[#allocation9 + $0xe40] sm:$0xff]
    %v1113 = vld [vmem:[#allocation9 + $0xe48] sm:$0xff]
    %v1114 = vld [vmem:[#allocation9 + $0xe50] sm:$0xff]
    %v1115 = vld [vmem:[#allocation9 + $0xe58] sm:$0xff]
    %v1116 = vld [vmem:[#allocation9 + $0xe60] sm:$0xff]
    %v1117 = vld [vmem:[#allocation9 + $0xe68] sm:$0xff]
    %v1118 = vld [vmem:[#allocation9 + $0xe70] sm:$0xff]
    %v1119 = vld [vmem:[#allocation9 + $0xe78] sm:$0xff]
    %v1120 = vld [vmem:[#allocation9 + $0xe80] sm:$0xff]
    %v1121 = vld [vmem:[#allocation9 + $0xe88] sm:$0xff]
    %v1122 = vld [vmem:[#allocation9 + $0xe90] sm:$0xff]
    %v1123 = vld [vmem:[#allocation9 + $0xe98] sm:$0xff]
    %v1124 = vld [vmem:[#allocation9 + $0xea0] sm:$0xff]
    %v1125 = vld [vmem:[#allocation9 + $0xea8] sm:$0xff]
    %v1126 = vld [vmem:[#allocation9 + $0xeb0] sm:$0xff]
    %v1127 = vld [vmem:[#allocation9 + $0xeb8] sm:$0xff]
    %v1128 = vld [vmem:[#allocation9 + $0xec0] sm:$0xff]
    %v1129 = vld [vmem:[#allocation9 + $0xec8] sm:$0xff]
    %v1130 = vld [vmem:[#allocation9 + $0xed0] sm:$0xff]
    %v1131 = vld [vmem:[#allocation9 + $0xed8] sm:$0xff]
    %v1132 = vld [vmem:[#allocation9 + $0xee0] sm:$0xff]
    %v1133 = vld [vmem:[#allocation9 + $0xee8] sm:$0xff]
    %v1134 = vld [vmem:[#allocation9 + $0xef0] sm:$0xff]
    %v1135 = vld [vmem:[#allocation9 + $0xef8] sm:$0xff]
    %v1136 = vld [vmem:[#allocation9 + $0xf00] sm:$0xff]
    %v1137 = vld [vmem:[#allocation9 + $0xf08] sm:$0xff]
    %v1138 = vld [vmem:[#allocation9 + $0xf10] sm:$0xff]
    %v1139 = vld [vmem:[#allocation9 + $0xf18] sm:$0xff]
    %v1140 = vld [vmem:[#allocation9 + $0xf20] sm:$0xff]
    %v1141 = vld [vmem:[#allocation9 + $0xf28] sm:$0xff]
    %v1142 = vld [vmem:[#allocation9 + $0xf30] sm:$0xff]
    %v1143 = vld [vmem:[#allocation9 + $0xf38] sm:$0xff]
    %v1144 = vld [vmem:[#allocation9 + $0xf40] sm:$0xff]
    %v1145 = vld [vmem:[#allocation9 + $0xf48] sm:$0xff]
    %v1146 = vld [vmem:[#allocation9 + $0xf50] sm:$0xff]
    %v1147 = vld [vmem:[#allocation9 + $0xf58] sm:$0xff]
    %v1148 = vld [vmem:[#allocation9 + $0xf60] sm:$0xff]
    %v1149 = vld [vmem:[#allocation9 + $0xf68] sm:$0xff]
    %v1150 = vld [vmem:[#allocation9 + $0xf70] sm:$0xff]
    %v1151 = vld [vmem:[#allocation9 + $0xf78] sm:$0xff]
    %v1152 = vld [vmem:[#allocation9 + $0xf80] sm:$0xff]
    %v1153 = vld [vmem:[#allocation9 + $0xf88] sm:$0xff]
    %v1154 = vld [vmem:[#allocation9 + $0xf90] sm:$0xff]
    %v1155 = vld [vmem:[#allocation9 + $0xf98] sm:$0xff]
    %v1156 = vld [vmem:[#allocation9 + $0xfa0] sm:$0xff]
    %v1157 = vld [vmem:[#allocation9 + $0xfa8] sm:$0xff]
    %v1158 = vld [vmem:[#allocation9 + $0xfb0] sm:$0xff]
    %v1159 = vld [vmem:[#allocation9 + $0xfb8] sm:$0xff]
    %v1160 = vld [vmem:[#allocation9 + $0xfc0] sm:$0xff]
    %v1161 = vld [vmem:[#allocation9 + $0xfc8] sm:$0xff]
    %v1162 = vld [vmem:[#allocation9 + $0xfd0] sm:$0xff]
    %v1163 = vld [vmem:[#allocation9 + $0xfd8] sm:$0xff]
    %v1164 = vld [vmem:[#allocation9 + $0xfe0] sm:$0xff]
    %v1165 = vld [vmem:[#allocation9 + $0xfe8] sm:$0xff]
    %v1166 = vld [vmem:[#allocation9 + $0xff0] sm:$0xff]
    %v1167 = vld [vmem:[#allocation9 + $0xff8] sm:$0xff]
    %v1680 = vunpack.c.l.b16 %v656
    %v1681 = vunpack.c.h.b16 %v656
    %v1682 = vunpack.c.l.b16 %v657
    %v1683 = vunpack.c.h.b16 %v657
    %v1684 = vunpack.c.l.b16 %v658
    %v1685 = vunpack.c.h.b16 %v658
    %v1686 = vunpack.c.l.b16 %v659
    %v1687 = vunpack.c.h.b16 %v659
    %v1688 = vunpack.c.l.b16 %v660
    %v1689 = vunpack.c.h.b16 %v660
    %v1690 = vunpack.c.l.b16 %v661
    %v1691 = vunpack.c.h.b16 %v661
    %v1692 = vunpack.c.l.b16 %v662
    %v1693 = vunpack.c.h.b16 %v662
    %v1694 = vunpack.c.l.b16 %v663
    %v1695 = vunpack.c.h.b16 %v663
    %v1696 = vunpack.c.l.b16 %v664
    %v1697 = vunpack.c.h.b16 %v664
    %v1698 = vunpack.c.l.b16 %v665
    %v1699 = vunpack.c.h.b16 %v665
    %v1700 = vunpack.c.l.b16 %v666
    %v1701 = vunpack.c.h.b16 %v666
    %v1702 = vunpack.c.l.b16 %v667
    %v1703 = vunpack.c.h.b16 %v667
    %v1704 = vunpack.c.l.b16 %v668
    %v1705 = vunpack.c.h.b16 %v668
    %v1706 = vunpack.c.l.b16 %v669
    %v1707 = vunpack.c.h.b16 %v669
    %v1708 = vunpack.c.l.b16 %v670
    %v1709 = vunpack.c.h.b16 %v670
    %v1710 = vunpack.c.l.b16 %v671
    %v1711 = vunpack.c.h.b16 %v671
    %v1712 = vunpack.c.l.b16 %v672
    %v1713 = vunpack.c.h.b16 %v672
    %v1714 = vunpack.c.l.b16 %v673
    %v1715 = vunpack.c.h.b16 %v673
    %v1716 = vunpack.c.l.b16 %v674
    %v1717 = vunpack.c.h.b16 %v674
    %v1718 = vunpack.c.l.b16 %v675
    %v1719 = vunpack.c.h.b16 %v675
    %v1720 = vunpack.c.l.b16 %v676
    %v1721 = vunpack.c.h.b16 %v676
    %v1722 = vunpack.c.l.b16 %v677
    %v1723 = vunpack.c.h.b16 %v677
    %v1724 = vunpack.c.l.b16 %v678
    %v1725 = vunpack.c.h.b16 %v678
    %v1726 = vunpack.c.l.b16 %v679
    %v1727 = vunpack.c.h.b16 %v679
    %v1728 = vunpack.c.l.b16 %v680
    %v1729 = vunpack.c.h.b16 %v680
    %v1730 = vunpack.c.l.b16 %v681
    %v1731 = vunpack.c.h.b16 %v681
    %v1732 = vunpack.c.l.b16 %v682
    %v1733 = vunpack.c.h.b16 %v682
    %v1734 = vunpack.c.l.b16 %v683
    %v1735 = vunpack.c.h.b16 %v683
    %v1736 = vunpack.c.l.b16 %v684
    %v1737 = vunpack.c.h.b16 %v684
    %v1738 = vunpack.c.l.b16 %v685
    %v1739 = vunpack.c.h.b16 %v685
    %v1740 = vunpack.c.l.b16 %v686
    %v1741 = vunpack.c.h.b16 %v686
    %v1742 = vunpack.c.l.b16 %v687
    %v1743 = vunpack.c.h.b16 %v687
    %v1744 = vunpack.c.l.b16 %v688
    %v1745 = vunpack.c.h.b16 %v688
    %v1746 = vunpack.c.l.b16 %v689
    %v1747 = vunpack.c.h.b16 %v689
    %v1748 = vunpack.c.l.b16 %v690
    %v1749 = vunpack.c.h.b16 %v690
    %v1750 = vunpack.c.l.b16 %v691
    %v1751 = vunpack.c.h.b16 %v691
    %v1752 = vunpack.c.l.b16 %v692
    %v1753 = vunpack.c.h.b16 %v692
    %v1754 = vunpack.c.l.b16 %v693
    %v1755 = vunpack.c.h.b16 %v693
    %v1756 = vunpack.c.l.b16 %v694
    %v1757 = vunpack.c.h.b16 %v694
    %v1758 = vunpack.c.l.b16 %v695
    %v1759 = vunpack.c.h.b16 %v695
    %v1760 = vunpack.c.l.b16 %v696
    %v1761 = vunpack.c.h.b16 %v696
    %v1762 = vunpack.c.l.b16 %v697
    %v1763 = vunpack.c.h.b16 %v697
    %v1764 = vunpack.c.l.b16 %v698
    %v1765 = vunpack.c.h.b16 %v698
    %v1766 = vunpack.c.l.b16 %v699
    %v1767 = vunpack.c.h.b16 %v699
    %v1768 = vunpack.c.l.b16 %v700
    %v1769 = vunpack.c.h.b16 %v700
    %v1770 = vunpack.c.l.b16 %v701
    %v1771 = vunpack.c.h.b16 %v701
    %v1772 = vunpack.c.l.b16 %v702
    %v1773 = vunpack.c.h.b16 %v702
    %v1774 = vunpack.c.l.b16 %v703
    %v1775 = vunpack.c.h.b16 %v703
    %v1776 = vunpack.c.l.b16 %v704
    %v1777 = vunpack.c.h.b16 %v704
    %v1778 = vunpack.c.l.b16 %v705
    %v1779 = vunpack.c.h.b16 %v705
    %v1780 = vunpack.c.l.b16 %v706
    %v1781 = vunpack.c.h.b16 %v706
    %v1782 = vunpack.c.l.b16 %v707
    %v1783 = vunpack.c.h.b16 %v707
    %v1784 = vunpack.c.l.b16 %v708
    %v1785 = vunpack.c.h.b16 %v708
    %v1786 = vunpack.c.l.b16 %v709
    %v1787 = vunpack.c.h.b16 %v709
    %v1788 = vunpack.c.l.b16 %v710
    %v1789 = vunpack.c.h.b16 %v710
    %v1790 = vunpack.c.l.b16 %v711
    %v1791 = vunpack.c.h.b16 %v711
    %v1792 = vunpack.c.l.b16 %v712
    %v1793 = vunpack.c.h.b16 %v712
    %v1794 = vunpack.c.l.b16 %v713
    %v1795 = vunpack.c.h.b16 %v713
    %v1796 = vunpack.c.l.b16 %v714
    %v1797 = vunpack.c.h.b16 %v714
    %v1798 = vunpack.c.l.b16 %v715
    %v1799 = vunpack.c.h.b16 %v715
    %v1800 = vunpack.c.l.b16 %v716
    %v1801 = vunpack.c.h.b16 %v716
    %v1802 = vunpack.c.l.b16 %v717
    %v1803 = vunpack.c.h.b16 %v717
    %v1804 = vunpack.c.l.b16 %v718
    %v1805 = vunpack.c.h.b16 %v718
    %v1806 = vunpack.c.l.b16 %v719
    %v1807 = vunpack.c.h.b16 %v719
    %v1808 = vunpack.c.l.b16 %v720
    %v1809 = vunpack.c.h.b16 %v720
    %v1810 = vunpack.c.l.b16 %v721
    %v1811 = vunpack.c.h.b16 %v721
    %v1812 = vunpack.c.l.b16 %v722
    %v1813 = vunpack.c.h.b16 %v722
    %v1814 = vunpack.c.l.b16 %v723
    %v1815 = vunpack.c.h.b16 %v723
    %v1816 = vunpack.c.l.b16 %v724
    %v1817 = vunpack.c.h.b16 %v724
    %v1818 = vunpack.c.l.b16 %v725
    %v1819 = vunpack.c.h.b16 %v725
    %v1820 = vunpack.c.l.b16 %v726
    %v1821 = vunpack.c.h.b16 %v726
    %v1822 = vunpack.c.l.b16 %v727
    %v1823 = vunpack.c.h.b16 %v727
    %v1824 = vunpack.c.l.b16 %v728
    %v1825 = vunpack.c.h.b16 %v728
    %v1826 = vunpack.c.l.b16 %v729
    %v1827 = vunpack.c.h.b16 %v729
    %v1828 = vunpack.c.l.b16 %v730
    %v1829 = vunpack.c.h.b16 %v730
    %v1830 = vunpack.c.l.b16 %v731
    %v1831 = vunpack.c.h.b16 %v731
    %v1832 = vunpack.c.l.b16 %v732
    %v1833 = vunpack.c.h.b16 %v732
    %v1834 = vunpack.c.l.b16 %v733
    %v1835 = vunpack.c.h.b16 %v733
    %v1836 = vunpack.c.l.b16 %v734
    %v1837 = vunpack.c.h.b16 %v734
    %v1838 = vunpack.c.l.b16 %v735
    %v1839 = vunpack.c.h.b16 %v735
    %v1840 = vunpack.c.l.b16 %v736
    %v1841 = vunpack.c.h.b16 %v736
    %v1842 = vunpack.c.l.b16 %v737
    %v1843 = vunpack.c.h.b16 %v737
    %v1844 = vunpack.c.l.b16 %v738
    %v1845 = vunpack.c.h.b16 %v738
    %v1846 = vunpack.c.l.b16 %v739
    %v1847 = vunpack.c.h.b16 %v739
    %v1848 = vunpack.c.l.b16 %v740
    %v1849 = vunpack.c.h.b16 %v740
    %v1850 = vunpack.c.l.b16 %v741
    %v1851 = vunpack.c.h.b16 %v741
    %v1852 = vunpack.c.l.b16 %v742
    %v1853 = vunpack.c.h.b16 %v742
    %v1854 = vunpack.c.l.b16 %v743
    %v1855 = vunpack.c.h.b16 %v743
    %v1856 = vunpack.c.l.b16 %v744
    %v1857 = vunpack.c.h.b16 %v744
    %v1858 = vunpack.c.l.b16 %v745
    %v1859 = vunpack.c.h.b16 %v745
    %v1860 = vunpack.c.l.b16 %v746
    %v1861 = vunpack.c.h.b16 %v746
    %v1862 = vunpack.c.l.b16 %v747
    %v1863 = vunpack.c.h.b16 %v747
    %v1864 = vunpack.c.l.b16 %v748
    %v1865 = vunpack.c.h.b16 %v748
    %v1866 = vunpack.c.l.b16 %v749
    %v1867 = vunpack.c.h.b16 %v749
    %v1868 = vunpack.c.l.b16 %v750
    %v1869 = vunpack.c.h.b16 %v750
    %v1870 = vunpack.c.l.b16 %v751
    %v1871 = vunpack.c.h.b16 %v751
    %v1872 = vunpack.c.l.b16 %v752
    %v1873 = vunpack.c.h.b16 %v752
    %v1874 = vunpack.c.l.b16 %v753
    %v1875 = vunpack.c.h.b16 %v753
    %v1876 = vunpack.c.l.b16 %v754
    %v1877 = vunpack.c.h.b16 %v754
    %v1878 = vunpack.c.l.b16 %v755
    %v1879 = vunpack.c.h.b16 %v755
    %v1880 = vunpack.c.l.b16 %v756
    %v1881 = vunpack.c.h.b16 %v756
    %v1882 = vunpack.c.l.b16 %v757
    %v1883 = vunpack.c.h.b16 %v757
    %v1884 = vunpack.c.l.b16 %v758
    %v1885 = vunpack.c.h.b16 %v758
    %v1886 = vunpack.c.l.b16 %v759
    %v1887 = vunpack.c.h.b16 %v759
    %v1888 = vunpack.c.l.b16 %v760
    %v1889 = vunpack.c.h.b16 %v760
    %v1890 = vunpack.c.l.b16 %v761
    %v1891 = vunpack.c.h.b16 %v761
    %v1892 = vunpack.c.l.b16 %v762
    %v1893 = vunpack.c.h.b16 %v762
    %v1894 = vunpack.c.l.b16 %v763
    %v1895 = vunpack.c.h.b16 %v763
    %v1896 = vunpack.c.l.b16 %v764
    %v1897 = vunpack.c.h.b16 %v764
    %v1898 = vunpack.c.l.b16 %v765
    %v1899 = vunpack.c.h.b16 %v765
    %v1900 = vunpack.c.l.b16 %v766
    %v1901 = vunpack.c.h.b16 %v766
    %v1902 = vunpack.c.l.b16 %v767
    %v1903 = vunpack.c.h.b16 %v767
    %v1904 = vunpack.c.l.b16 %v768
    %v1905 = vunpack.c.h.b16 %v768
    %v1906 = vunpack.c.l.b16 %v769
    %v1907 = vunpack.c.h.b16 %v769
    %v1908 = vunpack.c.l.b16 %v770
    %v1909 = vunpack.c.h.b16 %v770
    %v1910 = vunpack.c.l.b16 %v771
    %v1911 = vunpack.c.h.b16 %v771
    %v1912 = vunpack.c.l.b16 %v772
    %v1913 = vunpack.c.h.b16 %v772
    %v1914 = vunpack.c.l.b16 %v773
    %v1915 = vunpack.c.h.b16 %v773
    %v1916 = vunpack.c.l.b16 %v774
    %v1917 = vunpack.c.h.b16 %v774
    %v1918 = vunpack.c.l.b16 %v775
    %v1919 = vunpack.c.h.b16 %v775
    %v1920 = vunpack.c.l.b16 %v776
    %v1921 = vunpack.c.h.b16 %v776
    %v1922 = vunpack.c.l.b16 %v777
    %v1923 = vunpack.c.h.b16 %v777
    %v1924 = vunpack.c.l.b16 %v778
    %v1925 = vunpack.c.h.b16 %v778
    %v1926 = vunpack.c.l.b16 %v779
    %v1927 = vunpack.c.h.b16 %v779
    %v1928 = vunpack.c.l.b16 %v780
    %v1929 = vunpack.c.h.b16 %v780
    %v1930 = vunpack.c.l.b16 %v781
    %v1931 = vunpack.c.h.b16 %v781
    %v1932 = vunpack.c.l.b16 %v782
    %v1933 = vunpack.c.h.b16 %v782
    %v1934 = vunpack.c.l.b16 %v783
    %v1935 = vunpack.c.h.b16 %v783
    %v1936 = vunpack.c.l.b16 %v784
    %v1937 = vunpack.c.h.b16 %v784
    %v1938 = vunpack.c.l.b16 %v785
    %v1939 = vunpack.c.h.b16 %v785
    %v1940 = vunpack.c.l.b16 %v786
    %v1941 = vunpack.c.h.b16 %v786
    %v1942 = vunpack.c.l.b16 %v787
    %v1943 = vunpack.c.h.b16 %v787
    %v1944 = vunpack.c.l.b16 %v788
    %v1945 = vunpack.c.h.b16 %v788
    %v1946 = vunpack.c.l.b16 %v789
    %v1947 = vunpack.c.h.b16 %v789
    %v1948 = vunpack.c.l.b16 %v790
    %v1949 = vunpack.c.h.b16 %v790
    %v1950 = vunpack.c.l.b16 %v791
    %v1951 = vunpack.c.h.b16 %v791
    %v1952 = vunpack.c.l.b16 %v792
    %v1953 = vunpack.c.h.b16 %v792
    %v1954 = vunpack.c.l.b16 %v793
    %v1955 = vunpack.c.h.b16 %v793
    %v1956 = vunpack.c.l.b16 %v794
    %v1957 = vunpack.c.h.b16 %v794
    %v1958 = vunpack.c.l.b16 %v795
    %v1959 = vunpack.c.h.b16 %v795
    %v1960 = vunpack.c.l.b16 %v796
    %v1961 = vunpack.c.h.b16 %v796
    %v1962 = vunpack.c.l.b16 %v797
    %v1963 = vunpack.c.h.b16 %v797
    %v1964 = vunpack.c.l.b16 %v798
    %v1965 = vunpack.c.h.b16 %v798
    %v1966 = vunpack.c.l.b16 %v799
    %v1967 = vunpack.c.h.b16 %v799
    %v1968 = vunpack.c.l.b16 %v800
    %v1969 = vunpack.c.h.b16 %v800
    %v1970 = vunpack.c.l.b16 %v801
    %v1971 = vunpack.c.h.b16 %v801
    %v1972 = vunpack.c.l.b16 %v802
    %v1973 = vunpack.c.h.b16 %v802
    %v1974 = vunpack.c.l.b16 %v803
    %v1975 = vunpack.c.h.b16 %v803
    %v1976 = vunpack.c.l.b16 %v804
    %v1977 = vunpack.c.h.b16 %v804
    %v1978 = vunpack.c.l.b16 %v805
    %v1979 = vunpack.c.h.b16 %v805
    %v1980 = vunpack.c.l.b16 %v806
    %v1981 = vunpack.c.h.b16 %v806
    %v1982 = vunpack.c.l.b16 %v807
    %v1983 = vunpack.c.h.b16 %v807
    %v1984 = vunpack.c.l.b16 %v808
    %v1985 = vunpack.c.h.b16 %v808
    %v1986 = vunpack.c.l.b16 %v809
    %v1987 = vunpack.c.h.b16 %v809
    %v1988 = vunpack.c.l.b16 %v810
    %v1989 = vunpack.c.h.b16 %v810
    %v1990 = vunpack.c.l.b16 %v811
    %v1991 = vunpack.c.h.b16 %v811
    %v1992 = vunpack.c.l.b16 %v812
    %v1993 = vunpack.c.h.b16 %v812
    %v1994 = vunpack.c.l.b16 %v813
    %v1995 = vunpack.c.h.b16 %v813
    %v1996 = vunpack.c.l.b16 %v814
    %v1997 = vunpack.c.h.b16 %v814
    %v1998 = vunpack.c.l.b16 %v815
    %v1999 = vunpack.c.h.b16 %v815
    %v2000 = vunpack.c.l.b16 %v816
    %v2001 = vunpack.c.h.b16 %v816
    %v2002 = vunpack.c.l.b16 %v817
    %v2003 = vunpack.c.h.b16 %v817
    %v2004 = vunpack.c.l.b16 %v818
    %v2005 = vunpack.c.h.b16 %v818
    %v2006 = vunpack.c.l.b16 %v819
    %v2007 = vunpack.c.h.b16 %v819
    %v2008 = vunpack.c.l.b16 %v820
    %v2009 = vunpack.c.h.b16 %v820
    %v2010 = vunpack.c.l.b16 %v821
    %v2011 = vunpack.c.h.b16 %v821
    %v2012 = vunpack.c.l.b16 %v822
    %v2013 = vunpack.c.h.b16 %v822
    %v2014 = vunpack.c.l.b16 %v823
    %v2015 = vunpack.c.h.b16 %v823
    %v2016 = vunpack.c.l.b16 %v824
    %v2017 = vunpack.c.h.b16 %v824
    %v2018 = vunpack.c.l.b16 %v825
    %v2019 = vunpack.c.h.b16 %v825
    %v2020 = vunpack.c.l.b16 %v826
    %v2021 = vunpack.c.h.b16 %v826
    %v2022 = vunpack.c.l.b16 %v827
    %v2023 = vunpack.c.h.b16 %v827
    %v2024 = vunpack.c.l.b16 %v828
    %v2025 = vunpack.c.h.b16 %v828
    %v2026 = vunpack.c.l.b16 %v829
    %v2027 = vunpack.c.h.b16 %v829
    %v2028 = vunpack.c.l.b16 %v830
    %v2029 = vunpack.c.h.b16 %v830
    %v2030 = vunpack.c.l.b16 %v831
    %v2031 = vunpack.c.h.b16 %v831
    %v2032 = vunpack.c.l.b16 %v832
    %v2033 = vunpack.c.h.b16 %v832
    %v2034 = vunpack.c.l.b16 %v833
    %v2035 = vunpack.c.h.b16 %v833
    %v2036 = vunpack.c.l.b16 %v834
    %v2037 = vunpack.c.h.b16 %v834
    %v2038 = vunpack.c.l.b16 %v835
    %v2039 = vunpack.c.h.b16 %v835
    %v2040 = vunpack.c.l.b16 %v836
    %v2041 = vunpack.c.h.b16 %v836
    %v2042 = vunpack.c.l.b16 %v837
    %v2043 = vunpack.c.h.b16 %v837
    %v2044 = vunpack.c.l.b16 %v838
    %v2045 = vunpack.c.h.b16 %v838
    %v2046 = vunpack.c.l.b16 %v839
    %v2047 = vunpack.c.h.b16 %v839
    %v2048 = vunpack.c.l.b16 %v840
    %v2049 = vunpack.c.h.b16 %v840
    %v2050 = vunpack.c.l.b16 %v841
    %v2051 = vunpack.c.h.b16 %v841
    %v2052 = vunpack.c.l.b16 %v842
    %v2053 = vunpack.c.h.b16 %v842
    %v2054 = vunpack.c.l.b16 %v843
    %v2055 = vunpack.c.h.b16 %v843
    %v2056 = vunpack.c.l.b16 %v844
    %v2057 = vunpack.c.h.b16 %v844
    %v2058 = vunpack.c.l.b16 %v845
    %v2059 = vunpack.c.h.b16 %v845
    %v2060 = vunpack.c.l.b16 %v846
    %v2061 = vunpack.c.h.b16 %v846
    %v2062 = vunpack.c.l.b16 %v847
    %v2063 = vunpack.c.h.b16 %v847
    %v2064 = vunpack.c.l.b16 %v848
    %v2065 = vunpack.c.h.b16 %v848
    %v2066 = vunpack.c.l.b16 %v849
    %v2067 = vunpack.c.h.b16 %v849
    %v2068 = vunpack.c.l.b16 %v850
    %v2069 = vunpack.c.h.b16 %v850
    %v2070 = vunpack.c.l.b16 %v851
    %v2071 = vunpack.c.h.b16 %v851
    %v2072 = vunpack.c.l.b16 %v852
    %v2073 = vunpack.c.h.b16 %v852
    %v2074 = vunpack.c.l.b16 %v853
    %v2075 = vunpack.c.h.b16 %v853
    %v2076 = vunpack.c.l.b16 %v854
    %v2077 = vunpack.c.h.b16 %v854
    %v2078 = vunpack.c.l.b16 %v855
    %v2079 = vunpack.c.h.b16 %v855
    %v2080 = vunpack.c.l.b16 %v856
    %v2081 = vunpack.c.h.b16 %v856
    %v2082 = vunpack.c.l.b16 %v857
    %v2083 = vunpack.c.h.b16 %v857
    %v2084 = vunpack.c.l.b16 %v858
    %v2085 = vunpack.c.h.b16 %v858
    %v2086 = vunpack.c.l.b16 %v859
    %v2087 = vunpack.c.h.b16 %v859
    %v2088 = vunpack.c.l.b16 %v860
    %v2089 = vunpack.c.h.b16 %v860
    %v2090 = vunpack.c.l.b16 %v861
    %v2091 = vunpack.c.h.b16 %v861
    %v2092 = vunpack.c.l.b16 %v862
    %v2093 = vunpack.c.h.b16 %v862
    %v2094 = vunpack.c.l.b16 %v863
    %v2095 = vunpack.c.h.b16 %v863
    %v2096 = vunpack.c.l.b16 %v864
    %v2097 = vunpack.c.h.b16 %v864
    %v2098 = vunpack.c.l.b16 %v865
    %v2099 = vunpack.c.h.b16 %v865
    %v2100 = vunpack.c.l.b16 %v866
    %v2101 = vunpack.c.h.b16 %v866
    %v2102 = vunpack.c.l.b16 %v867
    %v2103 = vunpack.c.h.b16 %v867
    %v2104 = vunpack.c.l.b16 %v868
    %v2105 = vunpack.c.h.b16 %v868
    %v2106 = vunpack.c.l.b16 %v869
    %v2107 = vunpack.c.h.b16 %v869
    %v2108 = vunpack.c.l.b16 %v870
    %v2109 = vunpack.c.h.b16 %v870
    %v2110 = vunpack.c.l.b16 %v871
    %v2111 = vunpack.c.h.b16 %v871
    %v2112 = vunpack.c.l.b16 %v872
    %v2113 = vunpack.c.h.b16 %v872
    %v2114 = vunpack.c.l.b16 %v873
    %v2115 = vunpack.c.h.b16 %v873
    %v2116 = vunpack.c.l.b16 %v874
    %v2117 = vunpack.c.h.b16 %v874
    %v2118 = vunpack.c.l.b16 %v875
    %v2119 = vunpack.c.h.b16 %v875
    %v2120 = vunpack.c.l.b16 %v876
    %v2121 = vunpack.c.h.b16 %v876
    %v2122 = vunpack.c.l.b16 %v877
    %v2123 = vunpack.c.h.b16 %v877
    %v2124 = vunpack.c.l.b16 %v878
    %v2125 = vunpack.c.h.b16 %v878
    %v2126 = vunpack.c.l.b16 %v879
    %v2127 = vunpack.c.h.b16 %v879
    %v2128 = vunpack.c.l.b16 %v880
    %v2129 = vunpack.c.h.b16 %v880
    %v2130 = vunpack.c.l.b16 %v881
    %v2131 = vunpack.c.h.b16 %v881
    %v2132 = vunpack.c.l.b16 %v882
    %v2133 = vunpack.c.h.b16 %v882
    %v2134 = vunpack.c.l.b16 %v883
    %v2135 = vunpack.c.h.b16 %v883
    %v2136 = vunpack.c.l.b16 %v884
    %v2137 = vunpack.c.h.b16 %v884
    %v2138 = vunpack.c.l.b16 %v885
    %v2139 = vunpack.c.h.b16 %v885
    %v2140 = vunpack.c.l.b16 %v886
    %v2141 = vunpack.c.h.b16 %v886
    %v2142 = vunpack.c.l.b16 %v887
    %v2143 = vunpack.c.h.b16 %v887
    %v2144 = vunpack.c.l.b16 %v888
    %v2145 = vunpack.c.h.b16 %v888
    %v2146 = vunpack.c.l.b16 %v889
    %v2147 = vunpack.c.h.b16 %v889
    %v2148 = vunpack.c.l.b16 %v890
    %v2149 = vunpack.c.h.b16 %v890
    %v2150 = vunpack.c.l.b16 %v891
    %v2151 = vunpack.c.h.b16 %v891
    %v2152 = vunpack.c.l.b16 %v892
    %v2153 = vunpack.c.h.b16 %v892
    %v2154 = vunpack.c.l.b16 %v893
    %v2155 = vunpack.c.h.b16 %v893
    %v2156 = vunpack.c.l.b16 %v894
    %v2157 = vunpack.c.h.b16 %v894
    %v2158 = vunpack.c.l.b16 %v895
    %v2159 = vunpack.c.h.b16 %v895
    %v2160 = vunpack.c.l.b16 %v896
    %v2161 = vunpack.c.h.b16 %v896
    %v2162 = vunpack.c.l.b16 %v897
    %v2163 = vunpack.c.h.b16 %v897
    %v2164 = vunpack.c.l.b16 %v898
    %v2165 = vunpack.c.h.b16 %v898
    %v2166 = vunpack.c.l.b16 %v899
    %v2167 = vunpack.c.h.b16 %v899
    %v2168 = vunpack.c.l.b16 %v900
    %v2169 = vunpack.c.h.b16 %v900
    %v2170 = vunpack.c.l.b16 %v901
    %v2171 = vunpack.c.h.b16 %v901
    %v2172 = vunpack.c.l.b16 %v902
    %v2173 = vunpack.c.h.b16 %v902
    %v2174 = vunpack.c.l.b16 %v903
    %v2175 = vunpack.c.h.b16 %v903
    %v2176 = vunpack.c.l.b16 %v904
    %v2177 = vunpack.c.h.b16 %v904
    %v2178 = vunpack.c.l.b16 %v905
    %v2179 = vunpack.c.h.b16 %v905
    %v2180 = vunpack.c.l.b16 %v906
    %v2181 = vunpack.c.h.b16 %v906
    %v2182 = vunpack.c.l.b16 %v907
    %v2183 = vunpack.c.h.b16 %v907
    %v2184 = vunpack.c.l.b16 %v908
    %v2185 = vunpack.c.h.b16 %v908
    %v2186 = vunpack.c.l.b16 %v909
    %v2187 = vunpack.c.h.b16 %v909
    %v2188 = vunpack.c.l.b16 %v910
    %v2189 = vunpack.c.h.b16 %v910
    %v2190 = vunpack.c.l.b16 %v911
    %v2191 = vunpack.c.h.b16 %v911
    %v2192 = vunpack.c.l.b16 %v912
    %v2193 = vunpack.c.h.b16 %v912
    %v2194 = vunpack.c.l.b16 %v913
    %v2195 = vunpack.c.h.b16 %v913
    %v2196 = vunpack.c.l.b16 %v914
    %v2197 = vunpack.c.h.b16 %v914
    %v2198 = vunpack.c.l.b16 %v915
    %v2199 = vunpack.c.h.b16 %v915
    %v2200 = vunpack.c.l.b16 %v916
    %v2201 = vunpack.c.h.b16 %v916
    %v2202 = vunpack.c.l.b16 %v917
    %v2203 = vunpack.c.h.b16 %v917
    %v2204 = vunpack.c.l.b16 %v918
    %v2205 = vunpack.c.h.b16 %v918
    %v2206 = vunpack.c.l.b16 %v919
    %v2207 = vunpack.c.h.b16 %v919
    %v2208 = vunpack.c.l.b16 %v920
    %v2209 = vunpack.c.h.b16 %v920
    %v2210 = vunpack.c.l.b16 %v921
    %v2211 = vunpack.c.h.b16 %v921
    %v2212 = vunpack.c.l.b16 %v922
    %v2213 = vunpack.c.h.b16 %v922
    %v2214 = vunpack.c.l.b16 %v923
    %v2215 = vunpack.c.h.b16 %v923
    %v2216 = vunpack.c.l.b16 %v924
    %v2217 = vunpack.c.h.b16 %v924
    %v2218 = vunpack.c.l.b16 %v925
    %v2219 = vunpack.c.h.b16 %v925
    %v2220 = vunpack.c.l.b16 %v926
    %v2221 = vunpack.c.h.b16 %v926
    %v2222 = vunpack.c.l.b16 %v927
    %v2223 = vunpack.c.h.b16 %v927
    %v2224 = vunpack.c.l.b16 %v928
    %v2225 = vunpack.c.h.b16 %v928
    %v2226 = vunpack.c.l.b16 %v929
    %v2227 = vunpack.c.h.b16 %v929
    %v2228 = vunpack.c.l.b16 %v930
    %v2229 = vunpack.c.h.b16 %v930
    %v2230 = vunpack.c.l.b16 %v931
    %v2231 = vunpack.c.h.b16 %v931
    %v2232 = vunpack.c.l.b16 %v932
    %v2233 = vunpack.c.h.b16 %v932
    %v2234 = vunpack.c.l.b16 %v933
    %v2235 = vunpack.c.h.b16 %v933
    %v2236 = vunpack.c.l.b16 %v934
    %v2237 = vunpack.c.h.b16 %v934
    %v2238 = vunpack.c.l.b16 %v935
    %v2239 = vunpack.c.h.b16 %v935
    %v2240 = vunpack.c.l.b16 %v936
    %v2241 = vunpack.c.h.b16 %v936
    %v2242 = vunpack.c.l.b16 %v937
    %v2243 = vunpack.c.h.b16 %v937
    %v2244 = vunpack.c.l.b16 %v938
    %v2245 = vunpack.c.h.b16 %v938
    %v2246 = vunpack.c.l.b16 %v939
    %v2247 = vunpack.c.h.b16 %v939
    %v2248 = vunpack.c.l.b16 %v940
    %v2249 = vunpack.c.h.b16 %v940
    %v2250 = vunpack.c.l.b16 %v941
    %v2251 = vunpack.c.h.b16 %v941
    %v2252 = vunpack.c.l.b16 %v942
    %v2253 = vunpack.c.h.b16 %v942
    %v2254 = vunpack.c.l.b16 %v943
    %v2255 = vunpack.c.h.b16 %v943
    %v2256 = vunpack.c.l.b16 %v944
    %v2257 = vunpack.c.h.b16 %v944
    %v2258 = vunpack.c.l.b16 %v945
    %v2259 = vunpack.c.h.b16 %v945
    %v2260 = vunpack.c.l.b16 %v946
    %v2261 = vunpack.c.h.b16 %v946
    %v2262 = vunpack.c.l.b16 %v947
    %v2263 = vunpack.c.h.b16 %v947
    %v2264 = vunpack.c.l.b16 %v948
    %v2265 = vunpack.c.h.b16 %v948
    %v2266 = vunpack.c.l.b16 %v949
    %v2267 = vunpack.c.h.b16 %v949
    %v2268 = vunpack.c.l.b16 %v950
    %v2269 = vunpack.c.h.b16 %v950
    %v2270 = vunpack.c.l.b16 %v951
    %v2271 = vunpack.c.h.b16 %v951
    %v2272 = vunpack.c.l.b16 %v952
    %v2273 = vunpack.c.h.b16 %v952
    %v2274 = vunpack.c.l.b16 %v953
    %v2275 = vunpack.c.h.b16 %v953
    %v2276 = vunpack.c.l.b16 %v954
    %v2277 = vunpack.c.h.b16 %v954
    %v2278 = vunpack.c.l.b16 %v955
    %v2279 = vunpack.c.h.b16 %v955
    %v2280 = vunpack.c.l.b16 %v956
    %v2281 = vunpack.c.h.b16 %v956
    %v2282 = vunpack.c.l.b16 %v957
    %v2283 = vunpack.c.h.b16 %v957
    %v2284 = vunpack.c.l.b16 %v958
    %v2285 = vunpack.c.h.b16 %v958
    %v2286 = vunpack.c.l.b16 %v959
    %v2287 = vunpack.c.h.b16 %v959
    %v2288 = vunpack.c.l.b16 %v960
    %v2289 = vunpack.c.h.b16 %v960
    %v2290 = vunpack.c.l.b16 %v961
    %v2291 = vunpack.c.h.b16 %v961
    %v2292 = vunpack.c.l.b16 %v962
    %v2293 = vunpack.c.h.b16 %v962
    %v2294 = vunpack.c.l.b16 %v963
    %v2295 = vunpack.c.h.b16 %v963
    %v2296 = vunpack.c.l.b16 %v964
    %v2297 = vunpack.c.h.b16 %v964
    %v2298 = vunpack.c.l.b16 %v965
    %v2299 = vunpack.c.h.b16 %v965
    %v2300 = vunpack.c.l.b16 %v966
    %v2301 = vunpack.c.h.b16 %v966
    %v2302 = vunpack.c.l.b16 %v967
    %v2303 = vunpack.c.h.b16 %v967
    %v2304 = vunpack.c.l.b16 %v968
    %v2305 = vunpack.c.h.b16 %v968
    %v2306 = vunpack.c.l.b16 %v969
    %v2307 = vunpack.c.h.b16 %v969
    %v2308 = vunpack.c.l.b16 %v970
    %v2309 = vunpack.c.h.b16 %v970
    %v2310 = vunpack.c.l.b16 %v971
    %v2311 = vunpack.c.h.b16 %v971
    %v2312 = vunpack.c.l.b16 %v972
    %v2313 = vunpack.c.h.b16 %v972
    %v2314 = vunpack.c.l.b16 %v973
    %v2315 = vunpack.c.h.b16 %v973
    %v2316 = vunpack.c.l.b16 %v974
    %v2317 = vunpack.c.h.b16 %v974
    %v2318 = vunpack.c.l.b16 %v975
    %v2319 = vunpack.c.h.b16 %v975
    %v2320 = vunpack.c.l.b16 %v976
    %v2321 = vunpack.c.h.b16 %v976
    %v2322 = vunpack.c.l.b16 %v977
    %v2323 = vunpack.c.h.b16 %v977
    %v2324 = vunpack.c.l.b16 %v978
    %v2325 = vunpack.c.h.b16 %v978
    %v2326 = vunpack.c.l.b16 %v979
    %v2327 = vunpack.c.h.b16 %v979
    %v2328 = vunpack.c.l.b16 %v980
    %v2329 = vunpack.c.h.b16 %v980
    %v2330 = vunpack.c.l.b16 %v981
    %v2331 = vunpack.c.h.b16 %v981
    %v2332 = vunpack.c.l.b16 %v982
    %v2333 = vunpack.c.h.b16 %v982
    %v2334 = vunpack.c.l.b16 %v983
    %v2335 = vunpack.c.h.b16 %v983
    %v2336 = vunpack.c.l.b16 %v984
    %v2337 = vunpack.c.h.b16 %v984
    %v2338 = vunpack.c.l.b16 %v985
    %v2339 = vunpack.c.h.b16 %v985
    %v2340 = vunpack.c.l.b16 %v986
    %v2341 = vunpack.c.h.b16 %v986
    %v2342 = vunpack.c.l.b16 %v987
    %v2343 = vunpack.c.h.b16 %v987
    %v2344 = vunpack.c.l.b16 %v988
    %v2345 = vunpack.c.h.b16 %v988
    %v2346 = vunpack.c.l.b16 %v989
    %v2347 = vunpack.c.h.b16 %v989
    %v2348 = vunpack.c.l.b16 %v990
    %v2349 = vunpack.c.h.b16 %v990
    %v2350 = vunpack.c.l.b16 %v991
    %v2351 = vunpack.c.h.b16 %v991
    %v2352 = vunpack.c.l.b16 %v992
    %v2353 = vunpack.c.h.b16 %v992
    %v2354 = vunpack.c.l.b16 %v993
    %v2355 = vunpack.c.h.b16 %v993
    %v2356 = vunpack.c.l.b16 %v994
    %v2357 = vunpack.c.h.b16 %v994
    %v2358 = vunpack.c.l.b16 %v995
    %v2359 = vunpack.c.h.b16 %v995
    %v2360 = vunpack.c.l.b16 %v996
    %v2361 = vunpack.c.h.b16 %v996
    %v2362 = vunpack.c.l.b16 %v997
    %v2363 = vunpack.c.h.b16 %v997
    %v2364 = vunpack.c.l.b16 %v998
    %v2365 = vunpack.c.h.b16 %v998
    %v2366 = vunpack.c.l.b16 %v999
    %v2367 = vunpack.c.h.b16 %v999
    %v2368 = vunpack.c.l.b16 %v1000
    %v2369 = vunpack.c.h.b16 %v1000
    %v2370 = vunpack.c.l.b16 %v1001
    %v2371 = vunpack.c.h.b16 %v1001
    %v2372 = vunpack.c.l.b16 %v1002
    %v2373 = vunpack.c.h.b16 %v1002
    %v2374 = vunpack.c.l.b16 %v1003
    %v2375 = vunpack.c.h.b16 %v1003
    %v2376 = vunpack.c.l.b16 %v1004
    %v2377 = vunpack.c.h.b16 %v1004
    %v2378 = vunpack.c.l.b16 %v1005
    %v2379 = vunpack.c.h.b16 %v1005
    %v2380 = vunpack.c.l.b16 %v1006
    %v2381 = vunpack.c.h.b16 %v1006
    %v2382 = vunpack.c.l.b16 %v1007
    %v2383 = vunpack.c.h.b16 %v1007
    %v2384 = vunpack.c.l.b16 %v1008
    %v2385 = vunpack.c.h.b16 %v1008
    %v2386 = vunpack.c.l.b16 %v1009
    %v2387 = vunpack.c.h.b16 %v1009
    %v2388 = vunpack.c.l.b16 %v1010
    %v2389 = vunpack.c.h.b16 %v1010
    %v2390 = vunpack.c.l.b16 %v1011
    %v2391 = vunpack.c.h.b16 %v1011
    %v2392 = vunpack.c.l.b16 %v1012
    %v2393 = vunpack.c.h.b16 %v1012
    %v2394 = vunpack.c.l.b16 %v1013
    %v2395 = vunpack.c.h.b16 %v1013
    %v2396 = vunpack.c.l.b16 %v1014
    %v2397 = vunpack.c.h.b16 %v1014
    %v2398 = vunpack.c.l.b16 %v1015
    %v2399 = vunpack.c.h.b16 %v1015
    %v2400 = vunpack.c.l.b16 %v1016
    %v2401 = vunpack.c.h.b16 %v1016
    %v2402 = vunpack.c.l.b16 %v1017
    %v2403 = vunpack.c.h.b16 %v1017
    %v2404 = vunpack.c.l.b16 %v1018
    %v2405 = vunpack.c.h.b16 %v1018
    %v2406 = vunpack.c.l.b16 %v1019
    %v2407 = vunpack.c.h.b16 %v1019
    %v2408 = vunpack.c.l.b16 %v1020
    %v2409 = vunpack.c.h.b16 %v1020
    %v2410 = vunpack.c.l.b16 %v1021
    %v2411 = vunpack.c.h.b16 %v1021
    %v2412 = vunpack.c.l.b16 %v1022
    %v2413 = vunpack.c.h.b16 %v1022
    %v2414 = vunpack.c.l.b16 %v1023
    %v2415 = vunpack.c.h.b16 %v1023
    %v2416 = vunpack.c.l.b16 %v1024
    %v2417 = vunpack.c.h.b16 %v1024
    %v2418 = vunpack.c.l.b16 %v1025
    %v2419 = vunpack.c.h.b16 %v1025
    %v2420 = vunpack.c.l.b16 %v1026
    %v2421 = vunpack.c.h.b16 %v1026
    %v2422 = vunpack.c.l.b16 %v1027
    %v2423 = vunpack.c.h.b16 %v1027
    %v2424 = vunpack.c.l.b16 %v1028
    %v2425 = vunpack.c.h.b16 %v1028
    %v2426 = vunpack.c.l.b16 %v1029
    %v2427 = vunpack.c.h.b16 %v1029
    %v2428 = vunpack.c.l.b16 %v1030
    %v2429 = vunpack.c.h.b16 %v1030
    %v2430 = vunpack.c.l.b16 %v1031
    %v2431 = vunpack.c.h.b16 %v1031
    %v2432 = vunpack.c.l.b16 %v1032
    %v2433 = vunpack.c.h.b16 %v1032
    %v2434 = vunpack.c.l.b16 %v1033
    %v2435 = vunpack.c.h.b16 %v1033
    %v2436 = vunpack.c.l.b16 %v1034
    %v2437 = vunpack.c.h.b16 %v1034
    %v2438 = vunpack.c.l.b16 %v1035
    %v2439 = vunpack.c.h.b16 %v1035
    %v2440 = vunpack.c.l.b16 %v1036
    %v2441 = vunpack.c.h.b16 %v1036
    %v2442 = vunpack.c.l.b16 %v1037
    %v2443 = vunpack.c.h.b16 %v1037
    %v2444 = vunpack.c.l.b16 %v1038
    %v2445 = vunpack.c.h.b16 %v1038
    %v2446 = vunpack.c.l.b16 %v1039
    %v2447 = vunpack.c.h.b16 %v1039
    %v2448 = vunpack.c.l.b16 %v1040
    %v2449 = vunpack.c.h.b16 %v1040
    %v2450 = vunpack.c.l.b16 %v1041
    %v2451 = vunpack.c.h.b16 %v1041
    %v2452 = vunpack.c.l.b16 %v1042
    %v2453 = vunpack.c.h.b16 %v1042
    %v2454 = vunpack.c.l.b16 %v1043
    %v2455 = vunpack.c.h.b16 %v1043
    %v2456 = vunpack.c.l.b16 %v1044
    %v2457 = vunpack.c.h.b16 %v1044
    %v2458 = vunpack.c.l.b16 %v1045
    %v2459 = vunpack.c.h.b16 %v1045
    %v2460 = vunpack.c.l.b16 %v1046
    %v2461 = vunpack.c.h.b16 %v1046
    %v2462 = vunpack.c.l.b16 %v1047
    %v2463 = vunpack.c.h.b16 %v1047
    %v2464 = vunpack.c.l.b16 %v1048
    %v2465 = vunpack.c.h.b16 %v1048
    %v2466 = vunpack.c.l.b16 %v1049
    %v2467 = vunpack.c.h.b16 %v1049
    %v2468 = vunpack.c.l.b16 %v1050
    %v2469 = vunpack.c.h.b16 %v1050
    %v2470 = vunpack.c.l.b16 %v1051
    %v2471 = vunpack.c.h.b16 %v1051
    %v2472 = vunpack.c.l.b16 %v1052
    %v2473 = vunpack.c.h.b16 %v1052
    %v2474 = vunpack.c.l.b16 %v1053
    %v2475 = vunpack.c.h.b16 %v1053
    %v2476 = vunpack.c.l.b16 %v1054
    %v2477 = vunpack.c.h.b16 %v1054
    %v2478 = vunpack.c.l.b16 %v1055
    %v2479 = vunpack.c.h.b16 %v1055
    %v2480 = vunpack.c.l.b16 %v1056
    %v2481 = vunpack.c.h.b16 %v1056
    %v2482 = vunpack.c.l.b16 %v1057
    %v2483 = vunpack.c.h.b16 %v1057
    %v2484 = vunpack.c.l.b16 %v1058
    %v2485 = vunpack.c.h.b16 %v1058
    %v2486 = vunpack.c.l.b16 %v1059
    %v2487 = vunpack.c.h.b16 %v1059
    %v2488 = vunpack.c.l.b16 %v1060
    %v2489 = vunpack.c.h.b16 %v1060
    %v2490 = vunpack.c.l.b16 %v1061
    %v2491 = vunpack.c.h.b16 %v1061
    %v2492 = vunpack.c.l.b16 %v1062
    %v2493 = vunpack.c.h.b16 %v1062
    %v2494 = vunpack.c.l.b16 %v1063
    %v2495 = vunpack.c.h.b16 %v1063
    %v2496 = vunpack.c.l.b16 %v1064
    %v2497 = vunpack.c.h.b16 %v1064
    %v2498 = vunpack.c.l.b16 %v1065
    %v2499 = vunpack.c.h.b16 %v1065
    %v2500 = vunpack.c.l.b16 %v1066
    %v2501 = vunpack.c.h.b16 %v1066
    %v2502 = vunpack.c.l.b16 %v1067
    %v2503 = vunpack.c.h.b16 %v1067
    %v2504 = vunpack.c.l.b16 %v1068
    %v2505 = vunpack.c.h.b16 %v1068
    %v2506 = vunpack.c.l.b16 %v1069
    %v2507 = vunpack.c.h.b16 %v1069
    %v2508 = vunpack.c.l.b16 %v1070
    %v2509 = vunpack.c.h.b16 %v1070
    %v2510 = vunpack.c.l.b16 %v1071
    %v2511 = vunpack.c.h.b16 %v1071
    %v2512 = vunpack.c.l.b16 %v1072
    %v2513 = vunpack.c.h.b16 %v1072
    %v2514 = vunpack.c.l.b16 %v1073
    %v2515 = vunpack.c.h.b16 %v1073
    %v2516 = vunpack.c.l.b16 %v1074
    %v2517 = vunpack.c.h.b16 %v1074
    %v2518 = vunpack.c.l.b16 %v1075
    %v2519 = vunpack.c.h.b16 %v1075
    %v2520 = vunpack.c.l.b16 %v1076
    %v2521 = vunpack.c.h.b16 %v1076
    %v2522 = vunpack.c.l.b16 %v1077
    %v2523 = vunpack.c.h.b16 %v1077
    %v2524 = vunpack.c.l.b16 %v1078
    %v2525 = vunpack.c.h.b16 %v1078
    %v2526 = vunpack.c.l.b16 %v1079
    %v2527 = vunpack.c.h.b16 %v1079
    %v2528 = vunpack.c.l.b16 %v1080
    %v2529 = vunpack.c.h.b16 %v1080
    %v2530 = vunpack.c.l.b16 %v1081
    %v2531 = vunpack.c.h.b16 %v1081
    %v2532 = vunpack.c.l.b16 %v1082
    %v2533 = vunpack.c.h.b16 %v1082
    %v2534 = vunpack.c.l.b16 %v1083
    %v2535 = vunpack.c.h.b16 %v1083
    %v2536 = vunpack.c.l.b16 %v1084
    %v2537 = vunpack.c.h.b16 %v1084
    %v2538 = vunpack.c.l.b16 %v1085
    %v2539 = vunpack.c.h.b16 %v1085
    %v2540 = vunpack.c.l.b16 %v1086
    %v2541 = vunpack.c.h.b16 %v1086
    %v2542 = vunpack.c.l.b16 %v1087
    %v2543 = vunpack.c.h.b16 %v1087
    %v2544 = vunpack.c.l.b16 %v1088
    %v2545 = vunpack.c.h.b16 %v1088
    %v2546 = vunpack.c.l.b16 %v1089
    %v2547 = vunpack.c.h.b16 %v1089
    %v2548 = vunpack.c.l.b16 %v1090
    %v2549 = vunpack.c.h.b16 %v1090
    %v2550 = vunpack.c.l.b16 %v1091
    %v2551 = vunpack.c.h.b16 %v1091
    %v2552 = vunpack.c.l.b16 %v1092
    %v2553 = vunpack.c.h.b16 %v1092
    %v2554 = vunpack.c.l.b16 %v1093
    %v2555 = vunpack.c.h.b16 %v1093
    %v2556 = vunpack.c.l.b16 %v1094
    %v2557 = vunpack.c.h.b16 %v1094
    %v2558 = vunpack.c.l.b16 %v1095
    %v2559 = vunpack.c.h.b16 %v1095
    %v2560 = vunpack.c.l.b16 %v1096
    %v2561 = vunpack.c.h.b16 %v1096
    %v2562 = vunpack.c.l.b16 %v1097
    %v2563 = vunpack.c.h.b16 %v1097
    %v2564 = vunpack.c.l.b16 %v1098
    %v2565 = vunpack.c.h.b16 %v1098
    %v2566 = vunpack.c.l.b16 %v1099
    %v2567 = vunpack.c.h.b16 %v1099
    %v2568 = vunpack.c.l.b16 %v1100
    %v2569 = vunpack.c.h.b16 %v1100
    %v2570 = vunpack.c.l.b16 %v1101
    %v2571 = vunpack.c.h.b16 %v1101
    %v2572 = vunpack.c.l.b16 %v1102
    %v2573 = vunpack.c.h.b16 %v1102
    %v2574 = vunpack.c.l.b16 %v1103
    %v2575 = vunpack.c.h.b16 %v1103
    %v2576 = vunpack.c.l.b16 %v1104
    %v2577 = vunpack.c.h.b16 %v1104
    %v2578 = vunpack.c.l.b16 %v1105
    %v2579 = vunpack.c.h.b16 %v1105
    %v2580 = vunpack.c.l.b16 %v1106
    %v2581 = vunpack.c.h.b16 %v1106
    %v2582 = vunpack.c.l.b16 %v1107
    %v2583 = vunpack.c.h.b16 %v1107
    %v2584 = vunpack.c.l.b16 %v1108
    %v2585 = vunpack.c.h.b16 %v1108
    %v2586 = vunpack.c.l.b16 %v1109
    %v2587 = vunpack.c.h.b16 %v1109
    %v2588 = vunpack.c.l.b16 %v1110
    %v2589 = vunpack.c.h.b16 %v1110
    %v2590 = vunpack.c.l.b16 %v1111
    %v2591 = vunpack.c.h.b16 %v1111
    %v2592 = vunpack.c.l.b16 %v1112
    %v2593 = vunpack.c.h.b16 %v1112
    %v2594 = vunpack.c.l.b16 %v1113
    %v2595 = vunpack.c.h.b16 %v1113
    %v2596 = vunpack.c.l.b16 %v1114
    %v2597 = vunpack.c.h.b16 %v1114
    %v2598 = vunpack.c.l.b16 %v1115
    %v2599 = vunpack.c.h.b16 %v1115
    %v2600 = vunpack.c.l.b16 %v1116
    %v2601 = vunpack.c.h.b16 %v1116
    %v2602 = vunpack.c.l.b16 %v1117
    %v2603 = vunpack.c.h.b16 %v1117
    %v2604 = vunpack.c.l.b16 %v1118
    %v2605 = vunpack.c.h.b16 %v1118
    %v2606 = vunpack.c.l.b16 %v1119
    %v2607 = vunpack.c.h.b16 %v1119
    %v2608 = vunpack.c.l.b16 %v1120
    %v2609 = vunpack.c.h.b16 %v1120
    %v2610 = vunpack.c.l.b16 %v1121
    %v2611 = vunpack.c.h.b16 %v1121
    %v2612 = vunpack.c.l.b16 %v1122
    %v2613 = vunpack.c.h.b16 %v1122
    %v2614 = vunpack.c.l.b16 %v1123
    %v2615 = vunpack.c.h.b16 %v1123
    %v2616 = vunpack.c.l.b16 %v1124
    %v2617 = vunpack.c.h.b16 %v1124
    %v2618 = vunpack.c.l.b16 %v1125
    %v2619 = vunpack.c.h.b16 %v1125
    %v2620 = vunpack.c.l.b16 %v1126
    %v2621 = vunpack.c.h.b16 %v1126
    %v2622 = vunpack.c.l.b16 %v1127
    %v2623 = vunpack.c.h.b16 %v1127
    %v2624 = vunpack.c.l.b16 %v1128
    %v2625 = vunpack.c.h.b16 %v1128
    %v2626 = vunpack.c.l.b16 %v1129
    %v2627 = vunpack.c.h.b16 %v1129
    %v2628 = vunpack.c.l.b16 %v1130
    %v2629 = vunpack.c.h.b16 %v1130
    %v2630 = vunpack.c.l.b16 %v1131
    %v2631 = vunpack.c.h.b16 %v1131
    %v2632 = vunpack.c.l.b16 %v1132
    %v2633 = vunpack.c.h.b16 %v1132
    %v2634 = vunpack.c.l.b16 %v1133
    %v2635 = vunpack.c.h.b16 %v1133
    %v2636 = vunpack.c.l.b16 %v1134
    %v2637 = vunpack.c.h.b16 %v1134
    %v2638 = vunpack.c.l.b16 %v1135
    %v2639 = vunpack.c.h.b16 %v1135
    %v2640 = vunpack.c.l.b16 %v1136
    %v2641 = vunpack.c.h.b16 %v1136
    %v2642 = vunpack.c.l.b16 %v1137
    %v2643 = vunpack.c.h.b16 %v1137
    %v2644 = vunpack.c.l.b16 %v1138
    %v2645 = vunpack.c.h.b16 %v1138
    %v2646 = vunpack.c.l.b16 %v1139
    %v2647 = vunpack.c.h.b16 %v1139
    %v2648 = vunpack.c.l.b16 %v1140
    %v2649 = vunpack.c.h.b16 %v1140
    %v2650 = vunpack.c.l.b16 %v1141
    %v2651 = vunpack.c.h.b16 %v1141
    %v2652 = vunpack.c.l.b16 %v1142
    %v2653 = vunpack.c.h.b16 %v1142
    %v2654 = vunpack.c.l.b16 %v1143
    %v2655 = vunpack.c.h.b16 %v1143
    %v2656 = vunpack.c.l.b16 %v1144
    %v2657 = vunpack.c.h.b16 %v1144
    %v2658 = vunpack.c.l.b16 %v1145
    %v2659 = vunpack.c.h.b16 %v1145
    %v2660 = vunpack.c.l.b16 %v1146
    %v2661 = vunpack.c.h.b16 %v1146
    %v2662 = vunpack.c.l.b16 %v1147
    %v2663 = vunpack.c.h.b16 %v1147
    %v2664 = vunpack.c.l.b16 %v1148
    %v2665 = vunpack.c.h.b16 %v1148
    %v2666 = vunpack.c.l.b16 %v1149
    %v2667 = vunpack.c.h.b16 %v1149
    %v2668 = vunpack.c.l.b16 %v1150
    %v2669 = vunpack.c.h.b16 %v1150
    %v2670 = vunpack.c.l.b16 %v1151
    %v2671 = vunpack.c.h.b16 %v1151
    %v2672 = vunpack.c.l.b16 %v1152
    %v2673 = vunpack.c.h.b16 %v1152
    %v2674 = vunpack.c.l.b16 %v1153
    %v2675 = vunpack.c.h.b16 %v1153
    %v2676 = vunpack.c.l.b16 %v1154
    %v2677 = vunpack.c.h.b16 %v1154
    %v2678 = vunpack.c.l.b16 %v1155
    %v2679 = vunpack.c.h.b16 %v1155
    %v2680 = vunpack.c.l.b16 %v1156
    %v2681 = vunpack.c.h.b16 %v1156
    %v2682 = vunpack.c.l.b16 %v1157
    %v2683 = vunpack.c.h.b16 %v1157
    %v2684 = vunpack.c.l.b16 %v1158
    %v2685 = vunpack.c.h.b16 %v1158
    %v2686 = vunpack.c.l.b16 %v1159
    %v2687 = vunpack.c.h.b16 %v1159
    %v2688 = vunpack.c.l.b16 %v1160
    %v2689 = vunpack.c.h.b16 %v1160
    %v2690 = vunpack.c.l.b16 %v1161
    %v2691 = vunpack.c.h.b16 %v1161
    %v2692 = vunpack.c.l.b16 %v1162
    %v2693 = vunpack.c.h.b16 %v1162
    %v2694 = vunpack.c.l.b16 %v1163
    %v2695 = vunpack.c.h.b16 %v1163
    %v2696 = vunpack.c.l.b16 %v1164
    %v2697 = vunpack.c.h.b16 %v1164
    %v2698 = vunpack.c.l.b16 %v1165
    %v2699 = vunpack.c.h.b16 %v1165
    %v2700 = vunpack.c.l.b16 %v1166
    %v2701 = vunpack.c.h.b16 %v1166
    %v2702 = vunpack.c.l.b16 %v1167
    %v2703 = vunpack.c.h.b16 %v1167
    %v2704 = vpack.c.b16 %v1696, %v1680
    %v2705 = vpack.c.b16 %v1697, %v1681
    %v2706 = vpack.c.b16 %v1698, %v1682
    %v2707 = vpack.c.b16 %v1699, %v1683
    %v2708 = vpack.c.b16 %v1700, %v1684
    %v2709 = vpack.c.b16 %v1701, %v1685
    %v2710 = vpack.c.b16 %v1702, %v1686
    %v2711 = vpack.c.b16 %v1703, %v1687
    %v2712 = vpack.c.b16 %v1704, %v1688
    %v2713 = vpack.c.b16 %v1705, %v1689
    %v2714 = vpack.c.b16 %v1706, %v1690
    %v2715 = vpack.c.b16 %v1707, %v1691
    %v2716 = vpack.c.b16 %v1708, %v1692
    %v2717 = vpack.c.b16 %v1709, %v1693
    %v2718 = vpack.c.b16 %v1710, %v1694
    %v2719 = vpack.c.b16 %v1711, %v1695
    %v2720 = vpack.c.b16 %v1728, %v1712
    %v2721 = vpack.c.b16 %v1729, %v1713
    %v2722 = vpack.c.b16 %v1730, %v1714
    %v2723 = vpack.c.b16 %v1731, %v1715
    %v2724 = vpack.c.b16 %v1732, %v1716
    %v2725 = vpack.c.b16 %v1733, %v1717
    %v2726 = vpack.c.b16 %v1734, %v1718
    %v2727 = vpack.c.b16 %v1735, %v1719
    %v2728 = vpack.c.b16 %v1736, %v1720
    %v2729 = vpack.c.b16 %v1737, %v1721
    %v2730 = vpack.c.b16 %v1738, %v1722
    %v2731 = vpack.c.b16 %v1739, %v1723
    %v2732 = vpack.c.b16 %v1740, %v1724
    %v2733 = vpack.c.b16 %v1741, %v1725
    %v2734 = vpack.c.b16 %v1742, %v1726
    %v2735 = vpack.c.b16 %v1743, %v1727
    %v2736 = vpack.c.b16 %v1760, %v1744
    %v2737 = vpack.c.b16 %v1761, %v1745
    %v2738 = vpack.c.b16 %v1762, %v1746
    %v2739 = vpack.c.b16 %v1763, %v1747
    %v2740 = vpack.c.b16 %v1764, %v1748
    %v2741 = vpack.c.b16 %v1765, %v1749
    %v2742 = vpack.c.b16 %v1766, %v1750
    %v2743 = vpack.c.b16 %v1767, %v1751
    %v2744 = vpack.c.b16 %v1768, %v1752
    %v2745 = vpack.c.b16 %v1769, %v1753
    %v2746 = vpack.c.b16 %v1770, %v1754
    %v2747 = vpack.c.b16 %v1771, %v1755
    %v2748 = vpack.c.b16 %v1772, %v1756
    %v2749 = vpack.c.b16 %v1773, %v1757
    %v2750 = vpack.c.b16 %v1774, %v1758
    %v2751 = vpack.c.b16 %v1775, %v1759
    %v2752 = vpack.c.b16 %v1792, %v1776
    %v2753 = vpack.c.b16 %v1793, %v1777
    %v2754 = vpack.c.b16 %v1794, %v1778
    %v2755 = vpack.c.b16 %v1795, %v1779
    %v2756 = vpack.c.b16 %v1796, %v1780
    %v2757 = vpack.c.b16 %v1797, %v1781
    %v2758 = vpack.c.b16 %v1798, %v1782
    %v2759 = vpack.c.b16 %v1799, %v1783
    %v2760 = vpack.c.b16 %v1800, %v1784
    %v2761 = vpack.c.b16 %v1801, %v1785
    %v2762 = vpack.c.b16 %v1802, %v1786
    %v2763 = vpack.c.b16 %v1803, %v1787
    %v2764 = vpack.c.b16 %v1804, %v1788
    %v2765 = vpack.c.b16 %v1805, %v1789
    %v2766 = vpack.c.b16 %v1806, %v1790
    %v2767 = vpack.c.b16 %v1807, %v1791
    %v2768 = vpack.c.b16 %v1824, %v1808
    %v2769 = vpack.c.b16 %v1825, %v1809
    %v2770 = vpack.c.b16 %v1826, %v1810
    %v2771 = vpack.c.b16 %v1827, %v1811
    %v2772 = vpack.c.b16 %v1828, %v1812
    %v2773 = vpack.c.b16 %v1829, %v1813
    %v2774 = vpack.c.b16 %v1830, %v1814
    %v2775 = vpack.c.b16 %v1831, %v1815
    %v2776 = vpack.c.b16 %v1832, %v1816
    %v2777 = vpack.c.b16 %v1833, %v1817
    %v2778 = vpack.c.b16 %v1834, %v1818
    %v2779 = vpack.c.b16 %v1835, %v1819
    %v2780 = vpack.c.b16 %v1836, %v1820
    %v2781 = vpack.c.b16 %v1837, %v1821
    %v2782 = vpack.c.b16 %v1838, %v1822
    %v2783 = vpack.c.b16 %v1839, %v1823
    %v2784 = vpack.c.b16 %v1856, %v1840
    %v2785 = vpack.c.b16 %v1857, %v1841
    %v2786 = vpack.c.b16 %v1858, %v1842
    %v2787 = vpack.c.b16 %v1859, %v1843
    %v2788 = vpack.c.b16 %v1860, %v1844
    %v2789 = vpack.c.b16 %v1861, %v1845
    %v2790 = vpack.c.b16 %v1862, %v1846
    %v2791 = vpack.c.b16 %v1863, %v1847
    %v2792 = vpack.c.b16 %v1864, %v1848
    %v2793 = vpack.c.b16 %v1865, %v1849
    %v2794 = vpack.c.b16 %v1866, %v1850
    %v2795 = vpack.c.b16 %v1867, %v1851
    %v2796 = vpack.c.b16 %v1868, %v1852
    %v2797 = vpack.c.b16 %v1869, %v1853
    %v2798 = vpack.c.b16 %v1870, %v1854
    %v2799 = vpack.c.b16 %v1871, %v1855
    %v2800 = vpack.c.b16 %v1888, %v1872
    %v2801 = vpack.c.b16 %v1889, %v1873
    %v2802 = vpack.c.b16 %v1890, %v1874
    %v2803 = vpack.c.b16 %v1891, %v1875
    %v2804 = vpack.c.b16 %v1892, %v1876
    %v2805 = vpack.c.b16 %v1893, %v1877
    %v2806 = vpack.c.b16 %v1894, %v1878
    %v2807 = vpack.c.b16 %v1895, %v1879
    %v2808 = vpack.c.b16 %v1896, %v1880
    %v2809 = vpack.c.b16 %v1897, %v1881
    %v2810 = vpack.c.b16 %v1898, %v1882
    %v2811 = vpack.c.b16 %v1899, %v1883
    %v2812 = vpack.c.b16 %v1900, %v1884
    %v2813 = vpack.c.b16 %v1901, %v1885
    %v2814 = vpack.c.b16 %v1902, %v1886
    %v2815 = vpack.c.b16 %v1903, %v1887
    %v2816 = vpack.c.b16 %v1920, %v1904
    %v2817 = vpack.c.b16 %v1921, %v1905
    %v2818 = vpack.c.b16 %v1922, %v1906
    %v2819 = vpack.c.b16 %v1923, %v1907
    %v2820 = vpack.c.b16 %v1924, %v1908
    %v2821 = vpack.c.b16 %v1925, %v1909
    %v2822 = vpack.c.b16 %v1926, %v1910
    %v2823 = vpack.c.b16 %v1927, %v1911
    %v2824 = vpack.c.b16 %v1928, %v1912
    %v2825 = vpack.c.b16 %v1929, %v1913
    %v2826 = vpack.c.b16 %v1930, %v1914
    %v2827 = vpack.c.b16 %v1931, %v1915
    %v2828 = vpack.c.b16 %v1932, %v1916
    %v2829 = vpack.c.b16 %v1933, %v1917
    %v2830 = vpack.c.b16 %v1934, %v1918
    %v2831 = vpack.c.b16 %v1935, %v1919
    %v2832 = vpack.c.b16 %v1952, %v1936
    %v2833 = vpack.c.b16 %v1953, %v1937
    %v2834 = vpack.c.b16 %v1954, %v1938
    %v2835 = vpack.c.b16 %v1955, %v1939
    %v2836 = vpack.c.b16 %v1956, %v1940
    %v2837 = vpack.c.b16 %v1957, %v1941
    %v2838 = vpack.c.b16 %v1958, %v1942
    %v2839 = vpack.c.b16 %v1959, %v1943
    %v2840 = vpack.c.b16 %v1960, %v1944
    %v2841 = vpack.c.b16 %v1961, %v1945
    %v2842 = vpack.c.b16 %v1962, %v1946
    %v2843 = vpack.c.b16 %v1963, %v1947
    %v2844 = vpack.c.b16 %v1964, %v1948
    %v2845 = vpack.c.b16 %v1965, %v1949
    %v2846 = vpack.c.b16 %v1966, %v1950
    %v2847 = vpack.c.b16 %v1967, %v1951
    %v2848 = vpack.c.b16 %v1984, %v1968
    %v2849 = vpack.c.b16 %v1985, %v1969
    %v2850 = vpack.c.b16 %v1986, %v1970
    %v2851 = vpack.c.b16 %v1987, %v1971
    %v2852 = vpack.c.b16 %v1988, %v1972
    %v2853 = vpack.c.b16 %v1989, %v1973
    %v2854 = vpack.c.b16 %v1990, %v1974
    %v2855 = vpack.c.b16 %v1991, %v1975
    %v2856 = vpack.c.b16 %v1992, %v1976
    %v2857 = vpack.c.b16 %v1993, %v1977
    %v2858 = vpack.c.b16 %v1994, %v1978
    %v2859 = vpack.c.b16 %v1995, %v1979
    %v2860 = vpack.c.b16 %v1996, %v1980
    %v2861 = vpack.c.b16 %v1997, %v1981
    %v2862 = vpack.c.b16 %v1998, %v1982
    %v2863 = vpack.c.b16 %v1999, %v1983
    %v2864 = vpack.c.b16 %v2016, %v2000
    %v2865 = vpack.c.b16 %v2017, %v2001
    %v2866 = vpack.c.b16 %v2018, %v2002
    %v2867 = vpack.c.b16 %v2019, %v2003
    %v2868 = vpack.c.b16 %v2020, %v2004
    %v2869 = vpack.c.b16 %v2021, %v2005
    %v2870 = vpack.c.b16 %v2022, %v2006
    %v2871 = vpack.c.b16 %v2023, %v2007
    %v2872 = vpack.c.b16 %v2024, %v2008
    %v2873 = vpack.c.b16 %v2025, %v2009
    %v2874 = vpack.c.b16 %v2026, %v2010
    %v2875 = vpack.c.b16 %v2027, %v2011
    %v2876 = vpack.c.b16 %v2028, %v2012
    %v2877 = vpack.c.b16 %v2029, %v2013
    %v2878 = vpack.c.b16 %v2030, %v2014
    %v2879 = vpack.c.b16 %v2031, %v2015
    %v2880 = vpack.c.b16 %v2048, %v2032
    %v2881 = vpack.c.b16 %v2049, %v2033
    %v2882 = vpack.c.b16 %v2050, %v2034
    %v2883 = vpack.c.b16 %v2051, %v2035
    %v2884 = vpack.c.b16 %v2052, %v2036
    %v2885 = vpack.c.b16 %v2053, %v2037
    %v2886 = vpack.c.b16 %v2054, %v2038
    %v2887 = vpack.c.b16 %v2055, %v2039
    %v2888 = vpack.c.b16 %v2056, %v2040
    %v2889 = vpack.c.b16 %v2057, %v2041
    %v2890 = vpack.c.b16 %v2058, %v2042
    %v2891 = vpack.c.b16 %v2059, %v2043
    %v2892 = vpack.c.b16 %v2060, %v2044
    %v2893 = vpack.c.b16 %v2061, %v2045
    %v2894 = vpack.c.b16 %v2062, %v2046
    %v2895 = vpack.c.b16 %v2063, %v2047
    %v2896 = vpack.c.b16 %v2080, %v2064
    %v2897 = vpack.c.b16 %v2081, %v2065
    %v2898 = vpack.c.b16 %v2082, %v2066
    %v2899 = vpack.c.b16 %v2083, %v2067
    %v2900 = vpack.c.b16 %v2084, %v2068
    %v2901 = vpack.c.b16 %v2085, %v2069
    %v2902 = vpack.c.b16 %v2086, %v2070
    %v2903 = vpack.c.b16 %v2087, %v2071
    %v2904 = vpack.c.b16 %v2088, %v2072
    %v2905 = vpack.c.b16 %v2089, %v2073
    %v2906 = vpack.c.b16 %v2090, %v2074
    %v2907 = vpack.c.b16 %v2091, %v2075
    %v2908 = vpack.c.b16 %v2092, %v2076
    %v2909 = vpack.c.b16 %v2093, %v2077
    %v2910 = vpack.c.b16 %v2094, %v2078
    %v2911 = vpack.c.b16 %v2095, %v2079
    %v2912 = vpack.c.b16 %v2112, %v2096
    %v2913 = vpack.c.b16 %v2113, %v2097
    %v2914 = vpack.c.b16 %v2114, %v2098
    %v2915 = vpack.c.b16 %v2115, %v2099
    %v2916 = vpack.c.b16 %v2116, %v2100
    %v2917 = vpack.c.b16 %v2117, %v2101
    %v2918 = vpack.c.b16 %v2118, %v2102
    %v2919 = vpack.c.b16 %v2119, %v2103
    %v2920 = vpack.c.b16 %v2120, %v2104
    %v2921 = vpack.c.b16 %v2121, %v2105
    %v2922 = vpack.c.b16 %v2122, %v2106
    %v2923 = vpack.c.b16 %v2123, %v2107
    %v2924 = vpack.c.b16 %v2124, %v2108
    %v2925 = vpack.c.b16 %v2125, %v2109
    %v2926 = vpack.c.b16 %v2126, %v2110
    %v2927 = vpack.c.b16 %v2127, %v2111
    %v2928 = vpack.c.b16 %v2144, %v2128
    %v2929 = vpack.c.b16 %v2145, %v2129
    %v2930 = vpack.c.b16 %v2146, %v2130
    %v2931 = vpack.c.b16 %v2147, %v2131
    %v2932 = vpack.c.b16 %v2148, %v2132
    %v2933 = vpack.c.b16 %v2149, %v2133
    %v2934 = vpack.c.b16 %v2150, %v2134
    %v2935 = vpack.c.b16 %v2151, %v2135
    %v2936 = vpack.c.b16 %v2152, %v2136
    %v2937 = vpack.c.b16 %v2153, %v2137
    %v2938 = vpack.c.b16 %v2154, %v2138
    %v2939 = vpack.c.b16 %v2155, %v2139
    %v2940 = vpack.c.b16 %v2156, %v2140
    %v2941 = vpack.c.b16 %v2157, %v2141
    %v2942 = vpack.c.b16 %v2158, %v2142
    %v2943 = vpack.c.b16 %v2159, %v2143
    %v2944 = vpack.c.b16 %v2176, %v2160
    %v2945 = vpack.c.b16 %v2177, %v2161
    %v2946 = vpack.c.b16 %v2178, %v2162
    %v2947 = vpack.c.b16 %v2179, %v2163
    %v2948 = vpack.c.b16 %v2180, %v2164
    %v2949 = vpack.c.b16 %v2181, %v2165
    %v2950 = vpack.c.b16 %v2182, %v2166
    %v2951 = vpack.c.b16 %v2183, %v2167
    %v2952 = vpack.c.b16 %v2184, %v2168
    %v2953 = vpack.c.b16 %v2185, %v2169
    %v2954 = vpack.c.b16 %v2186, %v2170
    %v2955 = vpack.c.b16 %v2187, %v2171
    %v2956 = vpack.c.b16 %v2188, %v2172
    %v2957 = vpack.c.b16 %v2189, %v2173
    %v2958 = vpack.c.b16 %v2190, %v2174
    %v2959 = vpack.c.b16 %v2191, %v2175
    %v2960 = vpack.c.b16 %v2208, %v2192
    %v2961 = vpack.c.b16 %v2209, %v2193
    %v2962 = vpack.c.b16 %v2210, %v2194
    %v2963 = vpack.c.b16 %v2211, %v2195
    %v2964 = vpack.c.b16 %v2212, %v2196
    %v2965 = vpack.c.b16 %v2213, %v2197
    %v2966 = vpack.c.b16 %v2214, %v2198
    %v2967 = vpack.c.b16 %v2215, %v2199
    %v2968 = vpack.c.b16 %v2216, %v2200
    %v2969 = vpack.c.b16 %v2217, %v2201
    %v2970 = vpack.c.b16 %v2218, %v2202
    %v2971 = vpack.c.b16 %v2219, %v2203
    %v2972 = vpack.c.b16 %v2220, %v2204
    %v2973 = vpack.c.b16 %v2221, %v2205
    %v2974 = vpack.c.b16 %v2222, %v2206
    %v2975 = vpack.c.b16 %v2223, %v2207
    %v2976 = vpack.c.b16 %v2240, %v2224
    %v2977 = vpack.c.b16 %v2241, %v2225
    %v2978 = vpack.c.b16 %v2242, %v2226
    %v2979 = vpack.c.b16 %v2243, %v2227
    %v2980 = vpack.c.b16 %v2244, %v2228
    %v2981 = vpack.c.b16 %v2245, %v2229
    %v2982 = vpack.c.b16 %v2246, %v2230
    %v2983 = vpack.c.b16 %v2247, %v2231
    %v2984 = vpack.c.b16 %v2248, %v2232
    %v2985 = vpack.c.b16 %v2249, %v2233
    %v2986 = vpack.c.b16 %v2250, %v2234
    %v2987 = vpack.c.b16 %v2251, %v2235
    %v2988 = vpack.c.b16 %v2252, %v2236
    %v2989 = vpack.c.b16 %v2253, %v2237
    %v2990 = vpack.c.b16 %v2254, %v2238
    %v2991 = vpack.c.b16 %v2255, %v2239
    %v2992 = vpack.c.b16 %v2272, %v2256
    %v2993 = vpack.c.b16 %v2273, %v2257
    %v2994 = vpack.c.b16 %v2274, %v2258
    %v2995 = vpack.c.b16 %v2275, %v2259
    %v2996 = vpack.c.b16 %v2276, %v2260
    %v2997 = vpack.c.b16 %v2277, %v2261
    %v2998 = vpack.c.b16 %v2278, %v2262
    %v2999 = vpack.c.b16 %v2279, %v2263
    %v3000 = vpack.c.b16 %v2280, %v2264
    %v3001 = vpack.c.b16 %v2281, %v2265
    %v3002 = vpack.c.b16 %v2282, %v2266
    %v3003 = vpack.c.b16 %v2283, %v2267
    %v3004 = vpack.c.b16 %v2284, %v2268
    %v3005 = vpack.c.b16 %v2285, %v2269
    %v3006 = vpack.c.b16 %v2286, %v2270
    %v3007 = vpack.c.b16 %v2287, %v2271
    %v3008 = vpack.c.b16 %v2304, %v2288
    %v3009 = vpack.c.b16 %v2305, %v2289
    %v3010 = vpack.c.b16 %v2306, %v2290
    %v3011 = vpack.c.b16 %v2307, %v2291
    %v3012 = vpack.c.b16 %v2308, %v2292
    %v3013 = vpack.c.b16 %v2309, %v2293
    %v3014 = vpack.c.b16 %v2310, %v2294
    %v3015 = vpack.c.b16 %v2311, %v2295
    %v3016 = vpack.c.b16 %v2312, %v2296
    %v3017 = vpack.c.b16 %v2313, %v2297
    %v3018 = vpack.c.b16 %v2314, %v2298
    %v3019 = vpack.c.b16 %v2315, %v2299
    %v3020 = vpack.c.b16 %v2316, %v2300
    %v3021 = vpack.c.b16 %v2317, %v2301
    %v3022 = vpack.c.b16 %v2318, %v2302
    %v3023 = vpack.c.b16 %v2319, %v2303
    %v3024 = vpack.c.b16 %v2336, %v2320
    %v3025 = vpack.c.b16 %v2337, %v2321
    %v3026 = vpack.c.b16 %v2338, %v2322
    %v3027 = vpack.c.b16 %v2339, %v2323
    %v3028 = vpack.c.b16 %v2340, %v2324
    %v3029 = vpack.c.b16 %v2341, %v2325
    %v3030 = vpack.c.b16 %v2342, %v2326
    %v3031 = vpack.c.b16 %v2343, %v2327
    %v3032 = vpack.c.b16 %v2344, %v2328
    %v3033 = vpack.c.b16 %v2345, %v2329
    %v3034 = vpack.c.b16 %v2346, %v2330
    %v3035 = vpack.c.b16 %v2347, %v2331
    %v3036 = vpack.c.b16 %v2348, %v2332
    %v3037 = vpack.c.b16 %v2349, %v2333
    %v3038 = vpack.c.b16 %v2350, %v2334
    %v3039 = vpack.c.b16 %v2351, %v2335
    %v3040 = vpack.c.b16 %v2368, %v2352
    %v3041 = vpack.c.b16 %v2369, %v2353
    %v3042 = vpack.c.b16 %v2370, %v2354
    %v3043 = vpack.c.b16 %v2371, %v2355
    %v3044 = vpack.c.b16 %v2372, %v2356
    %v3045 = vpack.c.b16 %v2373, %v2357
    %v3046 = vpack.c.b16 %v2374, %v2358
    %v3047 = vpack.c.b16 %v2375, %v2359
    %v3048 = vpack.c.b16 %v2376, %v2360
    %v3049 = vpack.c.b16 %v2377, %v2361
    %v3050 = vpack.c.b16 %v2378, %v2362
    %v3051 = vpack.c.b16 %v2379, %v2363
    %v3052 = vpack.c.b16 %v2380, %v2364
    %v3053 = vpack.c.b16 %v2381, %v2365
    %v3054 = vpack.c.b16 %v2382, %v2366
    %v3055 = vpack.c.b16 %v2383, %v2367
    %v3056 = vpack.c.b16 %v2400, %v2384
    %v3057 = vpack.c.b16 %v2401, %v2385
    %v3058 = vpack.c.b16 %v2402, %v2386
    %v3059 = vpack.c.b16 %v2403, %v2387
    %v3060 = vpack.c.b16 %v2404, %v2388
    %v3061 = vpack.c.b16 %v2405, %v2389
    %v3062 = vpack.c.b16 %v2406, %v2390
    %v3063 = vpack.c.b16 %v2407, %v2391
    %v3064 = vpack.c.b16 %v2408, %v2392
    %v3065 = vpack.c.b16 %v2409, %v2393
    %v3066 = vpack.c.b16 %v2410, %v2394
    %v3067 = vpack.c.b16 %v2411, %v2395
    %v3068 = vpack.c.b16 %v2412, %v2396
    %v3069 = vpack.c.b16 %v2413, %v2397
    %v3070 = vpack.c.b16 %v2414, %v2398
    %v3071 = vpack.c.b16 %v2415, %v2399
    %v3072 = vpack.c.b16 %v2432, %v2416
    %v3073 = vpack.c.b16 %v2433, %v2417
    %v3074 = vpack.c.b16 %v2434, %v2418
    %v3075 = vpack.c.b16 %v2435, %v2419
    %v3076 = vpack.c.b16 %v2436, %v2420
    %v3077 = vpack.c.b16 %v2437, %v2421
    %v3078 = vpack.c.b16 %v2438, %v2422
    %v3079 = vpack.c.b16 %v2439, %v2423
    %v3080 = vpack.c.b16 %v2440, %v2424
    %v3081 = vpack.c.b16 %v2441, %v2425
    %v3082 = vpack.c.b16 %v2442, %v2426
    %v3083 = vpack.c.b16 %v2443, %v2427
    %v3084 = vpack.c.b16 %v2444, %v2428
    %v3085 = vpack.c.b16 %v2445, %v2429
    %v3086 = vpack.c.b16 %v2446, %v2430
    %v3087 = vpack.c.b16 %v2447, %v2431
    %v3088 = vpack.c.b16 %v2464, %v2448
    %v3089 = vpack.c.b16 %v2465, %v2449
    %v3090 = vpack.c.b16 %v2466, %v2450
    %v3091 = vpack.c.b16 %v2467, %v2451
    %v3092 = vpack.c.b16 %v2468, %v2452
    %v3093 = vpack.c.b16 %v2469, %v2453
    %v3094 = vpack.c.b16 %v2470, %v2454
    %v3095 = vpack.c.b16 %v2471, %v2455
    %v3096 = vpack.c.b16 %v2472, %v2456
    %v3097 = vpack.c.b16 %v2473, %v2457
    %v3098 = vpack.c.b16 %v2474, %v2458
    %v3099 = vpack.c.b16 %v2475, %v2459
    %v3100 = vpack.c.b16 %v2476, %v2460
    %v3101 = vpack.c.b16 %v2477, %v2461
    %v3102 = vpack.c.b16 %v2478, %v2462
    %v3103 = vpack.c.b16 %v2479, %v2463
    %v3104 = vpack.c.b16 %v2496, %v2480
    %v3105 = vpack.c.b16 %v2497, %v2481
    %v3106 = vpack.c.b16 %v2498, %v2482
    %v3107 = vpack.c.b16 %v2499, %v2483
    %v3108 = vpack.c.b16 %v2500, %v2484
    %v3109 = vpack.c.b16 %v2501, %v2485
    %v3110 = vpack.c.b16 %v2502, %v2486
    %v3111 = vpack.c.b16 %v2503, %v2487
    %v3112 = vpack.c.b16 %v2504, %v2488
    %v3113 = vpack.c.b16 %v2505, %v2489
    %v3114 = vpack.c.b16 %v2506, %v2490
    %v3115 = vpack.c.b16 %v2507, %v2491
    %v3116 = vpack.c.b16 %v2508, %v2492
    %v3117 = vpack.c.b16 %v2509, %v2493
    %v3118 = vpack.c.b16 %v2510, %v2494
    %v3119 = vpack.c.b16 %v2511, %v2495
    %v3120 = vpack.c.b16 %v2528, %v2512
    %v3121 = vpack.c.b16 %v2529, %v2513
    %v3122 = vpack.c.b16 %v2530, %v2514
    %v3123 = vpack.c.b16 %v2531, %v2515
    %v3124 = vpack.c.b16 %v2532, %v2516
    %v3125 = vpack.c.b16 %v2533, %v2517
    %v3126 = vpack.c.b16 %v2534, %v2518
    %v3127 = vpack.c.b16 %v2535, %v2519
    %v3128 = vpack.c.b16 %v2536, %v2520
    %v3129 = vpack.c.b16 %v2537, %v2521
    %v3130 = vpack.c.b16 %v2538, %v2522
    %v3131 = vpack.c.b16 %v2539, %v2523
    %v3132 = vpack.c.b16 %v2540, %v2524
    %v3133 = vpack.c.b16 %v2541, %v2525
    %v3134 = vpack.c.b16 %v2542, %v2526
    %v3135 = vpack.c.b16 %v2543, %v2527
    %v3136 = vpack.c.b16 %v2560, %v2544
    %v3137 = vpack.c.b16 %v2561, %v2545
    %v3138 = vpack.c.b16 %v2562, %v2546
    %v3139 = vpack.c.b16 %v2563, %v2547
    %v3140 = vpack.c.b16 %v2564, %v2548
    %v3141 = vpack.c.b16 %v2565, %v2549
    %v3142 = vpack.c.b16 %v2566, %v2550
    %v3143 = vpack.c.b16 %v2567, %v2551
    %v3144 = vpack.c.b16 %v2568, %v2552
    %v3145 = vpack.c.b16 %v2569, %v2553
    %v3146 = vpack.c.b16 %v2570, %v2554
    %v3147 = vpack.c.b16 %v2571, %v2555
    %v3148 = vpack.c.b16 %v2572, %v2556
    %v3149 = vpack.c.b16 %v2573, %v2557
    %v3150 = vpack.c.b16 %v2574, %v2558
    %v3151 = vpack.c.b16 %v2575, %v2559
    %v3152 = vpack.c.b16 %v2592, %v2576
    %v3153 = vpack.c.b16 %v2593, %v2577
    %v3154 = vpack.c.b16 %v2594, %v2578
    %v3155 = vpack.c.b16 %v2595, %v2579
    %v3156 = vpack.c.b16 %v2596, %v2580
    %v3157 = vpack.c.b16 %v2597, %v2581
    %v3158 = vpack.c.b16 %v2598, %v2582
    %v3159 = vpack.c.b16 %v2599, %v2583
    %v3160 = vpack.c.b16 %v2600, %v2584
    %v3161 = vpack.c.b16 %v2601, %v2585
    %v3162 = vpack.c.b16 %v2602, %v2586
    %v3163 = vpack.c.b16 %v2603, %v2587
    %v3164 = vpack.c.b16 %v2604, %v2588
    %v3165 = vpack.c.b16 %v2605, %v2589
    %v3166 = vpack.c.b16 %v2606, %v2590
    %v3167 = vpack.c.b16 %v2607, %v2591
    %v3168 = vpack.c.b16 %v2624, %v2608
    %v3169 = vpack.c.b16 %v2625, %v2609
    %v3170 = vpack.c.b16 %v2626, %v2610
    %v3171 = vpack.c.b16 %v2627, %v2611
    %v3172 = vpack.c.b16 %v2628, %v2612
    %v3173 = vpack.c.b16 %v2629, %v2613
    %v3174 = vpack.c.b16 %v2630, %v2614
    %v3175 = vpack.c.b16 %v2631, %v2615
    %v3176 = vpack.c.b16 %v2632, %v2616
    %v3177 = vpack.c.b16 %v2633, %v2617
    %v3178 = vpack.c.b16 %v2634, %v2618
    %v3179 = vpack.c.b16 %v2635, %v2619
    %v3180 = vpack.c.b16 %v2636, %v2620
    %v3181 = vpack.c.b16 %v2637, %v2621
    %v3182 = vpack.c.b16 %v2638, %v2622
    %v3183 = vpack.c.b16 %v2639, %v2623
    %v3184 = vpack.c.b16 %v2656, %v2640
    %v3185 = vpack.c.b16 %v2657, %v2641
    %v3186 = vpack.c.b16 %v2658, %v2642
    %v3187 = vpack.c.b16 %v2659, %v2643
    %v3188 = vpack.c.b16 %v2660, %v2644
    %v3189 = vpack.c.b16 %v2661, %v2645
    %v3190 = vpack.c.b16 %v2662, %v2646
    %v3191 = vpack.c.b16 %v2663, %v2647
    %v3192 = vpack.c.b16 %v2664, %v2648
    %v3193 = vpack.c.b16 %v2665, %v2649
    %v3194 = vpack.c.b16 %v2666, %v2650
    %v3195 = vpack.c.b16 %v2667, %v2651
    %v3196 = vpack.c.b16 %v2668, %v2652
    %v3197 = vpack.c.b16 %v2669, %v2653
    %v3198 = vpack.c.b16 %v2670, %v2654
    %v3199 = vpack.c.b16 %v2671, %v2655
    %v3200 = vpack.c.b16 %v2688, %v2672
    %v3201 = vpack.c.b16 %v2689, %v2673
    %v3202 = vpack.c.b16 %v2690, %v2674
    %v3203 = vpack.c.b16 %v2691, %v2675
    %v3204 = vpack.c.b16 %v2692, %v2676
    %v3205 = vpack.c.b16 %v2693, %v2677
    %v3206 = vpack.c.b16 %v2694, %v2678
    %v3207 = vpack.c.b16 %v2695, %v2679
    %v3208 = vpack.c.b16 %v2696, %v2680
    %v3209 = vpack.c.b16 %v2697, %v2681
    %v3210 = vpack.c.b16 %v2698, %v2682
    %v3211 = vpack.c.b16 %v2699, %v2683
    %v3212 = vpack.c.b16 %v2700, %v2684
    %v3213 = vpack.c.b16 %v2701, %v2685
    %v3214 = vpack.c.b16 %v2702, %v2686
    %v3215 = vpack.c.b16 %v2703, %v2687
    %3728 = vmatprep.subr.bf16.mxu0 %v2705
    %3729 = vmatpush1.bf16.msra.mxu0 %v2704
    %3730 = vmatprep.subr.bf16.mxu0 %v2721
    %3731 = vmatpush1.bf16.msra.mxu0 %v2720
    %3732 = vmatprep.subr.bf16.mxu0 %v2737
    %3733 = vmatpush1.bf16.msra.mxu0 %v2736
    %3734 = vmatprep.subr.bf16.mxu0 %v2753
    %3735 = vmatpush1.bf16.msra.mxu0 %v2752
    %3736 = vmatprep.subr.bf16.mxu0 %v2769
    %3737 = vmatpush1.bf16.msra.mxu0 %v2768
    %3738 = vmatprep.subr.bf16.mxu0 %v2785
    %3739 = vmatpush1.bf16.msra.mxu0 %v2784
    %3740 = vmatprep.subr.bf16.mxu0 %v2801
    %3741 = vmatpush1.bf16.msra.mxu0 %v2800
    %3742 = vmatprep.subr.bf16.mxu0 %v2817
    %3743 = vmatpush1.bf16.msra.mxu0 %v2816
    %3744 = vmatprep.subr.bf16.mxu0 %v2833
    %3745 = vmatpush1.bf16.msra.mxu0 %v2832
    %3746 = vmatprep.subr.bf16.mxu0 %v2849
    %3747 = vmatpush1.bf16.msra.mxu0 %v2848
    %3748 = vmatprep.subr.bf16.mxu0 %v2865
    %3749 = vmatpush1.bf16.msra.mxu0 %v2864
    %3750 = vmatprep.subr.bf16.mxu0 %v2881
    %3751 = vmatpush1.bf16.msra.mxu0 %v2880
    %3752 = vmatprep.subr.bf16.mxu0 %v2897
    %3753 = vmatpush1.bf16.msra.mxu0 %v2896
    %3754 = vmatprep.subr.bf16.mxu0 %v2913
    %3755 = vmatpush1.bf16.msra.mxu0 %v2912
    %3756 = vmatprep.subr.bf16.mxu0 %v2929
    %3757 = vmatpush1.bf16.msra.mxu0 %v2928
    %3758 = vmatprep.subr.bf16.mxu0 %v2945
    %3759 = vmatpush1.bf16.msra.mxu0 %v2944
    %3760 = vmatprep.mubr.bf16.mxu0 %v625
    %3761 = vmatmul.mubr.bf16.gmra.mrb[0].mxu0 %v624
    %v3762 = vpop.f32.mrb[0].mxu0
    %v3763 = vadd.f32 0.0, %v3762
    %v3764 = vpop.f32.mrb[0].mxu0
    %v3765 = vadd.f32 0.0, %v3764
    %v3766 = vpop.f32.mrb[0].mxu0
    %v3767 = vadd.f32 0.0, %v3766
    %v3768 = vpop.f32.mrb[0].mxu0
    %v3769 = vadd.f32 0.0, %v3768
    %3770 = vmatprep.mubr.bf16.mxu0 %v629
    %3771 = vmatmul.mubr.bf16.gmra.mrb[0].mxu0 %v628
    %v3772 = vpop.f32.mrb[0].mxu0
    %v3773 = vadd.f32 0.0, %v3772
    %v3774 = vpop.f32.mrb[0].mxu0
    %v3775 = vadd.f32 0.0, %v3774
    %v3776 = vpop.f32.mrb[0].mxu0
    %v3777 = vadd.f32 0.0, %v3776
    %v3778 = vpop.f32.mrb[0].mxu0
    %v3779 = vadd.f32 0.0, %v3778
    %3780 = vmatprep.mubr.bf16.mxu0 %v633
    %3781 = vmatmul.mubr.bf16.gmra.mrb[0].mxu0 %v632
    %v3782 = vpop.f32.mrb[0].mxu0
    %v3783 = vadd.f32 0.0, %v3782
    %v3784 = vpop.f32.mrb[0].mxu0
    %v3785 = vadd.f32 0.0, %v3784
    %v3786 = vpop.f32.mrb[0].mxu0
    %v3787 = vadd.f32 0.0, %v3786
    %v3788 = vpop.f32.mrb[0].mxu0
    %v3789 = vadd.f32 0.0, %v3788
    %3790 = vmatprep.mubr.bf16.mxu0 %v637
    %3791 = vmatmul.mubr.bf16.gmra.mrb[0].mxu0 %v636
    %v3792 = vpop.f32.mrb[0].mxu0
    %v3793 = vadd.f32 0.0, %v3792
    %v3794 = vpop.f32.mrb[0].mxu0
    %v3795 = vadd.f32 0.0, %v3794
    %v3796 = vpop.f32.mrb[0].mxu0
    %v3797 = vadd.f32 0.0, %v3796
    %v3798 = vpop.f32.mrb[0].mxu0
    %v3799 = vadd.f32 0.0, %v3798
    %3800 = vmatprep.mubr.bf16.mxu0 %v641
    %3801 = vmatmul.mubr.bf16.gmra.mrb[0].mxu0 %v640
    %v3802 = vpop.f32.mrb[0].mxu0
    %v3803 = vadd.f32 0.0, %v3802
    %v3804 = vpop.f32.mrb[0].mxu0
    %v3805 = vadd.f32 0.0, %v3804
    %v3806 = vpop.f32.mrb[0].mxu0
    %v3807 = vadd.f32 0.0, %v3806
    %v3808 = vpop.f32.mrb[0].mxu0
    %v3809 = vadd.f32 0.0, %v3808
    %3810 = vmatprep.mubr.bf16.mxu0 %v645
    %3811 = vmatmul.mubr.bf16.gmra.mrb[0].mxu0 %v644
    %v3812 = vpop.f32.mrb[0].mxu0
    %v3813 = vadd.f32 0.0, %v3812
    %v3814 = vpop.f32.mrb[0].mxu0
    %v3815 = vadd.f32 0.0, %v3814
    %v3816 = vpop.f32.mrb[0].mxu0
    %v3817 = vadd.f32 0.0, %v3816
    %v3818 = vpop.f32.mrb[0].mxu0
    %v3819 = vadd.f32 0.0, %v3818
    %3820 = vmatprep.mubr.bf16.mxu0 %v649
    %3821 = vmatmul.mubr.bf16.gmra.mrb[0].mxu0 %v648
    %v3822 = vpop.f32.mrb[0].mxu0
    %v3823 = vadd.f32 0.0, %v3822
    %v3824 = vpop.f32.mrb[0].mxu0
    %v3825 = vadd.f32 0.0, %v3824
    %v3826 = vpop.f32.mrb[0].mxu0
    %v3827 = vadd.f32 0.0, %v3826
    %v3828 = vpop.f32.mrb[0].mxu0
    %v3829 = vadd.f32 0.0, %v3828
    %3830 = vmatprep.mubr.bf16.mxu0 %v653
    %3831 = vmatmul.mubr.bf16.gmra.mrb[0].mxu0 %v652
    %v3832 = vpop.f32.mrb[0].mxu0
    %v3833 = vadd.f32 0.0, %v3832
    %v3834 = vpop.f32.mrb[0].mxu0
    %v3835 = vadd.f32 0.0, %v3834
    %v3836 = vpop.f32.mrb[0].mxu0
    %v3837 = vadd.f32 0.0, %v3836
    %v3838 = vpop.f32.mrb[0].mxu0
    %v3839 = vadd.f32 0.0, %v3838
    %3840 = vdwg.mxu0
    %3841 = vmatprep.subr.bf16.mxu0 %v2961
    %3842 = vmatpush1.bf16.msra.mxu0 %v2960
    %3843 = vmatprep.subr.bf16.mxu0 %v2977
    %3844 = vmatpush1.bf16.msra.mxu0 %v2976
    %3845 = vmatprep.subr.bf16.mxu0 %v2993
    %3846 = vmatpush1.bf16.msra.mxu0 %v2992
    %3847 = vmatprep.subr.bf16.mxu0 %v3009
    %3848 = vmatpush1.bf16.msra.mxu0 %v3008
    %3849 = vmatprep.subr.bf16.mxu0 %v3025
    %3850 = vmatpush1.bf16.msra.mxu0 %v3024
    %3851 = vmatprep.subr.bf16.mxu0 %v3041
    %3852 = vmatpush1.bf16.msra.mxu0 %v3040
    %3853 = vmatprep.subr.bf16.mxu0 %v3057
    %3854 = vmatpush1.bf16.msra.mxu0 %v3056
    %3855 = vmatprep.subr.bf16.mxu0 %v3073
    %3856 = vmatpush1.bf16.msra.mxu0 %v3072
    %3857 = vmatprep.subr.bf16.mxu0 %v3089
    %3858 = vmatpush1.bf16.msra.mxu0 %v3088
    %3859 = vmatprep.subr.bf16.mxu0 %v3105
    %3860 = vmatpush1.bf16.msra.mxu0 %v3104
    %3861 = vmatprep.subr.bf16.mxu0 %v3121
    %3862 = vmatpush1.bf16.msra.mxu0 %v3120
    %3863 = vmatprep.subr.bf16.mxu0 %v3137
    %3864 = vmatpush1.bf16.msra.mxu0 %v3136
    %3865 = vmatprep.subr.bf16.mxu0 %v3153
    %3866 = vmatpush1.bf16.msra.mxu0 %v3152
    %3867 = vmatprep.subr.bf16.mxu0 %v3169
    %3868 = vmatpush1.bf16.msra.mxu0 %v3168
    %3869 = vmatprep.subr.bf16.mxu0 %v3185
    %3870 = vmatpush1.bf16.msra.mxu0 %v3184
    %3871 = vmatprep.subr.bf16.mxu0 %v3201
    %3872 = vmatpush1.bf16.msra.mxu0 %v3200
    %3873 = vmatprep.mubr.bf16.mxu0 %v627
    %3874 = vmatmul.mubr.bf16.gmra.mrb[0].mxu0 %v626
    %v3875 = vpop.f32.mrb[0].mxu0
    %v3876 = vadd.f32 %v3763, %v3875
    %v3877 = vpop.f32.mrb[0].mxu0
    %v3878 = vadd.f32 %v3765, %v3877
    %v3879 = vpop.f32.mrb[0].mxu0
    %v3880 = vadd.f32 %v3767, %v3879
    %v3881 = vpop.f32.mrb[0].mxu0
    %v3882 = vadd.f32 %v3769, %v3881
    %3883 = vmatprep.mubr.bf16.mxu0 %v631
    %3884 = vmatmul.mubr.bf16.gmra.mrb[0].mxu0 %v630
    %v3885 = vpop.f32.mrb[0].mxu0
    %v3886 = vadd.f32 %v3773, %v3885
    %v3887 = vpop.f32.mrb[0].mxu0
    %v3888 = vadd.f32 %v3775, %v3887
    %v3889 = vpop.f32.mrb[0].mxu0
    %v3890 = vadd.f32 %v3777, %v3889
    %v3891 = vpop.f32.mrb[0].mxu0
    %v3892 = vadd.f32 %v3779, %v3891
    %3893 = vmatprep.mubr.bf16.mxu0 %v635
    %3894 = vmatmul.mubr.bf16.gmra.mrb[0].mxu0 %v634
    %v3895 = vpop.f32.mrb[0].mxu0
    %v3896 = vadd.f32 %v3783, %v3895
    %v3897 = vpop.f32.mrb[0].mxu0
    %v3898 = vadd.f32 %v3785, %v3897
    %v3899 = vpop.f32.mrb[0].mxu0
    %v3900 = vadd.f32 %v3787, %v3899
    %v3901 = vpop.f32.mrb[0].mxu0
    %v3902 = vadd.f32 %v3789, %v3901
    %3903 = vmatprep.mubr.bf16.mxu0 %v639
    %3904 = vmatmul.mubr.bf16.gmra.mrb[0].mxu0 %v638
    %v3905 = vpop.f32.mrb[0].mxu0
    %v3906 = vadd.f32 %v3793, %v3905
    %v3907 = vpop.f32.mrb[0].mxu0
    %v3908 = vadd.f32 %v3795, %v3907
    %v3909 = vpop.f32.mrb[0].mxu0
    %v3910 = vadd.f32 %v3797, %v3909
    %v3911 = vpop.f32.mrb[0].mxu0
    %v3912 = vadd.f32 %v3799, %v3911
    %3913 = vmatprep.mubr.bf16.mxu0 %v643
    %3914 = vmatmul.mubr.bf16.gmra.mrb[0].mxu0 %v642
    %v3915 = vpop.f32.mrb[0].mxu0
    %v3916 = vadd.f32 %v3803, %v3915
    %v3917 = vpop.f32.mrb[0].mxu0
    %v3918 = vadd.f32 %v3805, %v3917
    %v3919 = vpop.f32.mrb[0].mxu0
    %v3920 = vadd.f32 %v3807, %v3919
    %v3921 = vpop.f32.mrb[0].mxu0
    %v3922 = vadd.f32 %v3809, %v3921
    %3923 = vmatprep.mubr.bf16.mxu0 %v647
    %3924 = vmatmul.mubr.bf16.gmra.mrb[0].mxu0 %v646
    %v3925 = vpop.f32.mrb[0].mxu0
    %v3926 = vadd.f32 %v3813, %v3925
    %v3927 = vpop.f32.mrb[0].mxu0
    %v3928 = vadd.f32 %v3815, %v3927
    %v3929 = vpop.f32.mrb[0].mxu0
    %v3930 = vadd.f32 %v3817, %v3929
    %v3931 = vpop.f32.mrb[0].mxu0
    %v3932 = vadd.f32 %v3819, %v3931
    %3933 = vmatprep.mubr.bf16.mxu0 %v651
    %3934 = vmatmul.mubr.bf16.gmra.mrb[0].mxu0 %v650
    %v3935 = vpop.f32.mrb[0].mxu0
    %v3936 = vadd.f32 %v3823, %v3935
    %v3937 = vpop.f32.mrb[0].mxu0
    %v3938 = vadd.f32 %v3825, %v3937
    %v3939 = vpop.f32.mrb[0].mxu0
    %v3940 = vadd.f32 %v3827, %v3939
    %v3941 = vpop.f32.mrb[0].mxu0
    %v3942 = vadd.f32 %v3829, %v3941
    %3943 = vmatprep.mubr.bf16.mxu0 %v655
    %3944 = vmatmul.mubr.bf16.gmra.mrb[0].mxu0 %v654
    %v3945 = vpop.f32.mrb[0].mxu0
    %v3946 = vadd.f32 %v3833, %v3945
    %v3947 = vpop.f32.mrb[0].mxu0
    %v3948 = vadd.f32 %v3835, %v3947
    %v3949 = vpop.f32.mrb[0].mxu0
    %v3950 = vadd.f32 %v3837, %v3949
    %v3951 = vpop.f32.mrb[0].mxu0
    %v3952 = vadd.f32 %v3839, %v3951
    %3953 = vdwg.mxu0
    %3954 = vmatprep.subr.bf16.mxu0 %v2707
    %3955 = vmatpush1.bf16.msra.mxu0 %v2706
    %3956 = vmatprep.subr.bf16.mxu0 %v2723
    %3957 = vmatpush1.bf16.msra.mxu0 %v2722
    %3958 = vmatprep.subr.bf16.mxu0 %v2739
    %3959 = vmatpush1.bf16.msra.mxu0 %v2738
    %3960 = vmatprep.subr.bf16.mxu0 %v2755
    %3961 = vmatpush1.bf16.msra.mxu0 %v2754
    %3962 = vmatprep.subr.bf16.mxu0 %v2771
    %3963 = vmatpush1.bf16.msra.mxu0 %v2770
    %3964 = vmatprep.subr.bf16.mxu0 %v2787
    %3965 = vmatpush1.bf16.msra.mxu0 %v2786
    %3966 = vmatprep.subr.bf16.mxu0 %v2803
    %3967 = vmatpush1.bf16.msra.mxu0 %v2802
    %3968 = vmatprep.subr.bf16.mxu0 %v2819
    %3969 = vmatpush1.bf16.msra.mxu0 %v2818
    %3970 = vmatprep.subr.bf16.mxu0 %v2835
    %3971 = vmatpush1.bf16.msra.mxu0 %v2834
    %3972 = vmatprep.subr.bf16.mxu0 %v2851
    %3973 = vmatpush1.bf16.msra.mxu0 %v2850
    %3974 = vmatprep.subr.bf16.mxu0 %v2867
    %3975 = vmatpush1.bf16.msra.mxu0 %v2866
    %3976 = vmatprep.subr.bf16.mxu0 %v2883
    %3977 = vmatpush1.bf16.msra.mxu0 %v2882
    %3978 = vmatprep.subr.bf16.mxu0 %v2899
    %3979 = vmatpush1.bf16.msra.mxu0 %v2898
    %3980 = vmatprep.subr.bf16.mxu0 %v2915
    %3981 = vmatpush1.bf16.msra.mxu0 %v2914
    %3982 = vmatprep.subr.bf16.mxu0 %v2931
    %3983 = vmatpush1.bf16.msra.mxu0 %v2930
    %3984 = vmatprep.subr.bf16.mxu0 %v2947
    %3985 = vmatpush1.bf16.msra.mxu0 %v2946
    %3986 = vmatprep.mubr.bf16.mxu0 %v625
    %3987 = vmatmul.mubr.bf16.gmra.mrb[0].mxu0 %v624
    %v3988 = vpop.f32.mrb[0].mxu0
    %v3989 = vadd.f32 0.0, %v3988
    %v3990 = vpop.f32.mrb[0].mxu0
    %v3991 = vadd.f32 0.0, %v3990
    %v3992 = vpop.f32.mrb[0].mxu0
    %v3993 = vadd.f32 0.0, %v3992
    %v3994 = vpop.f32.mrb[0].mxu0
    %v3995 = vadd.f32 0.0, %v3994
    %3996 = vmatprep.mubr.bf16.mxu0 %v629
    %3997 = vmatmul.mubr.bf16.gmra.mrb[0].mxu0 %v628
    %v3998 = vpop.f32.mrb[0].mxu0
    %v3999 = vadd.f32 0.0, %v3998
    %v4000 = vpop.f32.mrb[0].mxu0
    %v4001 = vadd.f32 0.0, %v4000
    %v4002 = vpop.f32.mrb[0].mxu0
    %v4003 = vadd.f32 0.0, %v4002
    %v4004 = vpop.f32.mrb[0].mxu0
    %v4005 = vadd.f32 0.0, %v4004
    %4006 = vmatprep.mubr.bf16.mxu0 %v633
    %4007 = vmatmul.mubr.bf16.gmra.mrb[0].mxu0 %v632
    %v4008 = vpop.f32.mrb[0].mxu0
    %v4009 = vadd.f32 0.0, %v4008
    %v4010 = vpop.f32.mrb[0].mxu0
    %v4011 = vadd.f32 0.0, %v4010
    %v4012 = vpop.f32.mrb[0].mxu0
    %v4013 = vadd.f32 0.0, %v4012
    %v4014 = vpop.f32.mrb[0].mxu0
    %v4015 = vadd.f32 0.0, %v4014
    %4016 = vmatprep.mubr.bf16.mxu0 %v637
    %4017 = vmatmul.mubr.bf16.gmra.mrb[0].mxu0 %v636
    %v4018 = vpop.f32.mrb[0].mxu0
    %v4019 = vadd.f32 0.0, %v4018
    %v4020 = vpop.f32.mrb[0].mxu0
    %v4021 = vadd.f32 0.0, %v4020
    %v4022 = vpop.f32.mrb[0].mxu0
    %v4023 = vadd.f32 0.0, %v4022
    %v4024 = vpop.f32.mrb[0].mxu0
    %v4025 = vadd.f32 0.0, %v4024
    %4026 = vmatprep.mubr.bf16.mxu0 %v641
    %4027 = vmatmul.mubr.bf16.gmra.mrb[0].mxu0 %v640
    %v4028 = vpop.f32.mrb[0].mxu0
    %v4029 = vadd.f32 0.0, %v4028
    %v4030 = vpop.f32.mrb[0].mxu0
    %v4031 = vadd.f32 0.0, %v4030
    %v4032 = vpop.f32.mrb[0].mxu0
    %v4033 = vadd.f32 0.0, %v4032
    %v4034 = vpop.f32.mrb[0].mxu0
    %v4035 = vadd.f32 0.0, %v4034
    %4036 = vmatprep.mubr.bf16.mxu0 %v645
    %4037 = vmatmul.mubr.bf16.gmra.mrb[0].mxu0 %v644
    %v4038 = vpop.f32.mrb[0].mxu0
    %v4039 = vadd.f32 0.0, %v4038
    %v4040 = vpop.f32.mrb[0].mxu0
    %v4041 = vadd.f32 0.0, %v4040
    %v4042 = vpop.f32.mrb[0].mxu0
    %v4043 = vadd.f32 0.0, %v4042
    %v4044 = vpop.f32.mrb[0].mxu0
    %v4045 = vadd.f32 0.0, %v4044
    %4046 = vmatprep.mubr.bf16.mxu0 %v649
    %4047 = vmatmul.mubr.bf16.gmra.mrb[0].mxu0 %v648
    %v4048 = vpop.f32.mrb[0].mxu0
    %v4049 = vadd.f32 0.0, %v4048
    %v4050 = vpop.f32.mrb[0].mxu0
    %v4051 = vadd.f32 0.0, %v4050
    %v4052 = vpop.f32.mrb[0].mxu0
    %v4053 = vadd.f32 0.0, %v4052
    %v4054 = vpop.f32.mrb[0].mxu0
    %v4055 = vadd.f32 0.0, %v4054
    %4056 = vmatprep.mubr.bf16.mxu0 %v653
    %4057 = vmatmul.mubr.bf16.gmra.mrb[0].mxu0 %v652
    %v4058 = vpop.f32.mrb[0].mxu0
    %v4059 = vadd.f32 0.0, %v4058
    %v4060 = vpop.f32.mrb[0].mxu0
    %v4061 = vadd.f32 0.0, %v4060
    %v4062 = vpop.f32.mrb[0].mxu0
    %v4063 = vadd.f32 0.0, %v4062
    %v4064 = vpop.f32.mrb[0].mxu0
    %v4065 = vadd.f32 0.0, %v4064
    %4066 = vdwg.mxu0
    %4067 = vmatprep.subr.bf16.mxu0 %v2963
    %4068 = vmatpush1.bf16.msra.mxu0 %v2962
    %4069 = vmatprep.subr.bf16.mxu0 %v2979
    %4070 = vmatpush1.bf16.msra.mxu0 %v2978
    %4071 = vmatprep.subr.bf16.mxu0 %v2995
    %4072 = vmatpush1.bf16.msra.mxu0 %v2994
    %4073 = vmatprep.subr.bf16.mxu0 %v3011
    %4074 = vmatpush1.bf16.msra.mxu0 %v3010
    %4075 = vmatprep.subr.bf16.mxu0 %v3027
    %4076 = vmatpush1.bf16.msra.mxu0 %v3026
    %4077 = vmatprep.subr.bf16.mxu0 %v3043
    %4078 = vmatpush1.bf16.msra.mxu0 %v3042
    %4079 = vmatprep.subr.bf16.mxu0 %v3059
    %4080 = vmatpush1.bf16.msra.mxu0 %v3058
    %4081 = vmatprep.subr.bf16.mxu0 %v3075
    %4082 = vmatpush1.bf16.msra.mxu0 %v3074
    %4083 = vmatprep.subr.bf16.mxu0 %v3091
    %4084 = vmatpush1.bf16.msra.mxu0 %v3090
    %4085 = vmatprep.subr.bf16.mxu0 %v3107
    %4086 = vmatpush1.bf16.msra.mxu0 %v3106
    %4087 = vmatprep.subr.bf16.mxu0 %v3123
    %4088 = vmatpush1.bf16.msra.mxu0 %v3122
    %4089 = vmatprep.subr.bf16.mxu0 %v3139
    %4090 = vmatpush1.bf16.msra.mxu0 %v3138
    %4091 = vmatprep.subr.bf16.mxu0 %v3155
    %4092 = vmatpush1.bf16.msra.mxu0 %v3154
    %4093 = vmatprep.subr.bf16.mxu0 %v3171
    %4094 = vmatpush1.bf16.msra.mxu0 %v3170
    %4095 = vmatprep.subr.bf16.mxu0 %v3187
    %4096 = vmatpush1.bf16.msra.mxu0 %v3186
    %4097 = vmatprep.subr.bf16.mxu0 %v3203
    %4098 = vmatpush1.bf16.msra.mxu0 %v3202
    %4099 = vmatprep.mubr.bf16.mxu0 %v627
    %4100 = vmatmul.mubr.bf16.gmra.mrb[0].mxu0 %v626
    %v4101 = vpop.f32.mrb[0].mxu0
    %v4102 = vadd.f32 %v3989, %v4101
    %v4103 = vpop.f32.mrb[0].mxu0
    %v4104 = vadd.f32 %v3991, %v4103
    %v4105 = vpop.f32.mrb[0].mxu0
    %v4106 = vadd.f32 %v3993, %v4105
    %v4107 = vpop.f32.mrb[0].mxu0
    %v4108 = vadd.f32 %v3995, %v4107
    %4109 = vmatprep.mubr.bf16.mxu0 %v631
    %4110 = vmatmul.mubr.bf16.gmra.mrb[0].mxu0 %v630
    %v4111 = vpop.f32.mrb[0].mxu0
    %v4112 = vadd.f32 %v3999, %v4111
    %v4113 = vpop.f32.mrb[0].mxu0
    %v4114 = vadd.f32 %v4001, %v4113
    %v4115 = vpop.f32.mrb[0].mxu0
    %v4116 = vadd.f32 %v4003, %v4115
    %v4117 = vpop.f32.mrb[0].mxu0
    %v4118 = vadd.f32 %v4005, %v4117
    %4119 = vmatprep.mubr.bf16.mxu0 %v635
    %4120 = vmatmul.mubr.bf16.gmra.mrb[0].mxu0 %v634
    %v4121 = vpop.f32.mrb[0].mxu0
    %v4122 = vadd.f32 %v4009, %v4121
    %v4123 = vpop.f32.mrb[0].mxu0
    %v4124 = vadd.f32 %v4011, %v4123
    %v4125 = vpop.f32.mrb[0].mxu0
    %v4126 = vadd.f32 %v4013, %v4125
    %v4127 = vpop.f32.mrb[0].mxu0
    %v4128 = vadd.f32 %v4015, %v4127
    %4129 = vmatprep.mubr.bf16.mxu0 %v639
    %4130 = vmatmul.mubr.bf16.gmra.mrb[0].mxu0 %v638
    %v4131 = vpop.f32.mrb[0].mxu0
    %v4132 = vadd.f32 %v4019, %v4131
    %v4133 = vpop.f32.mrb[0].mxu0
    %v4134 = vadd.f32 %v4021, %v4133
    %v4135 = vpop.f32.mrb[0].mxu0
    %v4136 = vadd.f32 %v4023, %v4135
    %v4137 = vpop.f32.mrb[0].mxu0
    %v4138 = vadd.f32 %v4025, %v4137
    %4139 = vmatprep.mubr.bf16.mxu0 %v643
    %4140 = vmatmul.mubr.bf16.gmra.mrb[0].mxu0 %v642
    %v4141 = vpop.f32.mrb[0].mxu0
    %v4142 = vadd.f32 %v4029, %v4141
    %v4143 = vpop.f32.mrb[0].mxu0
    %v4144 = vadd.f32 %v4031, %v4143
    %v4145 = vpop.f32.mrb[0].mxu0
    %v4146 = vadd.f32 %v4033, %v4145
    %v4147 = vpop.f32.mrb[0].mxu0
    %v4148 = vadd.f32 %v4035, %v4147
    %4149 = vmatprep.mubr.bf16.mxu0 %v647
    %4150 = vmatmul.mubr.bf16.gmra.mrb[0].mxu0 %v646
    %v4151 = vpop.f32.mrb[0].mxu0
    %v4152 = vadd.f32 %v4039, %v4151
    %v4153 = vpop.f32.mrb[0].mxu0
    %v4154 = vadd.f32 %v4041, %v4153
    %v4155 = vpop.f32.mrb[0].mxu0
    %v4156 = vadd.f32 %v4043, %v4155
    %v4157 = vpop.f32.mrb[0].mxu0
    %v4158 = vadd.f32 %v4045, %v4157
    %4159 = vmatprep.mubr.bf16.mxu0 %v651
    %4160 = vmatmul.mubr.bf16.gmra.mrb[0].mxu0 %v650
    %v4161 = vpop.f32.mrb[0].mxu0
    %v4162 = vadd.f32 %v4049, %v4161
    %v4163 = vpop.f32.mrb[0].mxu0
    %v4164 = vadd.f32 %v4051, %v4163
    %v4165 = vpop.f32.mrb[0].mxu0
    %v4166 = vadd.f32 %v4053, %v4165
    %v4167 = vpop.f32.mrb[0].mxu0
    %v4168 = vadd.f32 %v4055, %v4167
    %4169 = vmatprep.mubr.bf16.mxu0 %v655
    %4170 = vmatmul.mubr.bf16.gmra.mrb[0].mxu0 %v654
    %v4171 = vpop.f32.mrb[0].mxu0
    %v4172 = vadd.f32 %v4059, %v4171
    %v4173 = vpop.f32.mrb[0].mxu0
    %v4174 = vadd.f32 %v4061, %v4173
    %v4175 = vpop.f32.mrb[0].mxu0
    %v4176 = vadd.f32 %v4063, %v4175
    %v4177 = vpop.f32.mrb[0].mxu0
    %v4178 = vadd.f32 %v4065, %v4177
    %4179 = vdwg.mxu0
    %4180 = vmatprep.subr.bf16.mxu0 %v2709
    %4181 = vmatpush1.bf16.msra.mxu0 %v2708
    %4182 = vmatprep.subr.bf16.mxu0 %v2725
    %4183 = vmatpush1.bf16.msra.mxu0 %v2724
    %4184 = vmatprep.subr.bf16.mxu0 %v2741
    %4185 = vmatpush1.bf16.msra.mxu0 %v2740
    %4186 = vmatprep.subr.bf16.mxu0 %v2757
    %4187 = vmatpush1.bf16.msra.mxu0 %v2756
    %4188 = vmatprep.subr.bf16.mxu0 %v2773
    %4189 = vmatpush1.bf16.msra.mxu0 %v2772
    %4190 = vmatprep.subr.bf16.mxu0 %v2789
    %4191 = vmatpush1.bf16.msra.mxu0 %v2788
    %4192 = vmatprep.subr.bf16.mxu0 %v2805
    %4193 = vmatpush1.bf16.msra.mxu0 %v2804
    %4194 = vmatprep.subr.bf16.mxu0 %v2821
    %4195 = vmatpush1.bf16.msra.mxu0 %v2820
    %4196 = vmatprep.subr.bf16.mxu0 %v2837
    %4197 = vmatpush1.bf16.msra.mxu0 %v2836
    %4198 = vmatprep.subr.bf16.mxu0 %v2853
    %4199 = vmatpush1.bf16.msra.mxu0 %v2852
    %4200 = vmatprep.subr.bf16.mxu0 %v2869
    %4201 = vmatpush1.bf16.msra.mxu0 %v2868
    %4202 = vmatprep.subr.bf16.mxu0 %v2885
    %4203 = vmatpush1.bf16.msra.mxu0 %v2884
    %4204 = vmatprep.subr.bf16.mxu0 %v2901
    %4205 = vmatpush1.bf16.msra.mxu0 %v2900
    %4206 = vmatprep.subr.bf16.mxu0 %v2917
    %4207 = vmatpush1.bf16.msra.mxu0 %v2916
    %4208 = vmatprep.subr.bf16.mxu0 %v2933
    %4209 = vmatpush1.bf16.msra.mxu0 %v2932
    %4210 = vmatprep.subr.bf16.mxu0 %v2949
    %4211 = vmatpush1.bf16.msra.mxu0 %v2948
    %4212 = vmatprep.mubr.bf16.mxu0 %v625
    %4213 = vmatmul.mubr.bf16.gmra.mrb[0].mxu0 %v624
    %v4214 = vpop.f32.mrb[0].mxu0
    %v4215 = vadd.f32 0.0, %v4214
    %v4216 = vpop.f32.mrb[0].mxu0
    %v4217 = vadd.f32 0.0, %v4216
    %v4218 = vpop.f32.mrb[0].mxu0
    %v4219 = vadd.f32 0.0, %v4218
    %v4220 = vpop.f32.mrb[0].mxu0
    %v4221 = vadd.f32 0.0, %v4220
    %4222 = vmatprep.mubr.bf16.mxu0 %v629
    %4223 = vmatmul.mubr.bf16.gmra.mrb[0].mxu0 %v628
    %v4224 = vpop.f32.mrb[0].mxu0
    %v4225 = vadd.f32 0.0, %v4224
    %v4226 = vpop.f32.mrb[0].mxu0
    %v4227 = vadd.f32 0.0, %v4226
    %v4228 = vpop.f32.mrb[0].mxu0
    %v4229 = vadd.f32 0.0, %v4228
    %v4230 = vpop.f32.mrb[0].mxu0
    %v4231 = vadd.f32 0.0, %v4230
    %4232 = vmatprep.mubr.bf16.mxu0 %v633
    %4233 = vmatmul.mubr.bf16.gmra.mrb[0].mxu0 %v632
    %v4234 = vpop.f32.mrb[0].mxu0
    %v4235 = vadd.f32 0.0, %v4234
    %v4236 = vpop.f32.mrb[0].mxu0
    %v4237 = vadd.f32 0.0, %v4236
    %v4238 = vpop.f32.mrb[0].mxu0
    %v4239 = vadd.f32 0.0, %v4238
    %v4240 = vpop.f32.mrb[0].mxu0
    %v4241 = vadd.f32 0.0, %v4240
    %4242 = vmatprep.mubr.bf16.mxu0 %v637
    %4243 = vmatmul.mubr.bf16.gmra.mrb[0].mxu0 %v636
    %v4244 = vpop.f32.mrb[0].mxu0
    %v4245 = vadd.f32 0.0, %v4244
    %v4246 = vpop.f32.mrb[0].mxu0
    %v4247 = vadd.f32 0.0, %v4246
    %v4248 = vpop.f32.mrb[0].mxu0
    %v4249 = vadd.f32 0.0, %v4248
    %v4250 = vpop.f32.mrb[0].mxu0
    %v4251 = vadd.f32 0.0, %v4250
    %4252 = vmatprep.mubr.bf16.mxu0 %v641
    %4253 = vmatmul.mubr.bf16.gmra.mrb[0].mxu0 %v640
    %v4254 = vpop.f32.mrb[0].mxu0
    %v4255 = vadd.f32 0.0, %v4254
    %v4256 = vpop.f32.mrb[0].mxu0
    %v4257 = vadd.f32 0.0, %v4256
    %v4258 = vpop.f32.mrb[0].mxu0
    %v4259 = vadd.f32 0.0, %v4258
    %v4260 = vpop.f32.mrb[0].mxu0
    %v4261 = vadd.f32 0.0, %v4260
    %4262 = vmatprep.mubr.bf16.mxu0 %v645
    %4263 = vmatmul.mubr.bf16.gmra.mrb[0].mxu0 %v644
    %v4264 = vpop.f32.mrb[0].mxu0
    %v4265 = vadd.f32 0.0, %v4264
    %v4266 = vpop.f32.mrb[0].mxu0
    %v4267 = vadd.f32 0.0, %v4266
    %v4268 = vpop.f32.mrb[0].mxu0
    %v4269 = vadd.f32 0.0, %v4268
    %v4270 = vpop.f32.mrb[0].mxu0
    %v4271 = vadd.f32 0.0, %v4270
    %4272 = vmatprep.mubr.bf16.mxu0 %v649
    %4273 = vmatmul.mubr.bf16.gmra.mrb[0].mxu0 %v648
    %v4274 = vpop.f32.mrb[0].mxu0
    %v4275 = vadd.f32 0.0, %v4274
    %v4276 = vpop.f32.mrb[0].mxu0
    %v4277 = vadd.f32 0.0, %v4276
    %v4278 = vpop.f32.mrb[0].mxu0
    %v4279 = vadd.f32 0.0, %v4278
    %v4280 = vpop.f32.mrb[0].mxu0
    %v4281 = vadd.f32 0.0, %v4280
    %4282 = vmatprep.mubr.bf16.mxu0 %v653
    %4283 = vmatmul.mubr.bf16.gmra.mrb[0].mxu0 %v652
    %v4284 = vpop.f32.mrb[0].mxu0
    %v4285 = vadd.f32 0.0, %v4284
    %v4286 = vpop.f32.mrb[0].mxu0
    %v4287 = vadd.f32 0.0, %v4286
    %v4288 = vpop.f32.mrb[0].mxu0
    %v4289 = vadd.f32 0.0, %v4288
    %v4290 = vpop.f32.mrb[0].mxu0
    %v4291 = vadd.f32 0.0, %v4290
    %4292 = vdwg.mxu0
    %4293 = vmatprep.subr.bf16.mxu0 %v2965
    %4294 = vmatpush1.bf16.msra.mxu0 %v2964
    %4295 = vmatprep.subr.bf16.mxu0 %v2981
    %4296 = vmatpush1.bf16.msra.mxu0 %v2980
    %4297 = vmatprep.subr.bf16.mxu0 %v2997
    %4298 = vmatpush1.bf16.msra.mxu0 %v2996
    %4299 = vmatprep.subr.bf16.mxu0 %v3013
    %4300 = vmatpush1.bf16.msra.mxu0 %v3012
    %4301 = vmatprep.subr.bf16.mxu0 %v3029
    %4302 = vmatpush1.bf16.msra.mxu0 %v3028
    %4303 = vmatprep.subr.bf16.mxu0 %v3045
    %4304 = vmatpush1.bf16.msra.mxu0 %v3044
    %4305 = vmatprep.subr.bf16.mxu0 %v3061
    %4306 = vmatpush1.bf16.msra.mxu0 %v3060
    %4307 = vmatprep.subr.bf16.mxu0 %v3077
    %4308 = vmatpush1.bf16.msra.mxu0 %v3076
    %4309 = vmatprep.subr.bf16.mxu0 %v3093
    %4310 = vmatpush1.bf16.msra.mxu0 %v3092
    %4311 = vmatprep.subr.bf16.mxu0 %v3109
    %4312 = vmatpush1.bf16.msra.mxu0 %v3108
    %4313 = vmatprep.subr.bf16.mxu0 %v3125
    %4314 = vmatpush1.bf16.msra.mxu0 %v3124
    %4315 = vmatprep.subr.bf16.mxu0 %v3141
    %4316 = vmatpush1.bf16.msra.mxu0 %v3140
    %4317 = vmatprep.subr.bf16.mxu0 %v3157
    %4318 = vmatpush1.bf16.msra.mxu0 %v3156
    %4319 = vmatprep.subr.bf16.mxu0 %v3173
    %4320 = vmatpush1.bf16.msra.mxu0 %v3172
    %4321 = vmatprep.subr.bf16.mxu0 %v3189
    %4322 = vmatpush1.bf16.msra.mxu0 %v3188
    %4323 = vmatprep.subr.bf16.mxu0 %v3205
    %4324 = vmatpush1.bf16.msra.mxu0 %v3204
    %4325 = vmatprep.mubr.bf16.mxu0 %v627
    %4326 = vmatmul.mubr.bf16.gmra.mrb[0].mxu0 %v626
    %v4327 = vpop.f32.mrb[0].mxu0
    %v4328 = vadd.f32 %v4215, %v4327
    %v4329 = vpop.f32.mrb[0].mxu0
    %v4330 = vadd.f32 %v4217, %v4329
    %v4331 = vpop.f32.mrb[0].mxu0
    %v4332 = vadd.f32 %v4219, %v4331
    %v4333 = vpop.f32.mrb[0].mxu0
    %v4334 = vadd.f32 %v4221, %v4333
    %4335 = vmatprep.mubr.bf16.mxu0 %v631
    %4336 = vmatmul.mubr.bf16.gmra.mrb[0].mxu0 %v630
    %v4337 = vpop.f32.mrb[0].mxu0
    %v4338 = vadd.f32 %v4225, %v4337
    %v4339 = vpop.f32.mrb[0].mxu0
    %v4340 = vadd.f32 %v4227, %v4339
    %v4341 = vpop.f32.mrb[0].mxu0
    %v4342 = vadd.f32 %v4229, %v4341
    %v4343 = vpop.f32.mrb[0].mxu0
    %v4344 = vadd.f32 %v4231, %v4343
    %4345 = vmatprep.mubr.bf16.mxu0 %v635
    %4346 = vmatmul.mubr.bf16.gmra.mrb[0].mxu0 %v634
    %v4347 = vpop.f32.mrb[0].mxu0
    %v4348 = vadd.f32 %v4235, %v4347
    %v4349 = vpop.f32.mrb[0].mxu0
    %v4350 = vadd.f32 %v4237, %v4349
    %v4351 = vpop.f32.mrb[0].mxu0
    %v4352 = vadd.f32 %v4239, %v4351
    %v4353 = vpop.f32.mrb[0].mxu0
    %v4354 = vadd.f32 %v4241, %v4353
    %4355 = vmatprep.mubr.bf16.mxu0 %v639
    %4356 = vmatmul.mubr.bf16.gmra.mrb[0].mxu0 %v638
    %v4357 = vpop.f32.mrb[0].mxu0
    %v4358 = vadd.f32 %v4245, %v4357
    %v4359 = vpop.f32.mrb[0].mxu0
    %v4360 = vadd.f32 %v4247, %v4359
    %v4361 = vpop.f32.mrb[0].mxu0
    %v4362 = vadd.f32 %v4249, %v4361
    %v4363 = vpop.f32.mrb[0].mxu0
    %v4364 = vadd.f32 %v4251, %v4363
    %4365 = vmatprep.mubr.bf16.mxu0 %v643
    %4366 = vmatmul.mubr.bf16.gmra.mrb[0].mxu0 %v642
    %v4367 = vpop.f32.mrb[0].mxu0
    %v4368 = vadd.f32 %v4255, %v4367
    %v4369 = vpop.f32.mrb[0].mxu0
    %v4370 = vadd.f32 %v4257, %v4369
    %v4371 = vpop.f32.mrb[0].mxu0
    %v4372 = vadd.f32 %v4259, %v4371
    %v4373 = vpop.f32.mrb[0].mxu0
    %v4374 = vadd.f32 %v4261, %v4373
    %4375 = vmatprep.mubr.bf16.mxu0 %v647
    %4376 = vmatmul.mubr.bf16.gmra.mrb[0].mxu0 %v646
    %v4377 = vpop.f32.mrb[0].mxu0
    %v4378 = vadd.f32 %v4265, %v4377
    %v4379 = vpop.f32.mrb[0].mxu0
    %v4380 = vadd.f32 %v4267, %v4379
    %v4381 = vpop.f32.mrb[0].mxu0
    %v4382 = vadd.f32 %v4269, %v4381
    %v4383 = vpop.f32.mrb[0].mxu0
    %v4384 = vadd.f32 %v4271, %v4383
    %4385 = vmatprep.mubr.bf16.mxu0 %v651
    %4386 = vmatmul.mubr.bf16.gmra.mrb[0].mxu0 %v650
    %v4387 = vpop.f32.mrb[0].mxu0
    %v4388 = vadd.f32 %v4275, %v4387
    %v4389 = vpop.f32.mrb[0].mxu0
    %v4390 = vadd.f32 %v4277, %v4389
    %v4391 = vpop.f32.mrb[0].mxu0
    %v4392 = vadd.f32 %v4279, %v4391
    %v4393 = vpop.f32.mrb[0].mxu0
    %v4394 = vadd.f32 %v4281, %v4393
    %4395 = vmatprep.mubr.bf16.mxu0 %v655
    %4396 = vmatmul.mubr.bf16.gmra.mrb[0].mxu0 %v654
    %v4397 = vpop.f32.mrb[0].mxu0
    %v4398 = vadd.f32 %v4285, %v4397
    %v4399 = vpop.f32.mrb[0].mxu0
    %v4400 = vadd.f32 %v4287, %v4399
    %v4401 = vpop.f32.mrb[0].mxu0
    %v4402 = vadd.f32 %v4289, %v4401
    %v4403 = vpop.f32.mrb[0].mxu0
    %v4404 = vadd.f32 %v4291, %v4403
    %4405 = vdwg.mxu0
    %4406 = vmatprep.subr.bf16.mxu0 %v2711
    %4407 = vmatpush1.bf16.msra.mxu0 %v2710
    %4408 = vmatprep.subr.bf16.mxu0 %v2727
    %4409 = vmatpush1.bf16.msra.mxu0 %v2726
    %4410 = vmatprep.subr.bf16.mxu0 %v2743
    %4411 = vmatpush1.bf16.msra.mxu0 %v2742
    %4412 = vmatprep.subr.bf16.mxu0 %v2759
    %4413 = vmatpush1.bf16.msra.mxu0 %v2758
    %4414 = vmatprep.subr.bf16.mxu0 %v2775
    %4415 = vmatpush1.bf16.msra.mxu0 %v2774
    %4416 = vmatprep.subr.bf16.mxu0 %v2791
    %4417 = vmatpush1.bf16.msra.mxu0 %v2790
    %4418 = vmatprep.subr.bf16.mxu0 %v2807
    %4419 = vmatpush1.bf16.msra.mxu0 %v2806
    %4420 = vmatprep.subr.bf16.mxu0 %v2823
    %4421 = vmatpush1.bf16.msra.mxu0 %v2822
    %4422 = vmatprep.subr.bf16.mxu0 %v2839
    %4423 = vmatpush1.bf16.msra.mxu0 %v2838
    %4424 = vmatprep.subr.bf16.mxu0 %v2855
    %4425 = vmatpush1.bf16.msra.mxu0 %v2854
    %4426 = vmatprep.subr.bf16.mxu0 %v2871
    %4427 = vmatpush1.bf16.msra.mxu0 %v2870
    %4428 = vmatprep.subr.bf16.mxu0 %v2887
    %4429 = vmatpush1.bf16.msra.mxu0 %v2886
    %4430 = vmatprep.subr.bf16.mxu0 %v2903
    %4431 = vmatpush1.bf16.msra.mxu0 %v2902
    %4432 = vmatprep.subr.bf16.mxu0 %v2919
    %4433 = vmatpush1.bf16.msra.mxu0 %v2918
    %4434 = vmatprep.subr.bf16.mxu0 %v2935
    %4435 = vmatpush1.bf16.msra.mxu0 %v2934
    %4436 = vmatprep.subr.bf16.mxu0 %v2951
    %4437 = vmatpush1.bf16.msra.mxu0 %v2950
    %4438 = vmatprep.mubr.bf16.mxu0 %v625
    %4439 = vmatmul.mubr.bf16.gmra.mrb[0].mxu0 %v624
    %v4440 = vpop.f32.mrb[0].mxu0
    %v4441 = vadd.f32 0.0, %v4440
    %v4442 = vpop.f32.mrb[0].mxu0
    %v4443 = vadd.f32 0.0, %v4442
    %v4444 = vpop.f32.mrb[0].mxu0
    %v4445 = vadd.f32 0.0, %v4444
    %v4446 = vpop.f32.mrb[0].mxu0
    %v4447 = vadd.f32 0.0, %v4446
    %4448 = vmatprep.mubr.bf16.mxu0 %v629
    %4449 = vmatmul.mubr.bf16.gmra.mrb[0].mxu0 %v628
    %v4450 = vpop.f32.mrb[0].mxu0
    %v4451 = vadd.f32 0.0, %v4450
    %v4452 = vpop.f32.mrb[0].mxu0
    %v4453 = vadd.f32 0.0, %v4452
    %v4454 = vpop.f32.mrb[0].mxu0
    %v4455 = vadd.f32 0.0, %v4454
    %v4456 = vpop.f32.mrb[0].mxu0
    %v4457 = vadd.f32 0.0, %v4456
    %4458 = vmatprep.mubr.bf16.mxu0 %v633
    %4459 = vmatmul.mubr.bf16.gmra.mrb[0].mxu0 %v632
    %v4460 = vpop.f32.mrb[0].mxu0
    %v4461 = vadd.f32 0.0, %v4460
    %v4462 = vpop.f32.mrb[0].mxu0
    %v4463 = vadd.f32 0.0, %v4462
    %v4464 = vpop.f32.mrb[0].mxu0
    %v4465 = vadd.f32 0.0, %v4464
    %v4466 = vpop.f32.mrb[0].mxu0
    %v4467 = vadd.f32 0.0, %v4466
    %4468 = vmatprep.mubr.bf16.mxu0 %v637
    %4469 = vmatmul.mubr.bf16.gmra.mrb[0].mxu0 %v636
    %v4470 = vpop.f32.mrb[0].mxu0
    %v4471 = vadd.f32 0.0, %v4470
    %v4472 = vpop.f32.mrb[0].mxu0
    %v4473 = vadd.f32 0.0, %v4472
    %v4474 = vpop.f32.mrb[0].mxu0
    %v4475 = vadd.f32 0.0, %v4474
    %v4476 = vpop.f32.mrb[0].mxu0
    %v4477 = vadd.f32 0.0, %v4476
    %4478 = vmatprep.mubr.bf16.mxu0 %v641
    %4479 = vmatmul.mubr.bf16.gmra.mrb[0].mxu0 %v640
    %v4480 = vpop.f32.mrb[0].mxu0
    %v4481 = vadd.f32 0.0, %v4480
    %v4482 = vpop.f32.mrb[0].mxu0
    %v4483 = vadd.f32 0.0, %v4482
    %v4484 = vpop.f32.mrb[0].mxu0
    %v4485 = vadd.f32 0.0, %v4484
    %v4486 = vpop.f32.mrb[0].mxu0
    %v4487 = vadd.f32 0.0, %v4486
    %4488 = vmatprep.mubr.bf16.mxu0 %v645
    %4489 = vmatmul.mubr.bf16.gmra.mrb[0].mxu0 %v644
    %v4490 = vpop.f32.mrb[0].mxu0
    %v4491 = vadd.f32 0.0, %v4490
    %v4492 = vpop.f32.mrb[0].mxu0
    %v4493 = vadd.f32 0.0, %v4492
    %v4494 = vpop.f32.mrb[0].mxu0
    %v4495 = vadd.f32 0.0, %v4494
    %v4496 = vpop.f32.mrb[0].mxu0
    %v4497 = vadd.f32 0.0, %v4496
    %4498 = vmatprep.mubr.bf16.mxu0 %v649
    %4499 = vmatmul.mubr.bf16.gmra.mrb[0].mxu0 %v648
    %v4500 = vpop.f32.mrb[0].mxu0
    %v4501 = vadd.f32 0.0, %v4500
    %v4502 = vpop.f32.mrb[0].mxu0
    %v4503 = vadd.f32 0.0, %v4502
    %v4504 = vpop.f32.mrb[0].mxu0
    %v4505 = vadd.f32 0.0, %v4504
    %v4506 = vpop.f32.mrb[0].mxu0
    %v4507 = vadd.f32 0.0, %v4506
    %4508 = vmatprep.mubr.bf16.mxu0 %v653
    %4509 = vmatmul.mubr.bf16.gmra.mrb[0].mxu0 %v652
    %v4510 = vpop.f32.mrb[0].mxu0
    %v4511 = vadd.f32 0.0, %v4510
    %v4512 = vpop.f32.mrb[0].mxu0
    %v4513 = vadd.f32 0.0, %v4512
    %v4514 = vpop.f32.mrb[0].mxu0
    %v4515 = vadd.f32 0.0, %v4514
    %v4516 = vpop.f32.mrb[0].mxu0
    %v4517 = vadd.f32 0.0, %v4516
    %4518 = vdwg.mxu0
    %4519 = vmatprep.subr.bf16.mxu0 %v2967
    %4520 = vmatpush1.bf16.msra.mxu0 %v2966
    %4521 = vmatprep.subr.bf16.mxu0 %v2983
    %4522 = vmatpush1.bf16.msra.mxu0 %v2982
    %4523 = vmatprep.subr.bf16.mxu0 %v2999
    %4524 = vmatpush1.bf16.msra.mxu0 %v2998
    %4525 = vmatprep.subr.bf16.mxu0 %v3015
    %4526 = vmatpush1.bf16.msra.mxu0 %v3014
    %4527 = vmatprep.subr.bf16.mxu0 %v3031
    %4528 = vmatpush1.bf16.msra.mxu0 %v3030
    %4529 = vmatprep.subr.bf16.mxu0 %v3047
    %4530 = vmatpush1.bf16.msra.mxu0 %v3046
    %4531 = vmatprep.subr.bf16.mxu0 %v3063
    %4532 = vmatpush1.bf16.msra.mxu0 %v3062
    %4533 = vmatprep.subr.bf16.mxu0 %v3079
    %4534 = vmatpush1.bf16.msra.mxu0 %v3078
    %4535 = vmatprep.subr.bf16.mxu0 %v3095
    %4536 = vmatpush1.bf16.msra.mxu0 %v3094
    %4537 = vmatprep.subr.bf16.mxu0 %v3111
    %4538 = vmatpush1.bf16.msra.mxu0 %v3110
    %4539 = vmatprep.subr.bf16.mxu0 %v3127
    %4540 = vmatpush1.bf16.msra.mxu0 %v3126
    %4541 = vmatprep.subr.bf16.mxu0 %v3143
    %4542 = vmatpush1.bf16.msra.mxu0 %v3142
    %4543 = vmatprep.subr.bf16.mxu0 %v3159
    %4544 = vmatpush1.bf16.msra.mxu0 %v3158
    %4545 = vmatprep.subr.bf16.mxu0 %v3175
    %4546 = vmatpush1.bf16.msra.mxu0 %v3174
    %4547 = vmatprep.subr.bf16.mxu0 %v3191
    %4548 = vmatpush1.bf16.msra.mxu0 %v3190
    %4549 = vmatprep.subr.bf16.mxu0 %v3207
    %4550 = vmatpush1.bf16.msra.mxu0 %v3206
    %4551 = vmatprep.mubr.bf16.mxu0 %v627
    %4552 = vmatmul.mubr.bf16.gmra.mrb[0].mxu0 %v626
    %v4553 = vpop.f32.mrb[0].mxu0
    %v4554 = vadd.f32 %v4441, %v4553
    %v4555 = vpop.f32.mrb[0].mxu0
    %v4556 = vadd.f32 %v4443, %v4555
    %v4557 = vpop.f32.mrb[0].mxu0
    %v4558 = vadd.f32 %v4445, %v4557
    %v4559 = vpop.f32.mrb[0].mxu0
    %v4560 = vadd.f32 %v4447, %v4559
    %4561 = vmatprep.mubr.bf16.mxu0 %v631
    %4562 = vmatmul.mubr.bf16.gmra.mrb[0].mxu0 %v630
    %v4563 = vpop.f32.mrb[0].mxu0
    %v4564 = vadd.f32 %v4451, %v4563
    %v4565 = vpop.f32.mrb[0].mxu0
    %v4566 = vadd.f32 %v4453, %v4565
    %v4567 = vpop.f32.mrb[0].mxu0
    %v4568 = vadd.f32 %v4455, %v4567
    %v4569 = vpop.f32.mrb[0].mxu0
    %v4570 = vadd.f32 %v4457, %v4569
    %4571 = vmatprep.mubr.bf16.mxu0 %v635
    %4572 = vmatmul.mubr.bf16.gmra.mrb[0].mxu0 %v634
    %v4573 = vpop.f32.mrb[0].mxu0
    %v4574 = vadd.f32 %v4461, %v4573
    %v4575 = vpop.f32.mrb[0].mxu0
    %v4576 = vadd.f32 %v4463, %v4575
    %v4577 = vpop.f32.mrb[0].mxu0
    %v4578 = vadd.f32 %v4465, %v4577
    %v4579 = vpop.f32.mrb[0].mxu0
    %v4580 = vadd.f32 %v4467, %v4579
    %4581 = vmatprep.mubr.bf16.mxu0 %v639
    %4582 = vmatmul.mubr.bf16.gmra.mrb[0].mxu0 %v638
    %v4583 = vpop.f32.mrb[0].mxu0
    %v4584 = vadd.f32 %v4471, %v4583
    %v4585 = vpop.f32.mrb[0].mxu0
    %v4586 = vadd.f32 %v4473, %v4585
    %v4587 = vpop.f32.mrb[0].mxu0
    %v4588 = vadd.f32 %v4475, %v4587
    %v4589 = vpop.f32.mrb[0].mxu0
    %v4590 = vadd.f32 %v4477, %v4589
    %4591 = vmatprep.mubr.bf16.mxu0 %v643
    %4592 = vmatmul.mubr.bf16.gmra.mrb[0].mxu0 %v642
    %v4593 = vpop.f32.mrb[0].mxu0
    %v4594 = vadd.f32 %v4481, %v4593
    %v4595 = vpop.f32.mrb[0].mxu0
    %v4596 = vadd.f32 %v4483, %v4595
    %v4597 = vpop.f32.mrb[0].mxu0
    %v4598 = vadd.f32 %v4485, %v4597
    %v4599 = vpop.f32.mrb[0].mxu0
    %v4600 = vadd.f32 %v4487, %v4599
    %4601 = vmatprep.mubr.bf16.mxu0 %v647
    %4602 = vmatmul.mubr.bf16.gmra.mrb[0].mxu0 %v646
    %v4603 = vpop.f32.mrb[0].mxu0
    %v4604 = vadd.f32 %v4491, %v4603
    %v4605 = vpop.f32.mrb[0].mxu0
    %v4606 = vadd.f32 %v4493, %v4605
    %v4607 = vpop.f32.mrb[0].mxu0
    %v4608 = vadd.f32 %v4495, %v4607
    %v4609 = vpop.f32.mrb[0].mxu0
    %v4610 = vadd.f32 %v4497, %v4609
    %4611 = vmatprep.mubr.bf16.mxu0 %v651
    %4612 = vmatmul.mubr.bf16.gmra.mrb[0].mxu0 %v650
    %v4613 = vpop.f32.mrb[0].mxu0
    %v4614 = vadd.f32 %v4501, %v4613
    %v4615 = vpop.f32.mrb[0].mxu0
    %v4616 = vadd.f32 %v4503, %v4615
    %v4617 = vpop.f32.mrb[0].mxu0
    %v4618 = vadd.f32 %v4505, %v4617
    %v4619 = vpop.f32.mrb[0].mxu0
    %v4620 = vadd.f32 %v4507, %v4619
    %4621 = vmatprep.mubr.bf16.mxu0 %v655
    %4622 = vmatmul.mubr.bf16.gmra.mrb[0].mxu0 %v654
    %v4623 = vpop.f32.mrb[0].mxu0
    %v4624 = vadd.f32 %v4511, %v4623
    %v4625 = vpop.f32.mrb[0].mxu0
    %v4626 = vadd.f32 %v4513, %v4625
    %v4627 = vpop.f32.mrb[0].mxu0
    %v4628 = vadd.f32 %v4515, %v4627
    %v4629 = vpop.f32.mrb[0].mxu0
    %v4630 = vadd.f32 %v4517, %v4629
    %4631 = vdwg.mxu0
    %4632 = vmatprep.subr.bf16.mxu0 %v2713
    %4633 = vmatpush1.bf16.msra.mxu0 %v2712
    %4634 = vmatprep.subr.bf16.mxu0 %v2729
    %4635 = vmatpush1.bf16.msra.mxu0 %v2728
    %4636 = vmatprep.subr.bf16.mxu0 %v2745
    %4637 = vmatpush1.bf16.msra.mxu0 %v2744
    %4638 = vmatprep.subr.bf16.mxu0 %v2761
    %4639 = vmatpush1.bf16.msra.mxu0 %v2760
    %4640 = vmatprep.subr.bf16.mxu0 %v2777
    %4641 = vmatpush1.bf16.msra.mxu0 %v2776
    %4642 = vmatprep.subr.bf16.mxu0 %v2793
    %4643 = vmatpush1.bf16.msra.mxu0 %v2792
    %4644 = vmatprep.subr.bf16.mxu0 %v2809
    %4645 = vmatpush1.bf16.msra.mxu0 %v2808
    %4646 = vmatprep.subr.bf16.mxu0 %v2825
    %4647 = vmatpush1.bf16.msra.mxu0 %v2824
    %4648 = vmatprep.subr.bf16.mxu0 %v2841
    %4649 = vmatpush1.bf16.msra.mxu0 %v2840
    %4650 = vmatprep.subr.bf16.mxu0 %v2857
    %4651 = vmatpush1.bf16.msra.mxu0 %v2856
    %4652 = vmatprep.subr.bf16.mxu0 %v2873
    %4653 = vmatpush1.bf16.msra.mxu0 %v2872
    %4654 = vmatprep.subr.bf16.mxu0 %v2889
    %4655 = vmatpush1.bf16.msra.mxu0 %v2888
    %4656 = vmatprep.subr.bf16.mxu0 %v2905
    %4657 = vmatpush1.bf16.msra.mxu0 %v2904
    %4658 = vmatprep.subr.bf16.mxu0 %v2921
    %4659 = vmatpush1.bf16.msra.mxu0 %v2920
    %4660 = vmatprep.subr.bf16.mxu0 %v2937
    %4661 = vmatpush1.bf16.msra.mxu0 %v2936
    %4662 = vmatprep.subr.bf16.mxu0 %v2953
    %4663 = vmatpush1.bf16.msra.mxu0 %v2952
    %4664 = vmatprep.mubr.bf16.mxu0 %v625
    %4665 = vmatmul.mubr.bf16.gmra.mrb[0].mxu0 %v624
    %v4666 = vpop.f32.mrb[0].mxu0
    %v4667 = vadd.f32 0.0, %v4666
    %v4668 = vpop.f32.mrb[0].mxu0
    %v4669 = vadd.f32 0.0, %v4668
    %v4670 = vpop.f32.mrb[0].mxu0
    %v4671 = vadd.f32 0.0, %v4670
    %v4672 = vpop.f32.mrb[0].mxu0
    %v4673 = vadd.f32 0.0, %v4672
    %4674 = vmatprep.mubr.bf16.mxu0 %v629
    %4675 = vmatmul.mubr.bf16.gmra.mrb[0].mxu0 %v628
    %v4676 = vpop.f32.mrb[0].mxu0
    %v4677 = vadd.f32 0.0, %v4676
    %v4678 = vpop.f32.mrb[0].mxu0
    %v4679 = vadd.f32 0.0, %v4678
    %v4680 = vpop.f32.mrb[0].mxu0
    %v4681 = vadd.f32 0.0, %v4680
    %v4682 = vpop.f32.mrb[0].mxu0
    %v4683 = vadd.f32 0.0, %v4682
    %4684 = vmatprep.mubr.bf16.mxu0 %v633
    %4685 = vmatmul.mubr.bf16.gmra.mrb[0].mxu0 %v632
    %v4686 = vpop.f32.mrb[0].mxu0
    %v4687 = vadd.f32 0.0, %v4686
    %v4688 = vpop.f32.mrb[0].mxu0
    %v4689 = vadd.f32 0.0, %v4688
    %v4690 = vpop.f32.mrb[0].mxu0
    %v4691 = vadd.f32 0.0, %v4690
    %v4692 = vpop.f32.mrb[0].mxu0
    %v4693 = vadd.f32 0.0, %v4692
    %4694 = vmatprep.mubr.bf16.mxu0 %v637
    %4695 = vmatmul.mubr.bf16.gmra.mrb[0].mxu0 %v636
    %v4696 = vpop.f32.mrb[0].mxu0
    %v4697 = vadd.f32 0.0, %v4696
    %v4698 = vpop.f32.mrb[0].mxu0
    %v4699 = vadd.f32 0.0, %v4698
    %v4700 = vpop.f32.mrb[0].mxu0
    %v4701 = vadd.f32 0.0, %v4700
    %v4702 = vpop.f32.mrb[0].mxu0
    %v4703 = vadd.f32 0.0, %v4702
    %4704 = vmatprep.mubr.bf16.mxu0 %v641
    %4705 = vmatmul.mubr.bf16.gmra.mrb[0].mxu0 %v640
    %v4706 = vpop.f32.mrb[0].mxu0
    %v4707 = vadd.f32 0.0, %v4706
    %v4708 = vpop.f32.mrb[0].mxu0
    %v4709 = vadd.f32 0.0, %v4708
    %v4710 = vpop.f32.mrb[0].mxu0
    %v4711 = vadd.f32 0.0, %v4710
    %v4712 = vpop.f32.mrb[0].mxu0
    %v4713 = vadd.f32 0.0, %v4712
    %4714 = vmatprep.mubr.bf16.mxu0 %v645
    %4715 = vmatmul.mubr.bf16.gmra.mrb[0].mxu0 %v644
    %v4716 = vpop.f32.mrb[0].mxu0
    %v4717 = vadd.f32 0.0, %v4716
    %v4718 = vpop.f32.mrb[0].mxu0
    %v4719 = vadd.f32 0.0, %v4718
    %v4720 = vpop.f32.mrb[0].mxu0
    %v4721 = vadd.f32 0.0, %v4720
    %v4722 = vpop.f32.mrb[0].mxu0
    %v4723 = vadd.f32 0.0, %v4722
    %4724 = vmatprep.mubr.bf16.mxu0 %v649
    %4725 = vmatmul.mubr.bf16.gmra.mrb[0].mxu0 %v648
    %v4726 = vpop.f32.mrb[0].mxu0
    %v4727 = vadd.f32 0.0, %v4726
    %v4728 = vpop.f32.mrb[0].mxu0
    %v4729 = vadd.f32 0.0, %v4728
    %v4730 = vpop.f32.mrb[0].mxu0
    %v4731 = vadd.f32 0.0, %v4730
    %v4732 = vpop.f32.mrb[0].mxu0
    %v4733 = vadd.f32 0.0, %v4732
    %4734 = vmatprep.mubr.bf16.mxu0 %v653
    %4735 = vmatmul.mubr.bf16.gmra.mrb[0].mxu0 %v652
    %v4736 = vpop.f32.mrb[0].mxu0
    %v4737 = vadd.f32 0.0, %v4736
    %v4738 = vpop.f32.mrb[0].mxu0
    %v4739 = vadd.f32 0.0, %v4738
    %v4740 = vpop.f32.mrb[0].mxu0
    %v4741 = vadd.f32 0.0, %v4740
    %v4742 = vpop.f32.mrb[0].mxu0
    %v4743 = vadd.f32 0.0, %v4742
    %4744 = vdwg.mxu0
    %4745 = vmatprep.subr.bf16.mxu0 %v2969
    %4746 = vmatpush1.bf16.msra.mxu0 %v2968
    %4747 = vmatprep.subr.bf16.mxu0 %v2985
    %4748 = vmatpush1.bf16.msra.mxu0 %v2984
    %4749 = vmatprep.subr.bf16.mxu0 %v3001
    %4750 = vmatpush1.bf16.msra.mxu0 %v3000
    %4751 = vmatprep.subr.bf16.mxu0 %v3017
    %4752 = vmatpush1.bf16.msra.mxu0 %v3016
    %4753 = vmatprep.subr.bf16.mxu0 %v3033
    %4754 = vmatpush1.bf16.msra.mxu0 %v3032
    %4755 = vmatprep.subr.bf16.mxu0 %v3049
    %4756 = vmatpush1.bf16.msra.mxu0 %v3048
    %4757 = vmatprep.subr.bf16.mxu0 %v3065
    %4758 = vmatpush1.bf16.msra.mxu0 %v3064
    %4759 = vmatprep.subr.bf16.mxu0 %v3081
    %4760 = vmatpush1.bf16.msra.mxu0 %v3080
    %4761 = vmatprep.subr.bf16.mxu0 %v3097
    %4762 = vmatpush1.bf16.msra.mxu0 %v3096
    %4763 = vmatprep.subr.bf16.mxu0 %v3113
    %4764 = vmatpush1.bf16.msra.mxu0 %v3112
    %4765 = vmatprep.subr.bf16.mxu0 %v3129
    %4766 = vmatpush1.bf16.msra.mxu0 %v3128
    %4767 = vmatprep.subr.bf16.mxu0 %v3145
    %4768 = vmatpush1.bf16.msra.mxu0 %v3144
    %4769 = vmatprep.subr.bf16.mxu0 %v3161
    %4770 = vmatpush1.bf16.msra.mxu0 %v3160
    %4771 = vmatprep.subr.bf16.mxu0 %v3177
    %4772 = vmatpush1.bf16.msra.mxu0 %v3176
    %4773 = vmatprep.subr.bf16.mxu0 %v3193
    %4774 = vmatpush1.bf16.msra.mxu0 %v3192
    %4775 = vmatprep.subr.bf16.mxu0 %v3209
    %4776 = vmatpush1.bf16.msra.mxu0 %v3208
    %4777 = vmatprep.mubr.bf16.mxu0 %v627
    %4778 = vmatmul.mubr.bf16.gmra.mrb[0].mxu0 %v626
    %v4779 = vpop.f32.mrb[0].mxu0
    %v4780 = vadd.f32 %v4667, %v4779
    %v4781 = vpop.f32.mrb[0].mxu0
    %v4782 = vadd.f32 %v4669, %v4781
    %v4783 = vpop.f32.mrb[0].mxu0
    %v4784 = vadd.f32 %v4671, %v4783
    %v4785 = vpop.f32.mrb[0].mxu0
    %v4786 = vadd.f32 %v4673, %v4785
    %4787 = vmatprep.mubr.bf16.mxu0 %v631
    %4788 = vmatmul.mubr.bf16.gmra.mrb[0].mxu0 %v630
    %v4789 = vpop.f32.mrb[0].mxu0
    %v4790 = vadd.f32 %v4677, %v4789
    %v4791 = vpop.f32.mrb[0].mxu0
    %v4792 = vadd.f32 %v4679, %v4791
    %v4793 = vpop.f32.mrb[0].mxu0
    %v4794 = vadd.f32 %v4681, %v4793
    %v4795 = vpop.f32.mrb[0].mxu0
    %v4796 = vadd.f32 %v4683, %v4795
    %4797 = vmatprep.mubr.bf16.mxu0 %v635
    %4798 = vmatmul.mubr.bf16.gmra.mrb[0].mxu0 %v634
    %v4799 = vpop.f32.mrb[0].mxu0
    %v4800 = vadd.f32 %v4687, %v4799
    %v4801 = vpop.f32.mrb[0].mxu0
    %v4802 = vadd.f32 %v4689, %v4801
    %v4803 = vpop.f32.mrb[0].mxu0
    %v4804 = vadd.f32 %v4691, %v4803
    %v4805 = vpop.f32.mrb[0].mxu0
    %v4806 = vadd.f32 %v4693, %v4805
    %4807 = vmatprep.mubr.bf16.mxu0 %v639
    %4808 = vmatmul.mubr.bf16.gmra.mrb[0].mxu0 %v638
    %v4809 = vpop.f32.mrb[0].mxu0
    %v4810 = vadd.f32 %v4697, %v4809
    %v4811 = vpop.f32.mrb[0].mxu0
    %v4812 = vadd.f32 %v4699, %v4811
    %v4813 = vpop.f32.mrb[0].mxu0
    %v4814 = vadd.f32 %v4701, %v4813
    %v4815 = vpop.f32.mrb[0].mxu0
    %v4816 = vadd.f32 %v4703, %v4815
    %4817 = vmatprep.mubr.bf16.mxu0 %v643
    %4818 = vmatmul.mubr.bf16.gmra.mrb[0].mxu0 %v642
    %v4819 = vpop.f32.mrb[0].mxu0
    %v4820 = vadd.f32 %v4707, %v4819
    %v4821 = vpop.f32.mrb[0].mxu0
    %v4822 = vadd.f32 %v4709, %v4821
    %v4823 = vpop.f32.mrb[0].mxu0
    %v4824 = vadd.f32 %v4711, %v4823
    %v4825 = vpop.f32.mrb[0].mxu0
    %v4826 = vadd.f32 %v4713, %v4825
    %4827 = vmatprep.mubr.bf16.mxu0 %v647
    %4828 = vmatmul.mubr.bf16.gmra.mrb[0].mxu0 %v646
    %v4829 = vpop.f32.mrb[0].mxu0
    %v4830 = vadd.f32 %v4717, %v4829
    %v4831 = vpop.f32.mrb[0].mxu0
    %v4832 = vadd.f32 %v4719, %v4831
    %v4833 = vpop.f32.mrb[0].mxu0
    %v4834 = vadd.f32 %v4721, %v4833
    %v4835 = vpop.f32.mrb[0].mxu0
    %v4836 = vadd.f32 %v4723, %v4835
    %4837 = vmatprep.mubr.bf16.mxu0 %v651
    %4838 = vmatmul.mubr.bf16.gmra.mrb[0].mxu0 %v650
    %v4839 = vpop.f32.mrb[0].mxu0
    %v4840 = vadd.f32 %v4727, %v4839
    %v4841 = vpop.f32.mrb[0].mxu0
    %v4842 = vadd.f32 %v4729, %v4841
    %v4843 = vpop.f32.mrb[0].mxu0
    %v4844 = vadd.f32 %v4731, %v4843
    %v4845 = vpop.f32.mrb[0].mxu0
    %v4846 = vadd.f32 %v4733, %v4845
    %4847 = vmatprep.mubr.bf16.mxu0 %v655
    %4848 = vmatmul.mubr.bf16.gmra.mrb[0].mxu0 %v654
    %v4849 = vpop.f32.mrb[0].mxu0
    %v4850 = vadd.f32 %v4737, %v4849
    %v4851 = vpop.f32.mrb[0].mxu0
    %v4852 = vadd.f32 %v4739, %v4851
    %v4853 = vpop.f32.mrb[0].mxu0
    %v4854 = vadd.f32 %v4741, %v4853
    %v4855 = vpop.f32.mrb[0].mxu0
    %v4856 = vadd.f32 %v4743, %v4855
    %4857 = vdwg.mxu0
    %4858 = vmatprep.subr.bf16.mxu0 %v2715
    %4859 = vmatpush1.bf16.msra.mxu0 %v2714
    %4860 = vmatprep.subr.bf16.mxu0 %v2731
    %4861 = vmatpush1.bf16.msra.mxu0 %v2730
    %4862 = vmatprep.subr.bf16.mxu0 %v2747
    %4863 = vmatpush1.bf16.msra.mxu0 %v2746
    %4864 = vmatprep.subr.bf16.mxu0 %v2763
    %4865 = vmatpush1.bf16.msra.mxu0 %v2762
    %4866 = vmatprep.subr.bf16.mxu0 %v2779
    %4867 = vmatpush1.bf16.msra.mxu0 %v2778
    %4868 = vmatprep.subr.bf16.mxu0 %v2795
    %4869 = vmatpush1.bf16.msra.mxu0 %v2794
    %4870 = vmatprep.subr.bf16.mxu0 %v2811
    %4871 = vmatpush1.bf16.msra.mxu0 %v2810
    %4872 = vmatprep.subr.bf16.mxu0 %v2827
    %4873 = vmatpush1.bf16.msra.mxu0 %v2826
    %4874 = vmatprep.subr.bf16.mxu0 %v2843
    %4875 = vmatpush1.bf16.msra.mxu0 %v2842
    %4876 = vmatprep.subr.bf16.mxu0 %v2859
    %4877 = vmatpush1.bf16.msra.mxu0 %v2858
    %4878 = vmatprep.subr.bf16.mxu0 %v2875
    %4879 = vmatpush1.bf16.msra.mxu0 %v2874
    %4880 = vmatprep.subr.bf16.mxu0 %v2891
    %4881 = vmatpush1.bf16.msra.mxu0 %v2890
    %4882 = vmatprep.subr.bf16.mxu0 %v2907
    %4883 = vmatpush1.bf16.msra.mxu0 %v2906
    %4884 = vmatprep.subr.bf16.mxu0 %v2923
    %4885 = vmatpush1.bf16.msra.mxu0 %v2922
    %4886 = vmatprep.subr.bf16.mxu0 %v2939
    %4887 = vmatpush1.bf16.msra.mxu0 %v2938
    %4888 = vmatprep.subr.bf16.mxu0 %v2955
    %4889 = vmatpush1.bf16.msra.mxu0 %v2954
    %4890 = vmatprep.mubr.bf16.mxu0 %v625
    %4891 = vmatmul.mubr.bf16.gmra.mrb[0].mxu0 %v624
    %v4892 = vpop.f32.mrb[0].mxu0
    %v4893 = vadd.f32 0.0, %v4892
    %v4894 = vpop.f32.mrb[0].mxu0
    %v4895 = vadd.f32 0.0, %v4894
    %v4896 = vpop.f32.mrb[0].mxu0
    %v4897 = vadd.f32 0.0, %v4896
    %v4898 = vpop.f32.mrb[0].mxu0
    %v4899 = vadd.f32 0.0, %v4898
    %4900 = vmatprep.mubr.bf16.mxu0 %v629
    %4901 = vmatmul.mubr.bf16.gmra.mrb[0].mxu0 %v628
    %v4902 = vpop.f32.mrb[0].mxu0
    %v4903 = vadd.f32 0.0, %v4902
    %v4904 = vpop.f32.mrb[0].mxu0
    %v4905 = vadd.f32 0.0, %v4904
    %v4906 = vpop.f32.mrb[0].mxu0
    %v4907 = vadd.f32 0.0, %v4906
    %v4908 = vpop.f32.mrb[0].mxu0
    %v4909 = vadd.f32 0.0, %v4908
    %4910 = vmatprep.mubr.bf16.mxu0 %v633
    %4911 = vmatmul.mubr.bf16.gmra.mrb[0].mxu0 %v632
    %v4912 = vpop.f32.mrb[0].mxu0
    %v4913 = vadd.f32 0.0, %v4912
    %v4914 = vpop.f32.mrb[0].mxu0
    %v4915 = vadd.f32 0.0, %v4914
    %v4916 = vpop.f32.mrb[0].mxu0
    %v4917 = vadd.f32 0.0, %v4916
    %v4918 = vpop.f32.mrb[0].mxu0
    %v4919 = vadd.f32 0.0, %v4918
    %4920 = vmatprep.mubr.bf16.mxu0 %v637
    %4921 = vmatmul.mubr.bf16.gmra.mrb[0].mxu0 %v636
    %v4922 = vpop.f32.mrb[0].mxu0
    %v4923 = vadd.f32 0.0, %v4922
    %v4924 = vpop.f32.mrb[0].mxu0
    %v4925 = vadd.f32 0.0, %v4924
    %v4926 = vpop.f32.mrb[0].mxu0
    %v4927 = vadd.f32 0.0, %v4926
    %v4928 = vpop.f32.mrb[0].mxu0
    %v4929 = vadd.f32 0.0, %v4928
    %4930 = vmatprep.mubr.bf16.mxu0 %v641
    %4931 = vmatmul.mubr.bf16.gmra.mrb[0].mxu0 %v640
    %v4932 = vpop.f32.mrb[0].mxu0
    %v4933 = vadd.f32 0.0, %v4932
    %v4934 = vpop.f32.mrb[0].mxu0
    %v4935 = vadd.f32 0.0, %v4934
    %v4936 = vpop.f32.mrb[0].mxu0
    %v4937 = vadd.f32 0.0, %v4936
    %v4938 = vpop.f32.mrb[0].mxu0
    %v4939 = vadd.f32 0.0, %v4938
    %4940 = vmatprep.mubr.bf16.mxu0 %v645
    %4941 = vmatmul.mubr.bf16.gmra.mrb[0].mxu0 %v644
    %v4942 = vpop.f32.mrb[0].mxu0
    %v4943 = vadd.f32 0.0, %v4942
    %v4944 = vpop.f32.mrb[0].mxu0
    %v4945 = vadd.f32 0.0, %v4944
    %v4946 = vpop.f32.mrb[0].mxu0
    %v4947 = vadd.f32 0.0, %v4946
    %v4948 = vpop.f32.mrb[0].mxu0
    %v4949 = vadd.f32 0.0, %v4948
    %4950 = vmatprep.mubr.bf16.mxu0 %v649
    %4951 = vmatmul.mubr.bf16.gmra.mrb[0].mxu0 %v648
    %v4952 = vpop.f32.mrb[0].mxu0
    %v4953 = vadd.f32 0.0, %v4952
    %v4954 = vpop.f32.mrb[0].mxu0
    %v4955 = vadd.f32 0.0, %v4954
    %v4956 = vpop.f32.mrb[0].mxu0
    %v4957 = vadd.f32 0.0, %v4956
    %v4958 = vpop.f32.mrb[0].mxu0
    %v4959 = vadd.f32 0.0, %v4958
    %4960 = vmatprep.mubr.bf16.mxu0 %v653
    %4961 = vmatmul.mubr.bf16.gmra.mrb[0].mxu0 %v652
    %v4962 = vpop.f32.mrb[0].mxu0
    %v4963 = vadd.f32 0.0, %v4962
    %v4964 = vpop.f32.mrb[0].mxu0
    %v4965 = vadd.f32 0.0, %v4964
    %v4966 = vpop.f32.mrb[0].mxu0
    %v4967 = vadd.f32 0.0, %v4966
    %v4968 = vpop.f32.mrb[0].mxu0
    %v4969 = vadd.f32 0.0, %v4968
    %4970 = vdwg.mxu0
    %4971 = vmatprep.subr.bf16.mxu0 %v2971
    %4972 = vmatpush1.bf16.msra.mxu0 %v2970
    %4973 = vmatprep.subr.bf16.mxu0 %v2987
    %4974 = vmatpush1.bf16.msra.mxu0 %v2986
    %4975 = vmatprep.subr.bf16.mxu0 %v3003
    %4976 = vmatpush1.bf16.msra.mxu0 %v3002
    %4977 = vmatprep.subr.bf16.mxu0 %v3019
    %4978 = vmatpush1.bf16.msra.mxu0 %v3018
    %4979 = vmatprep.subr.bf16.mxu0 %v3035
    %4980 = vmatpush1.bf16.msra.mxu0 %v3034
    %4981 = vmatprep.subr.bf16.mxu0 %v3051
    %4982 = vmatpush1.bf16.msra.mxu0 %v3050
    %4983 = vmatprep.subr.bf16.mxu0 %v3067
    %4984 = vmatpush1.bf16.msra.mxu0 %v3066
    %4985 = vmatprep.subr.bf16.mxu0 %v3083
    %4986 = vmatpush1.bf16.msra.mxu0 %v3082
    %4987 = vmatprep.subr.bf16.mxu0 %v3099
    %4988 = vmatpush1.bf16.msra.mxu0 %v3098
    %4989 = vmatprep.subr.bf16.mxu0 %v3115
    %4990 = vmatpush1.bf16.msra.mxu0 %v3114
    %4991 = vmatprep.subr.bf16.mxu0 %v3131
    %4992 = vmatpush1.bf16.msra.mxu0 %v3130
    %4993 = vmatprep.subr.bf16.mxu0 %v3147
    %4994 = vmatpush1.bf16.msra.mxu0 %v3146
    %4995 = vmatprep.subr.bf16.mxu0 %v3163
    %4996 = vmatpush1.bf16.msra.mxu0 %v3162
    %4997 = vmatprep.subr.bf16.mxu0 %v3179
    %4998 = vmatpush1.bf16.msra.mxu0 %v3178
    %4999 = vmatprep.subr.bf16.mxu0 %v3195
    %5000 = vmatpush1.bf16.msra.mxu0 %v3194
    %5001 = vmatprep.subr.bf16.mxu0 %v3211
    %5002 = vmatpush1.bf16.msra.mxu0 %v3210
    %5003 = vmatprep.mubr.bf16.mxu0 %v627
    %5004 = vmatmul.mubr.bf16.gmra.mrb[0].mxu0 %v626
    %v5005 = vpop.f32.mrb[0].mxu0
    %v5006 = vadd.f32 %v4893, %v5005
    %v5007 = vpop.f32.mrb[0].mxu0
    %v5008 = vadd.f32 %v4895, %v5007
    %v5009 = vpop.f32.mrb[0].mxu0
    %v5010 = vadd.f32 %v4897, %v5009
    %v5011 = vpop.f32.mrb[0].mxu0
    %v5012 = vadd.f32 %v4899, %v5011
    %5013 = vmatprep.mubr.bf16.mxu0 %v631
    %5014 = vmatmul.mubr.bf16.gmra.mrb[0].mxu0 %v630
    %v5015 = vpop.f32.mrb[0].mxu0
    %v5016 = vadd.f32 %v4903, %v5015
    %v5017 = vpop.f32.mrb[0].mxu0
    %v5018 = vadd.f32 %v4905, %v5017
    %v5019 = vpop.f32.mrb[0].mxu0
    %v5020 = vadd.f32 %v4907, %v5019
    %v5021 = vpop.f32.mrb[0].mxu0
    %v5022 = vadd.f32 %v4909, %v5021
    %5023 = vmatprep.mubr.bf16.mxu0 %v635
    %5024 = vmatmul.mubr.bf16.gmra.mrb[0].mxu0 %v634
    %v5025 = vpop.f32.mrb[0].mxu0
    %v5026 = vadd.f32 %v4913, %v5025
    %v5027 = vpop.f32.mrb[0].mxu0
    %v5028 = vadd.f32 %v4915, %v5027
    %v5029 = vpop.f32.mrb[0].mxu0
    %v5030 = vadd.f32 %v4917, %v5029
    %v5031 = vpop.f32.mrb[0].mxu0
    %v5032 = vadd.f32 %v4919, %v5031
    %5033 = vmatprep.mubr.bf16.mxu0 %v639
    %5034 = vmatmul.mubr.bf16.gmra.mrb[0].mxu0 %v638
    %v5035 = vpop.f32.mrb[0].mxu0
    %v5036 = vadd.f32 %v4923, %v5035
    %v5037 = vpop.f32.mrb[0].mxu0
    %v5038 = vadd.f32 %v4925, %v5037
    %v5039 = vpop.f32.mrb[0].mxu0
    %v5040 = vadd.f32 %v4927, %v5039
    %v5041 = vpop.f32.mrb[0].mxu0
    %v5042 = vadd.f32 %v4929, %v5041
    %5043 = vmatprep.mubr.bf16.mxu0 %v643
    %5044 = vmatmul.mubr.bf16.gmra.mrb[0].mxu0 %v642
    %v5045 = vpop.f32.mrb[0].mxu0
    %v5046 = vadd.f32 %v4933, %v5045
    %v5047 = vpop.f32.mrb[0].mxu0
    %v5048 = vadd.f32 %v4935, %v5047
    %v5049 = vpop.f32.mrb[0].mxu0
    %v5050 = vadd.f32 %v4937, %v5049
    %v5051 = vpop.f32.mrb[0].mxu0
    %v5052 = vadd.f32 %v4939, %v5051
    %5053 = vmatprep.mubr.bf16.mxu0 %v647
    %5054 = vmatmul.mubr.bf16.gmra.mrb[0].mxu0 %v646
    %v5055 = vpop.f32.mrb[0].mxu0
    %v5056 = vadd.f32 %v4943, %v5055
    %v5057 = vpop.f32.mrb[0].mxu0
    %v5058 = vadd.f32 %v4945, %v5057
    %v5059 = vpop.f32.mrb[0].mxu0
    %v5060 = vadd.f32 %v4947, %v5059
    %v5061 = vpop.f32.mrb[0].mxu0
    %v5062 = vadd.f32 %v4949, %v5061
    %5063 = vmatprep.mubr.bf16.mxu0 %v651
    %5064 = vmatmul.mubr.bf16.gmra.mrb[0].mxu0 %v650
    %v5065 = vpop.f32.mrb[0].mxu0
    %v5066 = vadd.f32 %v4953, %v5065
    %v5067 = vpop.f32.mrb[0].mxu0
    %v5068 = vadd.f32 %v4955, %v5067
    %v5069 = vpop.f32.mrb[0].mxu0
    %v5070 = vadd.f32 %v4957, %v5069
    %v5071 = vpop.f32.mrb[0].mxu0
    %v5072 = vadd.f32 %v4959, %v5071
    %5073 = vmatprep.mubr.bf16.mxu0 %v655
    %5074 = vmatmul.mubr.bf16.gmra.mrb[0].mxu0 %v654
    %v5075 = vpop.f32.mrb[0].mxu0
    %v5076 = vadd.f32 %v4963, %v5075
    %v5077 = vpop.f32.mrb[0].mxu0
    %v5078 = vadd.f32 %v4965, %v5077
    %v5079 = vpop.f32.mrb[0].mxu0
    %v5080 = vadd.f32 %v4967, %v5079
    %v5081 = vpop.f32.mrb[0].mxu0
    %v5082 = vadd.f32 %v4969, %v5081
    %5083 = vdwg.mxu0
    %5084 = vmatprep.subr.bf16.mxu0 %v2717
    %5085 = vmatpush1.bf16.msra.mxu0 %v2716
    %5086 = vmatprep.subr.bf16.mxu0 %v2733
    %5087 = vmatpush1.bf16.msra.mxu0 %v2732
    %5088 = vmatprep.subr.bf16.mxu0 %v2749
    %5089 = vmatpush1.bf16.msra.mxu0 %v2748
    %5090 = vmatprep.subr.bf16.mxu0 %v2765
    %5091 = vmatpush1.bf16.msra.mxu0 %v2764
    %5092 = vmatprep.subr.bf16.mxu0 %v2781
    %5093 = vmatpush1.bf16.msra.mxu0 %v2780
    %5094 = vmatprep.subr.bf16.mxu0 %v2797
    %5095 = vmatpush1.bf16.msra.mxu0 %v2796
    %5096 = vmatprep.subr.bf16.mxu0 %v2813
    %5097 = vmatpush1.bf16.msra.mxu0 %v2812
    %5098 = vmatprep.subr.bf16.mxu0 %v2829
    %5099 = vmatpush1.bf16.msra.mxu0 %v2828
    %5100 = vmatprep.subr.bf16.mxu0 %v2845
    %5101 = vmatpush1.bf16.msra.mxu0 %v2844
    %5102 = vmatprep.subr.bf16.mxu0 %v2861
    %5103 = vmatpush1.bf16.msra.mxu0 %v2860
    %5104 = vmatprep.subr.bf16.mxu0 %v2877
    %5105 = vmatpush1.bf16.msra.mxu0 %v2876
    %5106 = vmatprep.subr.bf16.mxu0 %v2893
    %5107 = vmatpush1.bf16.msra.mxu0 %v2892
    %5108 = vmatprep.subr.bf16.mxu0 %v2909
    %5109 = vmatpush1.bf16.msra.mxu0 %v2908
    %5110 = vmatprep.subr.bf16.mxu0 %v2925
    %5111 = vmatpush1.bf16.msra.mxu0 %v2924
    %5112 = vmatprep.subr.bf16.mxu0 %v2941
    %5113 = vmatpush1.bf16.msra.mxu0 %v2940
    %5114 = vmatprep.subr.bf16.mxu0 %v2957
    %5115 = vmatpush1.bf16.msra.mxu0 %v2956
    %5116 = vmatprep.mubr.bf16.mxu0 %v625
    %5117 = vmatmul.mubr.bf16.gmra.mrb[0].mxu0 %v624
    %v5118 = vpop.f32.mrb[0].mxu0
    %v5119 = vadd.f32 0.0, %v5118
    %v5120 = vpop.f32.mrb[0].mxu0
    %v5121 = vadd.f32 0.0, %v5120
    %v5122 = vpop.f32.mrb[0].mxu0
    %v5123 = vadd.f32 0.0, %v5122
    %v5124 = vpop.f32.mrb[0].mxu0
    %v5125 = vadd.f32 0.0, %v5124
    %5126 = vmatprep.mubr.bf16.mxu0 %v629
    %5127 = vmatmul.mubr.bf16.gmra.mrb[0].mxu0 %v628
    %v5128 = vpop.f32.mrb[0].mxu0
    %v5129 = vadd.f32 0.0, %v5128
    %v5130 = vpop.f32.mrb[0].mxu0
    %v5131 = vadd.f32 0.0, %v5130
    %v5132 = vpop.f32.mrb[0].mxu0
    %v5133 = vadd.f32 0.0, %v5132
    %v5134 = vpop.f32.mrb[0].mxu0
    %v5135 = vadd.f32 0.0, %v5134
    %5136 = vmatprep.mubr.bf16.mxu0 %v633
    %5137 = vmatmul.mubr.bf16.gmra.mrb[0].mxu0 %v632
    %v5138 = vpop.f32.mrb[0].mxu0
    %v5139 = vadd.f32 0.0, %v5138
    %v5140 = vpop.f32.mrb[0].mxu0
    %v5141 = vadd.f32 0.0, %v5140
    %v5142 = vpop.f32.mrb[0].mxu0
    %v5143 = vadd.f32 0.0, %v5142
    %v5144 = vpop.f32.mrb[0].mxu0
    %v5145 = vadd.f32 0.0, %v5144
    %5146 = vmatprep.mubr.bf16.mxu0 %v637
    %5147 = vmatmul.mubr.bf16.gmra.mrb[0].mxu0 %v636
    %v5148 = vpop.f32.mrb[0].mxu0
    %v5149 = vadd.f32 0.0, %v5148
    %v5150 = vpop.f32.mrb[0].mxu0
    %v5151 = vadd.f32 0.0, %v5150
    %v5152 = vpop.f32.mrb[0].mxu0
    %v5153 = vadd.f32 0.0, %v5152
    %v5154 = vpop.f32.mrb[0].mxu0
    %v5155 = vadd.f32 0.0, %v5154
    %5156 = vmatprep.mubr.bf16.mxu0 %v641
    %5157 = vmatmul.mubr.bf16.gmra.mrb[0].mxu0 %v640
    %v5158 = vpop.f32.mrb[0].mxu0
    %v5159 = vadd.f32 0.0, %v5158
    %v5160 = vpop.f32.mrb[0].mxu0
    %v5161 = vadd.f32 0.0, %v5160
    %v5162 = vpop.f32.mrb[0].mxu0
    %v5163 = vadd.f32 0.0, %v5162
    %v5164 = vpop.f32.mrb[0].mxu0
    %v5165 = vadd.f32 0.0, %v5164
    %5166 = vmatprep.mubr.bf16.mxu0 %v645
    %5167 = vmatmul.mubr.bf16.gmra.mrb[0].mxu0 %v644
    %v5168 = vpop.f32.mrb[0].mxu0
    %v5169 = vadd.f32 0.0, %v5168
    %v5170 = vpop.f32.mrb[0].mxu0
    %v5171 = vadd.f32 0.0, %v5170
    %v5172 = vpop.f32.mrb[0].mxu0
    %v5173 = vadd.f32 0.0, %v5172
    %v5174 = vpop.f32.mrb[0].mxu0
    %v5175 = vadd.f32 0.0, %v5174
    %5176 = vmatprep.mubr.bf16.mxu0 %v649
    %5177 = vmatmul.mubr.bf16.gmra.mrb[0].mxu0 %v648
    %v5178 = vpop.f32.mrb[0].mxu0
    %v5179 = vadd.f32 0.0, %v5178
    %v5180 = vpop.f32.mrb[0].mxu0
    %v5181 = vadd.f32 0.0, %v5180
    %v5182 = vpop.f32.mrb[0].mxu0
    %v5183 = vadd.f32 0.0, %v5182
    %v5184 = vpop.f32.mrb[0].mxu0
    %v5185 = vadd.f32 0.0, %v5184
    %5186 = vmatprep.mubr.bf16.mxu0 %v653
    %5187 = vmatmul.mubr.bf16.gmra.mrb[0].mxu0 %v652
    %v5188 = vpop.f32.mrb[0].mxu0
    %v5189 = vadd.f32 0.0, %v5188
    %v5190 = vpop.f32.mrb[0].mxu0
    %v5191 = vadd.f32 0.0, %v5190
    %v5192 = vpop.f32.mrb[0].mxu0
    %v5193 = vadd.f32 0.0, %v5192
    %v5194 = vpop.f32.mrb[0].mxu0
    %v5195 = vadd.f32 0.0, %v5194
    %5196 = vdwg.mxu0
    %5197 = vmatprep.subr.bf16.mxu0 %v2973
    %5198 = vmatpush1.bf16.msra.mxu0 %v2972
    %5199 = vmatprep.subr.bf16.mxu0 %v2989
    %5200 = vmatpush1.bf16.msra.mxu0 %v2988
    %5201 = vmatprep.subr.bf16.mxu0 %v3005
    %5202 = vmatpush1.bf16.msra.mxu0 %v3004
    %5203 = vmatprep.subr.bf16.mxu0 %v3021
    %5204 = vmatpush1.bf16.msra.mxu0 %v3020
    %5205 = vmatprep.subr.bf16.mxu0 %v3037
    %5206 = vmatpush1.bf16.msra.mxu0 %v3036
    %5207 = vmatprep.subr.bf16.mxu0 %v3053
    %5208 = vmatpush1.bf16.msra.mxu0 %v3052
    %5209 = vmatprep.subr.bf16.mxu0 %v3069
    %5210 = vmatpush1.bf16.msra.mxu0 %v3068
    %5211 = vmatprep.subr.bf16.mxu0 %v3085
    %5212 = vmatpush1.bf16.msra.mxu0 %v3084
    %5213 = vmatprep.subr.bf16.mxu0 %v3101
    %5214 = vmatpush1.bf16.msra.mxu0 %v3100
    %5215 = vmatprep.subr.bf16.mxu0 %v3117
    %5216 = vmatpush1.bf16.msra.mxu0 %v3116
    %5217 = vmatprep.subr.bf16.mxu0 %v3133
    %5218 = vmatpush1.bf16.msra.mxu0 %v3132
    %5219 = vmatprep.subr.bf16.mxu0 %v3149
    %5220 = vmatpush1.bf16.msra.mxu0 %v3148
    %5221 = vmatprep.subr.bf16.mxu0 %v3165
    %5222 = vmatpush1.bf16.msra.mxu0 %v3164
    %5223 = vmatprep.subr.bf16.mxu0 %v3181
    %5224 = vmatpush1.bf16.msra.mxu0 %v3180
    %5225 = vmatprep.subr.bf16.mxu0 %v3197
    %5226 = vmatpush1.bf16.msra.mxu0 %v3196
    %5227 = vmatprep.subr.bf16.mxu0 %v3213
    %5228 = vmatpush1.bf16.msra.mxu0 %v3212
    %5229 = vmatprep.mubr.bf16.mxu0 %v627
    %5230 = vmatmul.mubr.bf16.gmra.mrb[0].mxu0 %v626
    %v5231 = vpop.f32.mrb[0].mxu0
    %v5232 = vadd.f32 %v5119, %v5231
    %v5233 = vpop.f32.mrb[0].mxu0
    %v5234 = vadd.f32 %v5121, %v5233
    %v5235 = vpop.f32.mrb[0].mxu0
    %v5236 = vadd.f32 %v5123, %v5235
    %v5237 = vpop.f32.mrb[0].mxu0
    %v5238 = vadd.f32 %v5125, %v5237
    %5239 = vmatprep.mubr.bf16.mxu0 %v631
    %5240 = vmatmul.mubr.bf16.gmra.mrb[0].mxu0 %v630
    %v5241 = vpop.f32.mrb[0].mxu0
    %v5242 = vadd.f32 %v5129, %v5241
    %v5243 = vpop.f32.mrb[0].mxu0
    %v5244 = vadd.f32 %v5131, %v5243
    %v5245 = vpop.f32.mrb[0].mxu0
    %v5246 = vadd.f32 %v5133, %v5245
    %v5247 = vpop.f32.mrb[0].mxu0
    %v5248 = vadd.f32 %v5135, %v5247
    %5249 = vmatprep.mubr.bf16.mxu0 %v635
    %5250 = vmatmul.mubr.bf16.gmra.mrb[0].mxu0 %v634
    %v5251 = vpop.f32.mrb[0].mxu0
    %v5252 = vadd.f32 %v5139, %v5251
    %v5253 = vpop.f32.mrb[0].mxu0
    %v5254 = vadd.f32 %v5141, %v5253
    %v5255 = vpop.f32.mrb[0].mxu0
    %v5256 = vadd.f32 %v5143, %v5255
    %v5257 = vpop.f32.mrb[0].mxu0
    %v5258 = vadd.f32 %v5145, %v5257
    %5259 = vmatprep.mubr.bf16.mxu0 %v639
    %5260 = vmatmul.mubr.bf16.gmra.mrb[0].mxu0 %v638
    %v5261 = vpop.f32.mrb[0].mxu0
    %v5262 = vadd.f32 %v5149, %v5261
    %v5263 = vpop.f32.mrb[0].mxu0
    %v5264 = vadd.f32 %v5151, %v5263
    %v5265 = vpop.f32.mrb[0].mxu0
    %v5266 = vadd.f32 %v5153, %v5265
    %v5267 = vpop.f32.mrb[0].mxu0
    %v5268 = vadd.f32 %v5155, %v5267
    %5269 = vmatprep.mubr.bf16.mxu0 %v643
    %5270 = vmatmul.mubr.bf16.gmra.mrb[0].mxu0 %v642
    %v5271 = vpop.f32.mrb[0].mxu0
    %v5272 = vadd.f32 %v5159, %v5271
    %v5273 = vpop.f32.mrb[0].mxu0
    %v5274 = vadd.f32 %v5161, %v5273
    %v5275 = vpop.f32.mrb[0].mxu0
    %v5276 = vadd.f32 %v5163, %v5275
    %v5277 = vpop.f32.mrb[0].mxu0
    %v5278 = vadd.f32 %v5165, %v5277
    %5279 = vmatprep.mubr.bf16.mxu0 %v647
    %5280 = vmatmul.mubr.bf16.gmra.mrb[0].mxu0 %v646
    %v5281 = vpop.f32.mrb[0].mxu0
    %v5282 = vadd.f32 %v5169, %v5281
    %v5283 = vpop.f32.mrb[0].mxu0
    %v5284 = vadd.f32 %v5171, %v5283
    %v5285 = vpop.f32.mrb[0].mxu0
    %v5286 = vadd.f32 %v5173, %v5285
    %v5287 = vpop.f32.mrb[0].mxu0
    %v5288 = vadd.f32 %v5175, %v5287
    %5289 = vmatprep.mubr.bf16.mxu0 %v651
    %5290 = vmatmul.mubr.bf16.gmra.mrb[0].mxu0 %v650
    %v5291 = vpop.f32.mrb[0].mxu0
    %v5292 = vadd.f32 %v5179, %v5291
    %v5293 = vpop.f32.mrb[0].mxu0
    %v5294 = vadd.f32 %v5181, %v5293
    %v5295 = vpop.f32.mrb[0].mxu0
    %v5296 = vadd.f32 %v5183, %v5295
    %v5297 = vpop.f32.mrb[0].mxu0
    %v5298 = vadd.f32 %v5185, %v5297
    %5299 = vmatprep.mubr.bf16.mxu0 %v655
    %5300 = vmatmul.mubr.bf16.gmra.mrb[0].mxu0 %v654
    %v5301 = vpop.f32.mrb[0].mxu0
    %v5302 = vadd.f32 %v5189, %v5301
    %v5303 = vpop.f32.mrb[0].mxu0
    %v5304 = vadd.f32 %v5191, %v5303
    %v5305 = vpop.f32.mrb[0].mxu0
    %v5306 = vadd.f32 %v5193, %v5305
    %v5307 = vpop.f32.mrb[0].mxu0
    %v5308 = vadd.f32 %v5195, %v5307
    %5309 = vdwg.mxu0
    %5310 = vmatprep.subr.bf16.mxu0 %v2719
    %5311 = vmatpush1.bf16.msra.mxu0 %v2718
    %5312 = vmatprep.subr.bf16.mxu0 %v2735
    %5313 = vmatpush1.bf16.msra.mxu0 %v2734
    %5314 = vmatprep.subr.bf16.mxu0 %v2751
    %5315 = vmatpush1.bf16.msra.mxu0 %v2750
    %5316 = vmatprep.subr.bf16.mxu0 %v2767
    %5317 = vmatpush1.bf16.msra.mxu0 %v2766
    %5318 = vmatprep.subr.bf16.mxu0 %v2783
    %5319 = vmatpush1.bf16.msra.mxu0 %v2782
    %5320 = vmatprep.subr.bf16.mxu0 %v2799
    %5321 = vmatpush1.bf16.msra.mxu0 %v2798
    %5322 = vmatprep.subr.bf16.mxu0 %v2815
    %5323 = vmatpush1.bf16.msra.mxu0 %v2814
    %5324 = vmatprep.subr.bf16.mxu0 %v2831
    %5325 = vmatpush1.bf16.msra.mxu0 %v2830
    %5326 = vmatprep.subr.bf16.mxu0 %v2847
    %5327 = vmatpush1.bf16.msra.mxu0 %v2846
    %5328 = vmatprep.subr.bf16.mxu0 %v2863
    %5329 = vmatpush1.bf16.msra.mxu0 %v2862
    %5330 = vmatprep.subr.bf16.mxu0 %v2879
    %5331 = vmatpush1.bf16.msra.mxu0 %v2878
    %5332 = vmatprep.subr.bf16.mxu0 %v2895
    %5333 = vmatpush1.bf16.msra.mxu0 %v2894
    %5334 = vmatprep.subr.bf16.mxu0 %v2911
    %5335 = vmatpush1.bf16.msra.mxu0 %v2910
    %5336 = vmatprep.subr.bf16.mxu0 %v2927
    %5337 = vmatpush1.bf16.msra.mxu0 %v2926
    %5338 = vmatprep.subr.bf16.mxu0 %v2943
    %5339 = vmatpush1.bf16.msra.mxu0 %v2942
    %5340 = vmatprep.subr.bf16.mxu0 %v2959
    %5341 = vmatpush1.bf16.msra.mxu0 %v2958
    %5342 = vmatprep.mubr.bf16.mxu0 %v625
    %5343 = vmatmul.mubr.bf16.gmra.mrb[0].mxu0 %v624
    %v5344 = vpop.f32.mrb[0].mxu0
    %v5345 = vadd.f32 0.0, %v5344
    %v5346 = vpop.f32.mrb[0].mxu0
    %v5347 = vadd.f32 0.0, %v5346
    %v5348 = vpop.f32.mrb[0].mxu0
    %v5349 = vadd.f32 0.0, %v5348
    %v5350 = vpop.f32.mrb[0].mxu0
    %v5351 = vadd.f32 0.0, %v5350
    %5352 = vmatprep.mubr.bf16.mxu0 %v629
    %5353 = vmatmul.mubr.bf16.gmra.mrb[0].mxu0 %v628
    %v5354 = vpop.f32.mrb[0].mxu0
    %v5355 = vadd.f32 0.0, %v5354
    %v5356 = vpop.f32.mrb[0].mxu0
    %v5357 = vadd.f32 0.0, %v5356
    %v5358 = vpop.f32.mrb[0].mxu0
    %v5359 = vadd.f32 0.0, %v5358
    %v5360 = vpop.f32.mrb[0].mxu0
    %v5361 = vadd.f32 0.0, %v5360
    %5362 = vmatprep.mubr.bf16.mxu0 %v633
    %5363 = vmatmul.mubr.bf16.gmra.mrb[0].mxu0 %v632
    %v5364 = vpop.f32.mrb[0].mxu0
    %v5365 = vadd.f32 0.0, %v5364
    %v5366 = vpop.f32.mrb[0].mxu0
    %v5367 = vadd.f32 0.0, %v5366
    %v5368 = vpop.f32.mrb[0].mxu0
    %v5369 = vadd.f32 0.0, %v5368
    %v5370 = vpop.f32.mrb[0].mxu0
    %v5371 = vadd.f32 0.0, %v5370
    %5372 = vmatprep.mubr.bf16.mxu0 %v637
    %5373 = vmatmul.mubr.bf16.gmra.mrb[0].mxu0 %v636
    %v5374 = vpop.f32.mrb[0].mxu0
    %v5375 = vadd.f32 0.0, %v5374
    %v5376 = vpop.f32.mrb[0].mxu0
    %v5377 = vadd.f32 0.0, %v5376
    %v5378 = vpop.f32.mrb[0].mxu0
    %v5379 = vadd.f32 0.0, %v5378
    %v5380 = vpop.f32.mrb[0].mxu0
    %v5381 = vadd.f32 0.0, %v5380
    %5382 = vmatprep.mubr.bf16.mxu0 %v641
    %5383 = vmatmul.mubr.bf16.gmra.mrb[0].mxu0 %v640
    %v5384 = vpop.f32.mrb[0].mxu0
    %v5385 = vadd.f32 0.0, %v5384
    %v5386 = vpop.f32.mrb[0].mxu0
    %v5387 = vadd.f32 0.0, %v5386
    %v5388 = vpop.f32.mrb[0].mxu0
    %v5389 = vadd.f32 0.0, %v5388
    %v5390 = vpop.f32.mrb[0].mxu0
    %v5391 = vadd.f32 0.0, %v5390
    %5392 = vmatprep.mubr.bf16.mxu0 %v645
    %5393 = vmatmul.mubr.bf16.gmra.mrb[0].mxu0 %v644
    %v5394 = vpop.f32.mrb[0].mxu0
    %v5395 = vadd.f32 0.0, %v5394
    %v5396 = vpop.f32.mrb[0].mxu0
    %v5397 = vadd.f32 0.0, %v5396
    %v5398 = vpop.f32.mrb[0].mxu0
    %v5399 = vadd.f32 0.0, %v5398
    %v5400 = vpop.f32.mrb[0].mxu0
    %v5401 = vadd.f32 0.0, %v5400
    %5402 = vmatprep.mubr.bf16.mxu0 %v649
    %5403 = vmatmul.mubr.bf16.gmra.mrb[0].mxu0 %v648
    %v5404 = vpop.f32.mrb[0].mxu0
    %v5405 = vadd.f32 0.0, %v5404
    %v5406 = vpop.f32.mrb[0].mxu0
    %v5407 = vadd.f32 0.0, %v5406
    %v5408 = vpop.f32.mrb[0].mxu0
    %v5409 = vadd.f32 0.0, %v5408
    %v5410 = vpop.f32.mrb[0].mxu0
    %v5411 = vadd.f32 0.0, %v5410
    %5412 = vmatprep.mubr.bf16.mxu0 %v653
    %5413 = vmatmul.mubr.bf16.gmra.mrb[0].mxu0 %v652
    %v5414 = vpop.f32.mrb[0].mxu0
    %v5415 = vadd.f32 0.0, %v5414
    %v5416 = vpop.f32.mrb[0].mxu0
    %v5417 = vadd.f32 0.0, %v5416
    %v5418 = vpop.f32.mrb[0].mxu0
    %v5419 = vadd.f32 0.0, %v5418
    %v5420 = vpop.f32.mrb[0].mxu0
    %v5421 = vadd.f32 0.0, %v5420
    %5422 = vdwg.mxu0
    %5423 = vmatprep.subr.bf16.mxu0 %v2975
    %5424 = vmatpush1.bf16.msra.mxu0 %v2974
    %5425 = vmatprep.subr.bf16.mxu0 %v2991
    %5426 = vmatpush1.bf16.msra.mxu0 %v2990
    %5427 = vmatprep.subr.bf16.mxu0 %v3007
    %5428 = vmatpush1.bf16.msra.mxu0 %v3006
    %5429 = vmatprep.subr.bf16.mxu0 %v3023
    %5430 = vmatpush1.bf16.msra.mxu0 %v3022
    %5431 = vmatprep.subr.bf16.mxu0 %v3039
    %5432 = vmatpush1.bf16.msra.mxu0 %v3038
    %5433 = vmatprep.subr.bf16.mxu0 %v3055
    %5434 = vmatpush1.bf16.msra.mxu0 %v3054
    %5435 = vmatprep.subr.bf16.mxu0 %v3071
    %5436 = vmatpush1.bf16.msra.mxu0 %v3070
    %5437 = vmatprep.subr.bf16.mxu0 %v3087
    %5438 = vmatpush1.bf16.msra.mxu0 %v3086
    %5439 = vmatprep.subr.bf16.mxu0 %v3103
    %5440 = vmatpush1.bf16.msra.mxu0 %v3102
    %5441 = vmatprep.subr.bf16.mxu0 %v3119
    %5442 = vmatpush1.bf16.msra.mxu0 %v3118
    %5443 = vmatprep.subr.bf16.mxu0 %v3135
    %5444 = vmatpush1.bf16.msra.mxu0 %v3134
    %5445 = vmatprep.subr.bf16.mxu0 %v3151
    %5446 = vmatpush1.bf16.msra.mxu0 %v3150
    %5447 = vmatprep.subr.bf16.mxu0 %v3167
    %5448 = vmatpush1.bf16.msra.mxu0 %v3166
    %5449 = vmatprep.subr.bf16.mxu0 %v3183
    %5450 = vmatpush1.bf16.msra.mxu0 %v3182
    %5451 = vmatprep.subr.bf16.mxu0 %v3199
    %5452 = vmatpush1.bf16.msra.mxu0 %v3198
    %5453 = vmatprep.subr.bf16.mxu0 %v3215
    %5454 = vmatpush1.bf16.msra.mxu0 %v3214
    %5455 = vmatprep.mubr.bf16.mxu0 %v627
    %5456 = vmatmul.mubr.bf16.gmra.mrb[0].mxu0 %v626
    %v5457 = vpop.f32.mrb[0].mxu0
    %v5458 = vadd.f32 %v5345, %v5457
    %v5459 = vpop.f32.mrb[0].mxu0
    %v5460 = vadd.f32 %v5347, %v5459
    %v5461 = vpop.f32.mrb[0].mxu0
    %v5462 = vadd.f32 %v5349, %v5461
    %v5463 = vpop.f32.mrb[0].mxu0
    %v5464 = vadd.f32 %v5351, %v5463
    %5465 = vmatprep.mubr.bf16.mxu0 %v631
    %5466 = vmatmul.mubr.bf16.gmra.mrb[0].mxu0 %v630
    %v5467 = vpop.f32.mrb[0].mxu0
    %v5468 = vadd.f32 %v5355, %v5467
    %v5469 = vpop.f32.mrb[0].mxu0
    %v5470 = vadd.f32 %v5357, %v5469
    %v5471 = vpop.f32.mrb[0].mxu0
    %v5472 = vadd.f32 %v5359, %v5471
    %v5473 = vpop.f32.mrb[0].mxu0
    %v5474 = vadd.f32 %v5361, %v5473
    %5475 = vmatprep.mubr.bf16.mxu0 %v635
    %5476 = vmatmul.mubr.bf16.gmra.mrb[0].mxu0 %v634
    %v5477 = vpop.f32.mrb[0].mxu0
    %v5478 = vadd.f32 %v5365, %v5477
    %v5479 = vpop.f32.mrb[0].mxu0
    %v5480 = vadd.f32 %v5367, %v5479
    %v5481 = vpop.f32.mrb[0].mxu0
    %v5482 = vadd.f32 %v5369, %v5481
    %v5483 = vpop.f32.mrb[0].mxu0
    %v5484 = vadd.f32 %v5371, %v5483
    %5485 = vmatprep.mubr.bf16.mxu0 %v639
    %5486 = vmatmul.mubr.bf16.gmra.mrb[0].mxu0 %v638
    %v5487 = vpop.f32.mrb[0].mxu0
    %v5488 = vadd.f32 %v5375, %v5487
    %v5489 = vpop.f32.mrb[0].mxu0
    %v5490 = vadd.f32 %v5377, %v5489
    %v5491 = vpop.f32.mrb[0].mxu0
    %v5492 = vadd.f32 %v5379, %v5491
    %v5493 = vpop.f32.mrb[0].mxu0
    %v5494 = vadd.f32 %v5381, %v5493
    %5495 = vmatprep.mubr.bf16.mxu0 %v643
    %5496 = vmatmul.mubr.bf16.gmra.mrb[0].mxu0 %v642
    %v5497 = vpop.f32.mrb[0].mxu0
    %v5498 = vadd.f32 %v5385, %v5497
    %v5499 = vpop.f32.mrb[0].mxu0
    %v5500 = vadd.f32 %v5387, %v5499
    %v5501 = vpop.f32.mrb[0].mxu0
    %v5502 = vadd.f32 %v5389, %v5501
    %v5503 = vpop.f32.mrb[0].mxu0
    %v5504 = vadd.f32 %v5391, %v5503
    %5505 = vmatprep.mubr.bf16.mxu0 %v647
    %5506 = vmatmul.mubr.bf16.gmra.mrb[0].mxu0 %v646
    %v5507 = vpop.f32.mrb[0].mxu0
    %v5508 = vadd.f32 %v5395, %v5507
    %v5509 = vpop.f32.mrb[0].mxu0
    %v5510 = vadd.f32 %v5397, %v5509
    %v5511 = vpop.f32.mrb[0].mxu0
    %v5512 = vadd.f32 %v5399, %v5511
    %v5513 = vpop.f32.mrb[0].mxu0
    %v5514 = vadd.f32 %v5401, %v5513
    %5515 = vmatprep.mubr.bf16.mxu0 %v651
    %5516 = vmatmul.mubr.bf16.gmra.mrb[0].mxu0 %v650
    %v5517 = vpop.f32.mrb[0].mxu0
    %v5518 = vadd.f32 %v5405, %v5517
    %v5519 = vpop.f32.mrb[0].mxu0
    %v5520 = vadd.f32 %v5407, %v5519
    %v5521 = vpop.f32.mrb[0].mxu0
    %v5522 = vadd.f32 %v5409, %v5521
    %v5523 = vpop.f32.mrb[0].mxu0
    %v5524 = vadd.f32 %v5411, %v5523
    %5525 = vmatprep.mubr.bf16.mxu0 %v655
    %5526 = vmatmul.mubr.bf16.gmra.mrb[0].mxu0 %v654
    %v5527 = vpop.f32.mrb[0].mxu0
    %v5528 = vadd.f32 %v5415, %v5527
    %v5529 = vpop.f32.mrb[0].mxu0
    %v5530 = vadd.f32 %v5417, %v5529
    %v5531 = vpop.f32.mrb[0].mxu0
    %v5532 = vadd.f32 %v5419, %v5531
    %v5533 = vpop.f32.mrb[0].mxu0
    %v5534 = vadd.f32 %v5421, %v5533
    %5535 = vdwg.mxu0
    %v5552 = vunpack.c.l.b16 %v352
    %v5553 = vunpack.c.h.b16 %v352
    %v5554 = vunpack.c.l.b16 %v353
    %v5555 = vunpack.c.h.b16 %v353
    %v5556 = vunpack.c.l.b16 %v354
    %v5557 = vunpack.c.h.b16 %v354
    %v5558 = vunpack.c.l.b16 %v355
    %v5559 = vunpack.c.h.b16 %v355
    %v5560 = vunpack.c.l.b16 %v356
    %v5561 = vunpack.c.h.b16 %v356
    %v5562 = vunpack.c.l.b16 %v357
    %v5563 = vunpack.c.h.b16 %v357
    %v5564 = vunpack.c.l.b16 %v358
    %v5565 = vunpack.c.h.b16 %v358
    %v5566 = vunpack.c.l.b16 %v359
    %v5567 = vunpack.c.h.b16 %v359
    %v5568 = vunpack.c.l.b16 %v360
    %v5569 = vunpack.c.h.b16 %v360
    %v5570 = vunpack.c.l.b16 %v361
    %v5571 = vunpack.c.h.b16 %v361
    %v5572 = vunpack.c.l.b16 %v362
    %v5573 = vunpack.c.h.b16 %v362
    %v5574 = vunpack.c.l.b16 %v363
    %v5575 = vunpack.c.h.b16 %v363
    %v5576 = vunpack.c.l.b16 %v364
    %v5577 = vunpack.c.h.b16 %v364
    %v5578 = vunpack.c.l.b16 %v365
    %v5579 = vunpack.c.h.b16 %v365
    %v5580 = vunpack.c.l.b16 %v366
    %v5581 = vunpack.c.h.b16 %v366
    %v5582 = vunpack.c.l.b16 %v367
    %v5583 = vunpack.c.h.b16 %v367
    %v5584 = vpack.c.b16 %v5554, %v5552
    %v5585 = vpack.c.b16 %v5555, %v5553
    %v5586 = vpack.c.b16 %v5558, %v5556
    %v5587 = vpack.c.b16 %v5559, %v5557
    %v5588 = vpack.c.b16 %v5562, %v5560
    %v5589 = vpack.c.b16 %v5563, %v5561
    %v5590 = vpack.c.b16 %v5566, %v5564
    %v5591 = vpack.c.b16 %v5567, %v5565
    %v5592 = vpack.c.b16 %v5570, %v5568
    %v5593 = vpack.c.b16 %v5571, %v5569
    %v5594 = vpack.c.b16 %v5574, %v5572
    %v5595 = vpack.c.b16 %v5575, %v5573
    %v5596 = vpack.c.b16 %v5578, %v5576
    %v5597 = vpack.c.b16 %v5579, %v5577
    %v5598 = vpack.c.b16 %v5582, %v5580
    %v5599 = vpack.c.b16 %v5583, %v5581
    %v5872 = vunpack.c.l.b16 %v368
    %v5873 = vunpack.c.h.b16 %v368
    %v5874 = vunpack.c.l.b16 %v369
    %v5875 = vunpack.c.h.b16 %v369
    %v5876 = vunpack.c.l.b16 %v370
    %v5877 = vunpack.c.h.b16 %v370
    %v5878 = vunpack.c.l.b16 %v371
    %v5879 = vunpack.c.h.b16 %v371
    %v5880 = vunpack.c.l.b16 %v372
    %v5881 = vunpack.c.h.b16 %v372
    %v5882 = vunpack.c.l.b16 %v373
    %v5883 = vunpack.c.h.b16 %v373
    %v5884 = vunpack.c.l.b16 %v374
    %v5885 = vunpack.c.h.b16 %v374
    %v5886 = vunpack.c.l.b16 %v375
    %v5887 = vunpack.c.h.b16 %v375
    %v5888 = vunpack.c.l.b16 %v376
    %v5889 = vunpack.c.h.b16 %v376
    %v5890 = vunpack.c.l.b16 %v377
    %v5891 = vunpack.c.h.b16 %v377
    %v5892 = vunpack.c.l.b16 %v378
    %v5893 = vunpack.c.h.b16 %v378
    %v5894 = vunpack.c.l.b16 %v379
    %v5895 = vunpack.c.h.b16 %v379
    %v5896 = vunpack.c.l.b16 %v380
    %v5897 = vunpack.c.h.b16 %v380
    %v5898 = vunpack.c.l.b16 %v381
    %v5899 = vunpack.c.h.b16 %v381
    %v5900 = vunpack.c.l.b16 %v382
    %v5901 = vunpack.c.h.b16 %v382
    %v5902 = vunpack.c.l.b16 %v383
    %v5903 = vunpack.c.h.b16 %v383
    %v5904 = vunpack.c.l.b16 %v384
    %v5905 = vunpack.c.h.b16 %v384
    %v5906 = vunpack.c.l.b16 %v385
    %v5907 = vunpack.c.h.b16 %v385
    %v5908 = vunpack.c.l.b16 %v386
    %v5909 = vunpack.c.h.b16 %v386
    %v5910 = vunpack.c.l.b16 %v387
    %v5911 = vunpack.c.h.b16 %v387
    %v5912 = vunpack.c.l.b16 %v388
    %v5913 = vunpack.c.h.b16 %v388
    %v5914 = vunpack.c.l.b16 %v389
    %v5915 = vunpack.c.h.b16 %v389
    %v5916 = vunpack.c.l.b16 %v390
    %v5917 = vunpack.c.h.b16 %v390
    %v5918 = vunpack.c.l.b16 %v391
    %v5919 = vunpack.c.h.b16 %v391
    %v5920 = vunpack.c.l.b16 %v392
    %v5921 = vunpack.c.h.b16 %v392
    %v5922 = vunpack.c.l.b16 %v393
    %v5923 = vunpack.c.h.b16 %v393
    %v5924 = vunpack.c.l.b16 %v394
    %v5925 = vunpack.c.h.b16 %v394
    %v5926 = vunpack.c.l.b16 %v395
    %v5927 = vunpack.c.h.b16 %v395
    %v5928 = vunpack.c.l.b16 %v396
    %v5929 = vunpack.c.h.b16 %v396
    %v5930 = vunpack.c.l.b16 %v397
    %v5931 = vunpack.c.h.b16 %v397
    %v5932 = vunpack.c.l.b16 %v398
    %v5933 = vunpack.c.h.b16 %v398
    %v5934 = vunpack.c.l.b16 %v399
    %v5935 = vunpack.c.h.b16 %v399
    %v5936 = vunpack.c.l.b16 %v400
    %v5937 = vunpack.c.h.b16 %v400
    %v5938 = vunpack.c.l.b16 %v401
    %v5939 = vunpack.c.h.b16 %v401
    %v5940 = vunpack.c.l.b16 %v402
    %v5941 = vunpack.c.h.b16 %v402
    %v5942 = vunpack.c.l.b16 %v403
    %v5943 = vunpack.c.h.b16 %v403
    %v5944 = vunpack.c.l.b16 %v404
    %v5945 = vunpack.c.h.b16 %v404
    %v5946 = vunpack.c.l.b16 %v405
    %v5947 = vunpack.c.h.b16 %v405
    %v5948 = vunpack.c.l.b16 %v406
    %v5949 = vunpack.c.h.b16 %v406
    %v5950 = vunpack.c.l.b16 %v407
    %v5951 = vunpack.c.h.b16 %v407
    %v5952 = vunpack.c.l.b16 %v408
    %v5953 = vunpack.c.h.b16 %v408
    %v5954 = vunpack.c.l.b16 %v409
    %v5955 = vunpack.c.h.b16 %v409
    %v5956 = vunpack.c.l.b16 %v410
    %v5957 = vunpack.c.h.b16 %v410
    %v5958 = vunpack.c.l.b16 %v411
    %v5959 = vunpack.c.h.b16 %v411
    %v5960 = vunpack.c.l.b16 %v412
    %v5961 = vunpack.c.h.b16 %v412
    %v5962 = vunpack.c.l.b16 %v413
    %v5963 = vunpack.c.h.b16 %v413
    %v5964 = vunpack.c.l.b16 %v414
    %v5965 = vunpack.c.h.b16 %v414
    %v5966 = vunpack.c.l.b16 %v415
    %v5967 = vunpack.c.h.b16 %v415
    %v5968 = vunpack.c.l.b16 %v416
    %v5969 = vunpack.c.h.b16 %v416
    %v5970 = vunpack.c.l.b16 %v417
    %v5971 = vunpack.c.h.b16 %v417
    %v5972 = vunpack.c.l.b16 %v418
    %v5973 = vunpack.c.h.b16 %v418
    %v5974 = vunpack.c.l.b16 %v419
    %v5975 = vunpack.c.h.b16 %v419
    %v5976 = vunpack.c.l.b16 %v420
    %v5977 = vunpack.c.h.b16 %v420
    %v5978 = vunpack.c.l.b16 %v421
    %v5979 = vunpack.c.h.b16 %v421
    %v5980 = vunpack.c.l.b16 %v422
    %v5981 = vunpack.c.h.b16 %v422
    %v5982 = vunpack.c.l.b16 %v423
    %v5983 = vunpack.c.h.b16 %v423
    %v5984 = vunpack.c.l.b16 %v424
    %v5985 = vunpack.c.h.b16 %v424
    %v5986 = vunpack.c.l.b16 %v425
    %v5987 = vunpack.c.h.b16 %v425
    %v5988 = vunpack.c.l.b16 %v426
    %v5989 = vunpack.c.h.b16 %v426
    %v5990 = vunpack.c.l.b16 %v427
    %v5991 = vunpack.c.h.b16 %v427
    %v5992 = vunpack.c.l.b16 %v428
    %v5993 = vunpack.c.h.b16 %v428
    %v5994 = vunpack.c.l.b16 %v429
    %v5995 = vunpack.c.h.b16 %v429
    %v5996 = vunpack.c.l.b16 %v430
    %v5997 = vunpack.c.h.b16 %v430
    %v5998 = vunpack.c.l.b16 %v431
    %v5999 = vunpack.c.h.b16 %v431
    %v6000 = vunpack.c.l.b16 %v432
    %v6001 = vunpack.c.h.b16 %v432
    %v6002 = vunpack.c.l.b16 %v433
    %v6003 = vunpack.c.h.b16 %v433
    %v6004 = vunpack.c.l.b16 %v434
    %v6005 = vunpack.c.h.b16 %v434
    %v6006 = vunpack.c.l.b16 %v435
    %v6007 = vunpack.c.h.b16 %v435
    %v6008 = vunpack.c.l.b16 %v436
    %v6009 = vunpack.c.h.b16 %v436
    %v6010 = vunpack.c.l.b16 %v437
    %v6011 = vunpack.c.h.b16 %v437
    %v6012 = vunpack.c.l.b16 %v438
    %v6013 = vunpack.c.h.b16 %v438
    %v6014 = vunpack.c.l.b16 %v439
    %v6015 = vunpack.c.h.b16 %v439
    %v6016 = vunpack.c.l.b16 %v440
    %v6017 = vunpack.c.h.b16 %v440
    %v6018 = vunpack.c.l.b16 %v441
    %v6019 = vunpack.c.h.b16 %v441
    %v6020 = vunpack.c.l.b16 %v442
    %v6021 = vunpack.c.h.b16 %v442
    %v6022 = vunpack.c.l.b16 %v443
    %v6023 = vunpack.c.h.b16 %v443
    %v6024 = vunpack.c.l.b16 %v444
    %v6025 = vunpack.c.h.b16 %v444
    %v6026 = vunpack.c.l.b16 %v445
    %v6027 = vunpack.c.h.b16 %v445
    %v6028 = vunpack.c.l.b16 %v446
    %v6029 = vunpack.c.h.b16 %v446
    %v6030 = vunpack.c.l.b16 %v447
    %v6031 = vunpack.c.h.b16 %v447
    %v6032 = vunpack.c.l.b16 %v448
    %v6033 = vunpack.c.h.b16 %v448
    %v6034 = vunpack.c.l.b16 %v449
    %v6035 = vunpack.c.h.b16 %v449
    %v6036 = vunpack.c.l.b16 %v450
    %v6037 = vunpack.c.h.b16 %v450
    %v6038 = vunpack.c.l.b16 %v451
    %v6039 = vunpack.c.h.b16 %v451
    %v6040 = vunpack.c.l.b16 %v452
    %v6041 = vunpack.c.h.b16 %v452
    %v6042 = vunpack.c.l.b16 %v453
    %v6043 = vunpack.c.h.b16 %v453
    %v6044 = vunpack.c.l.b16 %v454
    %v6045 = vunpack.c.h.b16 %v454
    %v6046 = vunpack.c.l.b16 %v455
    %v6047 = vunpack.c.h.b16 %v455
    %v6048 = vunpack.c.l.b16 %v456
    %v6049 = vunpack.c.h.b16 %v456
    %v6050 = vunpack.c.l.b16 %v457
    %v6051 = vunpack.c.h.b16 %v457
    %v6052 = vunpack.c.l.b16 %v458
    %v6053 = vunpack.c.h.b16 %v458
    %v6054 = vunpack.c.l.b16 %v459
    %v6055 = vunpack.c.h.b16 %v459
    %v6056 = vunpack.c.l.b16 %v460
    %v6057 = vunpack.c.h.b16 %v460
    %v6058 = vunpack.c.l.b16 %v461
    %v6059 = vunpack.c.h.b16 %v461
    %v6060 = vunpack.c.l.b16 %v462
    %v6061 = vunpack.c.h.b16 %v462
    %v6062 = vunpack.c.l.b16 %v463
    %v6063 = vunpack.c.h.b16 %v463
    %v6064 = vunpack.c.l.b16 %v464
    %v6065 = vunpack.c.h.b16 %v464
    %v6066 = vunpack.c.l.b16 %v465
    %v6067 = vunpack.c.h.b16 %v465
    %v6068 = vunpack.c.l.b16 %v466
    %v6069 = vunpack.c.h.b16 %v466
    %v6070 = vunpack.c.l.b16 %v467
    %v6071 = vunpack.c.h.b16 %v467
    %v6072 = vunpack.c.l.b16 %v468
    %v6073 = vunpack.c.h.b16 %v468
    %v6074 = vunpack.c.l.b16 %v469
    %v6075 = vunpack.c.h.b16 %v469
    %v6076 = vunpack.c.l.b16 %v470
    %v6077 = vunpack.c.h.b16 %v470
    %v6078 = vunpack.c.l.b16 %v471
    %v6079 = vunpack.c.h.b16 %v471
    %v6080 = vunpack.c.l.b16 %v472
    %v6081 = vunpack.c.h.b16 %v472
    %v6082 = vunpack.c.l.b16 %v473
    %v6083 = vunpack.c.h.b16 %v473
    %v6084 = vunpack.c.l.b16 %v474
    %v6085 = vunpack.c.h.b16 %v474
    %v6086 = vunpack.c.l.b16 %v475
    %v6087 = vunpack.c.h.b16 %v475
    %v6088 = vunpack.c.l.b16 %v476
    %v6089 = vunpack.c.h.b16 %v476
    %v6090 = vunpack.c.l.b16 %v477
    %v6091 = vunpack.c.h.b16 %v477
    %v6092 = vunpack.c.l.b16 %v478
    %v6093 = vunpack.c.h.b16 %v478
    %v6094 = vunpack.c.l.b16 %v479
    %v6095 = vunpack.c.h.b16 %v479
    %v6096 = vunpack.c.l.b16 %v480
    %v6097 = vunpack.c.h.b16 %v480
    %v6098 = vunpack.c.l.b16 %v481
    %v6099 = vunpack.c.h.b16 %v481
    %v6100 = vunpack.c.l.b16 %v482
    %v6101 = vunpack.c.h.b16 %v482
    %v6102 = vunpack.c.l.b16 %v483
    %v6103 = vunpack.c.h.b16 %v483
    %v6104 = vunpack.c.l.b16 %v484
    %v6105 = vunpack.c.h.b16 %v484
    %v6106 = vunpack.c.l.b16 %v485
    %v6107 = vunpack.c.h.b16 %v485
    %v6108 = vunpack.c.l.b16 %v486
    %v6109 = vunpack.c.h.b16 %v486
    %v6110 = vunpack.c.l.b16 %v487
    %v6111 = vunpack.c.h.b16 %v487
    %v6112 = vunpack.c.l.b16 %v488
    %v6113 = vunpack.c.h.b16 %v488
    %v6114 = vunpack.c.l.b16 %v489
    %v6115 = vunpack.c.h.b16 %v489
    %v6116 = vunpack.c.l.b16 %v490
    %v6117 = vunpack.c.h.b16 %v490
    %v6118 = vunpack.c.l.b16 %v491
    %v6119 = vunpack.c.h.b16 %v491
    %v6120 = vunpack.c.l.b16 %v492
    %v6121 = vunpack.c.h.b16 %v492
    %v6122 = vunpack.c.l.b16 %v493
    %v6123 = vunpack.c.h.b16 %v493
    %v6124 = vunpack.c.l.b16 %v494
    %v6125 = vunpack.c.h.b16 %v494
    %v6126 = vunpack.c.l.b16 %v495
    %v6127 = vunpack.c.h.b16 %v495
    %v6128 = vunpack.c.l.b16 %v496
    %v6129 = vunpack.c.h.b16 %v496
    %v6130 = vunpack.c.l.b16 %v497
    %v6131 = vunpack.c.h.b16 %v497
    %v6132 = vunpack.c.l.b16 %v498
    %v6133 = vunpack.c.h.b16 %v498
    %v6134 = vunpack.c.l.b16 %v499
    %v6135 = vunpack.c.h.b16 %v499
    %v6136 = vunpack.c.l.b16 %v500
    %v6137 = vunpack.c.h.b16 %v500
    %v6138 = vunpack.c.l.b16 %v501
    %v6139 = vunpack.c.h.b16 %v501
    %v6140 = vunpack.c.l.b16 %v502
    %v6141 = vunpack.c.h.b16 %v502
    %v6142 = vunpack.c.l.b16 %v503
    %v6143 = vunpack.c.h.b16 %v503
    %v6144 = vunpack.c.l.b16 %v504
    %v6145 = vunpack.c.h.b16 %v504
    %v6146 = vunpack.c.l.b16 %v505
    %v6147 = vunpack.c.h.b16 %v505
    %v6148 = vunpack.c.l.b16 %v506
    %v6149 = vunpack.c.h.b16 %v506
    %v6150 = vunpack.c.l.b16 %v507
    %v6151 = vunpack.c.h.b16 %v507
    %v6152 = vunpack.c.l.b16 %v508
    %v6153 = vunpack.c.h.b16 %v508
    %v6154 = vunpack.c.l.b16 %v509
    %v6155 = vunpack.c.h.b16 %v509
    %v6156 = vunpack.c.l.b16 %v510
    %v6157 = vunpack.c.h.b16 %v510
    %v6158 = vunpack.c.l.b16 %v511
    %v6159 = vunpack.c.h.b16 %v511
    %v6160 = vunpack.c.l.b16 %v512
    %v6161 = vunpack.c.h.b16 %v512
    %v6162 = vunpack.c.l.b16 %v513
    %v6163 = vunpack.c.h.b16 %v513
    %v6164 = vunpack.c.l.b16 %v514
    %v6165 = vunpack.c.h.b16 %v514
    %v6166 = vunpack.c.l.b16 %v515
    %v6167 = vunpack.c.h.b16 %v515
    %v6168 = vunpack.c.l.b16 %v516
    %v6169 = vunpack.c.h.b16 %v516
    %v6170 = vunpack.c.l.b16 %v517
    %v6171 = vunpack.c.h.b16 %v517
    %v6172 = vunpack.c.l.b16 %v518
    %v6173 = vunpack.c.h.b16 %v518
    %v6174 = vunpack.c.l.b16 %v519
    %v6175 = vunpack.c.h.b16 %v519
    %v6176 = vunpack.c.l.b16 %v520
    %v6177 = vunpack.c.h.b16 %v520
    %v6178 = vunpack.c.l.b16 %v521
    %v6179 = vunpack.c.h.b16 %v521
    %v6180 = vunpack.c.l.b16 %v522
    %v6181 = vunpack.c.h.b16 %v522
    %v6182 = vunpack.c.l.b16 %v523
    %v6183 = vunpack.c.h.b16 %v523
    %v6184 = vunpack.c.l.b16 %v524
    %v6185 = vunpack.c.h.b16 %v524
    %v6186 = vunpack.c.l.b16 %v525
    %v6187 = vunpack.c.h.b16 %v525
    %v6188 = vunpack.c.l.b16 %v526
    %v6189 = vunpack.c.h.b16 %v526
    %v6190 = vunpack.c.l.b16 %v527
    %v6191 = vunpack.c.h.b16 %v527
    %v6192 = vunpack.c.l.b16 %v528
    %v6193 = vunpack.c.h.b16 %v528
    %v6194 = vunpack.c.l.b16 %v529
    %v6195 = vunpack.c.h.b16 %v529
    %v6196 = vunpack.c.l.b16 %v530
    %v6197 = vunpack.c.h.b16 %v530
    %v6198 = vunpack.c.l.b16 %v531
    %v6199 = vunpack.c.h.b16 %v531
    %v6200 = vunpack.c.l.b16 %v532
    %v6201 = vunpack.c.h.b16 %v532
    %v6202 = vunpack.c.l.b16 %v533
    %v6203 = vunpack.c.h.b16 %v533
    %v6204 = vunpack.c.l.b16 %v534
    %v6205 = vunpack.c.h.b16 %v534
    %v6206 = vunpack.c.l.b16 %v535
    %v6207 = vunpack.c.h.b16 %v535
    %v6208 = vunpack.c.l.b16 %v536
    %v6209 = vunpack.c.h.b16 %v536
    %v6210 = vunpack.c.l.b16 %v537
    %v6211 = vunpack.c.h.b16 %v537
    %v6212 = vunpack.c.l.b16 %v538
    %v6213 = vunpack.c.h.b16 %v538
    %v6214 = vunpack.c.l.b16 %v539
    %v6215 = vunpack.c.h.b16 %v539
    %v6216 = vunpack.c.l.b16 %v540
    %v6217 = vunpack.c.h.b16 %v540
    %v6218 = vunpack.c.l.b16 %v541
    %v6219 = vunpack.c.h.b16 %v541
    %v6220 = vunpack.c.l.b16 %v542
    %v6221 = vunpack.c.h.b16 %v542
    %v6222 = vunpack.c.l.b16 %v543
    %v6223 = vunpack.c.h.b16 %v543
    %v6224 = vunpack.c.l.b16 %v544
    %v6225 = vunpack.c.h.b16 %v544
    %v6226 = vunpack.c.l.b16 %v545
    %v6227 = vunpack.c.h.b16 %v545
    %v6228 = vunpack.c.l.b16 %v546
    %v6229 = vunpack.c.h.b16 %v546
    %v6230 = vunpack.c.l.b16 %v547
    %v6231 = vunpack.c.h.b16 %v547
    %v6232 = vunpack.c.l.b16 %v548
    %v6233 = vunpack.c.h.b16 %v548
    %v6234 = vunpack.c.l.b16 %v549
    %v6235 = vunpack.c.h.b16 %v549
    %v6236 = vunpack.c.l.b16 %v550
    %v6237 = vunpack.c.h.b16 %v550
    %v6238 = vunpack.c.l.b16 %v551
    %v6239 = vunpack.c.h.b16 %v551
    %v6240 = vunpack.c.l.b16 %v552
    %v6241 = vunpack.c.h.b16 %v552
    %v6242 = vunpack.c.l.b16 %v553
    %v6243 = vunpack.c.h.b16 %v553
    %v6244 = vunpack.c.l.b16 %v554
    %v6245 = vunpack.c.h.b16 %v554
    %v6246 = vunpack.c.l.b16 %v555
    %v6247 = vunpack.c.h.b16 %v555
    %v6248 = vunpack.c.l.b16 %v556
    %v6249 = vunpack.c.h.b16 %v556
    %v6250 = vunpack.c.l.b16 %v557
    %v6251 = vunpack.c.h.b16 %v557
    %v6252 = vunpack.c.l.b16 %v558
    %v6253 = vunpack.c.h.b16 %v558
    %v6254 = vunpack.c.l.b16 %v559
    %v6255 = vunpack.c.h.b16 %v559
    %v6256 = vunpack.c.l.b16 %v560
    %v6257 = vunpack.c.h.b16 %v560
    %v6258 = vunpack.c.l.b16 %v561
    %v6259 = vunpack.c.h.b16 %v561
    %v6260 = vunpack.c.l.b16 %v562
    %v6261 = vunpack.c.h.b16 %v562
    %v6262 = vunpack.c.l.b16 %v563
    %v6263 = vunpack.c.h.b16 %v563
    %v6264 = vunpack.c.l.b16 %v564
    %v6265 = vunpack.c.h.b16 %v564
    %v6266 = vunpack.c.l.b16 %v565
    %v6267 = vunpack.c.h.b16 %v565
    %v6268 = vunpack.c.l.b16 %v566
    %v6269 = vunpack.c.h.b16 %v566
    %v6270 = vunpack.c.l.b16 %v567
    %v6271 = vunpack.c.h.b16 %v567
    %v6272 = vunpack.c.l.b16 %v568
    %v6273 = vunpack.c.h.b16 %v568
    %v6274 = vunpack.c.l.b16 %v569
    %v6275 = vunpack.c.h.b16 %v569
    %v6276 = vunpack.c.l.b16 %v570
    %v6277 = vunpack.c.h.b16 %v570
    %v6278 = vunpack.c.l.b16 %v571
    %v6279 = vunpack.c.h.b16 %v571
    %v6280 = vunpack.c.l.b16 %v572
    %v6281 = vunpack.c.h.b16 %v572
    %v6282 = vunpack.c.l.b16 %v573
    %v6283 = vunpack.c.h.b16 %v573
    %v6284 = vunpack.c.l.b16 %v574
    %v6285 = vunpack.c.h.b16 %v574
    %v6286 = vunpack.c.l.b16 %v575
    %v6287 = vunpack.c.h.b16 %v575
    %v6288 = vunpack.c.l.b16 %v576
    %v6289 = vunpack.c.h.b16 %v576
    %v6290 = vunpack.c.l.b16 %v577
    %v6291 = vunpack.c.h.b16 %v577
    %v6292 = vunpack.c.l.b16 %v578
    %v6293 = vunpack.c.h.b16 %v578
    %v6294 = vunpack.c.l.b16 %v579
    %v6295 = vunpack.c.h.b16 %v579
    %v6296 = vunpack.c.l.b16 %v580
    %v6297 = vunpack.c.h.b16 %v580
    %v6298 = vunpack.c.l.b16 %v581
    %v6299 = vunpack.c.h.b16 %v581
    %v6300 = vunpack.c.l.b16 %v582
    %v6301 = vunpack.c.h.b16 %v582
    %v6302 = vunpack.c.l.b16 %v583
    %v6303 = vunpack.c.h.b16 %v583
    %v6304 = vunpack.c.l.b16 %v584
    %v6305 = vunpack.c.h.b16 %v584
    %v6306 = vunpack.c.l.b16 %v585
    %v6307 = vunpack.c.h.b16 %v585
    %v6308 = vunpack.c.l.b16 %v586
    %v6309 = vunpack.c.h.b16 %v586
    %v6310 = vunpack.c.l.b16 %v587
    %v6311 = vunpack.c.h.b16 %v587
    %v6312 = vunpack.c.l.b16 %v588
    %v6313 = vunpack.c.h.b16 %v588
    %v6314 = vunpack.c.l.b16 %v589
    %v6315 = vunpack.c.h.b16 %v589
    %v6316 = vunpack.c.l.b16 %v590
    %v6317 = vunpack.c.h.b16 %v590
    %v6318 = vunpack.c.l.b16 %v591
    %v6319 = vunpack.c.h.b16 %v591
    %v6320 = vunpack.c.l.b16 %v592
    %v6321 = vunpack.c.h.b16 %v592
    %v6322 = vunpack.c.l.b16 %v593
    %v6323 = vunpack.c.h.b16 %v593
    %v6324 = vunpack.c.l.b16 %v594
    %v6325 = vunpack.c.h.b16 %v594
    %v6326 = vunpack.c.l.b16 %v595
    %v6327 = vunpack.c.h.b16 %v595
    %v6328 = vunpack.c.l.b16 %v596
    %v6329 = vunpack.c.h.b16 %v596
    %v6330 = vunpack.c.l.b16 %v597
    %v6331 = vunpack.c.h.b16 %v597
    %v6332 = vunpack.c.l.b16 %v598
    %v6333 = vunpack.c.h.b16 %v598
    %v6334 = vunpack.c.l.b16 %v599
    %v6335 = vunpack.c.h.b16 %v599
    %v6336 = vunpack.c.l.b16 %v600
    %v6337 = vunpack.c.h.b16 %v600
    %v6338 = vunpack.c.l.b16 %v601
    %v6339 = vunpack.c.h.b16 %v601
    %v6340 = vunpack.c.l.b16 %v602
    %v6341 = vunpack.c.h.b16 %v602
    %v6342 = vunpack.c.l.b16 %v603
    %v6343 = vunpack.c.h.b16 %v603
    %v6344 = vunpack.c.l.b16 %v604
    %v6345 = vunpack.c.h.b16 %v604
    %v6346 = vunpack.c.l.b16 %v605
    %v6347 = vunpack.c.h.b16 %v605
    %v6348 = vunpack.c.l.b16 %v606
    %v6349 = vunpack.c.h.b16 %v606
    %v6350 = vunpack.c.l.b16 %v607
    %v6351 = vunpack.c.h.b16 %v607
    %v6352 = vunpack.c.l.b16 %v608
    %v6353 = vunpack.c.h.b16 %v608
    %v6354 = vunpack.c.l.b16 %v609
    %v6355 = vunpack.c.h.b16 %v609
    %v6356 = vunpack.c.l.b16 %v610
    %v6357 = vunpack.c.h.b16 %v610
    %v6358 = vunpack.c.l.b16 %v611
    %v6359 = vunpack.c.h.b16 %v611
    %v6360 = vunpack.c.l.b16 %v612
    %v6361 = vunpack.c.h.b16 %v612
    %v6362 = vunpack.c.l.b16 %v613
    %v6363 = vunpack.c.h.b16 %v613
    %v6364 = vunpack.c.l.b16 %v614
    %v6365 = vunpack.c.h.b16 %v614
    %v6366 = vunpack.c.l.b16 %v615
    %v6367 = vunpack.c.h.b16 %v615
    %v6368 = vunpack.c.l.b16 %v616
    %v6369 = vunpack.c.h.b16 %v616
    %v6370 = vunpack.c.l.b16 %v617
    %v6371 = vunpack.c.h.b16 %v617
    %v6372 = vunpack.c.l.b16 %v618
    %v6373 = vunpack.c.h.b16 %v618
    %v6374 = vunpack.c.l.b16 %v619
    %v6375 = vunpack.c.h.b16 %v619
    %v6376 = vunpack.c.l.b16 %v620
    %v6377 = vunpack.c.h.b16 %v620
    %v6378 = vunpack.c.l.b16 %v621
    %v6379 = vunpack.c.h.b16 %v621
    %v6380 = vunpack.c.l.b16 %v622
    %v6381 = vunpack.c.h.b16 %v622
    %v6382 = vunpack.c.l.b16 %v623
    %v6383 = vunpack.c.h.b16 %v623
    %v6384 = vpack.c.b16 %v5888, %v5872
    %v6385 = vpack.c.b16 %v5889, %v5873
    %v6386 = vpack.c.b16 %v5890, %v5874
    %v6387 = vpack.c.b16 %v5891, %v5875
    %v6388 = vpack.c.b16 %v5892, %v5876
    %v6389 = vpack.c.b16 %v5893, %v5877
    %v6390 = vpack.c.b16 %v5894, %v5878
    %v6391 = vpack.c.b16 %v5895, %v5879
    %v6392 = vpack.c.b16 %v5896, %v5880
    %v6393 = vpack.c.b16 %v5897, %v5881
    %v6394 = vpack.c.b16 %v5898, %v5882
    %v6395 = vpack.c.b16 %v5899, %v5883
    %v6396 = vpack.c.b16 %v5900, %v5884
    %v6397 = vpack.c.b16 %v5901, %v5885
    %v6398 = vpack.c.b16 %v5902, %v5886
    %v6399 = vpack.c.b16 %v5903, %v5887
    %v6400 = vpack.c.b16 %v5920, %v5904
    %v6401 = vpack.c.b16 %v5921, %v5905
    %v6402 = vpack.c.b16 %v5922, %v5906
    %v6403 = vpack.c.b16 %v5923, %v5907
    %v6404 = vpack.c.b16 %v5924, %v5908
    %v6405 = vpack.c.b16 %v5925, %v5909
    %v6406 = vpack.c.b16 %v5926, %v5910
    %v6407 = vpack.c.b16 %v5927, %v5911
    %v6408 = vpack.c.b16 %v5928, %v5912
    %v6409 = vpack.c.b16 %v5929, %v5913
    %v6410 = vpack.c.b16 %v5930, %v5914
    %v6411 = vpack.c.b16 %v5931, %v5915
    %v6412 = vpack.c.b16 %v5932, %v5916
    %v6413 = vpack.c.b16 %v5933, %v5917
    %v6414 = vpack.c.b16 %v5934, %v5918
    %v6415 = vpack.c.b16 %v5935, %v5919
    %v6416 = vpack.c.b16 %v5952, %v5936
    %v6417 = vpack.c.b16 %v5953, %v5937
    %v6418 = vpack.c.b16 %v5954, %v5938
    %v6419 = vpack.c.b16 %v5955, %v5939
    %v6420 = vpack.c.b16 %v5956, %v5940
    %v6421 = vpack.c.b16 %v5957, %v5941
    %v6422 = vpack.c.b16 %v5958, %v5942
    %v6423 = vpack.c.b16 %v5959, %v5943
    %v6424 = vpack.c.b16 %v5960, %v5944
    %v6425 = vpack.c.b16 %v5961, %v5945
    %v6426 = vpack.c.b16 %v5962, %v5946
    %v6427 = vpack.c.b16 %v5963, %v5947
    %v6428 = vpack.c.b16 %v5964, %v5948
    %v6429 = vpack.c.b16 %v5965, %v5949
    %v6430 = vpack.c.b16 %v5966, %v5950
    %v6431 = vpack.c.b16 %v5967, %v5951
    %v6432 = vpack.c.b16 %v5984, %v5968
    %v6433 = vpack.c.b16 %v5985, %v5969
    %v6434 = vpack.c.b16 %v5986, %v5970
    %v6435 = vpack.c.b16 %v5987, %v5971
    %v6436 = vpack.c.b16 %v5988, %v5972
    %v6437 = vpack.c.b16 %v5989, %v5973
    %v6438 = vpack.c.b16 %v5990, %v5974
    %v6439 = vpack.c.b16 %v5991, %v5975
    %v6440 = vpack.c.b16 %v5992, %v5976
    %v6441 = vpack.c.b16 %v5993, %v5977
    %v6442 = vpack.c.b16 %v5994, %v5978
    %v6443 = vpack.c.b16 %v5995, %v5979
    %v6444 = vpack.c.b16 %v5996, %v5980
    %v6445 = vpack.c.b16 %v5997, %v5981
    %v6446 = vpack.c.b16 %v5998, %v5982
    %v6447 = vpack.c.b16 %v5999, %v5983
    %v6448 = vpack.c.b16 %v6016, %v6000
    %v6449 = vpack.c.b16 %v6017, %v6001
    %v6450 = vpack.c.b16 %v6018, %v6002
    %v6451 = vpack.c.b16 %v6019, %v6003
    %v6452 = vpack.c.b16 %v6020, %v6004
    %v6453 = vpack.c.b16 %v6021, %v6005
    %v6454 = vpack.c.b16 %v6022, %v6006
    %v6455 = vpack.c.b16 %v6023, %v6007
    %v6456 = vpack.c.b16 %v6024, %v6008
    %v6457 = vpack.c.b16 %v6025, %v6009
    %v6458 = vpack.c.b16 %v6026, %v6010
    %v6459 = vpack.c.b16 %v6027, %v6011
    %v6460 = vpack.c.b16 %v6028, %v6012
    %v6461 = vpack.c.b16 %v6029, %v6013
    %v6462 = vpack.c.b16 %v6030, %v6014
    %v6463 = vpack.c.b16 %v6031, %v6015
    %v6464 = vpack.c.b16 %v6048, %v6032
    %v6465 = vpack.c.b16 %v6049, %v6033
    %v6466 = vpack.c.b16 %v6050, %v6034
    %v6467 = vpack.c.b16 %v6051, %v6035
    %v6468 = vpack.c.b16 %v6052, %v6036
    %v6469 = vpack.c.b16 %v6053, %v6037
    %v6470 = vpack.c.b16 %v6054, %v6038
    %v6471 = vpack.c.b16 %v6055, %v6039
    %v6472 = vpack.c.b16 %v6056, %v6040
    %v6473 = vpack.c.b16 %v6057, %v6041
    %v6474 = vpack.c.b16 %v6058, %v6042
    %v6475 = vpack.c.b16 %v6059, %v6043
    %v6476 = vpack.c.b16 %v6060, %v6044
    %v6477 = vpack.c.b16 %v6061, %v6045
    %v6478 = vpack.c.b16 %v6062, %v6046
    %v6479 = vpack.c.b16 %v6063, %v6047
    %v6480 = vpack.c.b16 %v6080, %v6064
    %v6481 = vpack.c.b16 %v6081, %v6065
    %v6482 = vpack.c.b16 %v6082, %v6066
    %v6483 = vpack.c.b16 %v6083, %v6067
    %v6484 = vpack.c.b16 %v6084, %v6068
    %v6485 = vpack.c.b16 %v6085, %v6069
    %v6486 = vpack.c.b16 %v6086, %v6070
    %v6487 = vpack.c.b16 %v6087, %v6071
    %v6488 = vpack.c.b16 %v6088, %v6072
    %v6489 = vpack.c.b16 %v6089, %v6073
    %v6490 = vpack.c.b16 %v6090, %v6074
    %v6491 = vpack.c.b16 %v6091, %v6075
    %v6492 = vpack.c.b16 %v6092, %v6076
    %v6493 = vpack.c.b16 %v6093, %v6077
    %v6494 = vpack.c.b16 %v6094, %v6078
    %v6495 = vpack.c.b16 %v6095, %v6079
    %v6496 = vpack.c.b16 %v6112, %v6096
    %v6497 = vpack.c.b16 %v6113, %v6097
    %v6498 = vpack.c.b16 %v6114, %v6098
    %v6499 = vpack.c.b16 %v6115, %v6099
    %v6500 = vpack.c.b16 %v6116, %v6100
    %v6501 = vpack.c.b16 %v6117, %v6101
    %v6502 = vpack.c.b16 %v6118, %v6102
    %v6503 = vpack.c.b16 %v6119, %v6103
    %v6504 = vpack.c.b16 %v6120, %v6104
    %v6505 = vpack.c.b16 %v6121, %v6105
    %v6506 = vpack.c.b16 %v6122, %v6106
    %v6507 = vpack.c.b16 %v6123, %v6107
    %v6508 = vpack.c.b16 %v6124, %v6108
    %v6509 = vpack.c.b16 %v6125, %v6109
    %v6510 = vpack.c.b16 %v6126, %v6110
    %v6511 = vpack.c.b16 %v6127, %v6111
    %v6512 = vpack.c.b16 %v6144, %v6128
    %v6513 = vpack.c.b16 %v6145, %v6129
    %v6514 = vpack.c.b16 %v6146, %v6130
    %v6515 = vpack.c.b16 %v6147, %v6131
    %v6516 = vpack.c.b16 %v6148, %v6132
    %v6517 = vpack.c.b16 %v6149, %v6133
    %v6518 = vpack.c.b16 %v6150, %v6134
    %v6519 = vpack.c.b16 %v6151, %v6135
    %v6520 = vpack.c.b16 %v6152, %v6136
    %v6521 = vpack.c.b16 %v6153, %v6137
    %v6522 = vpack.c.b16 %v6154, %v6138
    %v6523 = vpack.c.b16 %v6155, %v6139
    %v6524 = vpack.c.b16 %v6156, %v6140
    %v6525 = vpack.c.b16 %v6157, %v6141
    %v6526 = vpack.c.b16 %v6158, %v6142
    %v6527 = vpack.c.b16 %v6159, %v6143
    %v6528 = vpack.c.b16 %v6176, %v6160
    %v6529 = vpack.c.b16 %v6177, %v6161
    %v6530 = vpack.c.b16 %v6178, %v6162
    %v6531 = vpack.c.b16 %v6179, %v6163
    %v6532 = vpack.c.b16 %v6180, %v6164
    %v6533 = vpack.c.b16 %v6181, %v6165
    %v6534 = vpack.c.b16 %v6182, %v6166
    %v6535 = vpack.c.b16 %v6183, %v6167
    %v6536 = vpack.c.b16 %v6184, %v6168
    %v6537 = vpack.c.b16 %v6185, %v6169
    %v6538 = vpack.c.b16 %v6186, %v6170
    %v6539 = vpack.c.b16 %v6187, %v6171
    %v6540 = vpack.c.b16 %v6188, %v6172
    %v6541 = vpack.c.b16 %v6189, %v6173
    %v6542 = vpack.c.b16 %v6190, %v6174
    %v6543 = vpack.c.b16 %v6191, %v6175
    %v6544 = vpack.c.b16 %v6208, %v6192
    %v6545 = vpack.c.b16 %v6209, %v6193
    %v6546 = vpack.c.b16 %v6210, %v6194
    %v6547 = vpack.c.b16 %v6211, %v6195
    %v6548 = vpack.c.b16 %v6212, %v6196
    %v6549 = vpack.c.b16 %v6213, %v6197
    %v6550 = vpack.c.b16 %v6214, %v6198
    %v6551 = vpack.c.b16 %v6215, %v6199
    %v6552 = vpack.c.b16 %v6216, %v6200
    %v6553 = vpack.c.b16 %v6217, %v6201
    %v6554 = vpack.c.b16 %v6218, %v6202
    %v6555 = vpack.c.b16 %v6219, %v6203
    %v6556 = vpack.c.b16 %v6220, %v6204
    %v6557 = vpack.c.b16 %v6221, %v6205
    %v6558 = vpack.c.b16 %v6222, %v6206
    %v6559 = vpack.c.b16 %v6223, %v6207
    %v6560 = vpack.c.b16 %v6240, %v6224
    %v6561 = vpack.c.b16 %v6241, %v6225
    %v6562 = vpack.c.b16 %v6242, %v6226
    %v6563 = vpack.c.b16 %v6243, %v6227
    %v6564 = vpack.c.b16 %v6244, %v6228
    %v6565 = vpack.c.b16 %v6245, %v6229
    %v6566 = vpack.c.b16 %v6246, %v6230
    %v6567 = vpack.c.b16 %v6247, %v6231
    %v6568 = vpack.c.b16 %v6248, %v6232
    %v6569 = vpack.c.b16 %v6249, %v6233
    %v6570 = vpack.c.b16 %v6250, %v6234
    %v6571 = vpack.c.b16 %v6251, %v6235
    %v6572 = vpack.c.b16 %v6252, %v6236
    %v6573 = vpack.c.b16 %v6253, %v6237
    %v6574 = vpack.c.b16 %v6254, %v6238
    %v6575 = vpack.c.b16 %v6255, %v6239
    %v6576 = vpack.c.b16 %v6272, %v6256
    %v6577 = vpack.c.b16 %v6273, %v6257
    %v6578 = vpack.c.b16 %v6274, %v6258
    %v6579 = vpack.c.b16 %v6275, %v6259
    %v6580 = vpack.c.b16 %v6276, %v6260
    %v6581 = vpack.c.b16 %v6277, %v6261
    %v6582 = vpack.c.b16 %v6278, %v6262
    %v6583 = vpack.c.b16 %v6279, %v6263
    %v6584 = vpack.c.b16 %v6280, %v6264
    %v6585 = vpack.c.b16 %v6281, %v6265
    %v6586 = vpack.c.b16 %v6282, %v6266
    %v6587 = vpack.c.b16 %v6283, %v6267
    %v6588 = vpack.c.b16 %v6284, %v6268
    %v6589 = vpack.c.b16 %v6285, %v6269
    %v6590 = vpack.c.b16 %v6286, %v6270
    %v6591 = vpack.c.b16 %v6287, %v6271
    %v6592 = vpack.c.b16 %v6304, %v6288
    %v6593 = vpack.c.b16 %v6305, %v6289
    %v6594 = vpack.c.b16 %v6306, %v6290
    %v6595 = vpack.c.b16 %v6307, %v6291
    %v6596 = vpack.c.b16 %v6308, %v6292
    %v6597 = vpack.c.b16 %v6309, %v6293
    %v6598 = vpack.c.b16 %v6310, %v6294
    %v6599 = vpack.c.b16 %v6311, %v6295
    %v6600 = vpack.c.b16 %v6312, %v6296
    %v6601 = vpack.c.b16 %v6313, %v6297
    %v6602 = vpack.c.b16 %v6314, %v6298
    %v6603 = vpack.c.b16 %v6315, %v6299
    %v6604 = vpack.c.b16 %v6316, %v6300
    %v6605 = vpack.c.b16 %v6317, %v6301
    %v6606 = vpack.c.b16 %v6318, %v6302
    %v6607 = vpack.c.b16 %v6319, %v6303
    %v6608 = vpack.c.b16 %v6336, %v6320
    %v6609 = vpack.c.b16 %v6337, %v6321
    %v6610 = vpack.c.b16 %v6338, %v6322
    %v6611 = vpack.c.b16 %v6339, %v6323
    %v6612 = vpack.c.b16 %v6340, %v6324
    %v6613 = vpack.c.b16 %v6341, %v6325
    %v6614 = vpack.c.b16 %v6342, %v6326
    %v6615 = vpack.c.b16 %v6343, %v6327
    %v6616 = vpack.c.b16 %v6344, %v6328
    %v6617 = vpack.c.b16 %v6345, %v6329
    %v6618 = vpack.c.b16 %v6346, %v6330
    %v6619 = vpack.c.b16 %v6347, %v6331
    %v6620 = vpack.c.b16 %v6348, %v6332
    %v6621 = vpack.c.b16 %v6349, %v6333
    %v6622 = vpack.c.b16 %v6350, %v6334
    %v6623 = vpack.c.b16 %v6351, %v6335
    %v6624 = vpack.c.b16 %v6368, %v6352
    %v6625 = vpack.c.b16 %v6369, %v6353
    %v6626 = vpack.c.b16 %v6370, %v6354
    %v6627 = vpack.c.b16 %v6371, %v6355
    %v6628 = vpack.c.b16 %v6372, %v6356
    %v6629 = vpack.c.b16 %v6373, %v6357
    %v6630 = vpack.c.b16 %v6374, %v6358
    %v6631 = vpack.c.b16 %v6375, %v6359
    %v6632 = vpack.c.b16 %v6376, %v6360
    %v6633 = vpack.c.b16 %v6377, %v6361
    %v6634 = vpack.c.b16 %v6378, %v6362
    %v6635 = vpack.c.b16 %v6379, %v6363
    %v6636 = vpack.c.b16 %v6380, %v6364
    %v6637 = vpack.c.b16 %v6381, %v6365
    %v6638 = vpack.c.b16 %v6382, %v6366
    %v6639 = vpack.c.b16 %v6383, %v6367
    %6896 = vmatprep.subr.bf16.mxu0 %v6385
    %6897 = vmatpush1.bf16.msra.mxu0 %v6384
    %6898 = vmatprep.subr.bf16.mxu0 %v6401
    %6899 = vmatpush1.bf16.msra.mxu0 %v6400
    %6900 = vmatprep.subr.bf16.mxu0 %v6417
    %6901 = vmatpush1.bf16.msra.mxu0 %v6416
    %6902 = vmatprep.subr.bf16.mxu0 %v6433
    %6903 = vmatpush1.bf16.msra.mxu0 %v6432
    %6904 = vmatprep.subr.bf16.mxu0 %v6449
    %6905 = vmatpush1.bf16.msra.mxu0 %v6448
    %6906 = vmatprep.subr.bf16.mxu0 %v6465
    %6907 = vmatpush1.bf16.msra.mxu0 %v6464
    %6908 = vmatprep.subr.bf16.mxu0 %v6481
    %6909 = vmatpush1.bf16.msra.mxu0 %v6480
    %6910 = vmatprep.subr.bf16.mxu0 %v6497
    %6911 = vmatpush1.bf16.msra.mxu0 %v6496
    %6912 = vmatprep.subr.bf16.mxu0 %v6513
    %6913 = vmatpush1.bf16.msra.mxu0 %v6512
    %6914 = vmatprep.subr.bf16.mxu0 %v6529
    %6915 = vmatpush1.bf16.msra.mxu0 %v6528
    %6916 = vmatprep.subr.bf16.mxu0 %v6545
    %6917 = vmatpush1.bf16.msra.mxu0 %v6544
    %6918 = vmatprep.subr.bf16.mxu0 %v6561
    %6919 = vmatpush1.bf16.msra.mxu0 %v6560
    %6920 = vmatprep.subr.bf16.mxu0 %v6577
    %6921 = vmatpush1.bf16.msra.mxu0 %v6576
    %6922 = vmatprep.subr.bf16.mxu0 %v6593
    %6923 = vmatpush1.bf16.msra.mxu0 %v6592
    %6924 = vmatprep.subr.bf16.mxu0 %v6609
    %6925 = vmatpush1.bf16.msra.mxu0 %v6608
    %6926 = vmatprep.subr.bf16.mxu0 %v6625
    %6927 = vmatpush1.bf16.msra.mxu0 %v6624
    %6928 = vmatprep.mubr.bf16.mxu0 %v5585
    %6929 = vmatmul.mubr.bf16.gmra.mrb[0].mxu0 %v5584
    %v6930 = vpop.f32.mrb[0].mxu0
    %v6931 = vadd.f32 %v3876, %v6930
    %v6932 = vpop.f32.mrb[0].mxu0
    %v6933 = vadd.f32 %v3878, %v6932
    %v6934 = vpop.f32.mrb[0].mxu0
    %v6935 = vadd.f32 %v3880, %v6934
    %v6936 = vpop.f32.mrb[0].mxu0
    %v6937 = vadd.f32 %v3882, %v6936
    %6938 = vmatprep.mubr.bf16.mxu0 %v5587
    %6939 = vmatmul.mubr.bf16.gmra.mrb[0].mxu0 %v5586
    %v6940 = vpop.f32.mrb[0].mxu0
    %v6941 = vadd.f32 %v3886, %v6940
    %v6942 = vpop.f32.mrb[0].mxu0
    %v6943 = vadd.f32 %v3888, %v6942
    %v6944 = vpop.f32.mrb[0].mxu0
    %v6945 = vadd.f32 %v3890, %v6944
    %v6946 = vpop.f32.mrb[0].mxu0
    %v6947 = vadd.f32 %v3892, %v6946
    %6948 = vmatprep.mubr.bf16.mxu0 %v5589
    %6949 = vmatmul.mubr.bf16.gmra.mrb[0].mxu0 %v5588
    %v6950 = vpop.f32.mrb[0].mxu0
    %v6951 = vadd.f32 %v3896, %v6950
    %v6952 = vpop.f32.mrb[0].mxu0
    %v6953 = vadd.f32 %v3898, %v6952
    %v6954 = vpop.f32.mrb[0].mxu0
    %v6955 = vadd.f32 %v3900, %v6954
    %v6956 = vpop.f32.mrb[0].mxu0
    %v6957 = vadd.f32 %v3902, %v6956
    %6958 = vmatprep.mubr.bf16.mxu0 %v5591
    %6959 = vmatmul.mubr.bf16.gmra.mrb[0].mxu0 %v5590
    %v6960 = vpop.f32.mrb[0].mxu0
    %v6961 = vadd.f32 %v3906, %v6960
    %v6962 = vpop.f32.mrb[0].mxu0
    %v6963 = vadd.f32 %v3908, %v6962
    %v6964 = vpop.f32.mrb[0].mxu0
    %v6965 = vadd.f32 %v3910, %v6964
    %v6966 = vpop.f32.mrb[0].mxu0
    %v6967 = vadd.f32 %v3912, %v6966
    %6968 = vmatprep.mubr.bf16.mxu0 %v5593
    %6969 = vmatmul.mubr.bf16.gmra.mrb[0].mxu0 %v5592
    %v6970 = vpop.f32.mrb[0].mxu0
    %v6971 = vadd.f32 %v3916, %v6970
    %v6972 = vpop.f32.mrb[0].mxu0
    %v6973 = vadd.f32 %v3918, %v6972
    %v6974 = vpop.f32.mrb[0].mxu0
    %v6975 = vadd.f32 %v3920, %v6974
    %v6976 = vpop.f32.mrb[0].mxu0
    %v6977 = vadd.f32 %v3922, %v6976
    %6978 = vmatprep.mubr.bf16.mxu0 %v5595
    %6979 = vmatmul.mubr.bf16.gmra.mrb[0].mxu0 %v5594
    %v6980 = vpop.f32.mrb[0].mxu0
    %v6981 = vadd.f32 %v3926, %v6980
    %v6982 = vpop.f32.mrb[0].mxu0
    %v6983 = vadd.f32 %v3928, %v6982
    %v6984 = vpop.f32.mrb[0].mxu0
    %v6985 = vadd.f32 %v3930, %v6984
    %v6986 = vpop.f32.mrb[0].mxu0
    %v6987 = vadd.f32 %v3932, %v6986
    %6988 = vmatprep.mubr.bf16.mxu0 %v5597
    %6989 = vmatmul.mubr.bf16.gmra.mrb[0].mxu0 %v5596
    %v6990 = vpop.f32.mrb[0].mxu0
    %v6991 = vadd.f32 %v3936, %v6990
    %v6992 = vpop.f32.mrb[0].mxu0
    %v6993 = vadd.f32 %v3938, %v6992
    %v6994 = vpop.f32.mrb[0].mxu0
    %v6995 = vadd.f32 %v3940, %v6994
    %v6996 = vpop.f32.mrb[0].mxu0
    %v6997 = vadd.f32 %v3942, %v6996
    %6998 = vmatprep.mubr.bf16.mxu0 %v5599
    %6999 = vmatmul.mubr.bf16.gmra.mrb[0].mxu0 %v5598
    %v7000 = vpop.f32.mrb[0].mxu0
    %v7001 = vadd.f32 %v3946, %v7000
    %v7002 = vpop.f32.mrb[0].mxu0
    %v7003 = vadd.f32 %v3948, %v7002
    %v7004 = vpop.f32.mrb[0].mxu0
    %v7005 = vadd.f32 %v3950, %v7004
    %v7006 = vpop.f32.mrb[0].mxu0
    %v7007 = vadd.f32 %v3952, %v7006
    %7008 = vdwg.mxu0
    %7009 = vmatprep.subr.bf16.mxu0 %v6387
    %7010 = vmatpush1.bf16.msra.mxu0 %v6386
    %7011 = vmatprep.subr.bf16.mxu0 %v6403
    %7012 = vmatpush1.bf16.msra.mxu0 %v6402
    %7013 = vmatprep.subr.bf16.mxu0 %v6419
    %7014 = vmatpush1.bf16.msra.mxu0 %v6418
    %7015 = vmatprep.subr.bf16.mxu0 %v6435
    %7016 = vmatpush1.bf16.msra.mxu0 %v6434
    %7017 = vmatprep.subr.bf16.mxu0 %v6451
    %7018 = vmatpush1.bf16.msra.mxu0 %v6450
    %7019 = vmatprep.subr.bf16.mxu0 %v6467
    %7020 = vmatpush1.bf16.msra.mxu0 %v6466
    %7021 = vmatprep.subr.bf16.mxu0 %v6483
    %7022 = vmatpush1.bf16.msra.mxu0 %v6482
    %7023 = vmatprep.subr.bf16.mxu0 %v6499
    %7024 = vmatpush1.bf16.msra.mxu0 %v6498
    %7025 = vmatprep.subr.bf16.mxu0 %v6515
    %7026 = vmatpush1.bf16.msra.mxu0 %v6514
    %7027 = vmatprep.subr.bf16.mxu0 %v6531
    %7028 = vmatpush1.bf16.msra.mxu0 %v6530
    %7029 = vmatprep.subr.bf16.mxu0 %v6547
    %7030 = vmatpush1.bf16.msra.mxu0 %v6546
    %7031 = vmatprep.subr.bf16.mxu0 %v6563
    %7032 = vmatpush1.bf16.msra.mxu0 %v6562
    %7033 = vmatprep.subr.bf16.mxu0 %v6579
    %7034 = vmatpush1.bf16.msra.mxu0 %v6578
    %7035 = vmatprep.subr.bf16.mxu0 %v6595
    %7036 = vmatpush1.bf16.msra.mxu0 %v6594
    %7037 = vmatprep.subr.bf16.mxu0 %v6611
    %7038 = vmatpush1.bf16.msra.mxu0 %v6610
    %7039 = vmatprep.subr.bf16.mxu0 %v6627
    %7040 = vmatpush1.bf16.msra.mxu0 %v6626
    %7041 = vmatprep.mubr.bf16.mxu0 %v5585
    %7042 = vmatmul.mubr.bf16.gmra.mrb[0].mxu0 %v5584
    %v7043 = vpop.f32.mrb[0].mxu0
    %v7044 = vadd.f32 %v4102, %v7043
    %v7045 = vpop.f32.mrb[0].mxu0
    %v7046 = vadd.f32 %v4104, %v7045
    %v7047 = vpop.f32.mrb[0].mxu0
    %v7048 = vadd.f32 %v4106, %v7047
    %v7049 = vpop.f32.mrb[0].mxu0
    %v7050 = vadd.f32 %v4108, %v7049
    %7051 = vmatprep.mubr.bf16.mxu0 %v5587
    %7052 = vmatmul.mubr.bf16.gmra.mrb[0].mxu0 %v5586
    %v7053 = vpop.f32.mrb[0].mxu0
    %v7054 = vadd.f32 %v4112, %v7053
    %v7055 = vpop.f32.mrb[0].mxu0
    %v7056 = vadd.f32 %v4114, %v7055
    %v7057 = vpop.f32.mrb[0].mxu0
    %v7058 = vadd.f32 %v4116, %v7057
    %v7059 = vpop.f32.mrb[0].mxu0
    %v7060 = vadd.f32 %v4118, %v7059
    %7061 = vmatprep.mubr.bf16.mxu0 %v5589
    %7062 = vmatmul.mubr.bf16.gmra.mrb[0].mxu0 %v5588
    %v7063 = vpop.f32.mrb[0].mxu0
    %v7064 = vadd.f32 %v4122, %v7063
    %v7065 = vpop.f32.mrb[0].mxu0
    %v7066 = vadd.f32 %v4124, %v7065
    %v7067 = vpop.f32.mrb[0].mxu0
    %v7068 = vadd.f32 %v4126, %v7067
    %v7069 = vpop.f32.mrb[0].mxu0
    %v7070 = vadd.f32 %v4128, %v7069
    %7071 = vmatprep.mubr.bf16.mxu0 %v5591
    %7072 = vmatmul.mubr.bf16.gmra.mrb[0].mxu0 %v5590
    %v7073 = vpop.f32.mrb[0].mxu0
    %v7074 = vadd.f32 %v4132, %v7073
    %v7075 = vpop.f32.mrb[0].mxu0
    %v7076 = vadd.f32 %v4134, %v7075
    %v7077 = vpop.f32.mrb[0].mxu0
    %v7078 = vadd.f32 %v4136, %v7077
    %v7079 = vpop.f32.mrb[0].mxu0
    %v7080 = vadd.f32 %v4138, %v7079
    %7081 = vmatprep.mubr.bf16.mxu0 %v5593
    %7082 = vmatmul.mubr.bf16.gmra.mrb[0].mxu0 %v5592
    %v7083 = vpop.f32.mrb[0].mxu0
    %v7084 = vadd.f32 %v4142, %v7083
    %v7085 = vpop.f32.mrb[0].mxu0
    %v7086 = vadd.f32 %v4144, %v7085
    %v7087 = vpop.f32.mrb[0].mxu0
    %v7088 = vadd.f32 %v4146, %v7087
    %v7089 = vpop.f32.mrb[0].mxu0
    %v7090 = vadd.f32 %v4148, %v7089
    %7091 = vmatprep.mubr.bf16.mxu0 %v5595
    %7092 = vmatmul.mubr.bf16.gmra.mrb[0].mxu0 %v5594
    %v7093 = vpop.f32.mrb[0].mxu0
    %v7094 = vadd.f32 %v4152, %v7093
    %v7095 = vpop.f32.mrb[0].mxu0
    %v7096 = vadd.f32 %v4154, %v7095
    %v7097 = vpop.f32.mrb[0].mxu0
    %v7098 = vadd.f32 %v4156, %v7097
    %v7099 = vpop.f32.mrb[0].mxu0
    %v7100 = vadd.f32 %v4158, %v7099
    %7101 = vmatprep.mubr.bf16.mxu0 %v5597
    %7102 = vmatmul.mubr.bf16.gmra.mrb[0].mxu0 %v5596
    %v7103 = vpop.f32.mrb[0].mxu0
    %v7104 = vadd.f32 %v4162, %v7103
    %v7105 = vpop.f32.mrb[0].mxu0
    %v7106 = vadd.f32 %v4164, %v7105
    %v7107 = vpop.f32.mrb[0].mxu0
    %v7108 = vadd.f32 %v4166, %v7107
    %v7109 = vpop.f32.mrb[0].mxu0
    %v7110 = vadd.f32 %v4168, %v7109
    %7111 = vmatprep.mubr.bf16.mxu0 %v5599
    %7112 = vmatmul.mubr.bf16.gmra.mrb[0].mxu0 %v5598
    %v7113 = vpop.f32.mrb[0].mxu0
    %v7114 = vadd.f32 %v4172, %v7113
    %v7115 = vpop.f32.mrb[0].mxu0
    %v7116 = vadd.f32 %v4174, %v7115
    %v7117 = vpop.f32.mrb[0].mxu0
    %v7118 = vadd.f32 %v4176, %v7117
    %v7119 = vpop.f32.mrb[0].mxu0
    %v7120 = vadd.f32 %v4178, %v7119
    %7121 = vdwg.mxu0
    %7122 = vmatprep.subr.bf16.mxu0 %v6389
    %7123 = vmatpush1.bf16.msra.mxu0 %v6388
    %7124 = vmatprep.subr.bf16.mxu0 %v6405
    %7125 = vmatpush1.bf16.msra.mxu0 %v6404
    %7126 = vmatprep.subr.bf16.mxu0 %v6421
    %7127 = vmatpush1.bf16.msra.mxu0 %v6420
    %7128 = vmatprep.subr.bf16.mxu0 %v6437
    %7129 = vmatpush1.bf16.msra.mxu0 %v6436
    %7130 = vmatprep.subr.bf16.mxu0 %v6453
    %7131 = vmatpush1.bf16.msra.mxu0 %v6452
    %7132 = vmatprep.subr.bf16.mxu0 %v6469
    %7133 = vmatpush1.bf16.msra.mxu0 %v6468
    %7134 = vmatprep.subr.bf16.mxu0 %v6485
    %7135 = vmatpush1.bf16.msra.mxu0 %v6484
    %7136 = vmatprep.subr.bf16.mxu0 %v6501
    %7137 = vmatpush1.bf16.msra.mxu0 %v6500
    %7138 = vmatprep.subr.bf16.mxu0 %v6517
    %7139 = vmatpush1.bf16.msra.mxu0 %v6516
    %7140 = vmatprep.subr.bf16.mxu0 %v6533
    %7141 = vmatpush1.bf16.msra.mxu0 %v6532
    %7142 = vmatprep.subr.bf16.mxu0 %v6549
    %7143 = vmatpush1.bf16.msra.mxu0 %v6548
    %7144 = vmatprep.subr.bf16.mxu0 %v6565
    %7145 = vmatpush1.bf16.msra.mxu0 %v6564
    %7146 = vmatprep.subr.bf16.mxu0 %v6581
    %7147 = vmatpush1.bf16.msra.mxu0 %v6580
    %7148 = vmatprep.subr.bf16.mxu0 %v6597
    %7149 = vmatpush1.bf16.msra.mxu0 %v6596
    %7150 = vmatprep.subr.bf16.mxu0 %v6613
    %7151 = vmatpush1.bf16.msra.mxu0 %v6612
    %7152 = vmatprep.subr.bf16.mxu0 %v6629
    %7153 = vmatpush1.bf16.msra.mxu0 %v6628
    %7154 = vmatprep.mubr.bf16.mxu0 %v5585
    %7155 = vmatmul.mubr.bf16.gmra.mrb[0].mxu0 %v5584
    %v7156 = vpop.f32.mrb[0].mxu0
    %v7157 = vadd.f32 %v4328, %v7156
    %v7158 = vpop.f32.mrb[0].mxu0
    %v7159 = vadd.f32 %v4330, %v7158
    %v7160 = vpop.f32.mrb[0].mxu0
    %v7161 = vadd.f32 %v4332, %v7160
    %v7162 = vpop.f32.mrb[0].mxu0
    %v7163 = vadd.f32 %v4334, %v7162
    %7164 = vmatprep.mubr.bf16.mxu0 %v5587
    %7165 = vmatmul.mubr.bf16.gmra.mrb[0].mxu0 %v5586
    %v7166 = vpop.f32.mrb[0].mxu0
    %v7167 = vadd.f32 %v4338, %v7166
    %v7168 = vpop.f32.mrb[0].mxu0
    %v7169 = vadd.f32 %v4340, %v7168
    %v7170 = vpop.f32.mrb[0].mxu0
    %v7171 = vadd.f32 %v4342, %v7170
    %v7172 = vpop.f32.mrb[0].mxu0
    %v7173 = vadd.f32 %v4344, %v7172
    %7174 = vmatprep.mubr.bf16.mxu0 %v5589
    %7175 = vmatmul.mubr.bf16.gmra.mrb[0].mxu0 %v5588
    %v7176 = vpop.f32.mrb[0].mxu0
    %v7177 = vadd.f32 %v4348, %v7176
    %v7178 = vpop.f32.mrb[0].mxu0
    %v7179 = vadd.f32 %v4350, %v7178
    %v7180 = vpop.f32.mrb[0].mxu0
    %v7181 = vadd.f32 %v4352, %v7180
    %v7182 = vpop.f32.mrb[0].mxu0
    %v7183 = vadd.f32 %v4354, %v7182
    %7184 = vmatprep.mubr.bf16.mxu0 %v5591
    %7185 = vmatmul.mubr.bf16.gmra.mrb[0].mxu0 %v5590
    %v7186 = vpop.f32.mrb[0].mxu0
    %v7187 = vadd.f32 %v4358, %v7186
    %v7188 = vpop.f32.mrb[0].mxu0
    %v7189 = vadd.f32 %v4360, %v7188
    %v7190 = vpop.f32.mrb[0].mxu0
    %v7191 = vadd.f32 %v4362, %v7190
    %v7192 = vpop.f32.mrb[0].mxu0
    %v7193 = vadd.f32 %v4364, %v7192
    %7194 = vmatprep.mubr.bf16.mxu0 %v5593
    %7195 = vmatmul.mubr.bf16.gmra.mrb[0].mxu0 %v5592
    %v7196 = vpop.f32.mrb[0].mxu0
    %v7197 = vadd.f32 %v4368, %v7196
    %v7198 = vpop.f32.mrb[0].mxu0
    %v7199 = vadd.f32 %v4370, %v7198
    %v7200 = vpop.f32.mrb[0].mxu0
    %v7201 = vadd.f32 %v4372, %v7200
    %v7202 = vpop.f32.mrb[0].mxu0
    %v7203 = vadd.f32 %v4374, %v7202
    %7204 = vmatprep.mubr.bf16.mxu0 %v5595
    %7205 = vmatmul.mubr.bf16.gmra.mrb[0].mxu0 %v5594
    %v7206 = vpop.f32.mrb[0].mxu0
    %v7207 = vadd.f32 %v4378, %v7206
    %v7208 = vpop.f32.mrb[0].mxu0
    %v7209 = vadd.f32 %v4380, %v7208
    %v7210 = vpop.f32.mrb[0].mxu0
    %v7211 = vadd.f32 %v4382, %v7210
    %v7212 = vpop.f32.mrb[0].mxu0
    %v7213 = vadd.f32 %v4384, %v7212
    %7214 = vmatprep.mubr.bf16.mxu0 %v5597
    %7215 = vmatmul.mubr.bf16.gmra.mrb[0].mxu0 %v5596
    %v7216 = vpop.f32.mrb[0].mxu0
    %v7217 = vadd.f32 %v4388, %v7216
    %v7218 = vpop.f32.mrb[0].mxu0
    %v7219 = vadd.f32 %v4390, %v7218
    %v7220 = vpop.f32.mrb[0].mxu0
    %v7221 = vadd.f32 %v4392, %v7220
    %v7222 = vpop.f32.mrb[0].mxu0
    %v7223 = vadd.f32 %v4394, %v7222
    %7224 = vmatprep.mubr.bf16.mxu0 %v5599
    %7225 = vmatmul.mubr.bf16.gmra.mrb[0].mxu0 %v5598
    %v7226 = vpop.f32.mrb[0].mxu0
    %v7227 = vadd.f32 %v4398, %v7226
    %v7228 = vpop.f32.mrb[0].mxu0
    %v7229 = vadd.f32 %v4400, %v7228
    %v7230 = vpop.f32.mrb[0].mxu0
    %v7231 = vadd.f32 %v4402, %v7230
    %v7232 = vpop.f32.mrb[0].mxu0
    %v7233 = vadd.f32 %v4404, %v7232
    %7234 = vdwg.mxu0
    %7235 = vmatprep.subr.bf16.mxu0 %v6391
    %7236 = vmatpush1.bf16.msra.mxu0 %v6390
    %7237 = vmatprep.subr.bf16.mxu0 %v6407
    %7238 = vmatpush1.bf16.msra.mxu0 %v6406
    %7239 = vmatprep.subr.bf16.mxu0 %v6423
    %7240 = vmatpush1.bf16.msra.mxu0 %v6422
    %7241 = vmatprep.subr.bf16.mxu0 %v6439
    %7242 = vmatpush1.bf16.msra.mxu0 %v6438
    %7243 = vmatprep.subr.bf16.mxu0 %v6455
    %7244 = vmatpush1.bf16.msra.mxu0 %v6454
    %7245 = vmatprep.subr.bf16.mxu0 %v6471
    %7246 = vmatpush1.bf16.msra.mxu0 %v6470
    %7247 = vmatprep.subr.bf16.mxu0 %v6487
    %7248 = vmatpush1.bf16.msra.mxu0 %v6486
    %7249 = vmatprep.subr.bf16.mxu0 %v6503
    %7250 = vmatpush1.bf16.msra.mxu0 %v6502
    %7251 = vmatprep.subr.bf16.mxu0 %v6519
    %7252 = vmatpush1.bf16.msra.mxu0 %v6518
    %7253 = vmatprep.subr.bf16.mxu0 %v6535
    %7254 = vmatpush1.bf16.msra.mxu0 %v6534
    %7255 = vmatprep.subr.bf16.mxu0 %v6551
    %7256 = vmatpush1.bf16.msra.mxu0 %v6550
    %7257 = vmatprep.subr.bf16.mxu0 %v6567
    %7258 = vmatpush1.bf16.msra.mxu0 %v6566
    %7259 = vmatprep.subr.bf16.mxu0 %v6583
    %7260 = vmatpush1.bf16.msra.mxu0 %v6582
    %7261 = vmatprep.subr.bf16.mxu0 %v6599
    %7262 = vmatpush1.bf16.msra.mxu0 %v6598
    %7263 = vmatprep.subr.bf16.mxu0 %v6615
    %7264 = vmatpush1.bf16.msra.mxu0 %v6614
    %7265 = vmatprep.subr.bf16.mxu0 %v6631
    %7266 = vmatpush1.bf16.msra.mxu0 %v6630
    %7267 = vmatprep.mubr.bf16.mxu0 %v5585
    %7268 = vmatmul.mubr.bf16.gmra.mrb[0].mxu0 %v5584
    %v7269 = vpop.f32.mrb[0].mxu0
    %v7270 = vadd.f32 %v4554, %v7269
    %v7271 = vpop.f32.mrb[0].mxu0
    %v7272 = vadd.f32 %v4556, %v7271
    %v7273 = vpop.f32.mrb[0].mxu0
    %v7274 = vadd.f32 %v4558, %v7273
    %v7275 = vpop.f32.mrb[0].mxu0
    %v7276 = vadd.f32 %v4560, %v7275
    %7277 = vmatprep.mubr.bf16.mxu0 %v5587
    %7278 = vmatmul.mubr.bf16.gmra.mrb[0].mxu0 %v5586
    %v7279 = vpop.f32.mrb[0].mxu0
    %v7280 = vadd.f32 %v4564, %v7279
    %v7281 = vpop.f32.mrb[0].mxu0
    %v7282 = vadd.f32 %v4566, %v7281
    %v7283 = vpop.f32.mrb[0].mxu0
    %v7284 = vadd.f32 %v4568, %v7283
    %v7285 = vpop.f32.mrb[0].mxu0
    %v7286 = vadd.f32 %v4570, %v7285
    %7287 = vmatprep.mubr.bf16.mxu0 %v5589
    %7288 = vmatmul.mubr.bf16.gmra.mrb[0].mxu0 %v5588
    %v7289 = vpop.f32.mrb[0].mxu0
    %v7290 = vadd.f32 %v4574, %v7289
    %v7291 = vpop.f32.mrb[0].mxu0
    %v7292 = vadd.f32 %v4576, %v7291
    %v7293 = vpop.f32.mrb[0].mxu0
    %v7294 = vadd.f32 %v4578, %v7293
    %v7295 = vpop.f32.mrb[0].mxu0
    %v7296 = vadd.f32 %v4580, %v7295
    %7297 = vmatprep.mubr.bf16.mxu0 %v5591
    %7298 = vmatmul.mubr.bf16.gmra.mrb[0].mxu0 %v5590
    %v7299 = vpop.f32.mrb[0].mxu0
    %v7300 = vadd.f32 %v4584, %v7299
    %v7301 = vpop.f32.mrb[0].mxu0
    %v7302 = vadd.f32 %v4586, %v7301
    %v7303 = vpop.f32.mrb[0].mxu0
    %v7304 = vadd.f32 %v4588, %v7303
    %v7305 = vpop.f32.mrb[0].mxu0
    %v7306 = vadd.f32 %v4590, %v7305
    %7307 = vmatprep.mubr.bf16.mxu0 %v5593
    %7308 = vmatmul.mubr.bf16.gmra.mrb[0].mxu0 %v5592
    %v7309 = vpop.f32.mrb[0].mxu0
    %v7310 = vadd.f32 %v4594, %v7309
    %v7311 = vpop.f32.mrb[0].mxu0
    %v7312 = vadd.f32 %v4596, %v7311
    %v7313 = vpop.f32.mrb[0].mxu0
    %v7314 = vadd.f32 %v4598, %v7313
    %v7315 = vpop.f32.mrb[0].mxu0
    %v7316 = vadd.f32 %v4600, %v7315
    %7317 = vmatprep.mubr.bf16.mxu0 %v5595
    %7318 = vmatmul.mubr.bf16.gmra.mrb[0].mxu0 %v5594
    %v7319 = vpop.f32.mrb[0].mxu0
    %v7320 = vadd.f32 %v4604, %v7319
    %v7321 = vpop.f32.mrb[0].mxu0
    %v7322 = vadd.f32 %v4606, %v7321
    %v7323 = vpop.f32.mrb[0].mxu0
    %v7324 = vadd.f32 %v4608, %v7323
    %v7325 = vpop.f32.mrb[0].mxu0
    %v7326 = vadd.f32 %v4610, %v7325
    %7327 = vmatprep.mubr.bf16.mxu0 %v5597
    %7328 = vmatmul.mubr.bf16.gmra.mrb[0].mxu0 %v5596
    %v7329 = vpop.f32.mrb[0].mxu0
    %v7330 = vadd.f32 %v4614, %v7329
    %v7331 = vpop.f32.mrb[0].mxu0
    %v7332 = vadd.f32 %v4616, %v7331
    %v7333 = vpop.f32.mrb[0].mxu0
    %v7334 = vadd.f32 %v4618, %v7333
    %v7335 = vpop.f32.mrb[0].mxu0
    %v7336 = vadd.f32 %v4620, %v7335
    %7337 = vmatprep.mubr.bf16.mxu0 %v5599
    %7338 = vmatmul.mubr.bf16.gmra.mrb[0].mxu0 %v5598
    %v7339 = vpop.f32.mrb[0].mxu0
    %v7340 = vadd.f32 %v4624, %v7339
    %v7341 = vpop.f32.mrb[0].mxu0
    %v7342 = vadd.f32 %v4626, %v7341
    %v7343 = vpop.f32.mrb[0].mxu0
    %v7344 = vadd.f32 %v4628, %v7343
    %v7345 = vpop.f32.mrb[0].mxu0
    %v7346 = vadd.f32 %v4630, %v7345
    %7347 = vdwg.mxu0
    %7348 = vmatprep.subr.bf16.mxu0 %v6393
    %7349 = vmatpush1.bf16.msra.mxu0 %v6392
    %7350 = vmatprep.subr.bf16.mxu0 %v6409
    %7351 = vmatpush1.bf16.msra.mxu0 %v6408
    %7352 = vmatprep.subr.bf16.mxu0 %v6425
    %7353 = vmatpush1.bf16.msra.mxu0 %v6424
    %7354 = vmatprep.subr.bf16.mxu0 %v6441
    %7355 = vmatpush1.bf16.msra.mxu0 %v6440
    %7356 = vmatprep.subr.bf16.mxu0 %v6457
    %7357 = vmatpush1.bf16.msra.mxu0 %v6456
    %7358 = vmatprep.subr.bf16.mxu0 %v6473
    %7359 = vmatpush1.bf16.msra.mxu0 %v6472
    %7360 = vmatprep.subr.bf16.mxu0 %v6489
    %7361 = vmatpush1.bf16.msra.mxu0 %v6488
    %7362 = vmatprep.subr.bf16.mxu0 %v6505
    %7363 = vmatpush1.bf16.msra.mxu0 %v6504
    %7364 = vmatprep.subr.bf16.mxu0 %v6521
    %7365 = vmatpush1.bf16.msra.mxu0 %v6520
    %7366 = vmatprep.subr.bf16.mxu0 %v6537
    %7367 = vmatpush1.bf16.msra.mxu0 %v6536
    %7368 = vmatprep.subr.bf16.mxu0 %v6553
    %7369 = vmatpush1.bf16.msra.mxu0 %v6552
    %7370 = vmatprep.subr.bf16.mxu0 %v6569
    %7371 = vmatpush1.bf16.msra.mxu0 %v6568
    %7372 = vmatprep.subr.bf16.mxu0 %v6585
    %7373 = vmatpush1.bf16.msra.mxu0 %v6584
    %7374 = vmatprep.subr.bf16.mxu0 %v6601
    %7375 = vmatpush1.bf16.msra.mxu0 %v6600
    %7376 = vmatprep.subr.bf16.mxu0 %v6617
    %7377 = vmatpush1.bf16.msra.mxu0 %v6616
    %7378 = vmatprep.subr.bf16.mxu0 %v6633
    %7379 = vmatpush1.bf16.msra.mxu0 %v6632
    %7380 = vmatprep.mubr.bf16.mxu0 %v5585
    %7381 = vmatmul.mubr.bf16.gmra.mrb[0].mxu0 %v5584
    %v7382 = vpop.f32.mrb[0].mxu0
    %v7383 = vadd.f32 %v4780, %v7382
    %v7384 = vpop.f32.mrb[0].mxu0
    %v7385 = vadd.f32 %v4782, %v7384
    %v7386 = vpop.f32.mrb[0].mxu0
    %v7387 = vadd.f32 %v4784, %v7386
    %v7388 = vpop.f32.mrb[0].mxu0
    %v7389 = vadd.f32 %v4786, %v7388
    %7390 = vmatprep.mubr.bf16.mxu0 %v5587
    %7391 = vmatmul.mubr.bf16.gmra.mrb[0].mxu0 %v5586
    %v7392 = vpop.f32.mrb[0].mxu0
    %v7393 = vadd.f32 %v4790, %v7392
    %v7394 = vpop.f32.mrb[0].mxu0
    %v7395 = vadd.f32 %v4792, %v7394
    %v7396 = vpop.f32.mrb[0].mxu0
    %v7397 = vadd.f32 %v4794, %v7396
    %v7398 = vpop.f32.mrb[0].mxu0
    %v7399 = vadd.f32 %v4796, %v7398
    %7400 = vmatprep.mubr.bf16.mxu0 %v5589
    %7401 = vmatmul.mubr.bf16.gmra.mrb[0].mxu0 %v5588
    %v7402 = vpop.f32.mrb[0].mxu0
    %v7403 = vadd.f32 %v4800, %v7402
    %v7404 = vpop.f32.mrb[0].mxu0
    %v7405 = vadd.f32 %v4802, %v7404
    %v7406 = vpop.f32.mrb[0].mxu0
    %v7407 = vadd.f32 %v4804, %v7406
    %v7408 = vpop.f32.mrb[0].mxu0
    %v7409 = vadd.f32 %v4806, %v7408
    %7410 = vmatprep.mubr.bf16.mxu0 %v5591
    %7411 = vmatmul.mubr.bf16.gmra.mrb[0].mxu0 %v5590
    %v7412 = vpop.f32.mrb[0].mxu0
    %v7413 = vadd.f32 %v4810, %v7412
    %v7414 = vpop.f32.mrb[0].mxu0
    %v7415 = vadd.f32 %v4812, %v7414
    %v7416 = vpop.f32.mrb[0].mxu0
    %v7417 = vadd.f32 %v4814, %v7416
    %v7418 = vpop.f32.mrb[0].mxu0
    %v7419 = vadd.f32 %v4816, %v7418
    %7420 = vmatprep.mubr.bf16.mxu0 %v5593
    %7421 = vmatmul.mubr.bf16.gmra.mrb[0].mxu0 %v5592
    %v7422 = vpop.f32.mrb[0].mxu0
    %v7423 = vadd.f32 %v4820, %v7422
    %v7424 = vpop.f32.mrb[0].mxu0
    %v7425 = vadd.f32 %v4822, %v7424
    %v7426 = vpop.f32.mrb[0].mxu0
    %v7427 = vadd.f32 %v4824, %v7426
    %v7428 = vpop.f32.mrb[0].mxu0
    %v7429 = vadd.f32 %v4826, %v7428
    %7430 = vmatprep.mubr.bf16.mxu0 %v5595
    %7431 = vmatmul.mubr.bf16.gmra.mrb[0].mxu0 %v5594
    %v7432 = vpop.f32.mrb[0].mxu0
    %v7433 = vadd.f32 %v4830, %v7432
    %v7434 = vpop.f32.mrb[0].mxu0
    %v7435 = vadd.f32 %v4832, %v7434
    %v7436 = vpop.f32.mrb[0].mxu0
    %v7437 = vadd.f32 %v4834, %v7436
    %v7438 = vpop.f32.mrb[0].mxu0
    %v7439 = vadd.f32 %v4836, %v7438
    %7440 = vmatprep.mubr.bf16.mxu0 %v5597
    %7441 = vmatmul.mubr.bf16.gmra.mrb[0].mxu0 %v5596
    %v7442 = vpop.f32.mrb[0].mxu0
    %v7443 = vadd.f32 %v4840, %v7442
    %v7444 = vpop.f32.mrb[0].mxu0
    %v7445 = vadd.f32 %v4842, %v7444
    %v7446 = vpop.f32.mrb[0].mxu0
    %v7447 = vadd.f32 %v4844, %v7446
    %v7448 = vpop.f32.mrb[0].mxu0
    %v7449 = vadd.f32 %v4846, %v7448
    %7450 = vmatprep.mubr.bf16.mxu0 %v5599
    %7451 = vmatmul.mubr.bf16.gmra.mrb[0].mxu0 %v5598
    %v7452 = vpop.f32.mrb[0].mxu0
    %v7453 = vadd.f32 %v4850, %v7452
    %v7454 = vpop.f32.mrb[0].mxu0
    %v7455 = vadd.f32 %v4852, %v7454
    %v7456 = vpop.f32.mrb[0].mxu0
    %v7457 = vadd.f32 %v4854, %v7456
    %v7458 = vpop.f32.mrb[0].mxu0
    %v7459 = vadd.f32 %v4856, %v7458
    %7460 = vdwg.mxu0
    %7461 = vmatprep.subr.bf16.mxu0 %v6395
    %7462 = vmatpush1.bf16.msra.mxu0 %v6394
    %7463 = vmatprep.subr.bf16.mxu0 %v6411
    %7464 = vmatpush1.bf16.msra.mxu0 %v6410
    %7465 = vmatprep.subr.bf16.mxu0 %v6427
    %7466 = vmatpush1.bf16.msra.mxu0 %v6426
    %7467 = vmatprep.subr.bf16.mxu0 %v6443
    %7468 = vmatpush1.bf16.msra.mxu0 %v6442
    %7469 = vmatprep.subr.bf16.mxu0 %v6459
    %7470 = vmatpush1.bf16.msra.mxu0 %v6458
    %7471 = vmatprep.subr.bf16.mxu0 %v6475
    %7472 = vmatpush1.bf16.msra.mxu0 %v6474
    %7473 = vmatprep.subr.bf16.mxu0 %v6491
    %7474 = vmatpush1.bf16.msra.mxu0 %v6490
    %7475 = vmatprep.subr.bf16.mxu0 %v6507
    %7476 = vmatpush1.bf16.msra.mxu0 %v6506
    %7477 = vmatprep.subr.bf16.mxu0 %v6523
    %7478 = vmatpush1.bf16.msra.mxu0 %v6522
    %7479 = vmatprep.subr.bf16.mxu0 %v6539
    %7480 = vmatpush1.bf16.msra.mxu0 %v6538
    %7481 = vmatprep.subr.bf16.mxu0 %v6555
    %7482 = vmatpush1.bf16.msra.mxu0 %v6554
    %7483 = vmatprep.subr.bf16.mxu0 %v6571
    %7484 = vmatpush1.bf16.msra.mxu0 %v6570
    %7485 = vmatprep.subr.bf16.mxu0 %v6587
    %7486 = vmatpush1.bf16.msra.mxu0 %v6586
    %7487 = vmatprep.subr.bf16.mxu0 %v6603
    %7488 = vmatpush1.bf16.msra.mxu0 %v6602
    %7489 = vmatprep.subr.bf16.mxu0 %v6619
    %7490 = vmatpush1.bf16.msra.mxu0 %v6618
    %7491 = vmatprep.subr.bf16.mxu0 %v6635
    %7492 = vmatpush1.bf16.msra.mxu0 %v6634
    %7493 = vmatprep.mubr.bf16.mxu0 %v5585
    %7494 = vmatmul.mubr.bf16.gmra.mrb[0].mxu0 %v5584
    %v7495 = vpop.f32.mrb[0].mxu0
    %v7496 = vadd.f32 %v5006, %v7495
    %v7497 = vpop.f32.mrb[0].mxu0
    %v7498 = vadd.f32 %v5008, %v7497
    %v7499 = vpop.f32.mrb[0].mxu0
    %v7500 = vadd.f32 %v5010, %v7499
    %v7501 = vpop.f32.mrb[0].mxu0
    %v7502 = vadd.f32 %v5012, %v7501
    %7503 = vmatprep.mubr.bf16.mxu0 %v5587
    %7504 = vmatmul.mubr.bf16.gmra.mrb[0].mxu0 %v5586
    %v7505 = vpop.f32.mrb[0].mxu0
    %v7506 = vadd.f32 %v5016, %v7505
    %v7507 = vpop.f32.mrb[0].mxu0
    %v7508 = vadd.f32 %v5018, %v7507
    %v7509 = vpop.f32.mrb[0].mxu0
    %v7510 = vadd.f32 %v5020, %v7509
    %v7511 = vpop.f32.mrb[0].mxu0
    %v7512 = vadd.f32 %v5022, %v7511
    %7513 = vmatprep.mubr.bf16.mxu0 %v5589
    %7514 = vmatmul.mubr.bf16.gmra.mrb[0].mxu0 %v5588
    %v7515 = vpop.f32.mrb[0].mxu0
    %v7516 = vadd.f32 %v5026, %v7515
    %v7517 = vpop.f32.mrb[0].mxu0
    %v7518 = vadd.f32 %v5028, %v7517
    %v7519 = vpop.f32.mrb[0].mxu0
    %v7520 = vadd.f32 %v5030, %v7519
    %v7521 = vpop.f32.mrb[0].mxu0
    %v7522 = vadd.f32 %v5032, %v7521
    %7523 = vmatprep.mubr.bf16.mxu0 %v5591
    %7524 = vmatmul.mubr.bf16.gmra.mrb[0].mxu0 %v5590
    %v7525 = vpop.f32.mrb[0].mxu0
    %v7526 = vadd.f32 %v5036, %v7525
    %v7527 = vpop.f32.mrb[0].mxu0
    %v7528 = vadd.f32 %v5038, %v7527
    %v7529 = vpop.f32.mrb[0].mxu0
    %v7530 = vadd.f32 %v5040, %v7529
    %v7531 = vpop.f32.mrb[0].mxu0
    %v7532 = vadd.f32 %v5042, %v7531
    %7533 = vmatprep.mubr.bf16.mxu0 %v5593
    %7534 = vmatmul.mubr.bf16.gmra.mrb[0].mxu0 %v5592
    %v7535 = vpop.f32.mrb[0].mxu0
    %v7536 = vadd.f32 %v5046, %v7535
    %v7537 = vpop.f32.mrb[0].mxu0
    %v7538 = vadd.f32 %v5048, %v7537
    %v7539 = vpop.f32.mrb[0].mxu0
    %v7540 = vadd.f32 %v5050, %v7539
    %v7541 = vpop.f32.mrb[0].mxu0
    %v7542 = vadd.f32 %v5052, %v7541
    %7543 = vmatprep.mubr.bf16.mxu0 %v5595
    %7544 = vmatmul.mubr.bf16.gmra.mrb[0].mxu0 %v5594
    %v7545 = vpop.f32.mrb[0].mxu0
    %v7546 = vadd.f32 %v5056, %v7545
    %v7547 = vpop.f32.mrb[0].mxu0
    %v7548 = vadd.f32 %v5058, %v7547
    %v7549 = vpop.f32.mrb[0].mxu0
    %v7550 = vadd.f32 %v5060, %v7549
    %v7551 = vpop.f32.mrb[0].mxu0
    %v7552 = vadd.f32 %v5062, %v7551
    %7553 = vmatprep.mubr.bf16.mxu0 %v5597
    %7554 = vmatmul.mubr.bf16.gmra.mrb[0].mxu0 %v5596
    %v7555 = vpop.f32.mrb[0].mxu0
    %v7556 = vadd.f32 %v5066, %v7555
    %v7557 = vpop.f32.mrb[0].mxu0
    %v7558 = vadd.f32 %v5068, %v7557
    %v7559 = vpop.f32.mrb[0].mxu0
    %v7560 = vadd.f32 %v5070, %v7559
    %v7561 = vpop.f32.mrb[0].mxu0
    %v7562 = vadd.f32 %v5072, %v7561
    %7563 = vmatprep.mubr.bf16.mxu0 %v5599
    %7564 = vmatmul.mubr.bf16.gmra.mrb[0].mxu0 %v5598
    %v7565 = vpop.f32.mrb[0].mxu0
    %v7566 = vadd.f32 %v5076, %v7565
    %v7567 = vpop.f32.mrb[0].mxu0
    %v7568 = vadd.f32 %v5078, %v7567
    %v7569 = vpop.f32.mrb[0].mxu0
    %v7570 = vadd.f32 %v5080, %v7569
    %v7571 = vpop.f32.mrb[0].mxu0
    %v7572 = vadd.f32 %v5082, %v7571
    %7573 = vdwg.mxu0
    %7574 = vmatprep.subr.bf16.mxu0 %v6397
    %7575 = vmatpush1.bf16.msra.mxu0 %v6396
    %7576 = vmatprep.subr.bf16.mxu0 %v6413
    %7577 = vmatpush1.bf16.msra.mxu0 %v6412
    %7578 = vmatprep.subr.bf16.mxu0 %v6429
    %7579 = vmatpush1.bf16.msra.mxu0 %v6428
    %7580 = vmatprep.subr.bf16.mxu0 %v6445
    %7581 = vmatpush1.bf16.msra.mxu0 %v6444
    %7582 = vmatprep.subr.bf16.mxu0 %v6461
    %7583 = vmatpush1.bf16.msra.mxu0 %v6460
    %7584 = vmatprep.subr.bf16.mxu0 %v6477
    %7585 = vmatpush1.bf16.msra.mxu0 %v6476
    %7586 = vmatprep.subr.bf16.mxu0 %v6493
    %7587 = vmatpush1.bf16.msra.mxu0 %v6492
    %7588 = vmatprep.subr.bf16.mxu0 %v6509
    %7589 = vmatpush1.bf16.msra.mxu0 %v6508
    %7590 = vmatprep.subr.bf16.mxu0 %v6525
    %7591 = vmatpush1.bf16.msra.mxu0 %v6524
    %7592 = vmatprep.subr.bf16.mxu0 %v6541
    %7593 = vmatpush1.bf16.msra.mxu0 %v6540
    %7594 = vmatprep.subr.bf16.mxu0 %v6557
    %7595 = vmatpush1.bf16.msra.mxu0 %v6556
    %7596 = vmatprep.subr.bf16.mxu0 %v6573
    %7597 = vmatpush1.bf16.msra.mxu0 %v6572
    %7598 = vmatprep.subr.bf16.mxu0 %v6589
    %7599 = vmatpush1.bf16.msra.mxu0 %v6588
    %7600 = vmatprep.subr.bf16.mxu0 %v6605
    %7601 = vmatpush1.bf16.msra.mxu0 %v6604
    %7602 = vmatprep.subr.bf16.mxu0 %v6621
    %7603 = vmatpush1.bf16.msra.mxu0 %v6620
    %7604 = vmatprep.subr.bf16.mxu0 %v6637
    %7605 = vmatpush1.bf16.msra.mxu0 %v6636
    %7606 = vmatprep.mubr.bf16.mxu0 %v5585
    %7607 = vmatmul.mubr.bf16.gmra.mrb[0].mxu0 %v5584
    %v7608 = vpop.f32.mrb[0].mxu0
    %v7609 = vadd.f32 %v5232, %v7608
    %v7610 = vpop.f32.mrb[0].mxu0
    %v7611 = vadd.f32 %v5234, %v7610
    %v7612 = vpop.f32.mrb[0].mxu0
    %v7613 = vadd.f32 %v5236, %v7612
    %v7614 = vpop.f32.mrb[0].mxu0
    %v7615 = vadd.f32 %v5238, %v7614
    %7616 = vmatprep.mubr.bf16.mxu0 %v5587
    %7617 = vmatmul.mubr.bf16.gmra.mrb[0].mxu0 %v5586
    %v7618 = vpop.f32.mrb[0].mxu0
    %v7619 = vadd.f32 %v5242, %v7618
    %v7620 = vpop.f32.mrb[0].mxu0
    %v7621 = vadd.f32 %v5244, %v7620
    %v7622 = vpop.f32.mrb[0].mxu0
    %v7623 = vadd.f32 %v5246, %v7622
    %v7624 = vpop.f32.mrb[0].mxu0
    %v7625 = vadd.f32 %v5248, %v7624
    %7626 = vmatprep.mubr.bf16.mxu0 %v5589
    %7627 = vmatmul.mubr.bf16.gmra.mrb[0].mxu0 %v5588
    %v7628 = vpop.f32.mrb[0].mxu0
    %v7629 = vadd.f32 %v5252, %v7628
    %v7630 = vpop.f32.mrb[0].mxu0
    %v7631 = vadd.f32 %v5254, %v7630
    %v7632 = vpop.f32.mrb[0].mxu0
    %v7633 = vadd.f32 %v5256, %v7632
    %v7634 = vpop.f32.mrb[0].mxu0
    %v7635 = vadd.f32 %v5258, %v7634
    %7636 = vmatprep.mubr.bf16.mxu0 %v5591
    %7637 = vmatmul.mubr.bf16.gmra.mrb[0].mxu0 %v5590
    %v7638 = vpop.f32.mrb[0].mxu0
    %v7639 = vadd.f32 %v5262, %v7638
    %v7640 = vpop.f32.mrb[0].mxu0
    %v7641 = vadd.f32 %v5264, %v7640
    %v7642 = vpop.f32.mrb[0].mxu0
    %v7643 = vadd.f32 %v5266, %v7642
    %v7644 = vpop.f32.mrb[0].mxu0
    %v7645 = vadd.f32 %v5268, %v7644
    %7646 = vmatprep.mubr.bf16.mxu0 %v5593
    %7647 = vmatmul.mubr.bf16.gmra.mrb[0].mxu0 %v5592
    %v7648 = vpop.f32.mrb[0].mxu0
    %v7649 = vadd.f32 %v5272, %v7648
    %v7650 = vpop.f32.mrb[0].mxu0
    %v7651 = vadd.f32 %v5274, %v7650
    %v7652 = vpop.f32.mrb[0].mxu0
    %v7653 = vadd.f32 %v5276, %v7652
    %v7654 = vpop.f32.mrb[0].mxu0
    %v7655 = vadd.f32 %v5278, %v7654
    %7656 = vmatprep.mubr.bf16.mxu0 %v5595
    %7657 = vmatmul.mubr.bf16.gmra.mrb[0].mxu0 %v5594
    %v7658 = vpop.f32.mrb[0].mxu0
    %v7659 = vadd.f32 %v5282, %v7658
    %v7660 = vpop.f32.mrb[0].mxu0
    %v7661 = vadd.f32 %v5284, %v7660
    %v7662 = vpop.f32.mrb[0].mxu0
    %v7663 = vadd.f32 %v5286, %v7662
    %v7664 = vpop.f32.mrb[0].mxu0
    %v7665 = vadd.f32 %v5288, %v7664
    %7666 = vmatprep.mubr.bf16.mxu0 %v5597
    %7667 = vmatmul.mubr.bf16.gmra.mrb[0].mxu0 %v5596
    %v7668 = vpop.f32.mrb[0].mxu0
    %v7669 = vadd.f32 %v5292, %v7668
    %v7670 = vpop.f32.mrb[0].mxu0
    %v7671 = vadd.f32 %v5294, %v7670
    %v7672 = vpop.f32.mrb[0].mxu0
    %v7673 = vadd.f32 %v5296, %v7672
    %v7674 = vpop.f32.mrb[0].mxu0
    %v7675 = vadd.f32 %v5298, %v7674
    %7676 = vmatprep.mubr.bf16.mxu0 %v5599
    %7677 = vmatmul.mubr.bf16.gmra.mrb[0].mxu0 %v5598
    %v7678 = vpop.f32.mrb[0].mxu0
    %v7679 = vadd.f32 %v5302, %v7678
    %v7680 = vpop.f32.mrb[0].mxu0
    %v7681 = vadd.f32 %v5304, %v7680
    %v7682 = vpop.f32.mrb[0].mxu0
    %v7683 = vadd.f32 %v5306, %v7682
    %v7684 = vpop.f32.mrb[0].mxu0
    %v7685 = vadd.f32 %v5308, %v7684
    %7686 = vdwg.mxu0
    %7687 = vmatprep.subr.bf16.mxu0 %v6399
    %7688 = vmatpush1.bf16.msra.mxu0 %v6398
    %7689 = vmatprep.subr.bf16.mxu0 %v6415
    %7690 = vmatpush1.bf16.msra.mxu0 %v6414
    %7691 = vmatprep.subr.bf16.mxu0 %v6431
    %7692 = vmatpush1.bf16.msra.mxu0 %v6430
    %7693 = vmatprep.subr.bf16.mxu0 %v6447
    %7694 = vmatpush1.bf16.msra.mxu0 %v6446
    %7695 = vmatprep.subr.bf16.mxu0 %v6463
    %7696 = vmatpush1.bf16.msra.mxu0 %v6462
    %7697 = vmatprep.subr.bf16.mxu0 %v6479
    %7698 = vmatpush1.bf16.msra.mxu0 %v6478
    %7699 = vmatprep.subr.bf16.mxu0 %v6495
    %7700 = vmatpush1.bf16.msra.mxu0 %v6494
    %7701 = vmatprep.subr.bf16.mxu0 %v6511
    %7702 = vmatpush1.bf16.msra.mxu0 %v6510
    %7703 = vmatprep.subr.bf16.mxu0 %v6527
    %7704 = vmatpush1.bf16.msra.mxu0 %v6526
    %7705 = vmatprep.subr.bf16.mxu0 %v6543
    %7706 = vmatpush1.bf16.msra.mxu0 %v6542
    %7707 = vmatprep.subr.bf16.mxu0 %v6559
    %7708 = vmatpush1.bf16.msra.mxu0 %v6558
    %7709 = vmatprep.subr.bf16.mxu0 %v6575
    %7710 = vmatpush1.bf16.msra.mxu0 %v6574
    %7711 = vmatprep.subr.bf16.mxu0 %v6591
    %7712 = vmatpush1.bf16.msra.mxu0 %v6590
    %7713 = vmatprep.subr.bf16.mxu0 %v6607
    %7714 = vmatpush1.bf16.msra.mxu0 %v6606
    %7715 = vmatprep.subr.bf16.mxu0 %v6623
    %7716 = vmatpush1.bf16.msra.mxu0 %v6622
    %7717 = vmatprep.subr.bf16.mxu0 %v6639
    %7718 = vmatpush1.bf16.msra.mxu0 %v6638
    %7719 = vmatprep.mubr.bf16.mxu0 %v5585
    %7720 = vmatmul.mubr.bf16.gmra.mrb[0].mxu0 %v5584
    %v7721 = vpop.f32.mrb[0].mxu0
    %v7722 = vadd.f32 %v5458, %v7721
    %v7723 = vpop.f32.mrb[0].mxu0
    %v7724 = vadd.f32 %v5460, %v7723
    %v7725 = vpop.f32.mrb[0].mxu0
    %v7726 = vadd.f32 %v5462, %v7725
    %v7727 = vpop.f32.mrb[0].mxu0
    %v7728 = vadd.f32 %v5464, %v7727
    %7729 = vmatprep.mubr.bf16.mxu0 %v5587
    %7730 = vmatmul.mubr.bf16.gmra.mrb[0].mxu0 %v5586
    %v7731 = vpop.f32.mrb[0].mxu0
    %v7732 = vadd.f32 %v5468, %v7731
    %v7733 = vpop.f32.mrb[0].mxu0
    %v7734 = vadd.f32 %v5470, %v7733
    %v7735 = vpop.f32.mrb[0].mxu0
    %v7736 = vadd.f32 %v5472, %v7735
    %v7737 = vpop.f32.mrb[0].mxu0
    %v7738 = vadd.f32 %v5474, %v7737
    %7739 = vmatprep.mubr.bf16.mxu0 %v5589
    %7740 = vmatmul.mubr.bf16.gmra.mrb[0].mxu0 %v5588
    %v7741 = vpop.f32.mrb[0].mxu0
    %v7742 = vadd.f32 %v5478, %v7741
    %v7743 = vpop.f32.mrb[0].mxu0
    %v7744 = vadd.f32 %v5480, %v7743
    %v7745 = vpop.f32.mrb[0].mxu0
    %v7746 = vadd.f32 %v5482, %v7745
    %v7747 = vpop.f32.mrb[0].mxu0
    %v7748 = vadd.f32 %v5484, %v7747
    %7749 = vmatprep.mubr.bf16.mxu0 %v5591
    %7750 = vmatmul.mubr.bf16.gmra.mrb[0].mxu0 %v5590
    %v7751 = vpop.f32.mrb[0].mxu0
    %v7752 = vadd.f32 %v5488, %v7751
    %v7753 = vpop.f32.mrb[0].mxu0
    %v7754 = vadd.f32 %v5490, %v7753
    %v7755 = vpop.f32.mrb[0].mxu0
    %v7756 = vadd.f32 %v5492, %v7755
    %v7757 = vpop.f32.mrb[0].mxu0
    %v7758 = vadd.f32 %v5494, %v7757
    %7759 = vmatprep.mubr.bf16.mxu0 %v5593
    %7760 = vmatmul.mubr.bf16.gmra.mrb[0].mxu0 %v5592
    %v7761 = vpop.f32.mrb[0].mxu0
    %v7762 = vadd.f32 %v5498, %v7761
    %v7763 = vpop.f32.mrb[0].mxu0
    %v7764 = vadd.f32 %v5500, %v7763
    %v7765 = vpop.f32.mrb[0].mxu0
    %v7766 = vadd.f32 %v5502, %v7765
    %v7767 = vpop.f32.mrb[0].mxu0
    %v7768 = vadd.f32 %v5504, %v7767
    %7769 = vmatprep.mubr.bf16.mxu0 %v5595
    %7770 = vmatmul.mubr.bf16.gmra.mrb[0].mxu0 %v5594
    %v7771 = vpop.f32.mrb[0].mxu0
    %v7772 = vadd.f32 %v5508, %v7771
    %v7773 = vpop.f32.mrb[0].mxu0
    %v7774 = vadd.f32 %v5510, %v7773
    %v7775 = vpop.f32.mrb[0].mxu0
    %v7776 = vadd.f32 %v5512, %v7775
    %v7777 = vpop.f32.mrb[0].mxu0
    %v7778 = vadd.f32 %v5514, %v7777
    %7779 = vmatprep.mubr.bf16.mxu0 %v5597
    %7780 = vmatmul.mubr.bf16.gmra.mrb[0].mxu0 %v5596
    %v7781 = vpop.f32.mrb[0].mxu0
    %v7782 = vadd.f32 %v5518, %v7781
    %v7783 = vpop.f32.mrb[0].mxu0
    %v7784 = vadd.f32 %v5520, %v7783
    %v7785 = vpop.f32.mrb[0].mxu0
    %v7786 = vadd.f32 %v5522, %v7785
    %v7787 = vpop.f32.mrb[0].mxu0
    %v7788 = vadd.f32 %v5524, %v7787
    %7789 = vmatprep.mubr.bf16.mxu0 %v5599
    %7790 = vmatmul.mubr.bf16.gmra.mrb[0].mxu0 %v5598
    %v7791 = vpop.f32.mrb[0].mxu0
    %v7792 = vadd.f32 %v5528, %v7791
    %v7793 = vpop.f32.mrb[0].mxu0
    %v7794 = vadd.f32 %v5530, %v7793
    %v7795 = vpop.f32.mrb[0].mxu0
    %v7796 = vadd.f32 %v5532, %v7795
    %v7797 = vpop.f32.mrb[0].mxu0
    %v7798 = vadd.f32 %v5534, %v7797
    %7799 = vdwg.mxu0
    %v7800 = vmul.f32 %v6931, 0.5
    %v7801 = vmul.f32 %v6933, 0.5
    %v7802 = vmul.f32 %v7044, 0.5
    %v7803 = vmul.f32 %v7046, 0.5
    %v7804 = vmul.f32 %v6935, 0.5
    %v7805 = vmul.f32 %v6937, 0.5
    %v7806 = vmul.f32 %v7048, 0.5
    %v7807 = vmul.f32 %v7050, 0.5
    %v7808 = vmul.f32 %v6941, 0.5
    %v7809 = vmul.f32 %v6943, 0.5
    %v7810 = vmul.f32 %v7054, 0.5
    %v7811 = vmul.f32 %v7056, 0.5
    %v7812 = vmul.f32 %v6945, 0.5
    %v7813 = vmul.f32 %v6947, 0.5
    %v7814 = vmul.f32 %v7058, 0.5
    %v7815 = vmul.f32 %v7060, 0.5
    %v7816 = vmul.f32 %v6951, 0.5
    %v7817 = vmul.f32 %v6953, 0.5
    %v7818 = vmul.f32 %v7064, 0.5
    %v7819 = vmul.f32 %v7066, 0.5
    %v7820 = vmul.f32 %v6955, 0.5
    %v7821 = vmul.f32 %v6957, 0.5
    %v7822 = vmul.f32 %v7068, 0.5
    %v7823 = vmul.f32 %v7070, 0.5
    %v7824 = vmul.f32 %v6961, 0.5
    %v7825 = vmul.f32 %v6963, 0.5
    %v7826 = vmul.f32 %v7074, 0.5
    %v7827 = vmul.f32 %v7076, 0.5
    %v7828 = vmul.f32 %v6965, 0.5
    %v7829 = vmul.f32 %v6967, 0.5
    %v7830 = vmul.f32 %v7078, 0.5
    %v7831 = vmul.f32 %v7080, 0.5
    %v7832 = vmul.f32 %v6971, 0.5
    %v7833 = vmul.f32 %v6973, 0.5
    %v7834 = vmul.f32 %v7084, 0.5
    %v7835 = vmul.f32 %v7086, 0.5
    %v7836 = vmul.f32 %v6975, 0.5
    %v7837 = vmul.f32 %v6977, 0.5
    %v7838 = vmul.f32 %v7088, 0.5
    %v7839 = vmul.f32 %v7090, 0.5
    %v7840 = vmul.f32 %v6981, 0.5
    %v7841 = vmul.f32 %v6983, 0.5
    %v7842 = vmul.f32 %v7094, 0.5
    %v7843 = vmul.f32 %v7096, 0.5
    %v7844 = vmul.f32 %v6985, 0.5
    %v7845 = vmul.f32 %v6987, 0.5
    %v7846 = vmul.f32 %v7098, 0.5
    %v7847 = vmul.f32 %v7100, 0.5
    %v7848 = vmul.f32 %v6991, 0.5
    %v7849 = vmul.f32 %v6993, 0.5
    %v7850 = vmul.f32 %v7104, 0.5
    %v7851 = vmul.f32 %v7106, 0.5
    %v7852 = vmul.f32 %v6995, 0.5
    %v7853 = vmul.f32 %v6997, 0.5
    %v7854 = vmul.f32 %v7108, 0.5
    %v7855 = vmul.f32 %v7110, 0.5
    %v7856 = vmul.f32 %v7001, 0.5
    %v7857 = vmul.f32 %v7003, 0.5
    %v7858 = vmul.f32 %v7114, 0.5
    %v7859 = vmul.f32 %v7116, 0.5
    %v7860 = vmul.f32 %v7005, 0.5
    %v7861 = vmul.f32 %v7007, 0.5
    %v7862 = vmul.f32 %v7118, 0.5
    %v7863 = vmul.f32 %v7120, 0.5
    %v7864 = vtanh.pop %v7800
    %v7865 = vtanh.pop %v7801
    %v7866 = vtanh.pop %v7802
    %v7867 = vtanh.pop %v7803
    %v7868 = vtanh.pop %v7804
    %v7869 = vtanh.pop %v7805
    %v7870 = vtanh.pop %v7806
    %v7871 = vtanh.pop %v7807
    %v7872 = vtanh.pop %v7808
    %v7873 = vtanh.pop %v7809
    %v7874 = vtanh.pop %v7810
    %v7875 = vtanh.pop %v7811
    %v7876 = vtanh.pop %v7812
    %v7877 = vtanh.pop %v7813
    %v7878 = vtanh.pop %v7814
    %v7879 = vtanh.pop %v7815
    %v7880 = vtanh.pop %v7816
    %v7881 = vtanh.pop %v7817
    %v7882 = vtanh.pop %v7818
    %v7883 = vtanh.pop %v7819
    %v7884 = vtanh.pop %v7820
    %v7885 = vtanh.pop %v7821
    %v7886 = vtanh.pop %v7822
    %v7887 = vtanh.pop %v7823
    %v7888 = vtanh.pop %v7824
    %v7889 = vtanh.pop %v7825
    %v7890 = vtanh.pop %v7826
    %v7891 = vtanh.pop %v7827
    %v7892 = vtanh.pop %v7828
    %v7893 = vtanh.pop %v7829
    %v7894 = vtanh.pop %v7830
    %v7895 = vtanh.pop %v7831
    %v7896 = vtanh.pop %v7832
    %v7897 = vtanh.pop %v7833
    %v7898 = vtanh.pop %v7834
    %v7899 = vtanh.pop %v7835
    %v7900 = vtanh.pop %v7836
    %v7901 = vtanh.pop %v7837
    %v7902 = vtanh.pop %v7838
    %v7903 = vtanh.pop %v7839
    %v7904 = vtanh.pop %v7840
    %v7905 = vtanh.pop %v7841
    %v7906 = vtanh.pop %v7842
    %v7907 = vtanh.pop %v7843
    %v7908 = vtanh.pop %v7844
    %v7909 = vtanh.pop %v7845
    %v7910 = vtanh.pop %v7846
    %v7911 = vtanh.pop %v7847
    %v7912 = vtanh.pop %v7848
    %v7913 = vtanh.pop %v7849
    %v7914 = vtanh.pop %v7850
    %v7915 = vtanh.pop %v7851
    %v7916 = vtanh.pop %v7852
    %v7917 = vtanh.pop %v7853
    %v7918 = vtanh.pop %v7854
    %v7919 = vtanh.pop %v7855
    %v7920 = vtanh.pop %v7856
    %v7921 = vtanh.pop %v7857
    %v7922 = vtanh.pop %v7858
    %v7923 = vtanh.pop %v7859
    %v7924 = vtanh.pop %v7860
    %v7925 = vtanh.pop %v7861
    %v7926 = vtanh.pop %v7862
    %v7927 = vtanh.pop %v7863
    %v7928 = vmul.f32 %v7864, 0.5
    %v7929 = vmul.f32 %v7865, 0.5
    %v7930 = vmul.f32 %v7866, 0.5
    %v7931 = vmul.f32 %v7867, 0.5
    %v7932 = vmul.f32 %v7868, 0.5
    %v7933 = vmul.f32 %v7869, 0.5
    %v7934 = vmul.f32 %v7870, 0.5
    %v7935 = vmul.f32 %v7871, 0.5
    %v7936 = vmul.f32 %v7872, 0.5
    %v7937 = vmul.f32 %v7873, 0.5
    %v7938 = vmul.f32 %v7874, 0.5
    %v7939 = vmul.f32 %v7875, 0.5
    %v7940 = vmul.f32 %v7876, 0.5
    %v7941 = vmul.f32 %v7877, 0.5
    %v7942 = vmul.f32 %v7878, 0.5
    %v7943 = vmul.f32 %v7879, 0.5
    %v7944 = vmul.f32 %v7880, 0.5
    %v7945 = vmul.f32 %v7881, 0.5
    %v7946 = vmul.f32 %v7882, 0.5
    %v7947 = vmul.f32 %v7883, 0.5
    %v7948 = vmul.f32 %v7884, 0.5
    %v7949 = vmul.f32 %v7885, 0.5
    %v7950 = vmul.f32 %v7886, 0.5
    %v7951 = vmul.f32 %v7887, 0.5
    %v7952 = vmul.f32 %v7888, 0.5
    %v7953 = vmul.f32 %v7889, 0.5
    %v7954 = vmul.f32 %v7890, 0.5
    %v7955 = vmul.f32 %v7891, 0.5
    %v7956 = vmul.f32 %v7892, 0.5
    %v7957 = vmul.f32 %v7893, 0.5
    %v7958 = vmul.f32 %v7894, 0.5
    %v7959 = vmul.f32 %v7895, 0.5
    %v7960 = vmul.f32 %v7896, 0.5
    %v7961 = vmul.f32 %v7897, 0.5
    %v7962 = vmul.f32 %v7898, 0.5
    %v7963 = vmul.f32 %v7899, 0.5
    %v7964 = vmul.f32 %v7900, 0.5
    %v7965 = vmul.f32 %v7901, 0.5
    %v7966 = vmul.f32 %v7902, 0.5
    %v7967 = vmul.f32 %v7903, 0.5
    %v7968 = vmul.f32 %v7904, 0.5
    %v7969 = vmul.f32 %v7905, 0.5
    %v7970 = vmul.f32 %v7906, 0.5
    %v7971 = vmul.f32 %v7907, 0.5
    %v7972 = vmul.f32 %v7908, 0.5
    %v7973 = vmul.f32 %v7909, 0.5
    %v7974 = vmul.f32 %v7910, 0.5
    %v7975 = vmul.f32 %v7911, 0.5
    %v7976 = vmul.f32 %v7912, 0.5
    %v7977 = vmul.f32 %v7913, 0.5
    %v7978 = vmul.f32 %v7914, 0.5
    %v7979 = vmul.f32 %v7915, 0.5
    %v7980 = vmul.f32 %v7916, 0.5
    %v7981 = vmul.f32 %v7917, 0.5
    %v7982 = vmul.f32 %v7918, 0.5
    %v7983 = vmul.f32 %v7919, 0.5
    %v7984 = vmul.f32 %v7920, 0.5
    %v7985 = vmul.f32 %v7921, 0.5
    %v7986 = vmul.f32 %v7922, 0.5
    %v7987 = vmul.f32 %v7923, 0.5
    %v7988 = vmul.f32 %v7924, 0.5
    %v7989 = vmul.f32 %v7925, 0.5
    %v7990 = vmul.f32 %v7926, 0.5
    %v7991 = vmul.f32 %v7927, 0.5
    %v7992 = vadd.f32 %v7928, 0.5
    %v7993 = vadd.f32 %v7929, 0.5
    %v7994 = vadd.f32 %v7930, 0.5
    %v7995 = vadd.f32 %v7931, 0.5
    %v7996 = vadd.f32 %v7932, 0.5
    %v7997 = vadd.f32 %v7933, 0.5
    %v7998 = vadd.f32 %v7934, 0.5
    %v7999 = vadd.f32 %v7935, 0.5
    %v8000 = vadd.f32 %v7936, 0.5
    %v8001 = vadd.f32 %v7937, 0.5
    %v8002 = vadd.f32 %v7938, 0.5
    %v8003 = vadd.f32 %v7939, 0.5
    %v8004 = vadd.f32 %v7940, 0.5
    %v8005 = vadd.f32 %v7941, 0.5
    %v8006 = vadd.f32 %v7942, 0.5
    %v8007 = vadd.f32 %v7943, 0.5
    %v8008 = vadd.f32 %v7944, 0.5
    %v8009 = vadd.f32 %v7945, 0.5
    %v8010 = vadd.f32 %v7946, 0.5
    %v8011 = vadd.f32 %v7947, 0.5
    %v8012 = vadd.f32 %v7948, 0.5
    %v8013 = vadd.f32 %v7949, 0.5
    %v8014 = vadd.f32 %v7950, 0.5
    %v8015 = vadd.f32 %v7951, 0.5
    %v8016 = vadd.f32 %v7952, 0.5
    %v8017 = vadd.f32 %v7953, 0.5
    %v8018 = vadd.f32 %v7954, 0.5
    %v8019 = vadd.f32 %v7955, 0.5
    %v8020 = vadd.f32 %v7956, 0.5
    %v8021 = vadd.f32 %v7957, 0.5
    %v8022 = vadd.f32 %v7958, 0.5
    %v8023 = vadd.f32 %v7959, 0.5
    %v8024 = vadd.f32 %v7960, 0.5
    %v8025 = vadd.f32 %v7961, 0.5
    %v8026 = vadd.f32 %v7962, 0.5
    %v8027 = vadd.f32 %v7963, 0.5
    %v8028 = vadd.f32 %v7964, 0.5
    %v8029 = vadd.f32 %v7965, 0.5
    %v8030 = vadd.f32 %v7966, 0.5
    %v8031 = vadd.f32 %v7967, 0.5
    %v8032 = vadd.f32 %v7968, 0.5
    %v8033 = vadd.f32 %v7969, 0.5
    %v8034 = vadd.f32 %v7970, 0.5
    %v8035 = vadd.f32 %v7971, 0.5
    %v8036 = vadd.f32 %v7972, 0.5
    %v8037 = vadd.f32 %v7973, 0.5
    %v8038 = vadd.f32 %v7974, 0.5
    %v8039 = vadd.f32 %v7975, 0.5
    %v8040 = vadd.f32 %v7976, 0.5
    %v8041 = vadd.f32 %v7977, 0.5
    %v8042 = vadd.f32 %v7978, 0.5
    %v8043 = vadd.f32 %v7979, 0.5
    %v8044 = vadd.f32 %v7980, 0.5
    %v8045 = vadd.f32 %v7981, 0.5
    %v8046 = vadd.f32 %v7982, 0.5
    %v8047 = vadd.f32 %v7983, 0.5
    %v8048 = vadd.f32 %v7984, 0.5
    %v8049 = vadd.f32 %v7985, 0.5
    %v8050 = vadd.f32 %v7986, 0.5
    %v8051 = vadd.f32 %v7987, 0.5
    %v8052 = vadd.f32 %v7988, 0.5
    %v8053 = vadd.f32 %v7989, 0.5
    %v8054 = vadd.f32 %v7990, 0.5
    %v8055 = vadd.f32 %v7991, 0.5
    %v8056 = vmul.f32 %v7157, 0.5
    %v8057 = vmul.f32 %v7159, 0.5
    %v8058 = vmul.f32 %v7270, 0.5
    %v8059 = vmul.f32 %v7272, 0.5
    %v8060 = vmul.f32 %v7161, 0.5
    %v8061 = vmul.f32 %v7163, 0.5
    %v8062 = vmul.f32 %v7274, 0.5
    %v8063 = vmul.f32 %v7276, 0.5
    %v8064 = vmul.f32 %v7167, 0.5
    %v8065 = vmul.f32 %v7169, 0.5
    %v8066 = vmul.f32 %v7280, 0.5
    %v8067 = vmul.f32 %v7282, 0.5
    %v8068 = vmul.f32 %v7171, 0.5
    %v8069 = vmul.f32 %v7173, 0.5
    %v8070 = vmul.f32 %v7284, 0.5
    %v8071 = vmul.f32 %v7286, 0.5
    %v8072 = vmul.f32 %v7177, 0.5
    %v8073 = vmul.f32 %v7179, 0.5
    %v8074 = vmul.f32 %v7290, 0.5
    %v8075 = vmul.f32 %v7292, 0.5
    %v8076 = vmul.f32 %v7181, 0.5
    %v8077 = vmul.f32 %v7183, 0.5
    %v8078 = vmul.f32 %v7294, 0.5
    %v8079 = vmul.f32 %v7296, 0.5
    %v8080 = vmul.f32 %v7187, 0.5
    %v8081 = vmul.f32 %v7189, 0.5
    %v8082 = vmul.f32 %v7300, 0.5
    %v8083 = vmul.f32 %v7302, 0.5
    %v8084 = vmul.f32 %v7191, 0.5
    %v8085 = vmul.f32 %v7193, 0.5
    %v8086 = vmul.f32 %v7304, 0.5
    %v8087 = vmul.f32 %v7306, 0.5
    %v8088 = vmul.f32 %v7197, 0.5
    %v8089 = vmul.f32 %v7199, 0.5
    %v8090 = vmul.f32 %v7310, 0.5
    %v8091 = vmul.f32 %v7312, 0.5
    %v8092 = vmul.f32 %v7201, 0.5
    %v8093 = vmul.f32 %v7203, 0.5
    %v8094 = vmul.f32 %v7314, 0.5
    %v8095 = vmul.f32 %v7316, 0.5
    %v8096 = vmul.f32 %v7207, 0.5
    %v8097 = vmul.f32 %v7209, 0.5
    %v8098 = vmul.f32 %v7320, 0.5
    %v8099 = vmul.f32 %v7322, 0.5
    %v8100 = vmul.f32 %v7211, 0.5
    %v8101 = vmul.f32 %v7213, 0.5
    %v8102 = vmul.f32 %v7324, 0.5
    %v8103 = vmul.f32 %v7326, 0.5
    %v8104 = vmul.f32 %v7217, 0.5
    %v8105 = vmul.f32 %v7219, 0.5
    %v8106 = vmul.f32 %v7330, 0.5
    %v8107 = vmul.f32 %v7332, 0.5
    %v8108 = vmul.f32 %v7221, 0.5
    %v8109 = vmul.f32 %v7223, 0.5
    %v8110 = vmul.f32 %v7334, 0.5
    %v8111 = vmul.f32 %v7336, 0.5
    %v8112 = vmul.f32 %v7227, 0.5
    %v8113 = vmul.f32 %v7229, 0.5
    %v8114 = vmul.f32 %v7340, 0.5
    %v8115 = vmul.f32 %v7342, 0.5
    %v8116 = vmul.f32 %v7231, 0.5
    %v8117 = vmul.f32 %v7233, 0.5
    %v8118 = vmul.f32 %v7344, 0.5
    %v8119 = vmul.f32 %v7346, 0.5
    %v8120 = vtanh.pop %v8056
    %v8121 = vtanh.pop %v8057
    %v8122 = vtanh.pop %v8058
    %v8123 = vtanh.pop %v8059
    %v8124 = vtanh.pop %v8060
    %v8125 = vtanh.pop %v8061
    %v8126 = vtanh.pop %v8062
    %v8127 = vtanh.pop %v8063
    %v8128 = vtanh.pop %v8064
    %v8129 = vtanh.pop %v8065
    %v8130 = vtanh.pop %v8066
    %v8131 = vtanh.pop %v8067
    %v8132 = vtanh.pop %v8068
    %v8133 = vtanh.pop %v8069
    %v8134 = vtanh.pop %v8070
    %v8135 = vtanh.pop %v8071
    %v8136 = vtanh.pop %v8072
    %v8137 = vtanh.pop %v8073
    %v8138 = vtanh.pop %v8074
    %v8139 = vtanh.pop %v8075
    %v8140 = vtanh.pop %v8076
    %v8141 = vtanh.pop %v8077
    %v8142 = vtanh.pop %v8078
    %v8143 = vtanh.pop %v8079
    %v8144 = vtanh.pop %v8080
    %v8145 = vtanh.pop %v8081
    %v8146 = vtanh.pop %v8082
    %v8147 = vtanh.pop %v8083
    %v8148 = vtanh.pop %v8084
    %v8149 = vtanh.pop %v8085
    %v8150 = vtanh.pop %v8086
    %v8151 = vtanh.pop %v8087
    %v8152 = vtanh.pop %v8088
    %v8153 = vtanh.pop %v8089
    %v8154 = vtanh.pop %v8090
    %v8155 = vtanh.pop %v8091
    %v8156 = vtanh.pop %v8092
    %v8157 = vtanh.pop %v8093
    %v8158 = vtanh.pop %v8094
    %v8159 = vtanh.pop %v8095
    %v8160 = vtanh.pop %v8096
    %v8161 = vtanh.pop %v8097
    %v8162 = vtanh.pop %v8098
    %v8163 = vtanh.pop %v8099
    %v8164 = vtanh.pop %v8100
    %v8165 = vtanh.pop %v8101
    %v8166 = vtanh.pop %v8102
    %v8167 = vtanh.pop %v8103
    %v8168 = vtanh.pop %v8104
    %v8169 = vtanh.pop %v8105
    %v8170 = vtanh.pop %v8106
    %v8171 = vtanh.pop %v8107
    %v8172 = vtanh.pop %v8108
    %v8173 = vtanh.pop %v8109
    %v8174 = vtanh.pop %v8110
    %v8175 = vtanh.pop %v8111
    %v8176 = vtanh.pop %v8112
    %v8177 = vtanh.pop %v8113
    %v8178 = vtanh.pop %v8114
    %v8179 = vtanh.pop %v8115
    %v8180 = vtanh.pop %v8116
    %v8181 = vtanh.pop %v8117
    %v8182 = vtanh.pop %v8118
    %v8183 = vtanh.pop %v8119
    %v8184 = vmul.f32 %v8120, 0.5
    %v8185 = vmul.f32 %v8121, 0.5
    %v8186 = vmul.f32 %v8122, 0.5
    %v8187 = vmul.f32 %v8123, 0.5
    %v8188 = vmul.f32 %v8124, 0.5
    %v8189 = vmul.f32 %v8125, 0.5
    %v8190 = vmul.f32 %v8126, 0.5
    %v8191 = vmul.f32 %v8127, 0.5
    %v8192 = vmul.f32 %v8128, 0.5
    %v8193 = vmul.f32 %v8129, 0.5
    %v8194 = vmul.f32 %v8130, 0.5
    %v8195 = vmul.f32 %v8131, 0.5
    %v8196 = vmul.f32 %v8132, 0.5
    %v8197 = vmul.f32 %v8133, 0.5
    %v8198 = vmul.f32 %v8134, 0.5
    %v8199 = vmul.f32 %v8135, 0.5
    %v8200 = vmul.f32 %v8136, 0.5
    %v8201 = vmul.f32 %v8137, 0.5
    %v8202 = vmul.f32 %v8138, 0.5
    %v8203 = vmul.f32 %v8139, 0.5
    %v8204 = vmul.f32 %v8140, 0.5
    %v8205 = vmul.f32 %v8141, 0.5
    %v8206 = vmul.f32 %v8142, 0.5
    %v8207 = vmul.f32 %v8143, 0.5
    %v8208 = vmul.f32 %v8144, 0.5
    %v8209 = vmul.f32 %v8145, 0.5
    %v8210 = vmul.f32 %v8146, 0.5
    %v8211 = vmul.f32 %v8147, 0.5
    %v8212 = vmul.f32 %v8148, 0.5
    %v8213 = vmul.f32 %v8149, 0.5
    %v8214 = vmul.f32 %v8150, 0.5
    %v8215 = vmul.f32 %v8151, 0.5
    %v8216 = vmul.f32 %v8152, 0.5
    %v8217 = vmul.f32 %v8153, 0.5
    %v8218 = vmul.f32 %v8154, 0.5
    %v8219 = vmul.f32 %v8155, 0.5
    %v8220 = vmul.f32 %v8156, 0.5
    %v8221 = vmul.f32 %v8157, 0.5
    %v8222 = vmul.f32 %v8158, 0.5
    %v8223 = vmul.f32 %v8159, 0.5
    %v8224 = vmul.f32 %v8160, 0.5
    %v8225 = vmul.f32 %v8161, 0.5
    %v8226 = vmul.f32 %v8162, 0.5
    %v8227 = vmul.f32 %v8163, 0.5
    %v8228 = vmul.f32 %v8164, 0.5
    %v8229 = vmul.f32 %v8165, 0.5
    %v8230 = vmul.f32 %v8166, 0.5
    %v8231 = vmul.f32 %v8167, 0.5
    %v8232 = vmul.f32 %v8168, 0.5
    %v8233 = vmul.f32 %v8169, 0.5
    %v8234 = vmul.f32 %v8170, 0.5
    %v8235 = vmul.f32 %v8171, 0.5
    %v8236 = vmul.f32 %v8172, 0.5
    %v8237 = vmul.f32 %v8173, 0.5
    %v8238 = vmul.f32 %v8174, 0.5
    %v8239 = vmul.f32 %v8175, 0.5
    %v8240 = vmul.f32 %v8176, 0.5
    %v8241 = vmul.f32 %v8177, 0.5
    %v8242 = vmul.f32 %v8178, 0.5
    %v8243 = vmul.f32 %v8179, 0.5
    %v8244 = vmul.f32 %v8180, 0.5
    %v8245 = vmul.f32 %v8181, 0.5
    %v8246 = vmul.f32 %v8182, 0.5
    %v8247 = vmul.f32 %v8183, 0.5
    %v8248 = vadd.f32 %v8184, 0.5
    %v8249 = vadd.f32 %v8185, 0.5
    %v8250 = vadd.f32 %v8186, 0.5
    %v8251 = vadd.f32 %v8187, 0.5
    %v8252 = vadd.f32 %v8188, 0.5
    %v8253 = vadd.f32 %v8189, 0.5
    %v8254 = vadd.f32 %v8190, 0.5
    %v8255 = vadd.f32 %v8191, 0.5
    %v8256 = vadd.f32 %v8192, 0.5
    %v8257 = vadd.f32 %v8193, 0.5
    %v8258 = vadd.f32 %v8194, 0.5
    %v8259 = vadd.f32 %v8195, 0.5
    %v8260 = vadd.f32 %v8196, 0.5
    %v8261 = vadd.f32 %v8197, 0.5
    %v8262 = vadd.f32 %v8198, 0.5
    %v8263 = vadd.f32 %v8199, 0.5
    %v8264 = vadd.f32 %v8200, 0.5
    %v8265 = vadd.f32 %v8201, 0.5
    %v8266 = vadd.f32 %v8202, 0.5
    %v8267 = vadd.f32 %v8203, 0.5
    %v8268 = vadd.f32 %v8204, 0.5
    %v8269 = vadd.f32 %v8205, 0.5
    %v8270 = vadd.f32 %v8206, 0.5
    %v8271 = vadd.f32 %v8207, 0.5
    %v8272 = vadd.f32 %v8208, 0.5
    %v8273 = vadd.f32 %v8209, 0.5
    %v8274 = vadd.f32 %v8210, 0.5
    %v8275 = vadd.f32 %v8211, 0.5
    %v8276 = vadd.f32 %v8212, 0.5
    %v8277 = vadd.f32 %v8213, 0.5
    %v8278 = vadd.f32 %v8214, 0.5
    %v8279 = vadd.f32 %v8215, 0.5
    %v8280 = vadd.f32 %v8216, 0.5
    %v8281 = vadd.f32 %v8217, 0.5
    %v8282 = vadd.f32 %v8218, 0.5
    %v8283 = vadd.f32 %v8219, 0.5
    %v8284 = vadd.f32 %v8220, 0.5
    %v8285 = vadd.f32 %v8221, 0.5
    %v8286 = vadd.f32 %v8222, 0.5
    %v8287 = vadd.f32 %v8223, 0.5
    %v8288 = vadd.f32 %v8224, 0.5
    %v8289 = vadd.f32 %v8225, 0.5
    %v8290 = vadd.f32 %v8226, 0.5
    %v8291 = vadd.f32 %v8227, 0.5
    %v8292 = vadd.f32 %v8228, 0.5
    %v8293 = vadd.f32 %v8229, 0.5
    %v8294 = vadd.f32 %v8230, 0.5
    %v8295 = vadd.f32 %v8231, 0.5
    %v8296 = vadd.f32 %v8232, 0.5
    %v8297 = vadd.f32 %v8233, 0.5
    %v8298 = vadd.f32 %v8234, 0.5
    %v8299 = vadd.f32 %v8235, 0.5
    %v8300 = vadd.f32 %v8236, 0.5
    %v8301 = vadd.f32 %v8237, 0.5
    %v8302 = vadd.f32 %v8238, 0.5
    %v8303 = vadd.f32 %v8239, 0.5
    %v8304 = vadd.f32 %v8240, 0.5
    %v8305 = vadd.f32 %v8241, 0.5
    %v8306 = vadd.f32 %v8242, 0.5
    %v8307 = vadd.f32 %v8243, 0.5
    %v8308 = vadd.f32 %v8244, 0.5
    %v8309 = vadd.f32 %v8245, 0.5
    %v8310 = vadd.f32 %v8246, 0.5
    %v8311 = vadd.f32 %v8247, 0.5
    %v8312 = vtanh.pop %v7383
    %v8313 = vtanh.pop %v7385
    %v8314 = vtanh.pop %v7496
    %v8315 = vtanh.pop %v7498
    %v8316 = vtanh.pop %v7387
    %v8317 = vtanh.pop %v7389
    %v8318 = vtanh.pop %v7500
    %v8319 = vtanh.pop %v7502
    %v8320 = vtanh.pop %v7393
    %v8321 = vtanh.pop %v7395
    %v8322 = vtanh.pop %v7506
    %v8323 = vtanh.pop %v7508
    %v8324 = vtanh.pop %v7397
    %v8325 = vtanh.pop %v7399
    %v8326 = vtanh.pop %v7510
    %v8327 = vtanh.pop %v7512
    %v8328 = vtanh.pop %v7403
    %v8329 = vtanh.pop %v7405
    %v8330 = vtanh.pop %v7516
    %v8331 = vtanh.pop %v7518
    %v8332 = vtanh.pop %v7407
    %v8333 = vtanh.pop %v7409
    %v8334 = vtanh.pop %v7520
    %v8335 = vtanh.pop %v7522
    %v8336 = vtanh.pop %v7413
    %v8337 = vtanh.pop %v7415
    %v8338 = vtanh.pop %v7526
    %v8339 = vtanh.pop %v7528
    %v8340 = vtanh.pop %v7417
    %v8341 = vtanh.pop %v7419
    %v8342 = vtanh.pop %v7530
    %v8343 = vtanh.pop %v7532
    %v8344 = vtanh.pop %v7423
    %v8345 = vtanh.pop %v7425
    %v8346 = vtanh.pop %v7536
    %v8347 = vtanh.pop %v7538
    %v8348 = vtanh.pop %v7427
    %v8349 = vtanh.pop %v7429
    %v8350 = vtanh.pop %v7540
    %v8351 = vtanh.pop %v7542
    %v8352 = vtanh.pop %v7433
    %v8353 = vtanh.pop %v7435
    %v8354 = vtanh.pop %v7546
    %v8355 = vtanh.pop %v7548
    %v8356 = vtanh.pop %v7437
    %v8357 = vtanh.pop %v7439
    %v8358 = vtanh.pop %v7550
    %v8359 = vtanh.pop %v7552
    %v8360 = vtanh.pop %v7443
    %v8361 = vtanh.pop %v7445
    %v8362 = vtanh.pop %v7556
    %v8363 = vtanh.pop %v7558
    %v8364 = vtanh.pop %v7447
    %v8365 = vtanh.pop %v7449
    %v8366 = vtanh.pop %v7560
    %v8367 = vtanh.pop %v7562
    %v8368 = vtanh.pop %v7453
    %v8369 = vtanh.pop %v7455
    %v8370 = vtanh.pop %v7566
    %v8371 = vtanh.pop %v7568
    %v8372 = vtanh.pop %v7457
    %v8373 = vtanh.pop %v7459
    %v8374 = vtanh.pop %v7570
    %v8375 = vtanh.pop %v7572
    %v8376 = vmul.f32 %v7609, 0.5
    %v8377 = vmul.f32 %v7611, 0.5
    %v8378 = vmul.f32 %v7722, 0.5
    %v8379 = vmul.f32 %v7724, 0.5
    %v8380 = vmul.f32 %v7613, 0.5
    %v8381 = vmul.f32 %v7615, 0.5
    %v8382 = vmul.f32 %v7726, 0.5
    %v8383 = vmul.f32 %v7728, 0.5
    %v8384 = vmul.f32 %v7619, 0.5
    %v8385 = vmul.f32 %v7621, 0.5
    %v8386 = vmul.f32 %v7732, 0.5
    %v8387 = vmul.f32 %v7734, 0.5
    %v8388 = vmul.f32 %v7623, 0.5
    %v8389 = vmul.f32 %v7625, 0.5
    %v8390 = vmul.f32 %v7736, 0.5
    %v8391 = vmul.f32 %v7738, 0.5
    %v8392 = vmul.f32 %v7629, 0.5
    %v8393 = vmul.f32 %v7631, 0.5
    %v8394 = vmul.f32 %v7742, 0.5
    %v8395 = vmul.f32 %v7744, 0.5
    %v8396 = vmul.f32 %v7633, 0.5
    %v8397 = vmul.f32 %v7635, 0.5
    %v8398 = vmul.f32 %v7746, 0.5
    %v8399 = vmul.f32 %v7748, 0.5
    %v8400 = vmul.f32 %v7639, 0.5
    %v8401 = vmul.f32 %v7641, 0.5
    %v8402 = vmul.f32 %v7752, 0.5
    %v8403 = vmul.f32 %v7754, 0.5
    %v8404 = vmul.f32 %v7643, 0.5
    %v8405 = vmul.f32 %v7645, 0.5
    %v8406 = vmul.f32 %v7756, 0.5
    %v8407 = vmul.f32 %v7758, 0.5
    %v8408 = vmul.f32 %v7649, 0.5
    %v8409 = vmul.f32 %v7651, 0.5
    %v8410 = vmul.f32 %v7762, 0.5
    %v8411 = vmul.f32 %v7764, 0.5
    %v8412 = vmul.f32 %v7653, 0.5
    %v8413 = vmul.f32 %v7655, 0.5
    %v8414 = vmul.f32 %v7766, 0.5
    %v8415 = vmul.f32 %v7768, 0.5
    %v8416 = vmul.f32 %v7659, 0.5
    %v8417 = vmul.f32 %v7661, 0.5
    %v8418 = vmul.f32 %v7772, 0.5
    %v8419 = vmul.f32 %v7774, 0.5
    %v8420 = vmul.f32 %v7663, 0.5
    %v8421 = vmul.f32 %v7665, 0.5
    %v8422 = vmul.f32 %v7776, 0.5
    %v8423 = vmul.f32 %v7778, 0.5
    %v8424 = vmul.f32 %v7669, 0.5
    %v8425 = vmul.f32 %v7671, 0.5
    %v8426 = vmul.f32 %v7782, 0.5
    %v8427 = vmul.f32 %v7784, 0.5
    %v8428 = vmul.f32 %v7673, 0.5
    %v8429 = vmul.f32 %v7675, 0.5
    %v8430 = vmul.f32 %v7786, 0.5
    %v8431 = vmul.f32 %v7788, 0.5
    %v8432 = vmul.f32 %v7679, 0.5
    %v8433 = vmul.f32 %v7681, 0.5
    %v8434 = vmul.f32 %v7792, 0.5
    %v8435 = vmul.f32 %v7794, 0.5
    %v8436 = vmul.f32 %v7683, 0.5
    %v8437 = vmul.f32 %v7685, 0.5
    %v8438 = vmul.f32 %v7796, 0.5
    %v8439 = vmul.f32 %v7798, 0.5
    %v8440 = vtanh.pop %v8376
    %v8441 = vtanh.pop %v8377
    %v8442 = vtanh.pop %v8378
    %v8443 = vtanh.pop %v8379
    %v8444 = vtanh.pop %v8380
    %v8445 = vtanh.pop %v8381
    %v8446 = vtanh.pop %v8382
    %v8447 = vtanh.pop %v8383
    %v8448 = vtanh.pop %v8384
    %v8449 = vtanh.pop %v8385
    %v8450 = vtanh.pop %v8386
    %v8451 = vtanh.pop %v8387
    %v8452 = vtanh.pop %v8388
    %v8453 = vtanh.pop %v8389
    %v8454 = vtanh.pop %v8390
    %v8455 = vtanh.pop %v8391
    %v8456 = vtanh.pop %v8392
    %v8457 = vtanh.pop %v8393
    %v8458 = vtanh.pop %v8394
    %v8459 = vtanh.pop %v8395
    %v8460 = vtanh.pop %v8396
    %v8461 = vtanh.pop %v8397
    %v8462 = vtanh.pop %v8398
    %v8463 = vtanh.pop %v8399
    %v8464 = vtanh.pop %v8400
    %v8465 = vtanh.pop %v8401
    %v8466 = vtanh.pop %v8402
    %v8467 = vtanh.pop %v8403
    %v8468 = vtanh.pop %v8404
    %v8469 = vtanh.pop %v8405
    %v8470 = vtanh.pop %v8406
    %v8471 = vtanh.pop %v8407
    %v8472 = vtanh.pop %v8408
    %v8473 = vtanh.pop %v8409
    %v8474 = vtanh.pop %v8410
    %v8475 = vtanh.pop %v8411
    %v8476 = vtanh.pop %v8412
    %v8477 = vtanh.pop %v8413
    %v8478 = vtanh.pop %v8414
    %v8479 = vtanh.pop %v8415
    %v8480 = vtanh.pop %v8416
    %v8481 = vtanh.pop %v8417
    %v8482 = vtanh.pop %v8418
    %v8483 = vtanh.pop %v8419
    %v8484 = vtanh.pop %v8420
    %v8485 = vtanh.pop %v8421
    %v8486 = vtanh.pop %v8422
    %v8487 = vtanh.pop %v8423
    %v8488 = vtanh.pop %v8424
    %v8489 = vtanh.pop %v8425
    %v8490 = vtanh.pop %v8426
    %v8491 = vtanh.pop %v8427
    %v8492 = vtanh.pop %v8428
    %v8493 = vtanh.pop %v8429
    %v8494 = vtanh.pop %v8430
    %v8495 = vtanh.pop %v8431
    %v8496 = vtanh.pop %v8432
    %v8497 = vtanh.pop %v8433
    %v8498 = vtanh.pop %v8434
    %v8499 = vtanh.pop %v8435
    %v8500 = vtanh.pop %v8436
    %v8501 = vtanh.pop %v8437
    %v8502 = vtanh.pop %v8438
    %v8503 = vtanh.pop %v8439
    %v8504 = vmul.f32 %v8440, 0.5
    %v8505 = vmul.f32 %v8441, 0.5
    %v8506 = vmul.f32 %v8442, 0.5
    %v8507 = vmul.f32 %v8443, 0.5
    %v8508 = vmul.f32 %v8444, 0.5
    %v8509 = vmul.f32 %v8445, 0.5
    %v8510 = vmul.f32 %v8446, 0.5
    %v8511 = vmul.f32 %v8447, 0.5
    %v8512 = vmul.f32 %v8448, 0.5
    %v8513 = vmul.f32 %v8449, 0.5
    %v8514 = vmul.f32 %v8450, 0.5
    %v8515 = vmul.f32 %v8451, 0.5
    %v8516 = vmul.f32 %v8452, 0.5
    %v8517 = vmul.f32 %v8453, 0.5
    %v8518 = vmul.f32 %v8454, 0.5
    %v8519 = vmul.f32 %v8455, 0.5
    %v8520 = vmul.f32 %v8456, 0.5
    %v8521 = vmul.f32 %v8457, 0.5
    %v8522 = vmul.f32 %v8458, 0.5
    %v8523 = vmul.f32 %v8459, 0.5
    %v8524 = vmul.f32 %v8460, 0.5
    %v8525 = vmul.f32 %v8461, 0.5
    %v8526 = vmul.f32 %v8462, 0.5
    %v8527 = vmul.f32 %v8463, 0.5
    %v8528 = vmul.f32 %v8464, 0.5
    %v8529 = vmul.f32 %v8465, 0.5
    %v8530 = vmul.f32 %v8466, 0.5
    %v8531 = vmul.f32 %v8467, 0.5
    %v8532 = vmul.f32 %v8468, 0.5
    %v8533 = vmul.f32 %v8469, 0.5
    %v8534 = vmul.f32 %v8470, 0.5
    %v8535 = vmul.f32 %v8471, 0.5
    %v8536 = vmul.f32 %v8472, 0.5
    %v8537 = vmul.f32 %v8473, 0.5
    %v8538 = vmul.f32 %v8474, 0.5
    %v8539 = vmul.f32 %v8475, 0.5
    %v8540 = vmul.f32 %v8476, 0.5
    %v8541 = vmul.f32 %v8477, 0.5
    %v8542 = vmul.f32 %v8478, 0.5
    %v8543 = vmul.f32 %v8479, 0.5
    %v8544 = vmul.f32 %v8480, 0.5
    %v8545 = vmul.f32 %v8481, 0.5
    %v8546 = vmul.f32 %v8482, 0.5
    %v8547 = vmul.f32 %v8483, 0.5
    %v8548 = vmul.f32 %v8484, 0.5
    %v8549 = vmul.f32 %v8485, 0.5
    %v8550 = vmul.f32 %v8486, 0.5
    %v8551 = vmul.f32 %v8487, 0.5
    %v8552 = vmul.f32 %v8488, 0.5
    %v8553 = vmul.f32 %v8489, 0.5
    %v8554 = vmul.f32 %v8490, 0.5
    %v8555 = vmul.f32 %v8491, 0.5
    %v8556 = vmul.f32 %v8492, 0.5
    %v8557 = vmul.f32 %v8493, 0.5
    %v8558 = vmul.f32 %v8494, 0.5
    %v8559 = vmul.f32 %v8495, 0.5
    %v8560 = vmul.f32 %v8496, 0.5
    %v8561 = vmul.f32 %v8497, 0.5
    %v8562 = vmul.f32 %v8498, 0.5
    %v8563 = vmul.f32 %v8499, 0.5
    %v8564 = vmul.f32 %v8500, 0.5
    %v8565 = vmul.f32 %v8501, 0.5
    %v8566 = vmul.f32 %v8502, 0.5
    %v8567 = vmul.f32 %v8503, 0.5
    %v8568 = vadd.f32 %v8504, 0.5
    %v8569 = vadd.f32 %v8505, 0.5
    %v8570 = vadd.f32 %v8506, 0.5
    %v8571 = vadd.f32 %v8507, 0.5
    %v8572 = vadd.f32 %v8508, 0.5
    %v8573 = vadd.f32 %v8509, 0.5
    %v8574 = vadd.f32 %v8510, 0.5
    %v8575 = vadd.f32 %v8511, 0.5
    %v8576 = vadd.f32 %v8512, 0.5
    %v8577 = vadd.f32 %v8513, 0.5
    %v8578 = vadd.f32 %v8514, 0.5
    %v8579 = vadd.f32 %v8515, 0.5
    %v8580 = vadd.f32 %v8516, 0.5
    %v8581 = vadd.f32 %v8517, 0.5
    %v8582 = vadd.f32 %v8518, 0.5
    %v8583 = vadd.f32 %v8519, 0.5
    %v8584 = vadd.f32 %v8520, 0.5
    %v8585 = vadd.f32 %v8521, 0.5
    %v8586 = vadd.f32 %v8522, 0.5
    %v8587 = vadd.f32 %v8523, 0.5
    %v8588 = vadd.f32 %v8524, 0.5
    %v8589 = vadd.f32 %v8525, 0.5
    %v8590 = vadd.f32 %v8526, 0.5
    %v8591 = vadd.f32 %v8527, 0.5
    %v8592 = vadd.f32 %v8528, 0.5
    %v8593 = vadd.f32 %v8529, 0.5
    %v8594 = vadd.f32 %v8530, 0.5
    %v8595 = vadd.f32 %v8531, 0.5
    %v8596 = vadd.f32 %v8532, 0.5
    %v8597 = vadd.f32 %v8533, 0.5
    %v8598 = vadd.f32 %v8534, 0.5
    %v8599 = vadd.f32 %v8535, 0.5
    %v8600 = vadd.f32 %v8536, 0.5
    %v8601 = vadd.f32 %v8537, 0.5
    %v8602 = vadd.f32 %v8538, 0.5
    %v8603 = vadd.f32 %v8539, 0.5
    %v8604 = vadd.f32 %v8540, 0.5
    %v8605 = vadd.f32 %v8541, 0.5
    %v8606 = vadd.f32 %v8542, 0.5
    %v8607 = vadd.f32 %v8543, 0.5
    %v8608 = vadd.f32 %v8544, 0.5
    %v8609 = vadd.f32 %v8545, 0.5
    %v8610 = vadd.f32 %v8546, 0.5
    %v8611 = vadd.f32 %v8547, 0.5
    %v8612 = vadd.f32 %v8548, 0.5
    %v8613 = vadd.f32 %v8549, 0.5
    %v8614 = vadd.f32 %v8550, 0.5
    %v8615 = vadd.f32 %v8551, 0.5
    %v8616 = vadd.f32 %v8552, 0.5
    %v8617 = vadd.f32 %v8553, 0.5
    %v8618 = vadd.f32 %v8554, 0.5
    %v8619 = vadd.f32 %v8555, 0.5
    %v8620 = vadd.f32 %v8556, 0.5
    %v8621 = vadd.f32 %v8557, 0.5
    %v8622 = vadd.f32 %v8558, 0.5
    %v8623 = vadd.f32 %v8559, 0.5
    %v8624 = vadd.f32 %v8560, 0.5
    %v8625 = vadd.f32 %v8561, 0.5
    %v8626 = vadd.f32 %v8562, 0.5
    %v8627 = vadd.f32 %v8563, 0.5
    %v8628 = vadd.f32 %v8564, 0.5
    %v8629 = vadd.f32 %v8565, 0.5
    %v8630 = vadd.f32 %v8566, 0.5
    %v8631 = vadd.f32 %v8567, 0.5
    %v8632 = vld [vmem:[#allocation3] sm:$0xff]
    %v8633 = vld [vmem:[#allocation3 + $0x8] sm:$0xff]
    %v8634 = vld [vmem:[#allocation3 + $0x10] sm:$0xff]
    %v8635 = vld [vmem:[#allocation3 + $0x18] sm:$0xff]
    %v8636 = vld [vmem:[#allocation3 + $0x20] sm:$0xff]
    %v8637 = vld [vmem:[#allocation3 + $0x28] sm:$0xff]
    %v8638 = vld [vmem:[#allocation3 + $0x30] sm:$0xff]
    %v8639 = vld [vmem:[#allocation3 + $0x38] sm:$0xff]
    %v8640 = vld [vmem:[#allocation3 + $0x40] sm:$0xff]
    %v8641 = vld [vmem:[#allocation3 + $0x48] sm:$0xff]
    %v8642 = vld [vmem:[#allocation3 + $0x50] sm:$0xff]
    %v8643 = vld [vmem:[#allocation3 + $0x58] sm:$0xff]
    %v8644 = vld [vmem:[#allocation3 + $0x60] sm:$0xff]
    %v8645 = vld [vmem:[#allocation3 + $0x68] sm:$0xff]
    %v8646 = vld [vmem:[#allocation3 + $0x70] sm:$0xff]
    %v8647 = vld [vmem:[#allocation3 + $0x78] sm:$0xff]
    %v8648 = vld [vmem:[#allocation3 + $0x80] sm:$0xff]
    %v8649 = vld [vmem:[#allocation3 + $0x88] sm:$0xff]
    %v8650 = vld [vmem:[#allocation3 + $0x90] sm:$0xff]
    %v8651 = vld [vmem:[#allocation3 + $0x98] sm:$0xff]
    %v8652 = vld [vmem:[#allocation3 + $0xa0] sm:$0xff]
    %v8653 = vld [vmem:[#allocation3 + $0xa8] sm:$0xff]
    %v8654 = vld [vmem:[#allocation3 + $0xb0] sm:$0xff]
    %v8655 = vld [vmem:[#allocation3 + $0xb8] sm:$0xff]
    %v8656 = vld [vmem:[#allocation3 + $0xc0] sm:$0xff]
    %v8657 = vld [vmem:[#allocation3 + $0xc8] sm:$0xff]
    %v8658 = vld [vmem:[#allocation3 + $0xd0] sm:$0xff]
    %v8659 = vld [vmem:[#allocation3 + $0xd8] sm:$0xff]
    %v8660 = vld [vmem:[#allocation3 + $0xe0] sm:$0xff]
    %v8661 = vld [vmem:[#allocation3 + $0xe8] sm:$0xff]
    %v8662 = vld [vmem:[#allocation3 + $0xf0] sm:$0xff]
    %v8663 = vld [vmem:[#allocation3 + $0xf8] sm:$0xff]
    %v8664 = vld [vmem:[#allocation3 + $0x100] sm:$0xff]
    %v8665 = vld [vmem:[#allocation3 + $0x108] sm:$0xff]
    %v8666 = vld [vmem:[#allocation3 + $0x110] sm:$0xff]
    %v8667 = vld [vmem:[#allocation3 + $0x118] sm:$0xff]
    %v8668 = vld [vmem:[#allocation3 + $0x120] sm:$0xff]
    %v8669 = vld [vmem:[#allocation3 + $0x128] sm:$0xff]
    %v8670 = vld [vmem:[#allocation3 + $0x130] sm:$0xff]
    %v8671 = vld [vmem:[#allocation3 + $0x138] sm:$0xff]
    %v8672 = vld [vmem:[#allocation3 + $0x140] sm:$0xff]
    %v8673 = vld [vmem:[#allocation3 + $0x148] sm:$0xff]
    %v8674 = vld [vmem:[#allocation3 + $0x150] sm:$0xff]
    %v8675 = vld [vmem:[#allocation3 + $0x158] sm:$0xff]
    %v8676 = vld [vmem:[#allocation3 + $0x160] sm:$0xff]
    %v8677 = vld [vmem:[#allocation3 + $0x168] sm:$0xff]
    %v8678 = vld [vmem:[#allocation3 + $0x170] sm:$0xff]
    %v8679 = vld [vmem:[#allocation3 + $0x178] sm:$0xff]
    %v8680 = vld [vmem:[#allocation3 + $0x180] sm:$0xff]
    %v8681 = vld [vmem:[#allocation3 + $0x188] sm:$0xff]
    %v8682 = vld [vmem:[#allocation3 + $0x190] sm:$0xff]
    %v8683 = vld [vmem:[#allocation3 + $0x198] sm:$0xff]
    %v8684 = vld [vmem:[#allocation3 + $0x1a0] sm:$0xff]
    %v8685 = vld [vmem:[#allocation3 + $0x1a8] sm:$0xff]
    %v8686 = vld [vmem:[#allocation3 + $0x1b0] sm:$0xff]
    %v8687 = vld [vmem:[#allocation3 + $0x1b8] sm:$0xff]
    %v8688 = vld [vmem:[#allocation3 + $0x1c0] sm:$0xff]
    %v8689 = vld [vmem:[#allocation3 + $0x1c8] sm:$0xff]
    %v8690 = vld [vmem:[#allocation3 + $0x1d0] sm:$0xff]
    %v8691 = vld [vmem:[#allocation3 + $0x1d8] sm:$0xff]
    %v8692 = vld [vmem:[#allocation3 + $0x1e0] sm:$0xff]
    %v8693 = vld [vmem:[#allocation3 + $0x1e8] sm:$0xff]
    %v8694 = vld [vmem:[#allocation3 + $0x1f0] sm:$0xff]
    %v8695 = vld [vmem:[#allocation3 + $0x1f8] sm:$0xff]
    %v8696 = vmul.f32 %v7992, %v8632
    %v8697 = vmul.f32 %v7993, %v8633
    %v8698 = vmul.f32 %v7994, %v8634
    %v8699 = vmul.f32 %v7995, %v8635
    %v8700 = vmul.f32 %v7996, %v8636
    %v8701 = vmul.f32 %v7997, %v8637
    %v8702 = vmul.f32 %v7998, %v8638
    %v8703 = vmul.f32 %v7999, %v8639
    %v8704 = vmul.f32 %v8000, %v8640
    %v8705 = vmul.f32 %v8001, %v8641
    %v8706 = vmul.f32 %v8002, %v8642
    %v8707 = vmul.f32 %v8003, %v8643
    %v8708 = vmul.f32 %v8004, %v8644
    %v8709 = vmul.f32 %v8005, %v8645
    %v8710 = vmul.f32 %v8006, %v8646
    %v8711 = vmul.f32 %v8007, %v8647
    %v8712 = vmul.f32 %v8008, %v8648
    %v8713 = vmul.f32 %v8009, %v8649
    %v8714 = vmul.f32 %v8010, %v8650
    %v8715 = vmul.f32 %v8011, %v8651
    %v8716 = vmul.f32 %v8012, %v8652
    %v8717 = vmul.f32 %v8013, %v8653
    %v8718 = vmul.f32 %v8014, %v8654
    %v8719 = vmul.f32 %v8015, %v8655
    %v8720 = vmul.f32 %v8016, %v8656
    %v8721 = vmul.f32 %v8017, %v8657
    %v8722 = vmul.f32 %v8018, %v8658
    %v8723 = vmul.f32 %v8019, %v8659
    %v8724 = vmul.f32 %v8020, %v8660
    %v8725 = vmul.f32 %v8021, %v8661
    %v8726 = vmul.f32 %v8022, %v8662
    %v8727 = vmul.f32 %v8023, %v8663
    %v8728 = vmul.f32 %v8024, %v8664
    %v8729 = vmul.f32 %v8025, %v8665
    %v8730 = vmul.f32 %v8026, %v8666
    %v8731 = vmul.f32 %v8027, %v8667
    %v8732 = vmul.f32 %v8028, %v8668
    %v8733 = vmul.f32 %v8029, %v8669
    %v8734 = vmul.f32 %v8030, %v8670
    %v8735 = vmul.f32 %v8031, %v8671
    %v8736 = vmul.f32 %v8032, %v8672
    %v8737 = vmul.f32 %v8033, %v8673
    %v8738 = vmul.f32 %v8034, %v8674
    %v8739 = vmul.f32 %v8035, %v8675
    %v8740 = vmul.f32 %v8036, %v8676
    %v8741 = vmul.f32 %v8037, %v8677
    %v8742 = vmul.f32 %v8038, %v8678
    %v8743 = vmul.f32 %v8039, %v8679
    %v8744 = vmul.f32 %v8040, %v8680
    %v8745 = vmul.f32 %v8041, %v8681
    %v8746 = vmul.f32 %v8042, %v8682
    %v8747 = vmul.f32 %v8043, %v8683
    %v8748 = vmul.f32 %v8044, %v8684
    %v8749 = vmul.f32 %v8045, %v8685
    %v8750 = vmul.f32 %v8046, %v8686
    %v8751 = vmul.f32 %v8047, %v8687
    %v8752 = vmul.f32 %v8048, %v8688
    %v8753 = vmul.f32 %v8049, %v8689
    %v8754 = vmul.f32 %v8050, %v8690
    %v8755 = vmul.f32 %v8051, %v8691
    %v8756 = vmul.f32 %v8052, %v8692
    %v8757 = vmul.f32 %v8053, %v8693
    %v8758 = vmul.f32 %v8054, %v8694
    %v8759 = vmul.f32 %v8055, %v8695
    %v8760 = vmul.f32 %v8248, %v8312
    %v8761 = vmul.f32 %v8249, %v8313
    %v8762 = vmul.f32 %v8250, %v8314
    %v8763 = vmul.f32 %v8251, %v8315
    %v8764 = vmul.f32 %v8252, %v8316
    %v8765 = vmul.f32 %v8253, %v8317
    %v8766 = vmul.f32 %v8254, %v8318
    %v8767 = vmul.f32 %v8255, %v8319
    %v8768 = vmul.f32 %v8256, %v8320
    %v8769 = vmul.f32 %v8257, %v8321
    %v8770 = vmul.f32 %v8258, %v8322
    %v8771 = vmul.f32 %v8259, %v8323
    %v8772 = vmul.f32 %v8260, %v8324
    %v8773 = vmul.f32 %v8261, %v8325
    %v8774 = vmul.f32 %v8262, %v8326
    %v8775 = vmul.f32 %v8263, %v8327
    %v8776 = vmul.f32 %v8264, %v8328
    %v8777 = vmul.f32 %v8265, %v8329
    %v8778 = vmul.f32 %v8266, %v8330
    %v8779 = vmul.f32 %v8267, %v8331
    %v8780 = vmul.f32 %v8268, %v8332
    %v8781 = vmul.f32 %v8269, %v8333
    %v8782 = vmul.f32 %v8270, %v8334
    %v8783 = vmul.f32 %v8271, %v8335
    %v8784 = vmul.f32 %v8272, %v8336
    %v8785 = vmul.f32 %v8273, %v8337
    %v8786 = vmul.f32 %v8274, %v8338
    %v8787 = vmul.f32 %v8275, %v8339
    %v8788 = vmul.f32 %v8276, %v8340
    %v8789 = vmul.f32 %v8277, %v8341
    %v8790 = vmul.f32 %v8278, %v8342
    %v8791 = vmul.f32 %v8279, %v8343
    %v8792 = vmul.f32 %v8280, %v8344
    %v8793 = vmul.f32 %v8281, %v8345
    %v8794 = vmul.f32 %v8282, %v8346
    %v8795 = vmul.f32 %v8283, %v8347
    %v8796 = vmul.f32 %v8284, %v8348
    %v8797 = vmul.f32 %v8285, %v8349
    %v8798 = vmul.f32 %v8286, %v8350
    %v8799 = vmul.f32 %v8287, %v8351
    %v8800 = vmul.f32 %v8288, %v8352
    %v8801 = vmul.f32 %v8289, %v8353
    %v8802 = vmul.f32 %v8290, %v8354
    %v8803 = vmul.f32 %v8291, %v8355
    %v8804 = vmul.f32 %v8292, %v8356
    %v8805 = vmul.f32 %v8293, %v8357
    %v8806 = vmul.f32 %v8294, %v8358
    %v8807 = vmul.f32 %v8295, %v8359
    %v8808 = vmul.f32 %v8296, %v8360
    %v8809 = vmul.f32 %v8297, %v8361
    %v8810 = vmul.f32 %v8298, %v8362
    %v8811 = vmul.f32 %v8299, %v8363
    %v8812 = vmul.f32 %v8300, %v8364
    %v8813 = vmul.f32 %v8301, %v8365
    %v8814 = vmul.f32 %v8302, %v8366
    %v8815 = vmul.f32 %v8303, %v8367
    %v8816 = vmul.f32 %v8304, %v8368
    %v8817 = vmul.f32 %v8305, %v8369
    %v8818 = vmul.f32 %v8306, %v8370
    %v8819 = vmul.f32 %v8307, %v8371
    %v8820 = vmul.f32 %v8308, %v8372
    %v8821 = vmul.f32 %v8309, %v8373
    %v8822 = vmul.f32 %v8310, %v8374
    %v8823 = vmul.f32 %v8311, %v8375
    %v8824 = vadd.f32 %v8696, %v8760
    %v8825 = vadd.f32 %v8697, %v8761
    %v8826 = vadd.f32 %v8698, %v8762
    %v8827 = vadd.f32 %v8699, %v8763
    %v8828 = vadd.f32 %v8700, %v8764
    %v8829 = vadd.f32 %v8701, %v8765
    %v8830 = vadd.f32 %v8702, %v8766
    %v8831 = vadd.f32 %v8703, %v8767
    %v8832 = vadd.f32 %v8704, %v8768
    %v8833 = vadd.f32 %v8705, %v8769
    %v8834 = vadd.f32 %v8706, %v8770
    %v8835 = vadd.f32 %v8707, %v8771
    %v8836 = vadd.f32 %v8708, %v8772
    %v8837 = vadd.f32 %v8709, %v8773
    %v8838 = vadd.f32 %v8710, %v8774
    %v8839 = vadd.f32 %v8711, %v8775
    %v8840 = vadd.f32 %v8712, %v8776
    %v8841 = vadd.f32 %v8713, %v8777
    %v8842 = vadd.f32 %v8714, %v8778
    %v8843 = vadd.f32 %v8715, %v8779
    %v8844 = vadd.f32 %v8716, %v8780
    %v8845 = vadd.f32 %v8717, %v8781
    %v8846 = vadd.f32 %v8718, %v8782
    %v8847 = vadd.f32 %v8719, %v8783
    %v8848 = vadd.f32 %v8720, %v8784
    %v8849 = vadd.f32 %v8721, %v8785
    %v8850 = vadd.f32 %v8722, %v8786
    %v8851 = vadd.f32 %v8723, %v8787
    %v8852 = vadd.f32 %v8724, %v8788
    %v8853 = vadd.f32 %v8725, %v8789
    %v8854 = vadd.f32 %v8726, %v8790
    %v8855 = vadd.f32 %v8727, %v8791
    %v8856 = vadd.f32 %v8728, %v8792
    %v8857 = vadd.f32 %v8729, %v8793
    %v8858 = vadd.f32 %v8730, %v8794
    %v8859 = vadd.f32 %v8731, %v8795
    %v8860 = vadd.f32 %v8732, %v8796
    %v8861 = vadd.f32 %v8733, %v8797
    %v8862 = vadd.f32 %v8734, %v8798
    %v8863 = vadd.f32 %v8735, %v8799
    %v8864 = vadd.f32 %v8736, %v8800
    %v8865 = vadd.f32 %v8737, %v8801
    %v8866 = vadd.f32 %v8738, %v8802
    %v8867 = vadd.f32 %v8739, %v8803
    %v8868 = vadd.f32 %v8740, %v8804
    %v8869 = vadd.f32 %v8741, %v8805
    %v8870 = vadd.f32 %v8742, %v8806
    %v8871 = vadd.f32 %v8743, %v8807
    %v8872 = vadd.f32 %v8744, %v8808
    %v8873 = vadd.f32 %v8745, %v8809
    %v8874 = vadd.f32 %v8746, %v8810
    %v8875 = vadd.f32 %v8747, %v8811
    %v8876 = vadd.f32 %v8748, %v8812
    %v8877 = vadd.f32 %v8749, %v8813
    %v8878 = vadd.f32 %v8750, %v8814
    %v8879 = vadd.f32 %v8751, %v8815
    %v8880 = vadd.f32 %v8752, %v8816
    %v8881 = vadd.f32 %v8753, %v8817
    %v8882 = vadd.f32 %v8754, %v8818
    %v8883 = vadd.f32 %v8755, %v8819
    %v8884 = vadd.f32 %v8756, %v8820
    %v8885 = vadd.f32 %v8757, %v8821
    %v8886 = vadd.f32 %v8758, %v8822
    %v8887 = vadd.f32 %v8759, %v8823
    %v8888 = vtanh.pop %v8824
    %v8889 = vtanh.pop %v8825
    %v8890 = vtanh.pop %v8826
    %v8891 = vtanh.pop %v8827
    %v8892 = vtanh.pop %v8828
    %v8893 = vtanh.pop %v8829
    %v8894 = vtanh.pop %v8830
    %v8895 = vtanh.pop %v8831
    %v8896 = vtanh.pop %v8832
    %v8897 = vtanh.pop %v8833
    %v8898 = vtanh.pop %v8834
    %v8899 = vtanh.pop %v8835
    %v8900 = vtanh.pop %v8836
    %v8901 = vtanh.pop %v8837
    %v8902 = vtanh.pop %v8838
    %v8903 = vtanh.pop %v8839
    %v8904 = vtanh.pop %v8840
    %v8905 = vtanh.pop %v8841
    %v8906 = vtanh.pop %v8842
    %v8907 = vtanh.pop %v8843
    %v8908 = vtanh.pop %v8844
    %v8909 = vtanh.pop %v8845
    %v8910 = vtanh.pop %v8846
    %v8911 = vtanh.pop %v8847
    %v8912 = vtanh.pop %v8848
    %v8913 = vtanh.pop %v8849
    %v8914 = vtanh.pop %v8850
    %v8915 = vtanh.pop %v8851
    %v8916 = vtanh.pop %v8852
    %v8917 = vtanh.pop %v8853
    %v8918 = vtanh.pop %v8854
    %v8919 = vtanh.pop %v8855
    %v8920 = vtanh.pop %v8856
    %v8921 = vtanh.pop %v8857
    %v8922 = vtanh.pop %v8858
    %v8923 = vtanh.pop %v8859
    %v8924 = vtanh.pop %v8860
    %v8925 = vtanh.pop %v8861
    %v8926 = vtanh.pop %v8862
    %v8927 = vtanh.pop %v8863
    %v8928 = vtanh.pop %v8864
    %v8929 = vtanh.pop %v8865
    %v8930 = vtanh.pop %v8866
    %v8931 = vtanh.pop %v8867
    %v8932 = vtanh.pop %v8868
    %v8933 = vtanh.pop %v8869
    %v8934 = vtanh.pop %v8870
    %v8935 = vtanh.pop %v8871
    %v8936 = vtanh.pop %v8872
    %v8937 = vtanh.pop %v8873
    %v8938 = vtanh.pop %v8874
    %v8939 = vtanh.pop %v8875
    %v8940 = vtanh.pop %v8876
    %v8941 = vtanh.pop %v8877
    %v8942 = vtanh.pop %v8878
    %v8943 = vtanh.pop %v8879
    %v8944 = vtanh.pop %v8880
    %v8945 = vtanh.pop %v8881
    %v8946 = vtanh.pop %v8882
    %v8947 = vtanh.pop %v8883
    %v8948 = vtanh.pop %v8884
    %v8949 = vtanh.pop %v8885
    %v8950 = vtanh.pop %v8886
    %v8951 = vtanh.pop %v8887
    %v8952 = vmul.f32 %v8568, %v8888
    %v8953 = vmul.f32 %v8569, %v8889
    %v8954 = vmul.f32 %v8570, %v8890
    %v8955 = vmul.f32 %v8571, %v8891
    %v8956 = vmul.f32 %v8572, %v8892
    %v8957 = vmul.f32 %v8573, %v8893
    %v8958 = vmul.f32 %v8574, %v8894
    %v8959 = vmul.f32 %v8575, %v8895
    %v8960 = vmul.f32 %v8576, %v8896
    %v8961 = vmul.f32 %v8577, %v8897
    %v8962 = vmul.f32 %v8578, %v8898
    %v8963 = vmul.f32 %v8579, %v8899
    %v8964 = vmul.f32 %v8580, %v8900
    %v8965 = vmul.f32 %v8581, %v8901
    %v8966 = vmul.f32 %v8582, %v8902
    %v8967 = vmul.f32 %v8583, %v8903
    %v8968 = vmul.f32 %v8584, %v8904
    %v8969 = vmul.f32 %v8585, %v8905
    %v8970 = vmul.f32 %v8586, %v8906
    %v8971 = vmul.f32 %v8587, %v8907
    %v8972 = vmul.f32 %v8588, %v8908
    %v8973 = vmul.f32 %v8589, %v8909
    %v8974 = vmul.f32 %v8590, %v8910
    %v8975 = vmul.f32 %v8591, %v8911
    %v8976 = vmul.f32 %v8592, %v8912
    %v8977 = vmul.f32 %v8593, %v8913
    %v8978 = vmul.f32 %v8594, %v8914
    %v8979 = vmul.f32 %v8595, %v8915
    %v8980 = vmul.f32 %v8596, %v8916
    %v8981 = vmul.f32 %v8597, %v8917
    %v8982 = vmul.f32 %v8598, %v8918
    %v8983 = vmul.f32 %v8599, %v8919
    %v8984 = vmul.f32 %v8600, %v8920
    %v8985 = vmul.f32 %v8601, %v8921
    %v8986 = vmul.f32 %v8602, %v8922
    %v8987 = vmul.f32 %v8603, %v8923
    %v8988 = vmul.f32 %v8604, %v8924
    %v8989 = vmul.f32 %v8605, %v8925
    %v8990 = vmul.f32 %v8606, %v8926
    %v8991 = vmul.f32 %v8607, %v8927
    %v8992 = vmul.f32 %v8608, %v8928
    %v8993 = vmul.f32 %v8609, %v8929
    %v8994 = vmul.f32 %v8610, %v8930
    %v8995 = vmul.f32 %v8611, %v8931
    %v8996 = vmul.f32 %v8612, %v8932
    %v8997 = vmul.f32 %v8613, %v8933
    %v8998 = vmul.f32 %v8614, %v8934
    %v8999 = vmul.f32 %v8615, %v8935
    %v9000 = vmul.f32 %v8616, %v8936
    %v9001 = vmul.f32 %v8617, %v8937
    %v9002 = vmul.f32 %v8618, %v8938
    %v9003 = vmul.f32 %v8619, %v8939
    %v9004 = vmul.f32 %v8620, %v8940
    %v9005 = vmul.f32 %v8621, %v8941
    %v9006 = vmul.f32 %v8622, %v8942
    %v9007 = vmul.f32 %v8623, %v8943
    %v9008 = vmul.f32 %v8624, %v8944
    %v9009 = vmul.f32 %v8625, %v8945
    %v9010 = vmul.f32 %v8626, %v8946
    %v9011 = vmul.f32 %v8627, %v8947
    %v9012 = vmul.f32 %v8628, %v8948
    %v9013 = vmul.f32 %v8629, %v8949
    %v9014 = vmul.f32 %v8630, %v8950
    %v9015 = vmul.f32 %v8631, %v8951
    %9016 = vst [vmem:[#allocation3] sm:$0xff] %v8824
    %9017 = vst [vmem:[#allocation3 + $0x8] sm:$0xff] %v8825
    %9018 = vst [vmem:[#allocation3 + $0x10] sm:$0xff] %v8826
    %9019 = vst [vmem:[#allocation3 + $0x18] sm:$0xff] %v8827
    %9020 = vst [vmem:[#allocation3 + $0x20] sm:$0xff] %v8828
    %9021 = vst [vmem:[#allocation3 + $0x28] sm:$0xff] %v8829
    %9022 = vst [vmem:[#allocation3 + $0x30] sm:$0xff] %v8830
    %9023 = vst [vmem:[#allocation3 + $0x38] sm:$0xff] %v8831
    %9024 = vst [vmem:[#allocation3 + $0x40] sm:$0xff] %v8832
    %9025 = vst [vmem:[#allocation3 + $0x48] sm:$0xff] %v8833
    %9026 = vst [vmem:[#allocation3 + $0x50] sm:$0xff] %v8834
    %9027 = vst [vmem:[#allocation3 + $0x58] sm:$0xff] %v8835
    %9028 = vst [vmem:[#allocation3 + $0x60] sm:$0xff] %v8836
    %9029 = vst [vmem:[#allocation3 + $0x68] sm:$0xff] %v8837
    %9030 = vst [vmem:[#allocation3 + $0x70] sm:$0xff] %v8838
    %9031 = vst [vmem:[#allocation3 + $0x78] sm:$0xff] %v8839
    %9032 = vst [vmem:[#allocation3 + $0x80] sm:$0xff] %v8840
    %9033 = vst [vmem:[#allocation3 + $0x88] sm:$0xff] %v8841
    %9034 = vst [vmem:[#allocation3 + $0x90] sm:$0xff] %v8842
    %9035 = vst [vmem:[#allocation3 + $0x98] sm:$0xff] %v8843
    %9036 = vst [vmem:[#allocation3 + $0xa0] sm:$0xff] %v8844
    %9037 = vst [vmem:[#allocation3 + $0xa8] sm:$0xff] %v8845
    %9038 = vst [vmem:[#allocation3 + $0xb0] sm:$0xff] %v8846
    %9039 = vst [vmem:[#allocation3 + $0xb8] sm:$0xff] %v8847
    %9040 = vst [vmem:[#allocation3 + $0xc0] sm:$0xff] %v8848
    %9041 = vst [vmem:[#allocation3 + $0xc8] sm:$0xff] %v8849
    %9042 = vst [vmem:[#allocation3 + $0xd0] sm:$0xff] %v8850
    %9043 = vst [vmem:[#allocation3 + $0xd8] sm:$0xff] %v8851
    %9044 = vst [vmem:[#allocation3 + $0xe0] sm:$0xff] %v8852
    %9045 = vst [vmem:[#allocation3 + $0xe8] sm:$0xff] %v8853
    %9046 = vst [vmem:[#allocation3 + $0xf0] sm:$0xff] %v8854
    %9047 = vst [vmem:[#allocation3 + $0xf8] sm:$0xff] %v8855
    %9048 = vst [vmem:[#allocation3 + $0x100] sm:$0xff] %v8856
    %9049 = vst [vmem:[#allocation3 + $0x108] sm:$0xff] %v8857
    %9050 = vst [vmem:[#allocation3 + $0x110] sm:$0xff] %v8858
    %9051 = vst [vmem:[#allocation3 + $0x118] sm:$0xff] %v8859
    %9052 = vst [vmem:[#allocation3 + $0x120] sm:$0xff] %v8860
    %9053 = vst [vmem:[#allocation3 + $0x128] sm:$0xff] %v8861
    %9054 = vst [vmem:[#allocation3 + $0x130] sm:$0xff] %v8862
    %9055 = vst [vmem:[#allocation3 + $0x138] sm:$0xff] %v8863
    %9056 = vst [vmem:[#allocation3 + $0x140] sm:$0xff] %v8864
    %9057 = vst [vmem:[#allocation3 + $0x148] sm:$0xff] %v8865
    %9058 = vst [vmem:[#allocation3 + $0x150] sm:$0xff] %v8866
    %9059 = vst [vmem:[#allocation3 + $0x158] sm:$0xff] %v8867
    %9060 = vst [vmem:[#allocation3 + $0x160] sm:$0xff] %v8868
    %9061 = vst [vmem:[#allocation3 + $0x168] sm:$0xff] %v8869
    %9062 = vst [vmem:[#allocation3 + $0x170] sm:$0xff] %v8870
    %9063 = vst [vmem:[#allocation3 + $0x178] sm:$0xff] %v8871
    %9064 = vst [vmem:[#allocation3 + $0x180] sm:$0xff] %v8872
    %9065 = vst [vmem:[#allocation3 + $0x188] sm:$0xff] %v8873
    %9066 = vst [vmem:[#allocation3 + $0x190] sm:$0xff] %v8874
    %9067 = vst [vmem:[#allocation3 + $0x198] sm:$0xff] %v8875
    %9068 = vst [vmem:[#allocation3 + $0x1a0] sm:$0xff] %v8876
    %9069 = vst [vmem:[#allocation3 + $0x1a8] sm:$0xff] %v8877
    %9070 = vst [vmem:[#allocation3 + $0x1b0] sm:$0xff] %v8878
    %9071 = vst [vmem:[#allocation3 + $0x1b8] sm:$0xff] %v8879
    %9072 = vst [vmem:[#allocation3 + $0x1c0] sm:$0xff] %v8880
    %9073 = vst [vmem:[#allocation3 + $0x1c8] sm:$0xff] %v8881
    %9074 = vst [vmem:[#allocation3 + $0x1d0] sm:$0xff] %v8882
    %9075 = vst [vmem:[#allocation3 + $0x1d8] sm:$0xff] %v8883
    %9076 = vst [vmem:[#allocation3 + $0x1e0] sm:$0xff] %v8884
    %9077 = vst [vmem:[#allocation3 + $0x1e8] sm:$0xff] %v8885
    %9078 = vst [vmem:[#allocation3 + $0x1f0] sm:$0xff] %v8886
    %9079 = vst [vmem:[#allocation3 + $0x1f8] sm:$0xff] %v8887
    %v9080 = vpack.c.bf16 %v8956, %v8952
    %v9081 = vpack.c.bf16 %v8957, %v8953
    %v9082 = vpack.c.bf16 %v8958, %v8954
    %v9083 = vpack.c.bf16 %v8959, %v8955
    %v9084 = vpack.c.bf16 %v8964, %v8960
    %v9085 = vpack.c.bf16 %v8965, %v8961
    %v9086 = vpack.c.bf16 %v8966, %v8962
    %v9087 = vpack.c.bf16 %v8967, %v8963
    %v9088 = vpack.c.bf16 %v8972, %v8968
    %v9089 = vpack.c.bf16 %v8973, %v8969
    %v9090 = vpack.c.bf16 %v8974, %v8970
    %v9091 = vpack.c.bf16 %v8975, %v8971
    %v9092 = vpack.c.bf16 %v8980, %v8976
    %v9093 = vpack.c.bf16 %v8981, %v8977
    %v9094 = vpack.c.bf16 %v8982, %v8978
    %v9095 = vpack.c.bf16 %v8983, %v8979
    %v9096 = vpack.c.bf16 %v8988, %v8984
    %v9097 = vpack.c.bf16 %v8989, %v8985
    %v9098 = vpack.c.bf16 %v8990, %v8986
    %v9099 = vpack.c.bf16 %v8991, %v8987
    %v9100 = vpack.c.bf16 %v8996, %v8992
    %v9101 = vpack.c.bf16 %v8997, %v8993
    %v9102 = vpack.c.bf16 %v8998, %v8994
    %v9103 = vpack.c.bf16 %v8999, %v8995
    %v9104 = vpack.c.bf16 %v9004, %v9000
    %v9105 = vpack.c.bf16 %v9005, %v9001
    %v9106 = vpack.c.bf16 %v9006, %v9002
    %v9107 = vpack.c.bf16 %v9007, %v9003
    %v9108 = vpack.c.bf16 %v9012, %v9008
    %v9109 = vpack.c.bf16 %v9013, %v9009
    %v9110 = vpack.c.bf16 %v9014, %v9010
    %v9111 = vpack.c.bf16 %v9015, %v9011
    %9112 = vst [vmem:[#allocation2] sm:$0xff] %v9080
    %9113 = vst [vmem:[#allocation2 + $0x8] sm:$0xff] %v9081
    %9114 = vst [vmem:[#allocation2 + $0x10] sm:$0xff] %v9082
    %9115 = vst [vmem:[#allocation2 + $0x18] sm:$0xff] %v9083
    %9116 = vst [vmem:[#allocation2 + $0x20] sm:$0xff] %v9084
    %9117 = vst [vmem:[#allocation2 + $0x28] sm:$0xff] %v9085
    %9118 = vst [vmem:[#allocation2 + $0x30] sm:$0xff] %v9086
    %9119 = vst [vmem:[#allocation2 + $0x38] sm:$0xff] %v9087
    %9120 = vst [vmem:[#allocation2 + $0x40] sm:$0xff] %v9088
    %9121 = vst [vmem:[#allocation2 + $0x48] sm:$0xff] %v9089
    %9122 = vst [vmem:[#allocation2 + $0x50] sm:$0xff] %v9090
    %9123 = vst [vmem:[#allocation2 + $0x58] sm:$0xff] %v9091
    %9124 = vst [vmem:[#allocation2 + $0x60] sm:$0xff] %v9092
    %9125 = vst [vmem:[#allocation2 + $0x68] sm:$0xff] %v9093
    %9126 = vst [vmem:[#allocation2 + $0x70] sm:$0xff] %v9094
    %9127 = vst [vmem:[#allocation2 + $0x78] sm:$0xff] %v9095
    %9128 = vst [vmem:[#allocation2 + $0x80] sm:$0xff] %v9096
    %9129 = vst [vmem:[#allocation2 + $0x88] sm:$0xff] %v9097
    %9130 = vst [vmem:[#allocation2 + $0x90] sm:$0xff] %v9098
    %9131 = vst [vmem:[#allocation2 + $0x98] sm:$0xff] %v9099
    %9132 = vst [vmem:[#allocation2 + $0xa0] sm:$0xff] %v9100
    %9133 = vst [vmem:[#allocation2 + $0xa8] sm:$0xff] %v9101
    %9134 = vst [vmem:[#allocation2 + $0xb0] sm:$0xff] %v9102
    %9135 = vst [vmem:[#allocation2 + $0xb8] sm:$0xff] %v9103
    %9136 = vst [vmem:[#allocation2 + $0xc0] sm:$0xff] %v9104
    %9137 = vst [vmem:[#allocation2 + $0xc8] sm:$0xff] %v9105
    %9138 = vst [vmem:[#allocation2 + $0xd0] sm:$0xff] %v9106
    %9139 = vst [vmem:[#allocation2 + $0xd8] sm:$0xff] %v9107
    %9140 = vst [vmem:[#allocation2 + $0xe0] sm:$0xff] %v9108
    %9141 = vst [vmem:[#allocation2 + $0xe8] sm:$0xff] %v9109
    %9142 = vst [vmem:[#allocation2 + $0xf0] sm:$0xff] %v9110
    %9143 = vst [vmem:[#allocation2 + $0xf8] sm:$0xff] %v9111
    %v9176 = vunpack.c.l.b16 %v9080
    %v9177 = vunpack.c.l.b16 %v9081
    %v9178 = vunpack.c.l.b16 %v9082
    %v9179 = vunpack.c.l.b16 %v9083
    %v9180 = vunpack.c.h.b16 %v9080
    %v9181 = vunpack.c.h.b16 %v9081
    %v9182 = vunpack.c.h.b16 %v9082
    %v9183 = vunpack.c.h.b16 %v9083
    %v9184 = vunpack.c.l.b16 %v9084
    %v9185 = vunpack.c.l.b16 %v9085
    %v9186 = vunpack.c.l.b16 %v9086
    %v9187 = vunpack.c.l.b16 %v9087
    %v9188 = vunpack.c.h.b16 %v9084
    %v9189 = vunpack.c.h.b16 %v9085
    %v9190 = vunpack.c.h.b16 %v9086
    %v9191 = vunpack.c.h.b16 %v9087
    %v9192 = vunpack.c.l.b16 %v9088
    %v9193 = vunpack.c.l.b16 %v9089
    %v9194 = vunpack.c.l.b16 %v9090
    %v9195 = vunpack.c.l.b16 %v9091
    %v9196 = vunpack.c.h.b16 %v9088
    %v9197 = vunpack.c.h.b16 %v9089
    %v9198 = vunpack.c.h.b16 %v9090
    %v9199 = vunpack.c.h.b16 %v9091
    %v9200 = vunpack.c.l.b16 %v9092
    %v9201 = vunpack.c.l.b16 %v9093
    %v9202 = vunpack.c.l.b16 %v9094
    %v9203 = vunpack.c.l.b16 %v9095
    %v9204 = vunpack.c.h.b16 %v9092
    %v9205 = vunpack.c.h.b16 %v9093
    %v9206 = vunpack.c.h.b16 %v9094
    %v9207 = vunpack.c.h.b16 %v9095
    %v9208 = vunpack.c.l.b16 %v9096
    %v9209 = vunpack.c.l.b16 %v9097
    %v9210 = vunpack.c.l.b16 %v9098
    %v9211 = vunpack.c.l.b16 %v9099
    %v9212 = vunpack.c.h.b16 %v9096
    %v9213 = vunpack.c.h.b16 %v9097
    %v9214 = vunpack.c.h.b16 %v9098
    %v9215 = vunpack.c.h.b16 %v9099
    %v9216 = vunpack.c.l.b16 %v9100
    %v9217 = vunpack.c.l.b16 %v9101
    %v9218 = vunpack.c.l.b16 %v9102
    %v9219 = vunpack.c.l.b16 %v9103
    %v9220 = vunpack.c.h.b16 %v9100
    %v9221 = vunpack.c.h.b16 %v9101
    %v9222 = vunpack.c.h.b16 %v9102
    %v9223 = vunpack.c.h.b16 %v9103
    %v9224 = vunpack.c.l.b16 %v9104
    %v9225 = vunpack.c.l.b16 %v9105
    %v9226 = vunpack.c.l.b16 %v9106
    %v9227 = vunpack.c.l.b16 %v9107
    %v9228 = vunpack.c.h.b16 %v9104
    %v9229 = vunpack.c.h.b16 %v9105
    %v9230 = vunpack.c.h.b16 %v9106
    %v9231 = vunpack.c.h.b16 %v9107
    %v9232 = vunpack.c.l.b16 %v9108
    %v9233 = vunpack.c.l.b16 %v9109
    %v9234 = vunpack.c.l.b16 %v9110
    %v9235 = vunpack.c.l.b16 %v9111
    %v9236 = vunpack.c.h.b16 %v9108
    %v9237 = vunpack.c.h.b16 %v9109
    %v9238 = vunpack.c.h.b16 %v9110
    %v9239 = vunpack.c.h.b16 %v9111
    %v9240 = vpack.c.b16 %v9177, %v9176
    %v9241 = vpack.c.b16 %v9179, %v9178
    %v9242 = vpack.c.b16 %v9181, %v9180
    %v9243 = vpack.c.b16 %v9183, %v9182
    %v9244 = vpack.c.b16 %v9185, %v9184
    %v9245 = vpack.c.b16 %v9187, %v9186
    %v9246 = vpack.c.b16 %v9189, %v9188
    %v9247 = vpack.c.b16 %v9191, %v9190
    %v9248 = vpack.c.b16 %v9193, %v9192
    %v9249 = vpack.c.b16 %v9195, %v9194
    %v9250 = vpack.c.b16 %v9197, %v9196
    %v9251 = vpack.c.b16 %v9199, %v9198
    %v9252 = vpack.c.b16 %v9201, %v9200
    %v9253 = vpack.c.b16 %v9203, %v9202
    %v9254 = vpack.c.b16 %v9205, %v9204
    %v9255 = vpack.c.b16 %v9207, %v9206
    %v9256 = vpack.c.b16 %v9209, %v9208
    %v9257 = vpack.c.b16 %v9211, %v9210
    %v9258 = vpack.c.b16 %v9213, %v9212
    %v9259 = vpack.c.b16 %v9215, %v9214
    %v9260 = vpack.c.b16 %v9217, %v9216
    %v9261 = vpack.c.b16 %v9219, %v9218
    %v9262 = vpack.c.b16 %v9221, %v9220
    %v9263 = vpack.c.b16 %v9223, %v9222
    %v9264 = vpack.c.b16 %v9225, %v9224
    %v9265 = vpack.c.b16 %v9227, %v9226
    %v9266 = vpack.c.b16 %v9229, %v9228
    %v9267 = vpack.c.b16 %v9231, %v9230
    %v9268 = vpack.c.b16 %v9233, %v9232
    %v9269 = vpack.c.b16 %v9235, %v9234
    %v9270 = vpack.c.b16 %v9237, %v9236
    %v9271 = vpack.c.b16 %v9239, %v9238
    %9304 = vst [vmem:[#allocation13] sm:$0xff] %v9240
    %9305 = vst [vmem:[#allocation13 + $0x8] sm:$0xff] %v9241
    %9306 = vst [vmem:[#allocation13 + $0x10] sm:$0xff] %v9242
    %9307 = vst [vmem:[#allocation13 + $0x18] sm:$0xff] %v9243
    %9308 = vst [vmem:[#allocation13 + $0x20] sm:$0xff] %v9244
    %9309 = vst [vmem:[#allocation13 + $0x28] sm:$0xff] %v9245
    %9310 = vst [vmem:[#allocation13 + $0x30] sm:$0xff] %v9246
    %9311 = vst [vmem:[#allocation13 + $0x38] sm:$0xff] %v9247
    %9312 = vst [vmem:[#allocation13 + $0x40] sm:$0xff] %v9248
    %9313 = vst [vmem:[#allocation13 + $0x48] sm:$0xff] %v9249
    %9314 = vst [vmem:[#allocation13 + $0x50] sm:$0xff] %v9250
    %9315 = vst [vmem:[#allocation13 + $0x58] sm:$0xff] %v9251
    %9316 = vst [vmem:[#allocation13 + $0x60] sm:$0xff] %v9252
    %9317 = vst [vmem:[#allocation13 + $0x68] sm:$0xff] %v9253
    %9318 = vst [vmem:[#allocation13 + $0x70] sm:$0xff] %v9254
    %9319 = vst [vmem:[#allocation13 + $0x78] sm:$0xff] %v9255
    %9320 = vst [vmem:[#allocation13 + $0x80] sm:$0xff] %v9256
    %9321 = vst [vmem:[#allocation13 + $0x88] sm:$0xff] %v9257
    %9322 = vst [vmem:[#allocation13 + $0x90] sm:$0xff] %v9258
    %9323 = vst [vmem:[#allocation13 + $0x98] sm:$0xff] %v9259
    %9324 = vst [vmem:[#allocation13 + $0xa0] sm:$0xff] %v9260
    %9325 = vst [vmem:[#allocation13 + $0xa8] sm:$0xff] %v9261
    %9326 = vst [vmem:[#allocation13 + $0xb0] sm:$0xff] %v9262
    %9327 = vst [vmem:[#allocation13 + $0xb8] sm:$0xff] %v9263
    %9328 = vst [vmem:[#allocation13 + $0xc0] sm:$0xff] %v9264
    %9329 = vst [vmem:[#allocation13 + $0xc8] sm:$0xff] %v9265
    %9330 = vst [vmem:[#allocation13 + $0xd0] sm:$0xff] %v9266
    %9331 = vst [vmem:[#allocation13 + $0xd8] sm:$0xff] %v9267
    %9332 = vst [vmem:[#allocation13 + $0xe0] sm:$0xff] %v9268
    %9333 = vst [vmem:[#allocation13 + $0xe8] sm:$0xff] %v9269
    %9334 = vst [vmem:[#allocation13 + $0xf0] sm:$0xff] %v9270
    %9335 = vst [vmem:[#allocation13 + $0xf8] sm:$0xff] %v9271
    // Predicated region
    $region46: #{tpu_custom_call.1} parent=1 // pred_check
      %p9336 = pneg %p92
    $region47: #{tpu_custom_call.1} parent=1 // pred_check_branch
      %9338 = sbr.rel (%p9336) target = $region49
    $region48: #{tpu_custom_call.1} parent=1 // pred_region
      %v9339 = vld [vmem:[#allocation3] sm:$0xff]
      %v9340 = vld [vmem:[#allocation3 + $0x8] sm:$0xff]
      %v9341 = vld [vmem:[#allocation3 + $0x10] sm:$0xff]
      %v9342 = vld [vmem:[#allocation3 + $0x18] sm:$0xff]
      %v9343 = vld [vmem:[#allocation3 + $0x20] sm:$0xff]
      %v9344 = vld [vmem:[#allocation3 + $0x28] sm:$0xff]
      %v9345 = vld [vmem:[#allocation3 + $0x30] sm:$0xff]
      %v9346 = vld [vmem:[#allocation3 + $0x38] sm:$0xff]
      %v9347 = vld [vmem:[#allocation3 + $0x40] sm:$0xff]
      %v9348 = vld [vmem:[#allocation3 + $0x48] sm:$0xff]
      %v9349 = vld [vmem:[#allocation3 + $0x50] sm:$0xff]
      %v9350 = vld [vmem:[#allocation3 + $0x58] sm:$0xff]
      %v9351 = vld [vmem:[#allocation3 + $0x60] sm:$0xff]
      %v9352 = vld [vmem:[#allocation3 + $0x68] sm:$0xff]
      %v9353 = vld [vmem:[#allocation3 + $0x70] sm:$0xff]
      %v9354 = vld [vmem:[#allocation3 + $0x78] sm:$0xff]
      %v9355 = vld [vmem:[#allocation3 + $0x80] sm:$0xff]
      %v9356 = vld [vmem:[#allocation3 + $0x88] sm:$0xff]
      %v9357 = vld [vmem:[#allocation3 + $0x90] sm:$0xff]
      %v9358 = vld [vmem:[#allocation3 + $0x98] sm:$0xff]
      %v9359 = vld [vmem:[#allocation3 + $0xa0] sm:$0xff]
      %v9360 = vld [vmem:[#allocation3 + $0xa8] sm:$0xff]
      %v9361 = vld [vmem:[#allocation3 + $0xb0] sm:$0xff]
      %v9362 = vld [vmem:[#allocation3 + $0xb8] sm:$0xff]
      %v9363 = vld [vmem:[#allocation3 + $0xc0] sm:$0xff]
      %v9364 = vld [vmem:[#allocation3 + $0xc8] sm:$0xff]
      %v9365 = vld [vmem:[#allocation3 + $0xd0] sm:$0xff]
      %v9366 = vld [vmem:[#allocation3 + $0xd8] sm:$0xff]
      %v9367 = vld [vmem:[#allocation3 + $0xe0] sm:$0xff]
      %v9368 = vld [vmem:[#allocation3 + $0xe8] sm:$0xff]
      %v9369 = vld [vmem:[#allocation3 + $0xf0] sm:$0xff]
      %v9370 = vld [vmem:[#allocation3 + $0xf8] sm:$0xff]
      %v9371 = vld [vmem:[#allocation3 + $0x100] sm:$0xff]
      %v9372 = vld [vmem:[#allocation3 + $0x108] sm:$0xff]
      %v9373 = vld [vmem:[#allocation3 + $0x110] sm:$0xff]
      %v9374 = vld [vmem:[#allocation3 + $0x118] sm:$0xff]
      %v9375 = vld [vmem:[#allocation3 + $0x120] sm:$0xff]
      %v9376 = vld [vmem:[#allocation3 + $0x128] sm:$0xff]
      %v9377 = vld [vmem:[#allocation3 + $0x130] sm:$0xff]
      %v9378 = vld [vmem:[#allocation3 + $0x138] sm:$0xff]
      %v9379 = vld [vmem:[#allocation3 + $0x140] sm:$0xff]
      %v9380 = vld [vmem:[#allocation3 + $0x148] sm:$0xff]
      %v9381 = vld [vmem:[#allocation3 + $0x150] sm:$0xff]
      %v9382 = vld [vmem:[#allocation3 + $0x158] sm:$0xff]
      %v9383 = vld [vmem:[#allocation3 + $0x160] sm:$0xff]
      %v9384 = vld [vmem:[#allocation3 + $0x168] sm:$0xff]
      %v9385 = vld [vmem:[#allocation3 + $0x170] sm:$0xff]
      %v9386 = vld [vmem:[#allocation3 + $0x178] sm:$0xff]
      %v9387 = vld [vmem:[#allocation3 + $0x180] sm:$0xff]
      %v9388 = vld [vmem:[#allocation3 + $0x188] sm:$0xff]
      %v9389 = vld [vmem:[#allocation3 + $0x190] sm:$0xff]
      %v9390 = vld [vmem:[#allocation3 + $0x198] sm:$0xff]
      %v9391 = vld [vmem:[#allocation3 + $0x1a0] sm:$0xff]
      %v9392 = vld [vmem:[#allocation3 + $0x1a8] sm:$0xff]
      %v9393 = vld [vmem:[#allocation3 + $0x1b0] sm:$0xff]
      %v9394 = vld [vmem:[#allocation3 + $0x1b8] sm:$0xff]
      %v9395 = vld [vmem:[#allocation3 + $0x1c0] sm:$0xff]
      %v9396 = vld [vmem:[#allocation3 + $0x1c8] sm:$0xff]
      %v9397 = vld [vmem:[#allocation3 + $0x1d0] sm:$0xff]
      %v9398 = vld [vmem:[#allocation3 + $0x1d8] sm:$0xff]
      %v9399 = vld [vmem:[#allocation3 + $0x1e0] sm:$0xff]
      %v9400 = vld [vmem:[#allocation3 + $0x1e8] sm:$0xff]
      %v9401 = vld [vmem:[#allocation3 + $0x1f0] sm:$0xff]
      %v9402 = vld [vmem:[#allocation3 + $0x1f8] sm:$0xff]
      %9403 = vst [vmem:[#allocation14] sm:$0xff] %v9339
      %9404 = vst [vmem:[#allocation14 + $0x8] sm:$0xff] %v9340
      %9405 = vst [vmem:[#allocation14 + $0x10] sm:$0xff] %v9341
      %9406 = vst [vmem:[#allocation14 + $0x18] sm:$0xff] %v9342
      %9407 = vst [vmem:[#allocation14 + $0x20] sm:$0xff] %v9343
      %9408 = vst [vmem:[#allocation14 + $0x28] sm:$0xff] %v9344
      %9409 = vst [vmem:[#allocation14 + $0x30] sm:$0xff] %v9345
      %9410 = vst [vmem:[#allocation14 + $0x38] sm:$0xff] %v9346
      %9411 = vst [vmem:[#allocation14 + $0x40] sm:$0xff] %v9347
      %9412 = vst [vmem:[#allocation14 + $0x48] sm:$0xff] %v9348
      %9413 = vst [vmem:[#allocation14 + $0x50] sm:$0xff] %v9349
      %9414 = vst [vmem:[#allocation14 + $0x58] sm:$0xff] %v9350
      %9415 = vst [vmem:[#allocation14 + $0x60] sm:$0xff] %v9351
      %9416 = vst [vmem:[#allocation14 + $0x68] sm:$0xff] %v9352
      %9417 = vst [vmem:[#allocation14 + $0x70] sm:$0xff] %v9353
      %9418 = vst [vmem:[#allocation14 + $0x78] sm:$0xff] %v9354
      %9419 = vst [vmem:[#allocation14 + $0x80] sm:$0xff] %v9355
      %9420 = vst [vmem:[#allocation14 + $0x88] sm:$0xff] %v9356
      %9421 = vst [vmem:[#allocation14 + $0x90] sm:$0xff] %v9357
      %9422 = vst [vmem:[#allocation14 + $0x98] sm:$0xff] %v9358
      %9423 = vst [vmem:[#allocation14 + $0xa0] sm:$0xff] %v9359
      %9424 = vst [vmem:[#allocation14 + $0xa8] sm:$0xff] %v9360
      %9425 = vst [vmem:[#allocation14 + $0xb0] sm:$0xff] %v9361
      %9426 = vst [vmem:[#allocation14 + $0xb8] sm:$0xff] %v9362
      %9427 = vst [vmem:[#allocation14 + $0xc0] sm:$0xff] %v9363
      %9428 = vst [vmem:[#allocation14 + $0xc8] sm:$0xff] %v9364
      %9429 = vst [vmem:[#allocation14 + $0xd0] sm:$0xff] %v9365
      %9430 = vst [vmem:[#allocation14 + $0xd8] sm:$0xff] %v9366
      %9431 = vst [vmem:[#allocation14 + $0xe0] sm:$0xff] %v9367
      %9432 = vst [vmem:[#allocation14 + $0xe8] sm:$0xff] %v9368
      %9433 = vst [vmem:[#allocation14 + $0xf0] sm:$0xff] %v9369
      %9434 = vst [vmem:[#allocation14 + $0xf8] sm:$0xff] %v9370
      %9435 = vst [vmem:[#allocation14 + $0x100] sm:$0xff] %v9371
      %9436 = vst [vmem:[#allocation14 + $0x108] sm:$0xff] %v9372
      %9437 = vst [vmem:[#allocation14 + $0x110] sm:$0xff] %v9373
      %9438 = vst [vmem:[#allocation14 + $0x118] sm:$0xff] %v9374
      %9439 = vst [vmem:[#allocation14 + $0x120] sm:$0xff] %v9375
      %9440 = vst [vmem:[#allocation14 + $0x128] sm:$0xff] %v9376
      %9441 = vst [vmem:[#allocation14 + $0x130] sm:$0xff] %v9377
      %9442 = vst [vmem:[#allocation14 + $0x138] sm:$0xff] %v9378
      %9443 = vst [vmem:[#allocation14 + $0x140] sm:$0xff] %v9379
      %9444 = vst [vmem:[#allocation14 + $0x148] sm:$0xff] %v9380
      %9445 = vst [vmem:[#allocation14 + $0x150] sm:$0xff] %v9381
      %9446 = vst [vmem:[#allocation14 + $0x158] sm:$0xff] %v9382
      %9447 = vst [vmem:[#allocation14 + $0x160] sm:$0xff] %v9383
      %9448 = vst [vmem:[#allocation14 + $0x168] sm:$0xff] %v9384
      %9449 = vst [vmem:[#allocation14 + $0x170] sm:$0xff] %v9385
      %9450 = vst [vmem:[#allocation14 + $0x178] sm:$0xff] %v9386
      %9451 = vst [vmem:[#allocation14 + $0x180] sm:$0xff] %v9387
      %9452 = vst [vmem:[#allocation14 + $0x188] sm:$0xff] %v9388
      %9453 = vst [vmem:[#allocation14 + $0x190] sm:$0xff] %v9389
      %9454 = vst [vmem:[#allocation14 + $0x198] sm:$0xff] %v9390
      %9455 = vst [vmem:[#allocation14 + $0x1a0] sm:$0xff] %v9391
      %9456 = vst [vmem:[#allocation14 + $0x1a8] sm:$0xff] %v9392
      %9457 = vst [vmem:[#allocation14 + $0x1b0] sm:$0xff] %v9393
      %9458 = vst [vmem:[#allocation14 + $0x1b8] sm:$0xff] %v9394
      %9459 = vst [vmem:[#allocation14 + $0x1c0] sm:$0xff] %v9395
      %9460 = vst [vmem:[#allocation14 + $0x1c8] sm:$0xff] %v9396
      %9461 = vst [vmem:[#allocation14 + $0x1d0] sm:$0xff] %v9397
      %9462 = vst [vmem:[#allocation14 + $0x1d8] sm:$0xff] %v9398
      %9463 = vst [vmem:[#allocation14 + $0x1e0] sm:$0xff] %v9399
      %9464 = vst [vmem:[#allocation14 + $0x1e8] sm:$0xff] %v9400
      %9465 = vst [vmem:[#allocation14 + $0x1f0] sm:$0xff] %v9401
      %9466 = vst [vmem:[#allocation14 + $0x1f8] sm:$0xff] %v9402
    $region49: #{tpu_custom_call.1} parent=1 // pred_fallthru
      _
    // Predicated region
    $region50: #{tpu_custom_call.1} parent=1 // pred_check
      _
    $region51: #{tpu_custom_call.1} parent=1 // pred_check_branch
      %9468 = sbr.rel (0) target = $region53
    $region52: #{tpu_custom_call.1} parent=1 // pred_region
      %s9470 = ssub.s32 4096, 4096
      %9471 = vsyncadd [#allocation6], %s9470
      %s9472 = sshll.u32 [#allocation13], 4
      %s9473 = int_to_ptr.vmem [resolvable:$true] %s9472
      %9478 = dma.vmem_to_hbm [thread:$0]  %s9473, 4096, %s5, [#allocation6], 256, 256, 16
    $region53: #{tpu_custom_call.1} parent=1 // pred_fallthru
      _
    // Predicated region
    $region54: #{tpu_custom_call.1} parent=1 // pred_check
      _
    $region55: #{tpu_custom_call.1} parent=1 // pred_check_branch
      %9480 = sbr.rel (0) target = $region57
    $region56: #{tpu_custom_call.1} parent=1 // pred_region
      %s9482 = ssub.s32 8192, 8192
      %9483 = vsyncadd [#allocation15], %s9482
      %s9484 = sshll.u32 [#allocation14], 4
      %s9485 = int_to_ptr.vmem [resolvable:$true] %s9484
      %9490 = dma.vmem_to_hbm [thread:$0]  %s9485, 8192, %s6, [#allocation15], 512, 512, 32
    $region57: #{tpu_custom_call.1} parent=1 // pred_fallthru
      _
    // Predicated region
    $region58: #{tpu_custom_call.1} parent=1 // pred_check
      _
    $region59: #{tpu_custom_call.1} parent=1 // pred_check_branch
      %9492 = sbr.rel (0) target = $region61
    $region60: #{tpu_custom_call.1} parent=1 // pred_region
      %9493 = dma.done [#allocation6], 4096
    $region61: #{tpu_custom_call.1} parent=1 // pred_fallthru
      _
    // Predicated region
    $region62: #{tpu_custom_call.1} parent=1 // pred_check
      _
    $region63: #{tpu_custom_call.1} parent=1 // pred_check_branch
      %9495 = sbr.rel (0) target = $region65
    $region64: #{tpu_custom_call.1} parent=1 // pred_region
      %9496 = dma.done [#allocation15], 8192
    $region65: #{tpu_custom_call.1} parent=1 // pred_fallthru
      _
    %9497 = vsyncpa [#allocation5], 1
    %9498 = vsyncpa [#allocation8], 1
    %9499 = vsyncpa [#allocation11], 1
    %9500 = vsyncpa [#allocation6], 1
    %9501 = vsyncpa [#allocation15], 1

</llo_original>
